<compile_context>
chip_gen: v6e
topology: v6e:2x2x1
jax: 0.10.0
libtpu: 0.0.40
codegen_flags: <defaults>
</compile_context>

<pallas_src>
import functools

import jax
import jax.numpy as jnp
from jax.experimental import pallas as pl
from jax.experimental.pallas import tpu as pltpu

LEAK = 0.2
_HALO = 4  # extra input rows each row-tile needs below its main block


def _round_up(n, m):
    return ((n + m - 1) // m) * m


# ------------------------------ Pallas kernel --------------------------------

def _block_d_kernel(TRo, Wo, WoP, Wh, Cin, Cmid, Cout,
                    xem_ref, xeh_ref, xom_ref, xoh_ref,
                    w1_ref, b1_ref, w2_ref, b2_ref, ws_ref, bs_ref,
                    o_ref):
    """Fused Skip/Conv1/Conv2 for one (batch, row-tile) grid step.

    xem/xom : main row block of the even/odd column phases, (1, 2*TRo, Wph, Cin)
    xeh/xoh : 4-row halo below the main block,              (1, 1, 4,  Wph, Cin)
    w*      : (9, Cin_or_Cmid, Cout_or_Cmid) bf16, tap index = 3*ky + kx
    b*      : (1, C) f32
    o_ref   : (1, TRo, Wo, Cout) f32
    """
    t = pl.program_id(1)
    HR = 2 * TRo + 2        # rows of h computed for this tile (h row = 2*r0 - 1 + k)

    # Assemble the even/odd column slabs: (2*TRo + 4, Wph, Cin), bf16.
    xe = jnp.concatenate([xem_ref[0], xeh_ref[0, 0]], axis=0)
    xo = jnp.concatenate([xom_ref[0], xoh_ref[0, 0]], axis=0)

    def flat(v):                       # (R, C, K) -> (R*C, K); C is a multiple of 8
        r, c, k = v.shape
        return v.reshape(r * c, k)

    def rows_stride2(v, start, count):  # rows start, start+2, ..., start+2*(count-1)
        w = v[start:start + 2 * count]
        w = w.reshape(count, 2, v.shape[1], v.shape[2])
        return w[:, 0]

    def lrelu(v):
        return jnp.where(v > 0, v, LEAK * v)

    # -------- Skip branch: 3x3 / stride-2 conv on x, bias, LeakyReLU ---------
    skip_acc = jnp.zeros((TRo * WoP, Cout), jnp.float32)
    for ky in range(3):
        xe_k = rows_stride2(xe, 1 + ky, TRo)        # (TRo, Wph, Cin)
        xo_k = rows_stride2(xo, 1 + ky, TRo)
        taps = ((xo_k, 0), (xe_k, 1), (xo_k, 1))    # kx = 0, 1, 2
        for kx, (src, c0) in enumerate(taps):
            blk = flat(src[:, c0:c0 + WoP, :])      # (TRo*WoP, Cin) bf16
            skip_acc = skip_acc + jnp.dot(blk, ws_ref[3 * ky + kx],
                                          preferred_element_type=jnp.float32)
    skip_val = lrelu(skip_acc + bs_ref[...])        # (TRo*WoP, Cout) f32

    # -------- Conv1: 3x3 / stride-1 conv on x -> h (even/odd column phases) --
    he_acc = jnp.zeros((HR * Wh, Cmid), jnp.float32)   # h columns 2j
    ho_acc = jnp.zeros((HR * Wh, Cmid), jnp.float32)   # h columns 2j - 1
    for ky in range(3):
        xe_k = xe[ky:ky + HR]                       # (HR, Wph, Cin)
        xo_k = xo[ky:ky + HR]
        he_taps = ((xo_k, 0), (xe_k, 1), (xo_k, 1))  # kx = 0, 1, 2
        ho_taps = ((xe_k, 0), (xo_k, 0), (xe_k, 1))
        for kx in range(3):
            w_tap = w1_ref[3 * ky + kx]
            src, c0 = he_taps[kx]
            he_acc = he_acc + jnp.dot(flat(src[:, c0:c0 + Wh, :]), w_tap,
                                      preferred_element_type=jnp.float32)
            src, c0 = ho_taps[kx]
            ho_acc = ho_acc + jnp.dot(flat(src[:, c0:c0 + Wh, :]), w_tap,
                                      preferred_element_type=jnp.float32)

    b1 = b1_ref[...]
    h_ev = lrelu(he_acc + b1).reshape(HR, Wh, Cmid)
    h_od = lrelu(ho_acc + b1).reshape(HR, Wh, Cmid)

    # Conv2 zero-padding of h: h row -1 (first tile only) and h col -1 must be 0.
    k_idx = jax.lax.broadcasted_iota(jnp.int32, (HR, Wh, Cmid), 0)
    j_idx = jax.lax.broadcasted_iota(jnp.int32, (HR, Wh, Cmid), 1)
    row_ok = (k_idx + 2 * TRo * t) >= 1
    h_ev = jnp.where(row_ok, h_ev, 0.0).astype(jnp.bfloat16)
    h_od = jnp.where(row_ok & (j_idx >= 1), h_od, 0.0).astype(jnp.bfloat16)

    # -------- Conv2: 3x3 / stride-2 conv on h, bias, LeakyReLU, + skip -------
    out_acc = jnp.zeros((TRo * WoP, Cout), jnp.float32)
    for ky in range(3):
        he_k = rows_stride2(h_ev, ky, TRo)          # (TRo, Wh, Cmid)
        ho_k = rows_stride2(h_od, ky, TRo)
        taps = ((ho_k, 0), (he_k, 0), (ho_k, 1))    # kx = 0, 1, 2
        for kx, (src, c0) in enumerate(taps):
            blk = flat(src[:, c0:c0 + WoP, :])      # (TRo*WoP, Cmid) bf16
            out_acc = out_acc + jnp.dot(blk, w2_ref[3 * ky + kx],
                                        preferred_element_type=jnp.float32)

    out_val = lrelu(out_acc + b2_ref[...]) + skip_val   # (TRo*WoP, Cout) f32
    out3 = out_val.reshape(TRo, WoP, Cout)[:, :Wo, :]
    o_ref[0] = out3.astype(o_ref.dtype)


# ------------------------------ JAX wrapper ----------------------------------

def _choose_row_tile(Ho, Wph, Wh, WoP, Wo, Cin, Cmid, Cout,
                     budget_bytes=6 * 1024 * 1024):
    """Largest divisor of Ho whose working set fits a conservative VMEM budget."""
    best = 1
    for d in range(1, Ho + 1):
        if Ho % d:
            continue
        rx, hr = 2 * d + 4, 2 * d + 2
        est = (2 * rx * Wph * Cin * 2 * 2            # x slabs (main + halo, dbl buf)
               + 2 * hr * Wh * max(Cin, Cmid) * 4 * 2    # h phases / conv1 operands
               + 3 * d * WoP * Cout * 4 * 2              # accumulators + skip
               + d * Wo * Cout * 4 * 2)                  # output block
        if est <= budget_bytes:
            best = d
    return best


def block_d_forward(x_nchw, params):
    """BlockD forward.  Input/output NCHW, float32 (bf16 MXU internally)."""
    x = jnp.transpose(x_nchw, (0, 2, 3, 1)).astype(jnp.float32)     # -> NHWC
    N, H, W, Cin = x.shape
    assert H % 2 == 0 and W % 2 == 0, "even spatial dims required"
    Ho, Wo = H // 2, W // 2
    Cmid = params["conv1_b"].shape[0]
    Cout = params["conv2_b"].shape[0]

    WoP = _round_up(Wo, 8)    # stride-2 compute width (multiple of 8)
    Wh = WoP + 8              # h phase compute width  (multiple of 8, >= WoP + 1)
    Wph = Wh + 8              # even/odd column-phase array width

    TRo = _choose_row_tile(Ho, Wph, Wh, WoP, Wo, Cin, Cmid, Cout)
    T = Ho // TRo

    # Spatial zero padding: 2 rows top/bottom; 2 cols left, right up to 2*Wph.
    xp = jnp.pad(x, ((0, 0), (2, 2), (2, 2 * Wph - (W + 2)), (0, 0)))
    xp = xp.astype(jnp.bfloat16)
    x_ev = xp[:, :, 0::2, :]          # (N, H+4, Wph, Cin) : xp columns 2j
    x_od = xp[:, :, 1::2, :]          # (N, H+4, Wph, Cin) : xp columns 2j+1

    # 4-row halo below each main row block (keeps BlockSpecs non-overlapping).
    def build_halo(a):
        parts = [a[:, 2 * TRo * (t + 1): 2 * TRo * (t + 1) + _HALO] for t in range(T)]
        return jnp.stack(parts, axis=1)             # (N, T, 4, Wph, Cin)
    x_ev_h = build_halo(x_ev)
    x_od_h = build_halo(x_od)

    # Weights: OIHW -> (tap = 3*ky + kx, Cin, Cout) bf16; biases -> (1, C) f32.
    def wmat(w):
        co, ci = w.shape[0], w.shape[1]
        return jnp.transpose(w, (2, 3, 1, 0)).reshape(9, ci, co).astype(jnp.bfloat16)
    w1 = wmat(params["conv1_w"]); b1 = params["conv1_b"].reshape(1, -1).astype(jnp.float32)
    w2 = wmat(params["conv2_w"]); b2 = params["conv2_b"].reshape(1, -1).astype(jnp.float32)
    ws = wmat(params["skip_w"]);  bs = params["skip_b"].reshape(1, -1).astype(jnp.float32)

    kernel = functools.partial(_block_d_kernel, TRo, Wo, WoP, Wh, Cin, Cmid, Cout)

    in_specs = [
        pl.BlockSpec((1, 2 * TRo, Wph, Cin), lambda b, t: (b, t, 0, 0)),
        pl.BlockSpec((1, 1, _HALO, Wph, Cin), lambda b, t: (b, t, 0, 0, 0)),
        pl.BlockSpec((1, 2 * TRo, Wph, Cin), lambda b, t: (b, t, 0, 0)),
        pl.BlockSpec((1, 1, _HALO, Wph, Cin), lambda b, t: (b, t, 0, 0, 0)),
        pl.BlockSpec((9, Cin, Cmid), lambda b, t: (0, 0, 0)),
        pl.BlockSpec((1, Cmid), lambda b, t: (0, 0)),
        pl.BlockSpec((9, Cmid, Cout), lambda b, t: (0, 0, 0)),
        pl.BlockSpec((1, Cout), lambda b, t: (0, 0)),
        pl.BlockSpec((9, Cin, Cout), lambda b, t: (0, 0, 0)),
        pl.BlockSpec((1, Cout), lambda b, t: (0, 0)),
    ]
    out_spec = pl.BlockSpec((1, TRo, Wo, Cout), lambda b, t: (b, t, 0, 0))
    out_shape = jax.ShapeDtypeStruct((N, Ho, Wo, Cout), jnp.float32)

    flops = 2 * 9 * N * (H * W * Cin * Cmid            # conv1
                         + Ho * Wo * Cmid * Cout       # conv2
                         + Ho * Wo * Cin * Cout)       # skip
    bytes_accessed = (x_ev.size * 2 + x_od.size * 2
                      + x_ev_h.size * 2 + x_od_h.size * 2
                      + (w1.size + w2.size + ws.size) * 2
                      + N * Ho * Wo * Cout * 4)
    cost = pl.CostEstimate(flops=int(flops), transcendentals=0,
                           bytes_accessed=int(bytes_accessed))

    out = pl.pallas_call(
        kernel,
        grid=(N, T),
        in_specs=in_specs,
        out_specs=out_spec,
        out_shape=out_shape,
        compiler_params=pltpu.CompilerParams(
            dimension_semantics=("parallel", "parallel"),
            vmem_limit_bytes=48 * 1024 * 1024),
        cost_estimate=cost,
    )(x_ev, x_ev_h, x_od, x_od_h, w1, b1, w2, b2, ws, bs)

    return jnp.transpose(out, (0, 3, 1, 2))             # -> NCHW


# --------------------------- deterministic init -------------------------------

def init_params(key, in_channels, out_channels):
    def xavier_normal(k, cout, cin):
        fan_in = cin * 9
        fan_out = cout * 9
        std = (2.0 / (fan_in + fan_out)) ** 0.5
        return std * jax.random.normal(k, (cout, cin, 3, 3), jnp.float32)

    k1, k2, k3 = jax.random.split(key, 3)
    return {
        "conv1_w": xavier_normal(k1, out_channels, in_channels),
        "conv1_b": jnp.zeros((out_channels,), jnp.float32),
        "conv2_w": xavier_normal(k2, out_channels, out_channels),
        "conv2_b": jnp.zeros((out_channels,), jnp.float32),
        "skip_w": xavier_normal(k3, out_channels, in_channels),
        "skip_b": jnp.zeros((out_channels,), jnp.float32),
    }


# ------------------------------ f32 reference ---------------------------------

def _ref_conv(x_nchw, w, b, stride):
    out = jax.lax.conv_general_dilated(
        x_nchw, w, window_strides=(stride, stride),
        padding=((1, 1), (1, 1)),
        dimension_numbers=("NCHW", "OIHW", "NCHW"))
    return out + b.reshape(1, -1, 1, 1)


def _ref_forward(x, p):
    lrelu = lambda t: jnp.where(t > 0, t, LEAK * t)
    y = lrelu(_ref_conv(x, p["skip_w"], p["skip_b"], 2))
    h = lrelu(_ref_conv(x, p["conv1_w"], p["conv1_b"], 1))
    o = lrelu(_ref_conv(h, p["conv2_w"], p["conv2_b"], 2))
    return o + y


# --------------------------------- main ----------------------------------------

if __name__ == "__main__":
    key = jax.random.PRNGKey(0)
    kx, kp = jax.random.split(key)

    N, Cin, Cout, H, W = 2, 4, 8, 16, 16          # res_in=16, res_out=8
    x = jax.random.normal(kx, (N, Cin, H, W), jnp.float32)
    params = init_params(kp, Cin, Cout)

    out = jax.jit(block_d_forward)(x, params)
    out = jax.block_until_ready(out)

    ref = _ref_forward(x, params)
    assert out.shape == (N, Cout, H // 2, W // 2), out.shape
    # bf16 MXU inputs -> tolerance loosened vs. the pure-f32 reference.
    err = float(jnp.max(jnp.abs(out - ref)))
    assert jnp.allclose(out, ref, atol=5e-2, rtol=5e-2), err

    print("KERNEL_OK")
</pallas_src>

<mosaic_0001>
module attributes {stable_mosaic.version = 11 : i64} {
  func.func @_block_d_kernel(%arg0: i32, %arg1: i32, %arg2: memref<1x16x24x4xbf16, #tpu.memory_space<vmem>>, %arg3: memref<1x1x4x24x4xbf16, #tpu.memory_space<vmem>>, %arg4: memref<1x16x24x4xbf16, #tpu.memory_space<vmem>>, %arg5: memref<1x1x4x24x4xbf16, #tpu.memory_space<vmem>>, %arg6: memref<9x4x8xbf16, #tpu.memory_space<vmem>>, %arg7: memref<1x8xf32, #tpu.memory_space<vmem>>, %arg8: memref<9x8x8xbf16, #tpu.memory_space<vmem>>, %arg9: memref<1x8xf32, #tpu.memory_space<vmem>>, %arg10: memref<9x4x8xbf16, #tpu.memory_space<vmem>>, %arg11: memref<1x8xf32, #tpu.memory_space<vmem>>, %arg12: memref<1x8x8x8xf32, #tpu.memory_space<vmem>>) attributes {dimension_semantics = [#tpu.dimension_semantics<parallel>, #tpu.dimension_semantics<parallel>], iteration_bounds = array<i64: 2, 1>, scalar_prefetch = 0 : i64, scratch_operands = 0 : i64, tpu.core_type = #tpu.core_type<tc>, window_params = [{transform_indices = @transform_0, window_bounds = array<i64: 1, 16, 24, 4>}, {transform_indices = @transform_1, window_bounds = array<i64: 1, 1, 4, 24, 4>}, {transform_indices = @transform_2, window_bounds = array<i64: 1, 16, 24, 4>}, {transform_indices = @transform_3, window_bounds = array<i64: 1, 1, 4, 24, 4>}, {pipeline_mode = #tpu.pipeline_mode<synchronous>, transform_indices = @transform_4, window_bounds = array<i64: 9, 4, 8>}, {pipeline_mode = #tpu.pipeline_mode<synchronous>, transform_indices = @transform_5, window_bounds = array<i64: 1, 8>}, {pipeline_mode = #tpu.pipeline_mode<synchronous>, transform_indices = @transform_6, window_bounds = array<i64: 9, 8, 8>}, {pipeline_mode = #tpu.pipeline_mode<synchronous>, transform_indices = @transform_7, window_bounds = array<i64: 1, 8>}, {pipeline_mode = #tpu.pipeline_mode<synchronous>, transform_indices = @transform_8, window_bounds = array<i64: 9, 4, 8>}, {pipeline_mode = #tpu.pipeline_mode<synchronous>, transform_indices = @transform_9, window_bounds = array<i64: 1, 8>}, {transform_indices = @transform_10, window_bounds = array<i64: 1, 8, 8, 8>}]} {
    %c0 = arith.constant 0 : index
    %c0_0 = arith.constant 0 : index
    %c0_1 = arith.constant 0 : index
    %c0_2 = arith.constant 0 : index
    %0 = vector.load %arg2[%c0, %c0_0, %c0_1, %c0_2] : memref<1x16x24x4xbf16, #tpu.memory_space<vmem>>, vector<1x16x24x4xbf16>
    %1 = vector.shape_cast %0 : vector<1x16x24x4xbf16> to vector<16x24x4xbf16>
    %c0_3 = arith.constant 0 : index
    %c0_4 = arith.constant 0 : index
    %c0_5 = arith.constant 0 : index
    %c0_6 = arith.constant 0 : index
    %c0_7 = arith.constant 0 : index
    %2 = vector.load %arg3[%c0_3, %c0_4, %c0_5, %c0_6, %c0_7] : memref<1x1x4x24x4xbf16, #tpu.memory_space<vmem>>, vector<1x1x4x24x4xbf16>
    %3 = vector.shape_cast %2 : vector<1x1x4x24x4xbf16> to vector<4x24x4xbf16>
    %4 = tpu.concatenate %1, %3 in 0 : vector<16x24x4xbf16>, vector<4x24x4xbf16> -> vector<20x24x4xbf16>
    %c0_8 = arith.constant 0 : index
    %c0_9 = arith.constant 0 : index
    %c0_10 = arith.constant 0 : index
    %c0_11 = arith.constant 0 : index
    %5 = vector.load %arg4[%c0_8, %c0_9, %c0_10, %c0_11] : memref<1x16x24x4xbf16, #tpu.memory_space<vmem>>, vector<1x16x24x4xbf16>
    %6 = vector.shape_cast %5 : vector<1x16x24x4xbf16> to vector<16x24x4xbf16>
    %c0_12 = arith.constant 0 : index
    %c0_13 = arith.constant 0 : index
    %c0_14 = arith.constant 0 : index
    %c0_15 = arith.constant 0 : index
    %c0_16 = arith.constant 0 : index
    %7 = vector.load %arg5[%c0_12, %c0_13, %c0_14, %c0_15, %c0_16] : memref<1x1x4x24x4xbf16, #tpu.memory_space<vmem>>, vector<1x1x4x24x4xbf16>
    %8 = vector.shape_cast %7 : vector<1x1x4x24x4xbf16> to vector<4x24x4xbf16>
    %9 = tpu.concatenate %6, %8 in 0 : vector<16x24x4xbf16>, vector<4x24x4xbf16> -> vector<20x24x4xbf16>
    %cst = arith.constant 0.000000e+00 : f32
    %10 = vector.broadcast %cst : f32 to vector<64x8xf32>
    %11 = vector.extract_strided_slice %4 {offsets = [1, 0, 0], sizes = [16, 24, 4], strides = [1, 1, 1]} : vector<20x24x4xbf16> to vector<16x24x4xbf16>
    %12 = vector.shape_cast %11 : vector<16x24x4xbf16> to vector<8x2x24x4xbf16>
    %13 = vector.extract_strided_slice %12 {offsets = [0, 0, 0, 0], sizes = [8, 1, 24, 4], strides = [1, 1, 1, 1]} : vector<8x2x24x4xbf16> to vector<8x1x24x4xbf16>
    %14 = vector.shape_cast %13 : vector<8x1x24x4xbf16> to vector<8x24x4xbf16>
    %15 = vector.extract_strided_slice %9 {offsets = [1, 0, 0], sizes = [16, 24, 4], strides = [1, 1, 1]} : vector<20x24x4xbf16> to vector<16x24x4xbf16>
    %16 = vector.shape_cast %15 : vector<16x24x4xbf16> to vector<8x2x24x4xbf16>
    %17 = vector.extract_strided_slice %16 {offsets = [0, 0, 0, 0], sizes = [8, 1, 24, 4], strides = [1, 1, 1, 1]} : vector<8x2x24x4xbf16> to vector<8x1x24x4xbf16>
    %18 = vector.shape_cast %17 : vector<8x1x24x4xbf16> to vector<8x24x4xbf16>
    %19 = vector.extract_strided_slice %18 {offsets = [0, 0, 0], sizes = [8, 8, 4], strides = [1, 1, 1]} : vector<8x24x4xbf16> to vector<8x8x4xbf16>
    %20 = vector.shape_cast %19 : vector<8x8x4xbf16> to vector<64x4xbf16>
    %c0_17 = arith.constant 0 : index
    %c0_18 = arith.constant 0 : index
    %c0_19 = arith.constant 0 : index
    %21 = vector.load %arg10[%c0_17, %c0_18, %c0_19] : memref<9x4x8xbf16, #tpu.memory_space<vmem>>, vector<1x4x8xbf16>
    %22 = vector.shape_cast %21 : vector<1x4x8xbf16> to vector<4x8xbf16>
    %cst_20 = arith.constant dense<0.000000e+00> : vector<64x8xf32>
    %23 = tpu.matmul %20, %22, %cst_20 {dimension_numbers = #tpu.dot_dimension_numbers<[1], [0], [0], [1], [0, 0, 1, 1], [], []>} : vector<64x4xbf16>, vector<4x8xbf16>, vector<64x8xf32> -> vector<64x8xf32>
    %24 = arith.addf %10, %23 : vector<64x8xf32>
    %25 = vector.extract_strided_slice %14 {offsets = [0, 1, 0], sizes = [8, 8, 4], strides = [1, 1, 1]} : vector<8x24x4xbf16> to vector<8x8x4xbf16>
    %26 = vector.shape_cast %25 : vector<8x8x4xbf16> to vector<64x4xbf16>
    %c1 = arith.constant 1 : index
    %c0_21 = arith.constant 0 : index
    %c0_22 = arith.constant 0 : index
    %27 = vector.load %arg10[%c1, %c0_21, %c0_22] : memref<9x4x8xbf16, #tpu.memory_space<vmem>>, vector<1x4x8xbf16>
    %28 = vector.shape_cast %27 : vector<1x4x8xbf16> to vector<4x8xbf16>
    %cst_23 = arith.constant dense<0.000000e+00> : vector<64x8xf32>
    %29 = tpu.matmul %26, %28, %cst_23 {dimension_numbers = #tpu.dot_dimension_numbers<[1], [0], [0], [1], [0, 0, 1, 1], [], []>} : vector<64x4xbf16>, vector<4x8xbf16>, vector<64x8xf32> -> vector<64x8xf32>
    %30 = arith.addf %24, %29 : vector<64x8xf32>
    %31 = vector.extract_strided_slice %18 {offsets = [0, 1, 0], sizes = [8, 8, 4], strides = [1, 1, 1]} : vector<8x24x4xbf16> to vector<8x8x4xbf16>
    %32 = vector.shape_cast %31 : vector<8x8x4xbf16> to vector<64x4xbf16>
    %c2 = arith.constant 2 : index
    %c0_24 = arith.constant 0 : index
    %c0_25 = arith.constant 0 : index
    %33 = vector.load %arg10[%c2, %c0_24, %c0_25] : memref<9x4x8xbf16, #tpu.memory_space<vmem>>, vector<1x4x8xbf16>
    %34 = vector.shape_cast %33 : vector<1x4x8xbf16> to vector<4x8xbf16>
    %cst_26 = arith.constant dense<0.000000e+00> : vector<64x8xf32>
    %35 = tpu.matmul %32, %34, %cst_26 {dimension_numbers = #tpu.dot_dimension_numbers<[1], [0], [0], [1], [0, 0, 1, 1], [], []>} : vector<64x4xbf16>, vector<4x8xbf16>, vector<64x8xf32> -> vector<64x8xf32>
    %36 = arith.addf %30, %35 : vector<64x8xf32>
    %37 = vector.extract_strided_slice %4 {offsets = [2, 0, 0], sizes = [16, 24, 4], strides = [1, 1, 1]} : vector<20x24x4xbf16> to vector<16x24x4xbf16>
    %38 = vector.shape_cast %37 : vector<16x24x4xbf16> to vector<8x2x24x4xbf16>
    %39 = vector.extract_strided_slice %38 {offsets = [0, 0, 0, 0], sizes = [8, 1, 24, 4], strides = [1, 1, 1, 1]} : vector<8x2x24x4xbf16> to vector<8x1x24x4xbf16>
    %40 = vector.shape_cast %39 : vector<8x1x24x4xbf16> to vector<8x24x4xbf16>
    %41 = vector.extract_strided_slice %9 {offsets = [2, 0, 0], sizes = [16, 24, 4], strides = [1, 1, 1]} : vector<20x24x4xbf16> to vector<16x24x4xbf16>
    %42 = vector.shape_cast %41 : vector<16x24x4xbf16> to vector<8x2x24x4xbf16>
    %43 = vector.extract_strided_slice %42 {offsets = [0, 0, 0, 0], sizes = [8, 1, 24, 4], strides = [1, 1, 1, 1]} : vector<8x2x24x4xbf16> to vector<8x1x24x4xbf16>
    %44 = vector.shape_cast %43 : vector<8x1x24x4xbf16> to vector<8x24x4xbf16>
    %45 = vector.extract_strided_slice %44 {offsets = [0, 0, 0], sizes = [8, 8, 4], strides = [1, 1, 1]} : vector<8x24x4xbf16> to vector<8x8x4xbf16>
    %46 = vector.shape_cast %45 : vector<8x8x4xbf16> to vector<64x4xbf16>
    %c3 = arith.constant 3 : index
    %c0_27 = arith.constant 0 : index
    %c0_28 = arith.constant 0 : index
    %47 = vector.load %arg10[%c3, %c0_27, %c0_28] : memref<9x4x8xbf16, #tpu.memory_space<vmem>>, vector<1x4x8xbf16>
    %48 = vector.shape_cast %47 : vector<1x4x8xbf16> to vector<4x8xbf16>
    %cst_29 = arith.constant dense<0.000000e+00> : vector<64x8xf32>
    %49 = tpu.matmul %46, %48, %cst_29 {dimension_numbers = #tpu.dot_dimension_numbers<[1], [0], [0], [1], [0, 0, 1, 1], [], []>} : vector<64x4xbf16>, vector<4x8xbf16>, vector<64x8xf32> -> vector<64x8xf32>
    %50 = arith.addf %36, %49 : vector<64x8xf32>
    %51 = vector.extract_strided_slice %40 {offsets = [0, 1, 0], sizes = [8, 8, 4], strides = [1, 1, 1]} : vector<8x24x4xbf16> to vector<8x8x4xbf16>
    %52 = vector.shape_cast %51 : vector<8x8x4xbf16> to vector<64x4xbf16>
    %c4 = arith.constant 4 : index
    %c0_30 = arith.constant 0 : index
    %c0_31 = arith.constant 0 : index
    %53 = vector.load %arg10[%c4, %c0_30, %c0_31] : memref<9x4x8xbf16, #tpu.memory_space<vmem>>, vector<1x4x8xbf16>
    %54 = vector.shape_cast %53 : vector<1x4x8xbf16> to vector<4x8xbf16>
    %cst_32 = arith.constant dense<0.000000e+00> : vector<64x8xf32>
    %55 = tpu.matmul %52, %54, %cst_32 {dimension_numbers = #tpu.dot_dimension_numbers<[1], [0], [0], [1], [0, 0, 1, 1], [], []>} : vector<64x4xbf16>, vector<4x8xbf16>, vector<64x8xf32> -> vector<64x8xf32>
    %56 = arith.addf %50, %55 : vector<64x8xf32>
    %57 = vector.extract_strided_slice %44 {offsets = [0, 1, 0], sizes = [8, 8, 4], strides = [1, 1, 1]} : vector<8x24x4xbf16> to vector<8x8x4xbf16>
    %58 = vector.shape_cast %57 : vector<8x8x4xbf16> to vector<64x4xbf16>
    %c5 = arith.constant 5 : index
    %c0_33 = arith.constant 0 : index
    %c0_34 = arith.constant 0 : index
    %59 = vector.load %arg10[%c5, %c0_33, %c0_34] : memref<9x4x8xbf16, #tpu.memory_space<vmem>>, vector<1x4x8xbf16>
    %60 = vector.shape_cast %59 : vector<1x4x8xbf16> to vector<4x8xbf16>
    %cst_35 = arith.constant dense<0.000000e+00> : vector<64x8xf32>
    %61 = tpu.matmul %58, %60, %cst_35 {dimension_numbers = #tpu.dot_dimension_numbers<[1], [0], [0], [1], [0, 0, 1, 1], [], []>} : vector<64x4xbf16>, vector<4x8xbf16>, vector<64x8xf32> -> vector<64x8xf32>
    %62 = arith.addf %56, %61 : vector<64x8xf32>
    %63 = vector.extract_strided_slice %4 {offsets = [3, 0, 0], sizes = [16, 24, 4], strides = [1, 1, 1]} : vector<20x24x4xbf16> to vector<16x24x4xbf16>
    %64 = vector.shape_cast %63 : vector<16x24x4xbf16> to vector<8x2x24x4xbf16>
    %65 = vector.extract_strided_slice %64 {offsets = [0, 0, 0, 0], sizes = [8, 1, 24, 4], strides = [1, 1, 1, 1]} : vector<8x2x24x4xbf16> to vector<8x1x24x4xbf16>
    %66 = vector.shape_cast %65 : vector<8x1x24x4xbf16> to vector<8x24x4xbf16>
    %67 = vector.extract_strided_slice %9 {offsets = [3, 0, 0], sizes = [16, 24, 4], strides = [1, 1, 1]} : vector<20x24x4xbf16> to vector<16x24x4xbf16>
    %68 = vector.shape_cast %67 : vector<16x24x4xbf16> to vector<8x2x24x4xbf16>
    %69 = vector.extract_strided_slice %68 {offsets = [0, 0, 0, 0], sizes = [8, 1, 24, 4], strides = [1, 1, 1, 1]} : vector<8x2x24x4xbf16> to vector<8x1x24x4xbf16>
    %70 = vector.shape_cast %69 : vector<8x1x24x4xbf16> to vector<8x24x4xbf16>
    %71 = vector.extract_strided_slice %70 {offsets = [0, 0, 0], sizes = [8, 8, 4], strides = [1, 1, 1]} : vector<8x24x4xbf16> to vector<8x8x4xbf16>
    %72 = vector.shape_cast %71 : vector<8x8x4xbf16> to vector<64x4xbf16>
    %c6 = arith.constant 6 : index
    %c0_36 = arith.constant 0 : index
    %c0_37 = arith.constant 0 : index
    %73 = vector.load %arg10[%c6, %c0_36, %c0_37] : memref<9x4x8xbf16, #tpu.memory_space<vmem>>, vector<1x4x8xbf16>
    %74 = vector.shape_cast %73 : vector<1x4x8xbf16> to vector<4x8xbf16>
    %cst_38 = arith.constant dense<0.000000e+00> : vector<64x8xf32>
    %75 = tpu.matmul %72, %74, %cst_38 {dimension_numbers = #tpu.dot_dimension_numbers<[1], [0], [0], [1], [0, 0, 1, 1], [], []>} : vector<64x4xbf16>, vector<4x8xbf16>, vector<64x8xf32> -> vector<64x8xf32>
    %76 = arith.addf %62, %75 : vector<64x8xf32>
    %77 = vector.extract_strided_slice %66 {offsets = [0, 1, 0], sizes = [8, 8, 4], strides = [1, 1, 1]} : vector<8x24x4xbf16> to vector<8x8x4xbf16>
    %78 = vector.shape_cast %77 : vector<8x8x4xbf16> to vector<64x4xbf16>
    %c7 = arith.constant 7 : index
    %c0_39 = arith.constant 0 : index
    %c0_40 = arith.constant 0 : index
    %79 = vector.load %arg10[%c7, %c0_39, %c0_40] : memref<9x4x8xbf16, #tpu.memory_space<vmem>>, vector<1x4x8xbf16>
    %80 = vector.shape_cast %79 : vector<1x4x8xbf16> to vector<4x8xbf16>
    %cst_41 = arith.constant dense<0.000000e+00> : vector<64x8xf32>
    %81 = tpu.matmul %78, %80, %cst_41 {dimension_numbers = #tpu.dot_dimension_numbers<[1], [0], [0], [1], [0, 0, 1, 1], [], []>} : vector<64x4xbf16>, vector<4x8xbf16>, vector<64x8xf32> -> vector<64x8xf32>
    %82 = arith.addf %76, %81 : vector<64x8xf32>
    %83 = vector.extract_strided_slice %70 {offsets = [0, 1, 0], sizes = [8, 8, 4], strides = [1, 1, 1]} : vector<8x24x4xbf16> to vector<8x8x4xbf16>
    %84 = vector.shape_cast %83 : vector<8x8x4xbf16> to vector<64x4xbf16>
    %c8 = arith.constant 8 : index
    %c0_42 = arith.constant 0 : index
    %c0_43 = arith.constant 0 : index
    %85 = vector.load %arg10[%c8, %c0_42, %c0_43] : memref<9x4x8xbf16, #tpu.memory_space<vmem>>, vector<1x4x8xbf16>
    %86 = vector.shape_cast %85 : vector<1x4x8xbf16> to vector<4x8xbf16>
    %cst_44 = arith.constant dense<0.000000e+00> : vector<64x8xf32>
    %87 = tpu.matmul %84, %86, %cst_44 {dimension_numbers = #tpu.dot_dimension_numbers<[1], [0], [0], [1], [0, 0, 1, 1], [], []>} : vector<64x4xbf16>, vector<4x8xbf16>, vector<64x8xf32> -> vector<64x8xf32>
    %88 = arith.addf %82, %87 : vector<64x8xf32>
    %c0_45 = arith.constant 0 : index
    %c0_46 = arith.constant 0 : index
    %89 = vector.load %arg11[%c0_45, %c0_46] : memref<1x8xf32, #tpu.memory_space<vmem>>, vector<1x8xf32>
    %90 = vector.broadcast %89 : vector<1x8xf32> to vector<64x8xf32>
    %91 = arith.addf %88, %90 : vector<64x8xf32>
    %cst_47 = arith.constant 0.000000e+00 : f32
    %92 = vector.broadcast %cst_47 : f32 to vector<64x8xf32>
    %93 = arith.cmpf ogt, %91, %92 : vector<64x8xf32>
    %cst_48 = arith.constant 2.000000e-01 : f32
    %94 = vector.broadcast %cst_48 : f32 to vector<64x8xf32>
    %95 = arith.mulf %94, %91 : vector<64x8xf32>
    %96 = arith.select %93, %91, %95 : vector<64x8xi1>, vector<64x8xf32>
    %cst_49 = arith.constant 0.000000e+00 : f32
    %97 = vector.broadcast %cst_49 : f32 to vector<288x8xf32>
    %cst_50 = arith.constant 0.000000e+00 : f32
    %98 = vector.broadcast %cst_50 : f32 to vector<288x8xf32>
    %99 = vector.extract_strided_slice %4 {offsets = [0, 0, 0], sizes = [18, 24, 4], strides = [1, 1, 1]} : vector<20x24x4xbf16> to vector<18x24x4xbf16>
    %100 = vector.extract_strided_slice %9 {offsets = [0, 0, 0], sizes = [18, 24, 4], strides = [1, 1, 1]} : vector<20x24x4xbf16> to vector<18x24x4xbf16>
    %c0_51 = arith.constant 0 : index
    %c0_52 = arith.constant 0 : index
    %c0_53 = arith.constant 0 : index
    %101 = vector.load %arg6[%c0_51, %c0_52, %c0_53] : memref<9x4x8xbf16, #tpu.memory_space<vmem>>, vector<1x4x8xbf16>
    %102 = vector.shape_cast %101 : vector<1x4x8xbf16> to vector<4x8xbf16>
    %103 = vector.extract_strided_slice %100 {offsets = [0, 0, 0], sizes = [18, 16, 4], strides = [1, 1, 1]} : vector<18x24x4xbf16> to vector<18x16x4xbf16>
    %104 = vector.shape_cast %103 : vector<18x16x4xbf16> to vector<288x4xbf16>
    %cst_54 = arith.constant dense<0.000000e+00> : vector<288x8xf32>
    %105 = tpu.matmul %104, %102, %cst_54 {dimension_numbers = #tpu.dot_dimension_numbers<[1], [0], [0], [1], [0, 0, 1, 1], [], []>} : vector<288x4xbf16>, vector<4x8xbf16>, vector<288x8xf32> -> vector<288x8xf32>
    %106 = arith.addf %97, %105 : vector<288x8xf32>
    %107 = vector.extract_strided_slice %99 {offsets = [0, 0, 0], sizes = [18, 16, 4], strides = [1, 1, 1]} : vector<18x24x4xbf16> to vector<18x16x4xbf16>
    %108 = vector.shape_cast %107 : vector<18x16x4xbf16> to vector<288x4xbf16>
    %cst_55 = arith.constant dense<0.000000e+00> : vector<288x8xf32>
    %109 = tpu.matmul %108, %102, %cst_55 {dimension_numbers = #tpu.dot_dimension_numbers<[1], [0], [0], [1], [0, 0, 1, 1], [], []>} : vector<288x4xbf16>, vector<4x8xbf16>, vector<288x8xf32> -> vector<288x8xf32>
    %110 = arith.addf %98, %109 : vector<288x8xf32>
    %c1_56 = arith.constant 1 : index
    %c0_57 = arith.constant 0 : index
    %c0_58 = arith.constant 0 : index
    %111 = vector.load %arg6[%c1_56, %c0_57, %c0_58] : memref<9x4x8xbf16, #tpu.memory_space<vmem>>, vector<1x4x8xbf16>
    %112 = vector.shape_cast %111 : vector<1x4x8xbf16> to vector<4x8xbf16>
    %113 = vector.extract_strided_slice %99 {offsets = [0, 1, 0], sizes = [18, 16, 4], strides = [1, 1, 1]} : vector<18x24x4xbf16> to vector<18x16x4xbf16>
    %114 = vector.shape_cast %113 : vector<18x16x4xbf16> to vector<288x4xbf16>
    %cst_59 = arith.constant dense<0.000000e+00> : vector<288x8xf32>
    %115 = tpu.matmul %114, %112, %cst_59 {dimension_numbers = #tpu.dot_dimension_numbers<[1], [0], [0], [1], [0, 0, 1, 1], [], []>} : vector<288x4xbf16>, vector<4x8xbf16>, vector<288x8xf32> -> vector<288x8xf32>
    %116 = arith.addf %106, %115 : vector<288x8xf32>
    %117 = vector.extract_strided_slice %100 {offsets = [0, 0, 0], sizes = [18, 16, 4], strides = [1, 1, 1]} : vector<18x24x4xbf16> to vector<18x16x4xbf16>
    %118 = vector.shape_cast %117 : vector<18x16x4xbf16> to vector<288x4xbf16>
    %cst_60 = arith.constant dense<0.000000e+00> : vector<288x8xf32>
    %119 = tpu.matmul %118, %112, %cst_60 {dimension_numbers = #tpu.dot_dimension_numbers<[1], [0], [0], [1], [0, 0, 1, 1], [], []>} : vector<288x4xbf16>, vector<4x8xbf16>, vector<288x8xf32> -> vector<288x8xf32>
    %120 = arith.addf %110, %119 : vector<288x8xf32>
    %c2_61 = arith.constant 2 : index
    %c0_62 = arith.constant 0 : index
    %c0_63 = arith.constant 0 : index
    %121 = vector.load %arg6[%c2_61, %c0_62, %c0_63] : memref<9x4x8xbf16, #tpu.memory_space<vmem>>, vector<1x4x8xbf16>
    %122 = vector.shape_cast %121 : vector<1x4x8xbf16> to vector<4x8xbf16>
    %123 = vector.extract_strided_slice %100 {offsets = [0, 1, 0], sizes = [18, 16, 4], strides = [1, 1, 1]} : vector<18x24x4xbf16> to vector<18x16x4xbf16>
    %124 = vector.shape_cast %123 : vector<18x16x4xbf16> to vector<288x4xbf16>
    %cst_64 = arith.constant dense<0.000000e+00> : vector<288x8xf32>
    %125 = tpu.matmul %124, %122, %cst_64 {dimension_numbers = #tpu.dot_dimension_numbers<[1], [0], [0], [1], [0, 0, 1, 1], [], []>} : vector<288x4xbf16>, vector<4x8xbf16>, vector<288x8xf32> -> vector<288x8xf32>
    %126 = arith.addf %116, %125 : vector<288x8xf32>
    %127 = vector.extract_strided_slice %99 {offsets = [0, 1, 0], sizes = [18, 16, 4], strides = [1, 1, 1]} : vector<18x24x4xbf16> to vector<18x16x4xbf16>
    %128 = vector.shape_cast %127 : vector<18x16x4xbf16> to vector<288x4xbf16>
    %cst_65 = arith.constant dense<0.000000e+00> : vector<288x8xf32>
    %129 = tpu.matmul %128, %122, %cst_65 {dimension_numbers = #tpu.dot_dimension_numbers<[1], [0], [0], [1], [0, 0, 1, 1], [], []>} : vector<288x4xbf16>, vector<4x8xbf16>, vector<288x8xf32> -> vector<288x8xf32>
    %130 = arith.addf %120, %129 : vector<288x8xf32>
    %131 = vector.extract_strided_slice %4 {offsets = [1, 0, 0], sizes = [18, 24, 4], strides = [1, 1, 1]} : vector<20x24x4xbf16> to vector<18x24x4xbf16>
    %132 = vector.extract_strided_slice %9 {offsets = [1, 0, 0], sizes = [18, 24, 4], strides = [1, 1, 1]} : vector<20x24x4xbf16> to vector<18x24x4xbf16>
    %c3_66 = arith.constant 3 : index
    %c0_67 = arith.constant 0 : index
    %c0_68 = arith.constant 0 : index
    %133 = vector.load %arg6[%c3_66, %c0_67, %c0_68] : memref<9x4x8xbf16, #tpu.memory_space<vmem>>, vector<1x4x8xbf16>
    %134 = vector.shape_cast %133 : vector<1x4x8xbf16> to vector<4x8xbf16>
    %135 = vector.extract_strided_slice %132 {offsets = [0, 0, 0], sizes = [18, 16, 4], strides = [1, 1, 1]} : vector<18x24x4xbf16> to vector<18x16x4xbf16>
    %136 = vector.shape_cast %135 : vector<18x16x4xbf16> to vector<288x4xbf16>
    %cst_69 = arith.constant dense<0.000000e+00> : vector<288x8xf32>
    %137 = tpu.matmul %136, %134, %cst_69 {dimension_numbers = #tpu.dot_dimension_numbers<[1], [0], [0], [1], [0, 0, 1, 1], [], []>} : vector<288x4xbf16>, vector<4x8xbf16>, vector<288x8xf32> -> vector<288x8xf32>
    %138 = arith.addf %126, %137 : vector<288x8xf32>
    %139 = vector.extract_strided_slice %131 {offsets = [0, 0, 0], sizes = [18, 16, 4], strides = [1, 1, 1]} : vector<18x24x4xbf16> to vector<18x16x4xbf16>
    %140 = vector.shape_cast %139 : vector<18x16x4xbf16> to vector<288x4xbf16>
    %cst_70 = arith.constant dense<0.000000e+00> : vector<288x8xf32>
    %141 = tpu.matmul %140, %134, %cst_70 {dimension_numbers = #tpu.dot_dimension_numbers<[1], [0], [0], [1], [0, 0, 1, 1], [], []>} : vector<288x4xbf16>, vector<4x8xbf16>, vector<288x8xf32> -> vector<288x8xf32>
    %142 = arith.addf %130, %141 : vector<288x8xf32>
    %c4_71 = arith.constant 4 : index
    %c0_72 = arith.constant 0 : index
    %c0_73 = arith.constant 0 : index
    %143 = vector.load %arg6[%c4_71, %c0_72, %c0_73] : memref<9x4x8xbf16, #tpu.memory_space<vmem>>, vector<1x4x8xbf16>
    %144 = vector.shape_cast %143 : vector<1x4x8xbf16> to vector<4x8xbf16>
    %145 = vector.extract_strided_slice %131 {offsets = [0, 1, 0], sizes = [18, 16, 4], strides = [1, 1, 1]} : vector<18x24x4xbf16> to vector<18x16x4xbf16>
    %146 = vector.shape_cast %145 : vector<18x16x4xbf16> to vector<288x4xbf16>
    %cst_74 = arith.constant dense<0.000000e+00> : vector<288x8xf32>
    %147 = tpu.matmul %146, %144, %cst_74 {dimension_numbers = #tpu.dot_dimension_numbers<[1], [0], [0], [1], [0, 0, 1, 1], [], []>} : vector<288x4xbf16>, vector<4x8xbf16>, vector<288x8xf32> -> vector<288x8xf32>
    %148 = arith.addf %138, %147 : vector<288x8xf32>
    %149 = vector.extract_strided_slice %132 {offsets = [0, 0, 0], sizes = [18, 16, 4], strides = [1, 1, 1]} : vector<18x24x4xbf16> to vector<18x16x4xbf16>
    %150 = vector.shape_cast %149 : vector<18x16x4xbf16> to vector<288x4xbf16>
    %cst_75 = arith.constant dense<0.000000e+00> : vector<288x8xf32>
    %151 = tpu.matmul %150, %144, %cst_75 {dimension_numbers = #tpu.dot_dimension_numbers<[1], [0], [0], [1], [0, 0, 1, 1], [], []>} : vector<288x4xbf16>, vector<4x8xbf16>, vector<288x8xf32> -> vector<288x8xf32>
    %152 = arith.addf %142, %151 : vector<288x8xf32>
    %c5_76 = arith.constant 5 : index
    %c0_77 = arith.constant 0 : index
    %c0_78 = arith.constant 0 : index
    %153 = vector.load %arg6[%c5_76, %c0_77, %c0_78] : memref<9x4x8xbf16, #tpu.memory_space<vmem>>, vector<1x4x8xbf16>
    %154 = vector.shape_cast %153 : vector<1x4x8xbf16> to vector<4x8xbf16>
    %155 = vector.extract_strided_slice %132 {offsets = [0, 1, 0], sizes = [18, 16, 4], strides = [1, 1, 1]} : vector<18x24x4xbf16> to vector<18x16x4xbf16>
    %156 = vector.shape_cast %155 : vector<18x16x4xbf16> to vector<288x4xbf16>
    %cst_79 = arith.constant dense<0.000000e+00> : vector<288x8xf32>
    %157 = tpu.matmul %156, %154, %cst_79 {dimension_numbers = #tpu.dot_dimension_numbers<[1], [0], [0], [1], [0, 0, 1, 1], [], []>} : vector<288x4xbf16>, vector<4x8xbf16>, vector<288x8xf32> -> vector<288x8xf32>
    %158 = arith.addf %148, %157 : vector<288x8xf32>
    %159 = vector.extract_strided_slice %131 {offsets = [0, 1, 0], sizes = [18, 16, 4], strides = [1, 1, 1]} : vector<18x24x4xbf16> to vector<18x16x4xbf16>
    %160 = vector.shape_cast %159 : vector<18x16x4xbf16> to vector<288x4xbf16>
    %cst_80 = arith.constant dense<0.000000e+00> : vector<288x8xf32>
    %161 = tpu.matmul %160, %154, %cst_80 {dimension_numbers = #tpu.dot_dimension_numbers<[1], [0], [0], [1], [0, 0, 1, 1], [], []>} : vector<288x4xbf16>, vector<4x8xbf16>, vector<288x8xf32> -> vector<288x8xf32>
    %162 = arith.addf %152, %161 : vector<288x8xf32>
    %163 = vector.extract_strided_slice %4 {offsets = [2, 0, 0], sizes = [18, 24, 4], strides = [1, 1, 1]} : vector<20x24x4xbf16> to vector<18x24x4xbf16>
    %164 = vector.extract_strided_slice %9 {offsets = [2, 0, 0], sizes = [18, 24, 4], strides = [1, 1, 1]} : vector<20x24x4xbf16> to vector<18x24x4xbf16>
    %c6_81 = arith.constant 6 : index
    %c0_82 = arith.constant 0 : index
    %c0_83 = arith.constant 0 : index
    %165 = vector.load %arg6[%c6_81, %c0_82, %c0_83] : memref<9x4x8xbf16, #tpu.memory_space<vmem>>, vector<1x4x8xbf16>
    %166 = vector.shape_cast %165 : vector<1x4x8xbf16> to vector<4x8xbf16>
    %167 = vector.extract_strided_slice %164 {offsets = [0, 0, 0], sizes = [18, 16, 4], strides = [1, 1, 1]} : vector<18x24x4xbf16> to vector<18x16x4xbf16>
    %168 = vector.shape_cast %167 : vector<18x16x4xbf16> to vector<288x4xbf16>
    %cst_84 = arith.constant dense<0.000000e+00> : vector<288x8xf32>
    %169 = tpu.matmul %168, %166, %cst_84 {dimension_numbers = #tpu.dot_dimension_numbers<[1], [0], [0], [1], [0, 0, 1, 1], [], []>} : vector<288x4xbf16>, vector<4x8xbf16>, vector<288x8xf32> -> vector<288x8xf32>
    %170 = arith.addf %158, %169 : vector<288x8xf32>
    %171 = vector.extract_strided_slice %163 {offsets = [0, 0, 0], sizes = [18, 16, 4], strides = [1, 1, 1]} : vector<18x24x4xbf16> to vector<18x16x4xbf16>
    %172 = vector.shape_cast %171 : vector<18x16x4xbf16> to vector<288x4xbf16>
    %cst_85 = arith.constant dense<0.000000e+00> : vector<288x8xf32>
    %173 = tpu.matmul %172, %166, %cst_85 {dimension_numbers = #tpu.dot_dimension_numbers<[1], [0], [0], [1], [0, 0, 1, 1], [], []>} : vector<288x4xbf16>, vector<4x8xbf16>, vector<288x8xf32> -> vector<288x8xf32>
    %174 = arith.addf %162, %173 : vector<288x8xf32>
    %c7_86 = arith.constant 7 : index
    %c0_87 = arith.constant 0 : index
    %c0_88 = arith.constant 0 : index
    %175 = vector.load %arg6[%c7_86, %c0_87, %c0_88] : memref<9x4x8xbf16, #tpu.memory_space<vmem>>, vector<1x4x8xbf16>
    %176 = vector.shape_cast %175 : vector<1x4x8xbf16> to vector<4x8xbf16>
    %177 = vector.extract_strided_slice %163 {offsets = [0, 1, 0], sizes = [18, 16, 4], strides = [1, 1, 1]} : vector<18x24x4xbf16> to vector<18x16x4xbf16>
    %178 = vector.shape_cast %177 : vector<18x16x4xbf16> to vector<288x4xbf16>
    %cst_89 = arith.constant dense<0.000000e+00> : vector<288x8xf32>
    %179 = tpu.matmul %178, %176, %cst_89 {dimension_numbers = #tpu.dot_dimension_numbers<[1], [0], [0], [1], [0, 0, 1, 1], [], []>} : vector<288x4xbf16>, vector<4x8xbf16>, vector<288x8xf32> -> vector<288x8xf32>
    %180 = arith.addf %170, %179 : vector<288x8xf32>
    %181 = vector.extract_strided_slice %164 {offsets = [0, 0, 0], sizes = [18, 16, 4], strides = [1, 1, 1]} : vector<18x24x4xbf16> to vector<18x16x4xbf16>
    %182 = vector.shape_cast %181 : vector<18x16x4xbf16> to vector<288x4xbf16>
    %cst_90 = arith.constant dense<0.000000e+00> : vector<288x8xf32>
    %183 = tpu.matmul %182, %176, %cst_90 {dimension_numbers = #tpu.dot_dimension_numbers<[1], [0], [0], [1], [0, 0, 1, 1], [], []>} : vector<288x4xbf16>, vector<4x8xbf16>, vector<288x8xf32> -> vector<288x8xf32>
    %184 = arith.addf %174, %183 : vector<288x8xf32>
    %c8_91 = arith.constant 8 : index
    %c0_92 = arith.constant 0 : index
    %c0_93 = arith.constant 0 : index
    %185 = vector.load %arg6[%c8_91, %c0_92, %c0_93] : memref<9x4x8xbf16, #tpu.memory_space<vmem>>, vector<1x4x8xbf16>
    %186 = vector.shape_cast %185 : vector<1x4x8xbf16> to vector<4x8xbf16>
    %187 = vector.extract_strided_slice %164 {offsets = [0, 1, 0], sizes = [18, 16, 4], strides = [1, 1, 1]} : vector<18x24x4xbf16> to vector<18x16x4xbf16>
    %188 = vector.shape_cast %187 : vector<18x16x4xbf16> to vector<288x4xbf16>
    %cst_94 = arith.constant dense<0.000000e+00> : vector<288x8xf32>
    %189 = tpu.matmul %188, %186, %cst_94 {dimension_numbers = #tpu.dot_dimension_numbers<[1], [0], [0], [1], [0, 0, 1, 1], [], []>} : vector<288x4xbf16>, vector<4x8xbf16>, vector<288x8xf32> -> vector<288x8xf32>
    %190 = arith.addf %180, %189 : vector<288x8xf32>
    %191 = vector.extract_strided_slice %163 {offsets = [0, 1, 0], sizes = [18, 16, 4], strides = [1, 1, 1]} : vector<18x24x4xbf16> to vector<18x16x4xbf16>
    %192 = vector.shape_cast %191 : vector<18x16x4xbf16> to vector<288x4xbf16>
    %cst_95 = arith.constant dense<0.000000e+00> : vector<288x8xf32>
    %193 = tpu.matmul %192, %186, %cst_95 {dimension_numbers = #tpu.dot_dimension_numbers<[1], [0], [0], [1], [0, 0, 1, 1], [], []>} : vector<288x4xbf16>, vector<4x8xbf16>, vector<288x8xf32> -> vector<288x8xf32>
    %194 = arith.addf %184, %193 : vector<288x8xf32>
    %c0_96 = arith.constant 0 : index
    %c0_97 = arith.constant 0 : index
    %195 = vector.load %arg7[%c0_96, %c0_97] : memref<1x8xf32, #tpu.memory_space<vmem>>, vector<1x8xf32>
    %196 = vector.broadcast %195 : vector<1x8xf32> to vector<288x8xf32>
    %197 = arith.addf %190, %196 : vector<288x8xf32>
    %cst_98 = arith.constant 0.000000e+00 : f32
    %198 = vector.broadcast %cst_98 : f32 to vector<288x8xf32>
    %199 = arith.cmpf ogt, %197, %198 : vector<288x8xf32>
    %cst_99 = arith.constant 2.000000e-01 : f32
    %200 = vector.broadcast %cst_99 : f32 to vector<288x8xf32>
    %201 = arith.mulf %200, %197 : vector<288x8xf32>
    %202 = arith.select %199, %197, %201 : vector<288x8xi1>, vector<288x8xf32>
    %203 = vector.shape_cast %202 : vector<288x8xf32> to vector<18x16x8xf32>
    %204 = vector.broadcast %195 : vector<1x8xf32> to vector<288x8xf32>
    %205 = arith.addf %194, %204 : vector<288x8xf32>
    %cst_100 = arith.constant 0.000000e+00 : f32
    %206 = vector.broadcast %cst_100 : f32 to vector<288x8xf32>
    %207 = arith.cmpf ogt, %205, %206 : vector<288x8xf32>
    %cst_101 = arith.constant 2.000000e-01 : f32
    %208 = vector.broadcast %cst_101 : f32 to vector<288x8xf32>
    %209 = arith.mulf %208, %205 : vector<288x8xf32>
    %210 = arith.select %207, %205, %209 : vector<288x8xi1>, vector<288x8xf32>
    %211 = vector.shape_cast %210 : vector<288x8xf32> to vector<18x16x8xf32>
    %212 = tpu.iota {dimensions = array<i32: 0>} : vector<18x16x8xi32>
    %213 = tpu.iota {dimensions = array<i32: 1>} : vector<18x16x8xi32>
    %c16_i32 = arith.constant 16 : i32
    %214 = arith.muli %c16_i32, %arg1 : i32
    %215 = vector.broadcast %214 : i32 to vector<18x16x8xi32>
    %216 = arith.addi %212, %215 : vector<18x16x8xi32>
    %c1_i32 = arith.constant 1 : i32
    %217 = vector.broadcast %c1_i32 : i32 to vector<18x16x8xi32>
    %218 = arith.cmpi sge, %216, %217 : vector<18x16x8xi32>
    %cst_102 = arith.constant 0.000000e+00 : f32
    %219 = vector.broadcast %cst_102 : f32 to vector<18x16x8xf32>
    %220 = arith.select %218, %203, %219 : vector<18x16x8xi1>, vector<18x16x8xf32>
    %221 = arith.truncf %220 : vector<18x16x8xf32> to vector<18x16x8xbf16>
    %c1_i32_103 = arith.constant 1 : i32
    %222 = vector.broadcast %c1_i32_103 : i32 to vector<18x16x8xi32>
    %223 = arith.cmpi sge, %213, %222 : vector<18x16x8xi32>
    %224 = arith.andi %218, %223 : vector<18x16x8xi1>
    %cst_104 = arith.constant 0.000000e+00 : f32
    %225 = vector.broadcast %cst_104 : f32 to vector<18x16x8xf32>
    %226 = arith.select %224, %211, %225 : vector<18x16x8xi1>, vector<18x16x8xf32>
    %227 = arith.truncf %226 : vector<18x16x8xf32> to vector<18x16x8xbf16>
    %cst_105 = arith.constant 0.000000e+00 : f32
    %228 = vector.broadcast %cst_105 : f32 to vector<64x8xf32>
    %229 = vector.extract_strided_slice %221 {offsets = [0, 0, 0], sizes = [16, 16, 8], strides = [1, 1, 1]} : vector<18x16x8xbf16> to vector<16x16x8xbf16>
    %230 = vector.shape_cast %229 : vector<16x16x8xbf16> to vector<8x2x16x8xbf16>
    %231 = vector.extract_strided_slice %230 {offsets = [0, 0, 0, 0], sizes = [8, 1, 16, 8], strides = [1, 1, 1, 1]} : vector<8x2x16x8xbf16> to vector<8x1x16x8xbf16>
    %232 = vector.shape_cast %231 : vector<8x1x16x8xbf16> to vector<8x16x8xbf16>
    %233 = vector.extract_strided_slice %227 {offsets = [0, 0, 0], sizes = [16, 16, 8], strides = [1, 1, 1]} : vector<18x16x8xbf16> to vector<16x16x8xbf16>
    %234 = vector.shape_cast %233 : vector<16x16x8xbf16> to vector<8x2x16x8xbf16>
    %235 = vector.extract_strided_slice %234 {offsets = [0, 0, 0, 0], sizes = [8, 1, 16, 8], strides = [1, 1, 1, 1]} : vector<8x2x16x8xbf16> to vector<8x1x16x8xbf16>
    %236 = vector.shape_cast %235 : vector<8x1x16x8xbf16> to vector<8x16x8xbf16>
    %237 = vector.extract_strided_slice %236 {offsets = [0, 0, 0], sizes = [8, 8, 8], strides = [1, 1, 1]} : vector<8x16x8xbf16> to vector<8x8x8xbf16>
    %238 = vector.shape_cast %237 : vector<8x8x8xbf16> to vector<64x8xbf16>
    %c0_106 = arith.constant 0 : index
    %c0_107 = arith.constant 0 : index
    %c0_108 = arith.constant 0 : index
    %239 = vector.load %arg8[%c0_106, %c0_107, %c0_108] : memref<9x8x8xbf16, #tpu.memory_space<vmem>>, vector<1x8x8xbf16>
    %240 = vector.shape_cast %239 : vector<1x8x8xbf16> to vector<8x8xbf16>
    %cst_109 = arith.constant dense<0.000000e+00> : vector<64x8xf32>
    %241 = tpu.matmul %238, %240, %cst_109 {dimension_numbers = #tpu.dot_dimension_numbers<[1], [0], [0], [1], [0, 0, 1, 1], [], []>} : vector<64x8xbf16>, vector<8x8xbf16>, vector<64x8xf32> -> vector<64x8xf32>
    %242 = arith.addf %228, %241 : vector<64x8xf32>
    %243 = vector.extract_strided_slice %232 {offsets = [0, 0, 0], sizes = [8, 8, 8], strides = [1, 1, 1]} : vector<8x16x8xbf16> to vector<8x8x8xbf16>
    %244 = vector.shape_cast %243 : vector<8x8x8xbf16> to vector<64x8xbf16>
    %c1_110 = arith.constant 1 : index
    %c0_111 = arith.constant 0 : index
    %c0_112 = arith.constant 0 : index
    %245 = vector.load %arg8[%c1_110, %c0_111, %c0_112] : memref<9x8x8xbf16, #tpu.memory_space<vmem>>, vector<1x8x8xbf16>
    %246 = vector.shape_cast %245 : vector<1x8x8xbf16> to vector<8x8xbf16>
    %cst_113 = arith.constant dense<0.000000e+00> : vector<64x8xf32>
    %247 = tpu.matmul %244, %246, %cst_113 {dimension_numbers = #tpu.dot_dimension_numbers<[1], [0], [0], [1], [0, 0, 1, 1], [], []>} : vector<64x8xbf16>, vector<8x8xbf16>, vector<64x8xf32> -> vector<64x8xf32>
    %248 = arith.addf %242, %247 : vector<64x8xf32>
    %249 = vector.extract_strided_slice %236 {offsets = [0, 1, 0], sizes = [8, 8, 8], strides = [1, 1, 1]} : vector<8x16x8xbf16> to vector<8x8x8xbf16>
    %250 = vector.shape_cast %249 : vector<8x8x8xbf16> to vector<64x8xbf16>
    %c2_114 = arith.constant 2 : index
    %c0_115 = arith.constant 0 : index
    %c0_116 = arith.constant 0 : index
    %251 = vector.load %arg8[%c2_114, %c0_115, %c0_116] : memref<9x8x8xbf16, #tpu.memory_space<vmem>>, vector<1x8x8xbf16>
    %252 = vector.shape_cast %251 : vector<1x8x8xbf16> to vector<8x8xbf16>
    %cst_117 = arith.constant dense<0.000000e+00> : vector<64x8xf32>
    %253 = tpu.matmul %250, %252, %cst_117 {dimension_numbers = #tpu.dot_dimension_numbers<[1], [0], [0], [1], [0, 0, 1, 1], [], []>} : vector<64x8xbf16>, vector<8x8xbf16>, vector<64x8xf32> -> vector<64x8xf32>
    %254 = arith.addf %248, %253 : vector<64x8xf32>
    %255 = vector.extract_strided_slice %221 {offsets = [1, 0, 0], sizes = [16, 16, 8], strides = [1, 1, 1]} : vector<18x16x8xbf16> to vector<16x16x8xbf16>
    %256 = vector.shape_cast %255 : vector<16x16x8xbf16> to vector<8x2x16x8xbf16>
    %257 = vector.extract_strided_slice %256 {offsets = [0, 0, 0, 0], sizes = [8, 1, 16, 8], strides = [1, 1, 1, 1]} : vector<8x2x16x8xbf16> to vector<8x1x16x8xbf16>
    %258 = vector.shape_cast %257 : vector<8x1x16x8xbf16> to vector<8x16x8xbf16>
    %259 = vector.extract_strided_slice %227 {offsets = [1, 0, 0], sizes = [16, 16, 8], strides = [1, 1, 1]} : vector<18x16x8xbf16> to vector<16x16x8xbf16>
    %260 = vector.shape_cast %259 : vector<16x16x8xbf16> to vector<8x2x16x8xbf16>
    %261 = vector.extract_strided_slice %260 {offsets = [0, 0, 0, 0], sizes = [8, 1, 16, 8], strides = [1, 1, 1, 1]} : vector<8x2x16x8xbf16> to vector<8x1x16x8xbf16>
    %262 = vector.shape_cast %261 : vector<8x1x16x8xbf16> to vector<8x16x8xbf16>
    %263 = vector.extract_strided_slice %262 {offsets = [0, 0, 0], sizes = [8, 8, 8], strides = [1, 1, 1]} : vector<8x16x8xbf16> to vector<8x8x8xbf16>
    %264 = vector.shape_cast %263 : vector<8x8x8xbf16> to vector<64x8xbf16>
    %c3_118 = arith.constant 3 : index
    %c0_119 = arith.constant 0 : index
    %c0_120 = arith.constant 0 : index
    %265 = vector.load %arg8[%c3_118, %c0_119, %c0_120] : memref<9x8x8xbf16, #tpu.memory_space<vmem>>, vector<1x8x8xbf16>
    %266 = vector.shape_cast %265 : vector<1x8x8xbf16> to vector<8x8xbf16>
    %cst_121 = arith.constant dense<0.000000e+00> : vector<64x8xf32>
    %267 = tpu.matmul %264, %266, %cst_121 {dimension_numbers = #tpu.dot_dimension_numbers<[1], [0], [0], [1], [0, 0, 1, 1], [], []>} : vector<64x8xbf16>, vector<8x8xbf16>, vector<64x8xf32> -> vector<64x8xf32>
    %268 = arith.addf %254, %267 : vector<64x8xf32>
    %269 = vector.extract_strided_slice %258 {offsets = [0, 0, 0], sizes = [8, 8, 8], strides = [1, 1, 1]} : vector<8x16x8xbf16> to vector<8x8x8xbf16>
    %270 = vector.shape_cast %269 : vector<8x8x8xbf16> to vector<64x8xbf16>
    %c4_122 = arith.constant 4 : index
    %c0_123 = arith.constant 0 : index
    %c0_124 = arith.constant 0 : index
    %271 = vector.load %arg8[%c4_122, %c0_123, %c0_124] : memref<9x8x8xbf16, #tpu.memory_space<vmem>>, vector<1x8x8xbf16>
    %272 = vector.shape_cast %271 : vector<1x8x8xbf16> to vector<8x8xbf16>
    %cst_125 = arith.constant dense<0.000000e+00> : vector<64x8xf32>
    %273 = tpu.matmul %270, %272, %cst_125 {dimension_numbers = #tpu.dot_dimension_numbers<[1], [0], [0], [1], [0, 0, 1, 1], [], []>} : vector<64x8xbf16>, vector<8x8xbf16>, vector<64x8xf32> -> vector<64x8xf32>
    %274 = arith.addf %268, %273 : vector<64x8xf32>
    %275 = vector.extract_strided_slice %262 {offsets = [0, 1, 0], sizes = [8, 8, 8], strides = [1, 1, 1]} : vector<8x16x8xbf16> to vector<8x8x8xbf16>
    %276 = vector.shape_cast %275 : vector<8x8x8xbf16> to vector<64x8xbf16>
    %c5_126 = arith.constant 5 : index
    %c0_127 = arith.constant 0 : index
    %c0_128 = arith.constant 0 : index
    %277 = vector.load %arg8[%c5_126, %c0_127, %c0_128] : memref<9x8x8xbf16, #tpu.memory_space<vmem>>, vector<1x8x8xbf16>
    %278 = vector.shape_cast %277 : vector<1x8x8xbf16> to vector<8x8xbf16>
    %cst_129 = arith.constant dense<0.000000e+00> : vector<64x8xf32>
    %279 = tpu.matmul %276, %278, %cst_129 {dimension_numbers = #tpu.dot_dimension_numbers<[1], [0], [0], [1], [0, 0, 1, 1], [], []>} : vector<64x8xbf16>, vector<8x8xbf16>, vector<64x8xf32> -> vector<64x8xf32>
    %280 = arith.addf %274, %279 : vector<64x8xf32>
    %281 = vector.extract_strided_slice %221 {offsets = [2, 0, 0], sizes = [16, 16, 8], strides = [1, 1, 1]} : vector<18x16x8xbf16> to vector<16x16x8xbf16>
    %282 = vector.shape_cast %281 : vector<16x16x8xbf16> to vector<8x2x16x8xbf16>
    %283 = vector.extract_strided_slice %282 {offsets = [0, 0, 0, 0], sizes = [8, 1, 16, 8], strides = [1, 1, 1, 1]} : vector<8x2x16x8xbf16> to vector<8x1x16x8xbf16>
    %284 = vector.shape_cast %283 : vector<8x1x16x8xbf16> to vector<8x16x8xbf16>
    %285 = vector.extract_strided_slice %227 {offsets = [2, 0, 0], sizes = [16, 16, 8], strides = [1, 1, 1]} : vector<18x16x8xbf16> to vector<16x16x8xbf16>
    %286 = vector.shape_cast %285 : vector<16x16x8xbf16> to vector<8x2x16x8xbf16>
    %287 = vector.extract_strided_slice %286 {offsets = [0, 0, 0, 0], sizes = [8, 1, 16, 8], strides = [1, 1, 1, 1]} : vector<8x2x16x8xbf16> to vector<8x1x16x8xbf16>
    %288 = vector.shape_cast %287 : vector<8x1x16x8xbf16> to vector<8x16x8xbf16>
    %289 = vector.extract_strided_slice %288 {offsets = [0, 0, 0], sizes = [8, 8, 8], strides = [1, 1, 1]} : vector<8x16x8xbf16> to vector<8x8x8xbf16>
    %290 = vector.shape_cast %289 : vector<8x8x8xbf16> to vector<64x8xbf16>
    %c6_130 = arith.constant 6 : index
    %c0_131 = arith.constant 0 : index
    %c0_132 = arith.constant 0 : index
    %291 = vector.load %arg8[%c6_130, %c0_131, %c0_132] : memref<9x8x8xbf16, #tpu.memory_space<vmem>>, vector<1x8x8xbf16>
    %292 = vector.shape_cast %291 : vector<1x8x8xbf16> to vector<8x8xbf16>
    %cst_133 = arith.constant dense<0.000000e+00> : vector<64x8xf32>
    %293 = tpu.matmul %290, %292, %cst_133 {dimension_numbers = #tpu.dot_dimension_numbers<[1], [0], [0], [1], [0, 0, 1, 1], [], []>} : vector<64x8xbf16>, vector<8x8xbf16>, vector<64x8xf32> -> vector<64x8xf32>
    %294 = arith.addf %280, %293 : vector<64x8xf32>
    %295 = vector.extract_strided_slice %284 {offsets = [0, 0, 0], sizes = [8, 8, 8], strides = [1, 1, 1]} : vector<8x16x8xbf16> to vector<8x8x8xbf16>
    %296 = vector.shape_cast %295 : vector<8x8x8xbf16> to vector<64x8xbf16>
    %c7_134 = arith.constant 7 : index
    %c0_135 = arith.constant 0 : index
    %c0_136 = arith.constant 0 : index
    %297 = vector.load %arg8[%c7_134, %c0_135, %c0_136] : memref<9x8x8xbf16, #tpu.memory_space<vmem>>, vector<1x8x8xbf16>
    %298 = vector.shape_cast %297 : vector<1x8x8xbf16> to vector<8x8xbf16>
    %cst_137 = arith.constant dense<0.000000e+00> : vector<64x8xf32>
    %299 = tpu.matmul %296, %298, %cst_137 {dimension_numbers = #tpu.dot_dimension_numbers<[1], [0], [0], [1], [0, 0, 1, 1], [], []>} : vector<64x8xbf16>, vector<8x8xbf16>, vector<64x8xf32> -> vector<64x8xf32>
    %300 = arith.addf %294, %299 : vector<64x8xf32>
    %301 = vector.extract_strided_slice %288 {offsets = [0, 1, 0], sizes = [8, 8, 8], strides = [1, 1, 1]} : vector<8x16x8xbf16> to vector<8x8x8xbf16>
    %302 = vector.shape_cast %301 : vector<8x8x8xbf16> to vector<64x8xbf16>
    %c8_138 = arith.constant 8 : index
    %c0_139 = arith.constant 0 : index
    %c0_140 = arith.constant 0 : index
    %303 = vector.load %arg8[%c8_138, %c0_139, %c0_140] : memref<9x8x8xbf16, #tpu.memory_space<vmem>>, vector<1x8x8xbf16>
    %304 = vector.shape_cast %303 : vector<1x8x8xbf16> to vector<8x8xbf16>
    %cst_141 = arith.constant dense<0.000000e+00> : vector<64x8xf32>
    %305 = tpu.matmul %302, %304, %cst_141 {dimension_numbers = #tpu.dot_dimension_numbers<[1], [0], [0], [1], [0, 0, 1, 1], [], []>} : vector<64x8xbf16>, vector<8x8xbf16>, vector<64x8xf32> -> vector<64x8xf32>
    %306 = arith.addf %300, %305 : vector<64x8xf32>
    %c0_142 = arith.constant 0 : index
    %c0_143 = arith.constant 0 : index
    %307 = vector.load %arg9[%c0_142, %c0_143] : memref<1x8xf32, #tpu.memory_space<vmem>>, vector<1x8xf32>
    %308 = vector.broadcast %307 : vector<1x8xf32> to vector<64x8xf32>
    %309 = arith.addf %306, %308 : vector<64x8xf32>
    %cst_144 = arith.constant 0.000000e+00 : f32
    %310 = vector.broadcast %cst_144 : f32 to vector<64x8xf32>
    %311 = arith.cmpf ogt, %309, %310 : vector<64x8xf32>
    %cst_145 = arith.constant 2.000000e-01 : f32
    %312 = vector.broadcast %cst_145 : f32 to vector<64x8xf32>
    %313 = arith.mulf %312, %309 : vector<64x8xf32>
    %314 = arith.select %311, %309, %313 : vector<64x8xi1>, vector<64x8xf32>
    %315 = arith.addf %314, %96 : vector<64x8xf32>
    %316 = vector.shape_cast %315 : vector<64x8xf32> to vector<8x8x8xf32>
    %c0_146 = arith.constant 0 : index
    %c0_147 = arith.constant 0 : index
    %c0_148 = arith.constant 0 : index
    %c0_149 = arith.constant 0 : index
    %317 = vector.load %arg12[%c0_146, %c0_147, %c0_148, %c0_149] : memref<1x8x8x8xf32, #tpu.memory_space<vmem>>, vector<1x8x8x8xf32>
    %318 = vector.shape_cast %317 : vector<1x8x8x8xf32> to vector<8x8x8xf32>
    %319 = vector.shape_cast %316 : vector<8x8x8xf32> to vector<1x8x8x8xf32>
    tpu.vector_store %arg12[%c0_146, %c0_147, %c0_148, %c0_149], %319 {strides = array<i32>} : memref<1x8x8x8xf32, #tpu.memory_space<vmem>>, vector<1x8x8x8xf32>,
    return
  }
  func.func @transform_0(%arg0: i32, %arg1: i32) -> (i32, i32, i32, i32) {
    %c0_i32 = arith.constant 0 : i32
    %c0_i32_0 = arith.constant 0 : i32
    %c0_i32_1 = arith.constant 0 : i32
    return %arg0, %arg1, %c0_i32, %c0_i32_0 : i32, i32, i32, i32
  }
  func.func @transform_1(%arg0: i32, %arg1: i32) -> (i32, i32, i32, i32, i32) {
    %c0_i32 = arith.constant 0 : i32
    %c0_i32_0 = arith.constant 0 : i32
    %c0_i32_1 = arith.constant 0 : i32
    %c0_i32_2 = arith.constant 0 : i32
    return %arg0, %arg1, %c0_i32, %c0_i32_0, %c0_i32_1 : i32, i32, i32, i32, i32
  }
  func.func @transform_2(%arg0: i32, %arg1: i32) -> (i32, i32, i32, i32) {
    %c0_i32 = arith.constant 0 : i32
    %c0_i32_0 = arith.constant 0 : i32
    %c0_i32_1 = arith.constant 0 : i32
    return %arg0, %arg1, %c0_i32, %c0_i32_0 : i32, i32, i32, i32
  }
  func.func @transform_3(%arg0: i32, %arg1: i32) -> (i32, i32, i32, i32, i32) {
    %c0_i32 = arith.constant 0 : i32
    %c0_i32_0 = arith.constant 0 : i32
    %c0_i32_1 = arith.constant 0 : i32
    %c0_i32_2 = arith.constant 0 : i32
    return %arg0, %arg1, %c0_i32, %c0_i32_0, %c0_i32_1 : i32, i32, i32, i32, i32
  }
  func.func @transform_4(%arg0: i32, %arg1: i32) -> (i32, i32, i32) {
    %c0_i32 = arith.constant 0 : i32
    %c0_i32_0 = arith.constant 0 : i32
    %c0_i32_1 = arith.constant 0 : i32
    %c0_i32_2 = arith.constant 0 : i32
    return %c0_i32, %c0_i32_0, %c0_i32_1 : i32, i32, i32
  }
  func.func @transform_5(%arg0: i32, %arg1: i32) -> (i32, i32) {
    %c0_i32 = arith.constant 0 : i32
    %c0_i32_0 = arith.constant 0 : i32
    %c0_i32_1 = arith.constant 0 : i32
    return %c0_i32, %c0_i32_0 : i32, i32
  }
  func.func @transform_6(%arg0: i32, %arg1: i32) -> (i32, i32, i32) {
    %c0_i32 = arith.constant 0 : i32
    %c0_i32_0 = arith.constant 0 : i32
    %c0_i32_1 = arith.constant 0 : i32
    %c0_i32_2 = arith.constant 0 : i32
    return %c0_i32, %c0_i32_0, %c0_i32_1 : i32, i32, i32
  }
  func.func @transform_7(%arg0: i32, %arg1: i32) -> (i32, i32) {
    %c0_i32 = arith.constant 0 : i32
    %c0_i32_0 = arith.constant 0 : i32
    %c0_i32_1 = arith.constant 0 : i32
    return %c0_i32, %c0_i32_0 : i32, i32
  }
  func.func @transform_8(%arg0: i32, %arg1: i32) -> (i32, i32, i32) {
    %c0_i32 = arith.constant 0 : i32
    %c0_i32_0 = arith.constant 0 : i32
    %c0_i32_1 = arith.constant 0 : i32
    %c0_i32_2 = arith.constant 0 : i32
    return %c0_i32, %c0_i32_0, %c0_i32_1 : i32, i32, i32
  }
  func.func @transform_9(%arg0: i32, %arg1: i32) -> (i32, i32) {
    %c0_i32 = arith.constant 0 : i32
    %c0_i32_0 = arith.constant 0 : i32
    %c0_i32_1 = arith.constant 0 : i32
    return %c0_i32, %c0_i32_0 : i32, i32
  }
  func.func @transform_10(%arg0: i32, %arg1: i32) -> (i32, i32, i32, i32) {
    %c0_i32 = arith.constant 0 : i32
    %c0_i32_0 = arith.constant 0 : i32
    %c0_i32_1 = arith.constant 0 : i32
    return %arg0, %arg1, %c0_i32, %c0_i32_0 : i32, i32, i32, i32
  }
}

</mosaic_0001>

<llo_original>
// kernel: block_d_forward.1
$region0: #{block_d_forward.1}
  #allocation0 [shape = 'u32[]', space=smem, size = 0x4, offset = 0x4, fixed_abs, tag = 'smem constant byte address 0x4 - core index']
  #allocation1 [shape = 'u32[144,128]{1,0:T(1,128)}', space=vmem, size = 0x12000, scoped, tag = 'internal scratch']
  %s0 = inlined_call_operand.vmem [shape: bf16[2,20,24,4], index: 0, kind: input, shape index: {}]
  %s1 = inlined_call_operand.vmem [shape: bf16[2,1,4,24,4], index: 1, kind: input, shape index: {}]
  %s2 = inlined_call_operand.vmem [shape: bf16[2,20,24,4], index: 2, kind: input, shape index: {}]
  %s3 = inlined_call_operand.vmem [shape: bf16[2,1,4,24,4], index: 3, kind: input, shape index: {}]
  %s4 = inlined_call_operand.vmem [shape: bf16[9,4,8], index: 4, kind: input, shape index: {}]
  %s5 = inlined_call_operand.vmem [shape: f32[1,8], index: 5, kind: input, shape index: {}]
  %s6 = inlined_call_operand.vmem [shape: bf16[9,8,8], index: 6, kind: input, shape index: {}]
  %s7 = inlined_call_operand.vmem [shape: f32[1,8], index: 7, kind: input, shape index: {}]
  %s8 = inlined_call_operand.vmem [shape: bf16[9,4,8], index: 8, kind: input, shape index: {}]
  %s9 = inlined_call_operand.vmem [shape: f32[1,8], index: 9, kind: input, shape index: {}]
  %s10 = inlined_call_operand.vmem [shape: f32[2,8,8,8], index: 10, kind: output, shape index: {}]
  %s11 = sld [smem:[#allocation0]]
  $region73: #{block_d_forward.1} parent=0
    _
  %s13 = ssub.s32 1, %s11
  %s14 = scalar_select 0, %s13, %s11
  loop: start=0, step=1, limit=4
  $region2: #{block_d_forward.1} parent=0 // loop_pre_header
    _
  $region3: #{block_d_forward.1} parent=0 // loop_header
    %s16 = sphi 0, %s20
    %p17 = scmp.ge.s32.totalorder %s16, 4
    %s23 = sphi 0, %s35
    %s24 = sphi 0, %s31
    %s25 = sphi 0, %s23
    %s26 = sphi 0, %s24
    %s27 = sphi 0, %s25
    %s28 = sphi 0, %s26
    %s40 = sphi 0, %s42
    %s43 = sphi 0, %s40
    %s44 = sphi 0, %s43
    %s60 = sphi 0, %s44
    %s68 = sphi 0, %s70
    %s71 = sphi 0, %s68
    %s72 = sphi 0, %s71
    %s88 = sphi 0, %s72
    %s96 = sphi 0, %s98
    %s99 = sphi 0, %s96
    %s100 = sphi 0, %s99
    %s116 = sphi 0, %s100
    %s124 = sphi 0, %s126
    %s127 = sphi 0, %s124
    %s128 = sphi 0, %s127
    %s144 = sphi 0, %s128
    %s148 = sphi 0, %s148
    %s150 = sphi 0, %s148
    %s151 = sphi 0, %s150
    %s165 = sphi 0, %s151
    %s169 = sphi 0, %s169
    %s171 = sphi 0, %s169
    %s172 = sphi 0, %s171
    %s186 = sphi 0, %s172
    %s190 = sphi 0, %s190
    %s192 = sphi 0, %s190
    %s193 = sphi 0, %s192
    %s207 = sphi 0, %s193
    %s211 = sphi 0, %s211
    %s213 = sphi 0, %s211
    %s214 = sphi 0, %s213
    %s228 = sphi 0, %s214
    %s232 = sphi 0, %s232
    %s234 = sphi 0, %s232
    %s235 = sphi 0, %s234
    %s249 = sphi 0, %s235
    %s253 = sphi 0, %s253
    %s255 = sphi 0, %s253
    %s256 = sphi 0, %s255
    %s270 = sphi 0, %s256
    %s278 = sphi 0, %s280
    %s281 = sphi 0, %s278
    %s282 = sphi 0, %s281
    %s298 = sphi 0, %s282
  $region4: #{block_d_forward.1} parent=0 // loop_header_branch
    %19 = sbr.rel (%p17) target = $region8
  $region5: #{block_d_forward.1} parent=0 // loop_body
    %s21 = ssub.s32 %s16, 1
    %s22 = ssub.s32 %s16, 2
    %s29 = sadd.s32 1, %s24
    %p30 = scmp.ge.s32.totalorder %s29, 1
    %s31 = scalar_select %p30, 0, %s29
    %s32 = sadd.s32 1, %s23
    %s33 = scalar_select %p30, %s32, %s23
    %p34 = scmp.ge.s32.totalorder %s33, 2
    %s35 = scalar_select %p34, 0, %s33
    %s36 = ssub.s32 %s23, %s35
    %s37 = ssub.s32 %s24, %s31
    %s38 = sor.u32 %s36, %s37
    %p39 = scmp.eq.s32.totalorder %s38, 0
    %s41 = sadd.s32 %s40, 1
    %s42 = scalar_select %p39, %s40, %s41
    %p45 = pneg %p39
    %p46 = scmp.eq.s32.totalorder %s16, 1
    %p47 = por %p45, %p46
    %p48 = scmp.ne.s32.totalorder %s40, %s43
    %p49 = scmp.eq.s32.totalorder %s16, 0
    %p50 = por %p48, %p49
    %p51 = scmp.ne.s32.totalorder %s40, %s43
    %p52 = scmp.eq.s32.totalorder %s21, 1
    %p53 = por %p51, %p52
    %p54 = scmp.ne.s32.totalorder %s43, %s44
    %p55 = scmp.eq.s32.totalorder %s21, 0
    %p56 = por %p54, %p55
    %p57 = scmp.ne.s32.totalorder %s43, %s44
    %p58 = scmp.eq.s32.totalorder %s22, 1
    %p59 = por %p57, %p58
    %p61 = scmp.ne.s32.totalorder %s44, %s60
    %p62 = scmp.eq.s32.totalorder %s22, 0
    %p63 = por %p61, %p62
    %s64 = ssub.s32 %s23, %s35
    %s65 = ssub.s32 %s24, %s31
    %s66 = sor.u32 %s64, %s65
    %p67 = scmp.eq.s32.totalorder %s66, 0
    %s69 = sadd.s32 %s68, 1
    %s70 = scalar_select %p67, %s68, %s69
    %p73 = pneg %p67
    %p74 = scmp.eq.s32.totalorder %s16, 1
    %p75 = por %p73, %p74
    %p76 = scmp.ne.s32.totalorder %s68, %s71
    %p77 = scmp.eq.s32.totalorder %s16, 0
    %p78 = por %p76, %p77
    %p79 = scmp.ne.s32.totalorder %s68, %s71
    %p80 = scmp.eq.s32.totalorder %s21, 1
    %p81 = por %p79, %p80
    %p82 = scmp.ne.s32.totalorder %s71, %s72
    %p83 = scmp.eq.s32.totalorder %s21, 0
    %p84 = por %p82, %p83
    %p85 = scmp.ne.s32.totalorder %s71, %s72
    %p86 = scmp.eq.s32.totalorder %s22, 1
    %p87 = por %p85, %p86
    %p89 = scmp.ne.s32.totalorder %s72, %s88
    %p90 = scmp.eq.s32.totalorder %s22, 0
    %p91 = por %p89, %p90
    %s92 = ssub.s32 %s23, %s35
    %s93 = ssub.s32 %s24, %s31
    %s94 = sor.u32 %s92, %s93
    %p95 = scmp.eq.s32.totalorder %s94, 0
    %s97 = sadd.s32 %s96, 1
    %s98 = scalar_select %p95, %s96, %s97
    %p101 = pneg %p95
    %p102 = scmp.eq.s32.totalorder %s16, 1
    %p103 = por %p101, %p102
    %p104 = scmp.ne.s32.totalorder %s96, %s99
    %p105 = scmp.eq.s32.totalorder %s16, 0
    %p106 = por %p104, %p105
    %p107 = scmp.ne.s32.totalorder %s96, %s99
    %p108 = scmp.eq.s32.totalorder %s21, 1
    %p109 = por %p107, %p108
    %p110 = scmp.ne.s32.totalorder %s99, %s100
    %p111 = scmp.eq.s32.totalorder %s21, 0
    %p112 = por %p110, %p111
    %p113 = scmp.ne.s32.totalorder %s99, %s100
    %p114 = scmp.eq.s32.totalorder %s22, 1
    %p115 = por %p113, %p114
    %p117 = scmp.ne.s32.totalorder %s100, %s116
    %p118 = scmp.eq.s32.totalorder %s22, 0
    %p119 = por %p117, %p118
    %s120 = ssub.s32 %s23, %s35
    %s121 = ssub.s32 %s24, %s31
    %s122 = sor.u32 %s120, %s121
    %p123 = scmp.eq.s32.totalorder %s122, 0
    %s125 = sadd.s32 %s124, 1
    %s126 = scalar_select %p123, %s124, %s125
    %p129 = pneg %p123
    %p130 = scmp.eq.s32.totalorder %s16, 1
    %p131 = por %p129, %p130
    %p132 = scmp.ne.s32.totalorder %s124, %s127
    %p133 = scmp.eq.s32.totalorder %s16, 0
    %p134 = por %p132, %p133
    %p135 = scmp.ne.s32.totalorder %s124, %s127
    %p136 = scmp.eq.s32.totalorder %s21, 1
    %p137 = por %p135, %p136
    %p138 = scmp.ne.s32.totalorder %s127, %s128
    %p139 = scmp.eq.s32.totalorder %s21, 0
    %p140 = por %p138, %p139
    %p141 = scmp.ne.s32.totalorder %s127, %s128
    %p142 = scmp.eq.s32.totalorder %s22, 1
    %p143 = por %p141, %p142
    %p145 = scmp.ne.s32.totalorder %s128, %s144
    %p146 = scmp.eq.s32.totalorder %s22, 0
    %p147 = por %p145, %p146
    %s149 = sadd.s32 %s148, 1
    %p152 = scmp.eq.s32.totalorder %s16, 1
    %p153 = scmp.ne.s32.totalorder %s148, %s150
    %p154 = scmp.eq.s32.totalorder %s16, 0
    %p155 = por %p153, %p154
    %p156 = scmp.ne.s32.totalorder %s148, %s150
    %p157 = scmp.eq.s32.totalorder %s21, 1
    %p158 = por %p156, %p157
    %p159 = scmp.ne.s32.totalorder %s150, %s151
    %p160 = scmp.eq.s32.totalorder %s21, 0
    %p161 = por %p159, %p160
    %p162 = scmp.ne.s32.totalorder %s150, %s151
    %p163 = scmp.eq.s32.totalorder %s22, 1
    %p164 = por %p162, %p163
    %p166 = scmp.ne.s32.totalorder %s151, %s165
    %p167 = scmp.eq.s32.totalorder %s22, 0
    %p168 = por %p166, %p167
    %s170 = sadd.s32 %s169, 1
    %p173 = scmp.eq.s32.totalorder %s16, 1
    %p174 = scmp.ne.s32.totalorder %s169, %s171
    %p175 = scmp.eq.s32.totalorder %s16, 0
    %p176 = por %p174, %p175
    %p177 = scmp.ne.s32.totalorder %s169, %s171
    %p178 = scmp.eq.s32.totalorder %s21, 1
    %p179 = por %p177, %p178
    %p180 = scmp.ne.s32.totalorder %s171, %s172
    %p181 = scmp.eq.s32.totalorder %s21, 0
    %p182 = por %p180, %p181
    %p183 = scmp.ne.s32.totalorder %s171, %s172
    %p184 = scmp.eq.s32.totalorder %s22, 1
    %p185 = por %p183, %p184
    %p187 = scmp.ne.s32.totalorder %s172, %s186
    %p188 = scmp.eq.s32.totalorder %s22, 0
    %p189 = por %p187, %p188
    %s191 = sadd.s32 %s190, 1
    %p194 = scmp.eq.s32.totalorder %s16, 1
    %p195 = scmp.ne.s32.totalorder %s190, %s192
    %p196 = scmp.eq.s32.totalorder %s16, 0
    %p197 = por %p195, %p196
    %p198 = scmp.ne.s32.totalorder %s190, %s192
    %p199 = scmp.eq.s32.totalorder %s21, 1
    %p200 = por %p198, %p199
    %p201 = scmp.ne.s32.totalorder %s192, %s193
    %p202 = scmp.eq.s32.totalorder %s21, 0
    %p203 = por %p201, %p202
    %p204 = scmp.ne.s32.totalorder %s192, %s193
    %p205 = scmp.eq.s32.totalorder %s22, 1
    %p206 = por %p204, %p205
    %p208 = scmp.ne.s32.totalorder %s193, %s207
    %p209 = scmp.eq.s32.totalorder %s22, 0
    %p210 = por %p208, %p209
    %s212 = sadd.s32 %s211, 1
    %p215 = scmp.eq.s32.totalorder %s16, 1
    %p216 = scmp.ne.s32.totalorder %s211, %s213
    %p217 = scmp.eq.s32.totalorder %s16, 0
    %p218 = por %p216, %p217
    %p219 = scmp.ne.s32.totalorder %s211, %s213
    %p220 = scmp.eq.s32.totalorder %s21, 1
    %p221 = por %p219, %p220
    %p222 = scmp.ne.s32.totalorder %s213, %s214
    %p223 = scmp.eq.s32.totalorder %s21, 0
    %p224 = por %p222, %p223
    %p225 = scmp.ne.s32.totalorder %s213, %s214
    %p226 = scmp.eq.s32.totalorder %s22, 1
    %p227 = por %p225, %p226
    %p229 = scmp.ne.s32.totalorder %s214, %s228
    %p230 = scmp.eq.s32.totalorder %s22, 0
    %p231 = por %p229, %p230
    %s233 = sadd.s32 %s232, 1
    %p236 = scmp.eq.s32.totalorder %s16, 1
    %p237 = scmp.ne.s32.totalorder %s232, %s234
    %p238 = scmp.eq.s32.totalorder %s16, 0
    %p239 = por %p237, %p238
    %p240 = scmp.ne.s32.totalorder %s232, %s234
    %p241 = scmp.eq.s32.totalorder %s21, 1
    %p242 = por %p240, %p241
    %p243 = scmp.ne.s32.totalorder %s234, %s235
    %p244 = scmp.eq.s32.totalorder %s21, 0
    %p245 = por %p243, %p244
    %p246 = scmp.ne.s32.totalorder %s234, %s235
    %p247 = scmp.eq.s32.totalorder %s22, 1
    %p248 = por %p246, %p247
    %p250 = scmp.ne.s32.totalorder %s235, %s249
    %p251 = scmp.eq.s32.totalorder %s22, 0
    %p252 = por %p250, %p251
    %s254 = sadd.s32 %s253, 1
    %p257 = scmp.eq.s32.totalorder %s16, 1
    %p258 = scmp.ne.s32.totalorder %s253, %s255
    %p259 = scmp.eq.s32.totalorder %s16, 0
    %p260 = por %p258, %p259
    %p261 = scmp.ne.s32.totalorder %s253, %s255
    %p262 = scmp.eq.s32.totalorder %s21, 1
    %p263 = por %p261, %p262
    %p264 = scmp.ne.s32.totalorder %s255, %s256
    %p265 = scmp.eq.s32.totalorder %s21, 0
    %p266 = por %p264, %p265
    %p267 = scmp.ne.s32.totalorder %s255, %s256
    %p268 = scmp.eq.s32.totalorder %s22, 1
    %p269 = por %p267, %p268
    %p271 = scmp.ne.s32.totalorder %s256, %s270
    %p272 = scmp.eq.s32.totalorder %s22, 0
    %p273 = por %p271, %p272
    %s274 = ssub.s32 %s23, %s35
    %s275 = ssub.s32 %s24, %s31
    %s276 = sor.u32 %s274, %s275
    %p277 = scmp.eq.s32.totalorder %s276, 0
    %s279 = sadd.s32 %s278, 1
    %s280 = scalar_select %p277, %s278, %s279
    %p283 = pneg %p277
    %p284 = scmp.eq.s32.totalorder %s16, 1
    %p285 = por %p283, %p284
    %p286 = scmp.ne.s32.totalorder %s278, %s281
    %p287 = scmp.eq.s32.totalorder %s16, 0
    %p288 = por %p286, %p287
    %p289 = scmp.ne.s32.totalorder %s278, %s281
    %p290 = scmp.eq.s32.totalorder %s21, 1
    %p291 = por %p289, %p290
    %p292 = scmp.ne.s32.totalorder %s281, %s282
    %p293 = scmp.eq.s32.totalorder %s21, 0
    %p294 = por %p292, %p293
    %p295 = scmp.ne.s32.totalorder %s281, %s282
    %p296 = scmp.eq.s32.totalorder %s22, 1
    %p297 = por %p295, %p296
    %p299 = scmp.ne.s32.totalorder %s282, %s298
    %p300 = scmp.eq.s32.totalorder %s22, 0
    %p301 = por %p299, %p300
    %p302 = scmp.le.s32.totalorder 1, %s16
    %p303 = scmp.lt.s32.totalorder %s16, 3
    %p304 = pnand %p302, %p303
    %p305 = pneg %p304
    // Predicated region
    $region9: #{block_d_forward.1} parent=5 // pred_check
      _
    $region10: #{block_d_forward.1} parent=5 // pred_check_branch
      %307 = sbr.rel (%p304) target = $region12
    $region11: #{block_d_forward.1} parent=5 // pred_region
      %s308 = ssub.s32 %s16, 1
      // Predicated region
      $region13: #{block_d_forward.1} parent=11 // pred_check
        %p309 = pneg %p161
      $region14: #{block_d_forward.1} parent=11 // pred_check_branch
        %311 = sbr.rel (%p309) target = $region16
      $region15: #{block_d_forward.1} parent=11 // pred_region
        _
      $region16: #{block_d_forward.1} parent=11 // pred_fallthru
        _
      // Predicated region
      $region17: #{block_d_forward.1} parent=11 // pred_check
        %p312 = pneg %p182
      $region18: #{block_d_forward.1} parent=11 // pred_check_branch
        %314 = sbr.rel (%p312) target = $region20
      $region19: #{block_d_forward.1} parent=11 // pred_region
        _
      $region20: #{block_d_forward.1} parent=11 // pred_fallthru
        _
      // Predicated region
      $region21: #{block_d_forward.1} parent=11 // pred_check
        %p315 = pneg %p203
      $region22: #{block_d_forward.1} parent=11 // pred_check_branch
        %317 = sbr.rel (%p315) target = $region24
      $region23: #{block_d_forward.1} parent=11 // pred_region
        _
      $region24: #{block_d_forward.1} parent=11 // pred_fallthru
        _
      // Predicated region
      $region25: #{block_d_forward.1} parent=11 // pred_check
        %p318 = pneg %p224
      $region26: #{block_d_forward.1} parent=11 // pred_check_branch
        %320 = sbr.rel (%p318) target = $region28
      $region27: #{block_d_forward.1} parent=11 // pred_region
        _
      $region28: #{block_d_forward.1} parent=11 // pred_fallthru
        _
      // Predicated region
      $region29: #{block_d_forward.1} parent=11 // pred_check
        %p321 = pneg %p245
      $region30: #{block_d_forward.1} parent=11 // pred_check_branch
        %323 = sbr.rel (%p321) target = $region32
      $region31: #{block_d_forward.1} parent=11 // pred_region
        _
      $region32: #{block_d_forward.1} parent=11 // pred_fallthru
        _
      // Predicated region
      $region33: #{block_d_forward.1} parent=11 // pred_check
        %p324 = pneg %p266
      $region34: #{block_d_forward.1} parent=11 // pred_check_branch
        %326 = sbr.rel (%p324) target = $region36
      $region35: #{block_d_forward.1} parent=11 // pred_region
        _
      $region36: #{block_d_forward.1} parent=11 // pred_fallthru
        _
    $region12: #{block_d_forward.1} parent=5 // pred_fallthru
      _
    %p327 = scmp.lt.s32.totalorder %s16, 2
    // Predicated region
    $region37: #{block_d_forward.1} parent=5 // pred_check
      %p328 = pneg %p327
    $region38: #{block_d_forward.1} parent=5 // pred_check_branch
      %330 = sbr.rel (%p328) target = $region40
    $region39: #{block_d_forward.1} parent=5 // pred_region
      // Predicated region
      $region41: #{block_d_forward.1} parent=39 // pred_check
        %p331 = pneg %p50
      $region42: #{block_d_forward.1} parent=39 // pred_check_branch
        %333 = sbr.rel (%p331) target = $region44
      $region43: #{block_d_forward.1} parent=39 // pred_region
        %s334 = smul.u32 16, %s24
        %s335 = ssub.s32 20, %s334
        %p336 = scmp.lt.s32.totalorder %s335, 16
        %s337 = scalar_select %p336, %s335, 16
        %s338 = smul.u32 64, %s337
        %s339 = smul.u32 %s338, 3
        %p340 = scmp.lt.s32.totalorder %s23, 1
        %s341 = scalar_select %p340, %s23, 1
        %p342 = scmp.lt.s32.totalorder %s334, 19
        %s343 = scalar_select %p342, %s334, 19
        %s344 = smul.addr %s343, 3
        %s345 = smul.addr %s341, 60
        %s346 = sadd.s32 %s344, %s345
        %s347 = smul.addr %s346, 4
        %s348 = scalar_lea.vmem %s0, %s347
        %s349 = smul.u32 16, %s24
        %s350 = ssub.s32 20, %s349
        %p351 = scmp.lt.s32.totalorder %s350, 16
        %s352 = scalar_select %p351, %s350, 16
        %s353 = smul.u32 64, %s352
        %s354 = smul.u32 %s353, 3
      $region44: #{block_d_forward.1} parent=39 // pred_fallthru
        _
      // Predicated region
      $region45: #{block_d_forward.1} parent=39 // pred_check
        %p355 = pneg %p78
      $region46: #{block_d_forward.1} parent=39 // pred_check_branch
        %357 = sbr.rel (%p355) target = $region48
      $region47: #{block_d_forward.1} parent=39 // pred_region
        %p358 = scmp.lt.s32.totalorder %s23, 1
        %s359 = scalar_select %p358, %s23, 1
        %p360 = scmp.lt.s32.totalorder %s24, 0
        %s361 = scalar_select %p360, %s24, 0
        %s362 = smul.addr %s361, 12
        %s363 = smul.addr %s359, 12
        %s364 = sadd.s32 %s362, %s363
        %s365 = smul.addr %s364, 4
        %s366 = scalar_lea.vmem %s1, %s365
      $region48: #{block_d_forward.1} parent=39 // pred_fallthru
        _
      // Predicated region
      $region49: #{block_d_forward.1} parent=39 // pred_check
        %p367 = pneg %p106
      $region50: #{block_d_forward.1} parent=39 // pred_check_branch
        %369 = sbr.rel (%p367) target = $region52
      $region51: #{block_d_forward.1} parent=39 // pred_region
        %s370 = smul.u32 16, %s24
        %s371 = ssub.s32 20, %s370
        %p372 = scmp.lt.s32.totalorder %s371, 16
        %s373 = scalar_select %p372, %s371, 16
        %s374 = smul.u32 64, %s373
        %s375 = smul.u32 %s374, 3
        %p376 = scmp.lt.s32.totalorder %s23, 1
        %s377 = scalar_select %p376, %s23, 1
        %p378 = scmp.lt.s32.totalorder %s370, 19
        %s379 = scalar_select %p378, %s370, 19
        %s380 = smul.addr %s379, 3
        %s381 = smul.addr %s377, 60
        %s382 = sadd.s32 %s380, %s381
        %s383 = smul.addr %s382, 4
        %s384 = scalar_lea.vmem %s2, %s383
        %s385 = smul.u32 16, %s24
        %s386 = ssub.s32 20, %s385
        %p387 = scmp.lt.s32.totalorder %s386, 16
        %s388 = scalar_select %p387, %s386, 16
        %s389 = smul.u32 64, %s388
        %s390 = smul.u32 %s389, 3
      $region52: #{block_d_forward.1} parent=39 // pred_fallthru
        _
      // Predicated region
      $region53: #{block_d_forward.1} parent=39 // pred_check
        %p391 = pneg %p134
      $region54: #{block_d_forward.1} parent=39 // pred_check_branch
        %393 = sbr.rel (%p391) target = $region56
      $region55: #{block_d_forward.1} parent=39 // pred_region
        %p394 = scmp.lt.s32.totalorder %s23, 1
        %s395 = scalar_select %p394, %s23, 1
        %p396 = scmp.lt.s32.totalorder %s24, 0
        %s397 = scalar_select %p396, %s24, 0
        %s398 = smul.addr %s397, 12
        %s399 = smul.addr %s395, 12
        %s400 = sadd.s32 %s398, %s399
        %s401 = smul.addr %s400, 4
        %s402 = scalar_lea.vmem %s3, %s401
      $region56: #{block_d_forward.1} parent=39 // pred_fallthru
        _
    $region40: #{block_d_forward.1} parent=5 // pred_fallthru
      _
    %p403 = scmp.le.s32.totalorder 1, %s16
    %p404 = scmp.lt.s32.totalorder %s16, 3
    %p405 = pnand %p403, %p404
    %p406 = pneg %p405
    // Predicated region
    $region57: #{block_d_forward.1} parent=5 // pred_check
      _
    $region58: #{block_d_forward.1} parent=5 // pred_check_branch
      %408 = sbr.rel (%p405) target = $region60
    $region59: #{block_d_forward.1} parent=5 // pred_region
      %s409 = ssub.s32 %s16, 1
      %s410 = smul.u32 16, %s26
      %s411 = ssub.s32 20, %s410
      %p412 = scmp.lt.s32.totalorder %s411, 16
      %s413 = scalar_select %p412, %s411, 16
      %s414 = smul.u32 64, %s413
      %s415 = smul.u32 %s414, 3
      %p416 = scmp.lt.s32.totalorder %s25, 1
      %s417 = scalar_select %p416, %s25, 1
      %p418 = scmp.lt.s32.totalorder %s410, 19
      %s419 = scalar_select %p418, %s410, 19
      %s420 = smul.addr %s419, 3
      %s421 = smul.addr %s417, 60
      %s422 = sadd.s32 %s420, %s421
      %s423 = smul.addr %s422, 4
      %s424 = scalar_lea.vmem %s0, %s423
      %p425 = pneg %p56
      %p426 = pneg %p53
      %p427 = scmp.lt.s32.totalorder %s25, 1
      %s428 = scalar_select %p427, %s25, 1
      %p429 = scmp.lt.s32.totalorder %s26, 0
      %s430 = scalar_select %p429, %s26, 0
      %s431 = smul.addr %s430, 12
      %s432 = smul.addr %s428, 12
      %s433 = sadd.s32 %s431, %s432
      %s434 = smul.addr %s433, 4
      %s435 = scalar_lea.vmem %s1, %s434
      %p436 = pneg %p84
      %p437 = pneg %p81
      %s438 = smul.u32 16, %s26
      %s439 = ssub.s32 20, %s438
      %p440 = scmp.lt.s32.totalorder %s439, 16
      %s441 = scalar_select %p440, %s439, 16
      %s442 = smul.u32 64, %s441
      %s443 = smul.u32 %s442, 3
      %p444 = scmp.lt.s32.totalorder %s25, 1
      %s445 = scalar_select %p444, %s25, 1
      %p446 = scmp.lt.s32.totalorder %s438, 19
      %s447 = scalar_select %p446, %s438, 19
      %s448 = smul.addr %s447, 3
      %s449 = smul.addr %s445, 60
      %s450 = sadd.s32 %s448, %s449
      %s451 = smul.addr %s450, 4
      %s452 = scalar_lea.vmem %s2, %s451
      %p453 = pneg %p112
      %p454 = pneg %p109
      %p455 = scmp.lt.s32.totalorder %s25, 1
      %s456 = scalar_select %p455, %s25, 1
      %p457 = scmp.lt.s32.totalorder %s26, 0
      %s458 = scalar_select %p457, %s26, 0
      %s459 = smul.addr %s458, 12
      %s460 = smul.addr %s456, 12
      %s461 = sadd.s32 %s459, %s460
      %s462 = smul.addr %s461, 4
      %s463 = scalar_lea.vmem %s3, %s462
      %p464 = pneg %p140
      %p465 = pneg %p137
      %p466 = pneg %p161
      %p467 = pneg %p158
      %p468 = pneg %p182
      %p469 = pneg %p179
      %p470 = pneg %p203
      %p471 = pneg %p200
      %p472 = pneg %p224
      %p473 = pneg %p221
      %p474 = pneg %p245
      %p475 = pneg %p242
      %p476 = pneg %p266
      %p477 = pneg %p263
      %p478 = pneg %p294
      %p479 = pneg %p291
      %s480 = smul.u32 8, %s26
      %p481 = scmp.lt.s32.totalorder %s25, 1
      %s482 = scalar_select %p481, %s25, 1
      %p483 = scmp.lt.s32.totalorder %s480, 7
      %s484 = scalar_select %p483, %s480, 7
      %s485 = smul.addr %s482, 8
      %s486 = sadd.s32 %s484, %s485
      %s487 = smul.addr %s486, 8
      %s488 = scalar_lea.vmem %s10, %s487
      %s489 = smul.u32 16, %s26
      %s490 = ssub.s32 20, %s489
      %p491 = scmp.lt.s32.totalorder %s490, 16
      %s492 = scalar_select %p491, %s490, 16
      %s493 = smul.u32 64, %s492
      %s494 = smul.u32 %s493, 3
      %p495 = scmp.lt.s32.totalorder %s25, 1
      %s496 = scalar_select %p495, %s25, 1
      %p497 = scmp.lt.s32.totalorder %s489, 19
      %s498 = scalar_select %p497, %s489, 19
      %s499 = smul.addr %s498, 3
      %s500 = smul.addr %s496, 60
      %s501 = sadd.s32 %s499, %s500
      %s502 = smul.addr %s501, 4
      %s503 = scalar_lea.vmem %s0, %s502
      %s504 = smul.u32 16, %s26
      %s505 = ssub.s32 20, %s504
      %p506 = scmp.lt.s32.totalorder %s505, 16
      %s507 = scalar_select %p506, %s505, 16
      %s508 = smul.u32 64, %s507
      %s509 = smul.u32 %s508, 3
      %p510 = scmp.lt.s32.totalorder %s25, 1
      %s511 = scalar_select %p510, %s25, 1
      %p512 = scmp.lt.s32.totalorder %s26, 0
      %s513 = scalar_select %p512, %s26, 0
      %s514 = smul.addr %s513, 12
      %s515 = smul.addr %s511, 12
      %s516 = sadd.s32 %s514, %s515
      %s517 = smul.addr %s516, 4
      %s518 = scalar_lea.vmem %s1, %s517
      %s519 = smul.u32 16, %s26
      %s520 = ssub.s32 20, %s519
      %p521 = scmp.lt.s32.totalorder %s520, 16
      %s522 = scalar_select %p521, %s520, 16
      %s523 = smul.u32 64, %s522
      %s524 = smul.u32 %s523, 3
      %p525 = scmp.lt.s32.totalorder %s25, 1
      %s526 = scalar_select %p525, %s25, 1
      %p527 = scmp.lt.s32.totalorder %s519, 19
      %s528 = scalar_select %p527, %s519, 19
      %s529 = smul.addr %s528, 3
      %s530 = smul.addr %s526, 60
      %s531 = sadd.s32 %s529, %s530
      %s532 = smul.addr %s531, 4
      %s533 = scalar_lea.vmem %s2, %s532
      %s534 = smul.u32 16, %s26
      %s535 = ssub.s32 20, %s534
      %p536 = scmp.lt.s32.totalorder %s535, 16
      %s537 = scalar_select %p536, %s535, 16
      %s538 = smul.u32 64, %s537
      %s539 = smul.u32 %s538, 3
      %p540 = scmp.lt.s32.totalorder %s25, 1
      %s541 = scalar_select %p540, %s25, 1
      %p542 = scmp.lt.s32.totalorder %s26, 0
      %s543 = scalar_select %p542, %s26, 0
      %s544 = smul.addr %s543, 12
      %s545 = smul.addr %s541, 12
      %s546 = sadd.s32 %s544, %s545
      %s547 = smul.addr %s546, 4
      %s548 = scalar_lea.vmem %s3, %s547
      %s549 = smul.u32 8, %s26
      %p550 = scmp.lt.s32.totalorder %s25, 1
      %s551 = scalar_select %p550, %s25, 1
      %p552 = scmp.lt.s32.totalorder %s549, 7
      %s553 = scalar_select %p552, %s549, 7
      %s554 = smul.addr %s551, 8
      %s555 = sadd.s32 %s553, %s554
      %s556 = smul.addr %s555, 8
      %s557 = scalar_lea.vmem %s10, %s556
      %s558 = smul.u32 8, %s26
      %v560 = vld [vmem:[%s503] sm:$0xf]
      %v561 = vld [vmem:[%s503 + $0x4] sm:$0xf]
      %v562 = vld [vmem:[%s503 + $0x8] sm:$0xf]
      %v563 = vld [vmem:[%s503 + $0xc] sm:$0xf]
      %v564 = vld [vmem:[%s503 + $0x10] sm:$0xf]
      %v565 = vld [vmem:[%s503 + $0x14] sm:$0xf]
      %v566 = vld [vmem:[%s503 + $0x18] sm:$0xf]
      %v567 = vld [vmem:[%s503 + $0x1c] sm:$0xf]
      %v568 = vld [vmem:[%s503 + $0x20] sm:$0xf]
      %v569 = vld [vmem:[%s503 + $0x24] sm:$0xf]
      %v570 = vld [vmem:[%s503 + $0x28] sm:$0xf]
      %v571 = vld [vmem:[%s503 + $0x2c] sm:$0xf]
      %v572 = vld [vmem:[%s503 + $0x30] sm:$0xf]
      %v573 = vld [vmem:[%s503 + $0x34] sm:$0xf]
      %v574 = vld [vmem:[%s503 + $0x38] sm:$0xf]
      %v575 = vld [vmem:[%s503 + $0x3c] sm:$0xf]
      %v576 = vld [vmem:[%s503 + $0x40] sm:$0xf]
      %v577 = vld [vmem:[%s503 + $0x44] sm:$0xf]
      %v578 = vld [vmem:[%s503 + $0x48] sm:$0xf]
      %v579 = vld [vmem:[%s503 + $0x4c] sm:$0xf]
      %v580 = vld [vmem:[%s503 + $0x50] sm:$0xf]
      %v581 = vld [vmem:[%s503 + $0x54] sm:$0xf]
      %v582 = vld [vmem:[%s503 + $0x58] sm:$0xf]
      %v583 = vld [vmem:[%s503 + $0x5c] sm:$0xf]
      %v584 = vld [vmem:[%s503 + $0x60] sm:$0xf]
      %v585 = vld [vmem:[%s503 + $0x64] sm:$0xf]
      %v586 = vld [vmem:[%s503 + $0x68] sm:$0xf]
      %v587 = vld [vmem:[%s503 + $0x6c] sm:$0xf]
      %v588 = vld [vmem:[%s503 + $0x70] sm:$0xf]
      %v589 = vld [vmem:[%s503 + $0x74] sm:$0xf]
      %v590 = vld [vmem:[%s503 + $0x78] sm:$0xf]
      %v591 = vld [vmem:[%s503 + $0x7c] sm:$0xf]
      %v592 = vld [vmem:[%s503 + $0x80] sm:$0xf]
      %v593 = vld [vmem:[%s503 + $0x84] sm:$0xf]
      %v594 = vld [vmem:[%s503 + $0x88] sm:$0xf]
      %v595 = vld [vmem:[%s503 + $0x8c] sm:$0xf]
      %v596 = vld [vmem:[%s503 + $0x90] sm:$0xf]
      %v597 = vld [vmem:[%s503 + $0x94] sm:$0xf]
      %v598 = vld [vmem:[%s503 + $0x98] sm:$0xf]
      %v599 = vld [vmem:[%s503 + $0x9c] sm:$0xf]
      %v600 = vld [vmem:[%s503 + $0xa0] sm:$0xf]
      %v601 = vld [vmem:[%s503 + $0xa4] sm:$0xf]
      %v602 = vld [vmem:[%s503 + $0xa8] sm:$0xf]
      %v603 = vld [vmem:[%s503 + $0xac] sm:$0xf]
      %v604 = vld [vmem:[%s503 + $0xb0] sm:$0xf]
      %v605 = vld [vmem:[%s503 + $0xb4] sm:$0xf]
      %v606 = vld [vmem:[%s503 + $0xb8] sm:$0xf]
      %v607 = vld [vmem:[%s503 + $0xbc] sm:$0xf]
      %v608 = vld [vmem:[%s518] sm:$0xf]
      %v609 = vld [vmem:[%s518 + $0x4] sm:$0xf]
      %v610 = vld [vmem:[%s518 + $0x8] sm:$0xf]
      %v611 = vld [vmem:[%s518 + $0xc] sm:$0xf]
      %v612 = vld [vmem:[%s518 + $0x10] sm:$0xf]
      %v613 = vld [vmem:[%s518 + $0x14] sm:$0xf]
      %v614 = vld [vmem:[%s518 + $0x18] sm:$0xf]
      %v615 = vld [vmem:[%s518 + $0x1c] sm:$0xf]
      %v616 = vld [vmem:[%s518 + $0x20] sm:$0xf]
      %v617 = vld [vmem:[%s518 + $0x24] sm:$0xf]
      %v618 = vld [vmem:[%s518 + $0x28] sm:$0xf]
      %v619 = vld [vmem:[%s518 + $0x2c] sm:$0xf]
      %v620 = vld [vmem:[%s533] sm:$0xf]
      %v621 = vld [vmem:[%s533 + $0x4] sm:$0xf]
      %v622 = vld [vmem:[%s533 + $0x8] sm:$0xf]
      %v623 = vld [vmem:[%s533 + $0xc] sm:$0xf]
      %v624 = vld [vmem:[%s533 + $0x10] sm:$0xf]
      %v625 = vld [vmem:[%s533 + $0x14] sm:$0xf]
      %v626 = vld [vmem:[%s533 + $0x18] sm:$0xf]
      %v627 = vld [vmem:[%s533 + $0x1c] sm:$0xf]
      %v628 = vld [vmem:[%s533 + $0x20] sm:$0xf]
      %v629 = vld [vmem:[%s533 + $0x24] sm:$0xf]
      %v630 = vld [vmem:[%s533 + $0x28] sm:$0xf]
      %v631 = vld [vmem:[%s533 + $0x2c] sm:$0xf]
      %v632 = vld [vmem:[%s533 + $0x30] sm:$0xf]
      %v633 = vld [vmem:[%s533 + $0x34] sm:$0xf]
      %v634 = vld [vmem:[%s533 + $0x38] sm:$0xf]
      %v635 = vld [vmem:[%s533 + $0x3c] sm:$0xf]
      %v636 = vld [vmem:[%s533 + $0x40] sm:$0xf]
      %v637 = vld [vmem:[%s533 + $0x44] sm:$0xf]
      %v638 = vld [vmem:[%s533 + $0x48] sm:$0xf]
      %v639 = vld [vmem:[%s533 + $0x4c] sm:$0xf]
      %v640 = vld [vmem:[%s533 + $0x50] sm:$0xf]
      %v641 = vld [vmem:[%s533 + $0x54] sm:$0xf]
      %v642 = vld [vmem:[%s533 + $0x58] sm:$0xf]
      %v643 = vld [vmem:[%s533 + $0x5c] sm:$0xf]
      %v644 = vld [vmem:[%s533 + $0x60] sm:$0xf]
      %v645 = vld [vmem:[%s533 + $0x64] sm:$0xf]
      %v646 = vld [vmem:[%s533 + $0x68] sm:$0xf]
      %v647 = vld [vmem:[%s533 + $0x6c] sm:$0xf]
      %v648 = vld [vmem:[%s533 + $0x70] sm:$0xf]
      %v649 = vld [vmem:[%s533 + $0x74] sm:$0xf]
      %v650 = vld [vmem:[%s533 + $0x78] sm:$0xf]
      %v651 = vld [vmem:[%s533 + $0x7c] sm:$0xf]
      %v652 = vld [vmem:[%s533 + $0x80] sm:$0xf]
      %v653 = vld [vmem:[%s533 + $0x84] sm:$0xf]
      %v654 = vld [vmem:[%s533 + $0x88] sm:$0xf]
      %v655 = vld [vmem:[%s533 + $0x8c] sm:$0xf]
      %v656 = vld [vmem:[%s533 + $0x90] sm:$0xf]
      %v657 = vld [vmem:[%s533 + $0x94] sm:$0xf]
      %v658 = vld [vmem:[%s533 + $0x98] sm:$0xf]
      %v659 = vld [vmem:[%s533 + $0x9c] sm:$0xf]
      %v660 = vld [vmem:[%s533 + $0xa0] sm:$0xf]
      %v661 = vld [vmem:[%s533 + $0xa4] sm:$0xf]
      %v662 = vld [vmem:[%s533 + $0xa8] sm:$0xf]
      %v663 = vld [vmem:[%s533 + $0xac] sm:$0xf]
      %v664 = vld [vmem:[%s533 + $0xb0] sm:$0xf]
      %v665 = vld [vmem:[%s533 + $0xb4] sm:$0xf]
      %v666 = vld [vmem:[%s533 + $0xb8] sm:$0xf]
      %v667 = vld [vmem:[%s533 + $0xbc] sm:$0xf]
      %v668 = vld [vmem:[%s548] sm:$0xf]
      %v669 = vld [vmem:[%s548 + $0x4] sm:$0xf]
      %v670 = vld [vmem:[%s548 + $0x8] sm:$0xf]
      %v671 = vld [vmem:[%s548 + $0xc] sm:$0xf]
      %v672 = vld [vmem:[%s548 + $0x10] sm:$0xf]
      %v673 = vld [vmem:[%s548 + $0x14] sm:$0xf]
      %v674 = vld [vmem:[%s548 + $0x18] sm:$0xf]
      %v675 = vld [vmem:[%s548 + $0x1c] sm:$0xf]
      %v676 = vld [vmem:[%s548 + $0x20] sm:$0xf]
      %v677 = vld [vmem:[%s548 + $0x24] sm:$0xf]
      %v678 = vld [vmem:[%s548 + $0x28] sm:$0xf]
      %v679 = vld [vmem:[%s548 + $0x2c] sm:$0xf]
      %v680 = vld [vmem:[%s8] sm:$0x3]
      %vm681 = vsmask.f32 3328
      %vm682 = vsmask.f32 7440
      %vm683 = vmor %vm681, %vm682
      %v685 = vshrl.u32 %v563, 16
      %v687 = vrot.slane %v685, 4
      %v688 = vshll.u32 %v563, 16
      %v690 = vrot.slane %v688, 5
      %v691 = vor.u32 %v687, %v690
      %v692 = vrot.slane %v691, 4
      %v694 = vshll.u32 %v564, 16
      %v696 = vrot.slane %v694, 5
      %v697 = vsel %vm683, %v692, %v696
      %v699 = vshrl.u32 %v569, 16
      %v701 = vrot.slane %v699, 4
      %v702 = vshll.u32 %v569, 16
      %v704 = vrot.slane %v702, 5
      %v705 = vor.u32 %v701, %v704
      %v706 = vrot.slane %v705, 4
      %v708 = vshll.u32 %v570, 16
      %v710 = vrot.slane %v708, 5
      %v711 = vsel %vm683, %v706, %v710
      %v713 = vshrl.u32 %v575, 16
      %v715 = vrot.slane %v713, 4
      %v716 = vshll.u32 %v575, 16
      %v718 = vrot.slane %v716, 5
      %v719 = vor.u32 %v715, %v718
      %v720 = vrot.slane %v719, 4
      %v722 = vshll.u32 %v576, 16
      %v724 = vrot.slane %v722, 5
      %v725 = vsel %vm683, %v720, %v724
      %v727 = vshrl.u32 %v581, 16
      %v729 = vrot.slane %v727, 4
      %v730 = vshll.u32 %v581, 16
      %v732 = vrot.slane %v730, 5
      %v733 = vor.u32 %v729, %v732
      %v734 = vrot.slane %v733, 4
      %v736 = vshll.u32 %v582, 16
      %v738 = vrot.slane %v736, 5
      %v739 = vsel %vm683, %v734, %v738
      %v741 = vshrl.u32 %v587, 16
      %v743 = vrot.slane %v741, 4
      %v744 = vshll.u32 %v587, 16
      %v746 = vrot.slane %v744, 5
      %v747 = vor.u32 %v743, %v746
      %v748 = vrot.slane %v747, 4
      %v750 = vshll.u32 %v588, 16
      %v752 = vrot.slane %v750, 5
      %v753 = vsel %vm683, %v748, %v752
      %v755 = vshrl.u32 %v593, 16
      %v757 = vrot.slane %v755, 4
      %v758 = vshll.u32 %v593, 16
      %v760 = vrot.slane %v758, 5
      %v761 = vor.u32 %v757, %v760
      %v762 = vrot.slane %v761, 4
      %v764 = vshll.u32 %v594, 16
      %v766 = vrot.slane %v764, 5
      %v767 = vsel %vm683, %v762, %v766
      %v769 = vshrl.u32 %v599, 16
      %v771 = vrot.slane %v769, 4
      %v772 = vshll.u32 %v599, 16
      %v774 = vrot.slane %v772, 5
      %v775 = vor.u32 %v771, %v774
      %v776 = vrot.slane %v775, 4
      %v778 = vshll.u32 %v600, 16
      %v780 = vrot.slane %v778, 5
      %v781 = vsel %vm683, %v776, %v780
      %v783 = vshrl.u32 %v605, 16
      %v785 = vrot.slane %v783, 4
      %v786 = vshll.u32 %v605, 16
      %v788 = vrot.slane %v786, 5
      %v789 = vor.u32 %v785, %v788
      %v790 = vrot.slane %v789, 4
      %v792 = vshll.u32 %v606, 16
      %v794 = vrot.slane %v792, 5
      %v795 = vsel %vm683, %v790, %v794
      %s796 = scalar_lea.vmem %s8, 2
      %v797 = vld [vmem:[%s796] sm:$0x3]
      %v798 = vunpack.c.l.b16 %v697
      %v799 = vunpack.c.l.b16 %v711
      %v800 = vunpack.c.l.b16 %v725
      %v801 = vunpack.c.l.b16 %v739
      %v802 = vunpack.c.l.b16 %v753
      %v803 = vunpack.c.l.b16 %v767
      %v804 = vunpack.c.l.b16 %v781
      %v805 = vunpack.c.l.b16 %v795
      %v806 = vpack.c.b16 %v799, %v798
      %v807 = vpack.c.b16 %v801, %v800
      %v808 = vpack.c.b16 %v803, %v802
      %v809 = vpack.c.b16 %v805, %v804
      %vm810 = vcmask 31744
      %v812 = vsel %vm810, %v806, 0
      %v815 = vsel %vm810, %v807, 0
      %v818 = vsel %vm810, %v808, 0
      %v821 = vsel %vm810, %v809, 0
      %vm823 = vcmask 1041408
      %v825 = vsel %vm823, %v797, 0
      %827 = vmatprep.subr.bf16.mxu0 0
      %828 = vmatpush1.bf16.msra.mxu0 0
      %829 = vmatprep.subr.bf16.mxu0 0
      %830 = vmatpush1.bf16.msra.mxu0 0
      %831 = vmatprep.subr.bf16.mxu0 0
      %832 = vmatpush1.bf16.msra.mxu0 0
      %833 = vmatprep.subr.bf16.mxu0 0
      %834 = vmatpush1.bf16.msra.mxu0 0
      %835 = vmatprep.subr.bf16.mxu0 0
      %836 = vmatpush1.bf16.msra.mxu0 0
      %837 = vmatprep.subr.bf16.mxu0 0
      %838 = vmatpush1.bf16.msra.mxu0 0
      %839 = vmatprep.subr.bf16.mxu0 0
      %840 = vmatpush1.bf16.msra.mxu0 0
      %841 = vmatprep.subr.bf16.mxu0 0
      %842 = vmatpush1.bf16.msra.mxu0 %v825
      %843 = vmatprep.subr.bf16.mxu0 0
      %844 = vmatpush2.bf16.msra.mxu0 0
      %845 = vmatprep.subr.bf16.mxu0 0
      %846 = vmatpush2.bf16.msra.mxu0 0
      %847 = vmatprep.subr.bf16.mxu0 0
      %848 = vmatpush2.bf16.msra.mxu0 0
      %849 = vmatprep.subr.bf16.mxu0 0
      %850 = vmatpush2.bf16.msra.mxu0 0
      %851 = vmatprep.subr.bf16.mxu0 0
      %852 = vmatpush2.bf16.msra.mxu0 0
      %853 = vmatprep.subr.bf16.mxu0 0
      %854 = vmatpush2.bf16.msra.mxu0 0
      %855 = vmatprep.subr.bf16.mxu0 0
      %856 = vmatpush2.bf16.msra.mxu0 0
      %857 = vmatprep.subr.bf16.mxu0 0
      %858 = vmatpush2.bf16.msra.mxu0 0
      %859 = vmatprep.mubr.bf16.mxu0 0
      %860 = vmatmul.mubr.bf16.gmra.mxu0 %v812
      %v861 = vpop.f32.mrf.mxu0
      %v862 = vadd.f32 0.0, %v861
      %v863 = vpop.f32.mrf.mxu0
      %v864 = vpop.f32.mrf.mxu0
      %v865 = vadd.f32 0.0, %v864
      %v866 = vpop.f32.mrf.mxu0
      %867 = vmatprep.mubr.bf16.mxu0 0
      %868 = vmatmul.mubr.bf16.gmra.mxu0 %v815
      %v869 = vpop.f32.mrf.mxu0
      %v870 = vadd.f32 0.0, %v869
      %v871 = vpop.f32.mrf.mxu0
      %v872 = vpop.f32.mrf.mxu0
      %v873 = vadd.f32 0.0, %v872
      %v874 = vpop.f32.mrf.mxu0
      %875 = vmatprep.mubr.bf16.mxu0 0
      %876 = vmatmul.mubr.bf16.gmra.mxu0 %v818
      %v877 = vpop.f32.mrf.mxu0
      %v878 = vadd.f32 0.0, %v877
      %v879 = vpop.f32.mrf.mxu0
      %v880 = vpop.f32.mrf.mxu0
      %v881 = vadd.f32 0.0, %v880
      %v882 = vpop.f32.mrf.mxu0
      %883 = vmatprep.mubr.bf16.mxu0 0
      %884 = vmatmul.mubr.bf16.gmra.mxu0 %v821
      %v885 = vpop.f32.mrf.mxu0
      %v886 = vadd.f32 0.0, %v885
      %v887 = vpop.f32.mrf.mxu0
      %v888 = vpop.f32.mrf.mxu0
      %v889 = vadd.f32 0.0, %v888
      %v890 = vpop.f32.mrf.mxu0
      %891 = vdwg.mxu0
      %v900 = vunpack.c.l.b16 %v623
      %v901 = vunpack.c.l.b16 %v629
      %v902 = vunpack.c.l.b16 %v635
      %v903 = vunpack.c.l.b16 %v641
      %v904 = vunpack.c.l.b16 %v647
      %v905 = vunpack.c.l.b16 %v653
      %v906 = vunpack.c.l.b16 %v659
      %v907 = vunpack.c.l.b16 %v665
      %v908 = vpack.c.b16 %v901, %v900
      %v909 = vpack.c.b16 %v903, %v902
      %v910 = vpack.c.b16 %v905, %v904
      %v911 = vpack.c.b16 %v907, %v906
      %v913 = vsel %vm810, %v908, 0
      %v916 = vsel %vm810, %v909, 0
      %v919 = vsel %vm810, %v910, 0
      %v922 = vsel %vm810, %v911, 0
      %v925 = vsel %vm823, %v680, 0
      %927 = vmatprep.subr.bf16.mxu0 0
      %928 = vmatpush1.bf16.msra.mxu0 0
      %929 = vmatprep.subr.bf16.mxu0 0
      %930 = vmatpush1.bf16.msra.mxu0 0
      %931 = vmatprep.subr.bf16.mxu0 0
      %932 = vmatpush1.bf16.msra.mxu0 0
      %933 = vmatprep.subr.bf16.mxu0 0
      %934 = vmatpush1.bf16.msra.mxu0 0
      %935 = vmatprep.subr.bf16.mxu0 0
      %936 = vmatpush1.bf16.msra.mxu0 0
      %937 = vmatprep.subr.bf16.mxu0 0
      %938 = vmatpush1.bf16.msra.mxu0 0
      %939 = vmatprep.subr.bf16.mxu0 0
      %940 = vmatpush1.bf16.msra.mxu0 0
      %941 = vmatprep.subr.bf16.mxu0 0
      %942 = vmatpush1.bf16.msra.mxu0 %v925
      %943 = vmatprep.subr.bf16.mxu0 0
      %944 = vmatpush2.bf16.msra.mxu0 0
      %945 = vmatprep.subr.bf16.mxu0 0
      %946 = vmatpush2.bf16.msra.mxu0 0
      %947 = vmatprep.subr.bf16.mxu0 0
      %948 = vmatpush2.bf16.msra.mxu0 0
      %949 = vmatprep.subr.bf16.mxu0 0
      %950 = vmatpush2.bf16.msra.mxu0 0
      %951 = vmatprep.subr.bf16.mxu0 0
      %952 = vmatpush2.bf16.msra.mxu0 0
      %953 = vmatprep.subr.bf16.mxu0 0
      %954 = vmatpush2.bf16.msra.mxu0 0
      %955 = vmatprep.subr.bf16.mxu0 0
      %956 = vmatpush2.bf16.msra.mxu0 0
      %957 = vmatprep.subr.bf16.mxu0 0
      %958 = vmatpush2.bf16.msra.mxu0 0
      %959 = vmatprep.mubr.bf16.mxu0 0
      %960 = vmatmul.mubr.bf16.gmra.mxu0 %v913
      %v961 = vpop.f32.mrf.mxu0
      %v962 = vadd.f32 %v862, %v961
      %v963 = vpop.f32.mrf.mxu0
      %v964 = vpop.f32.mrf.mxu0
      %v965 = vadd.f32 %v865, %v964
      %v966 = vpop.f32.mrf.mxu0
      %967 = vmatprep.mubr.bf16.mxu0 0
      %968 = vmatmul.mubr.bf16.gmra.mxu0 %v916
      %v969 = vpop.f32.mrf.mxu0
      %v970 = vadd.f32 %v870, %v969
      %v971 = vpop.f32.mrf.mxu0
      %v972 = vpop.f32.mrf.mxu0
      %v973 = vadd.f32 %v873, %v972
      %v974 = vpop.f32.mrf.mxu0
      %975 = vmatprep.mubr.bf16.mxu0 0
      %976 = vmatmul.mubr.bf16.gmra.mxu0 %v919
      %v977 = vpop.f32.mrf.mxu0
      %v978 = vadd.f32 %v878, %v977
      %v979 = vpop.f32.mrf.mxu0
      %v980 = vpop.f32.mrf.mxu0
      %v981 = vadd.f32 %v881, %v980
      %v982 = vpop.f32.mrf.mxu0
      %983 = vmatprep.mubr.bf16.mxu0 0
      %984 = vmatmul.mubr.bf16.gmra.mxu0 %v922
      %v985 = vpop.f32.mrf.mxu0
      %v986 = vadd.f32 %v886, %v985
      %v987 = vpop.f32.mrf.mxu0
      %v988 = vpop.f32.mrf.mxu0
      %v989 = vadd.f32 %v889, %v988
      %v990 = vpop.f32.mrf.mxu0
      %991 = vdwg.mxu0
      %v993 = vshrl.u32 %v623, 16
      %v995 = vrot.slane %v993, 4
      %v996 = vshll.u32 %v623, 16
      %v998 = vrot.slane %v996, 5
      %v999 = vor.u32 %v995, %v998
      %v1000 = vrot.slane %v999, 4
      %v1002 = vshll.u32 %v624, 16
      %v1004 = vrot.slane %v1002, 5
      %v1005 = vsel %vm683, %v1000, %v1004
      %v1007 = vshrl.u32 %v629, 16
      %v1009 = vrot.slane %v1007, 4
      %v1010 = vshll.u32 %v629, 16
      %v1012 = vrot.slane %v1010, 5
      %v1013 = vor.u32 %v1009, %v1012
      %v1014 = vrot.slane %v1013, 4
      %v1016 = vshll.u32 %v630, 16
      %v1018 = vrot.slane %v1016, 5
      %v1019 = vsel %vm683, %v1014, %v1018
      %v1021 = vshrl.u32 %v635, 16
      %v1023 = vrot.slane %v1021, 4
      %v1024 = vshll.u32 %v635, 16
      %v1026 = vrot.slane %v1024, 5
      %v1027 = vor.u32 %v1023, %v1026
      %v1028 = vrot.slane %v1027, 4
      %v1030 = vshll.u32 %v636, 16
      %v1032 = vrot.slane %v1030, 5
      %v1033 = vsel %vm683, %v1028, %v1032
      %v1035 = vshrl.u32 %v641, 16
      %v1037 = vrot.slane %v1035, 4
      %v1038 = vshll.u32 %v641, 16
      %v1040 = vrot.slane %v1038, 5
      %v1041 = vor.u32 %v1037, %v1040
      %v1042 = vrot.slane %v1041, 4
      %v1044 = vshll.u32 %v642, 16
      %v1046 = vrot.slane %v1044, 5
      %v1047 = vsel %vm683, %v1042, %v1046
      %v1049 = vshrl.u32 %v647, 16
      %v1051 = vrot.slane %v1049, 4
      %v1052 = vshll.u32 %v647, 16
      %v1054 = vrot.slane %v1052, 5
      %v1055 = vor.u32 %v1051, %v1054
      %v1056 = vrot.slane %v1055, 4
      %v1058 = vshll.u32 %v648, 16
      %v1060 = vrot.slane %v1058, 5
      %v1061 = vsel %vm683, %v1056, %v1060
      %v1063 = vshrl.u32 %v653, 16
      %v1065 = vrot.slane %v1063, 4
      %v1066 = vshll.u32 %v653, 16
      %v1068 = vrot.slane %v1066, 5
      %v1069 = vor.u32 %v1065, %v1068
      %v1070 = vrot.slane %v1069, 4
      %v1072 = vshll.u32 %v654, 16
      %v1074 = vrot.slane %v1072, 5
      %v1075 = vsel %vm683, %v1070, %v1074
      %v1077 = vshrl.u32 %v659, 16
      %v1079 = vrot.slane %v1077, 4
      %v1080 = vshll.u32 %v659, 16
      %v1082 = vrot.slane %v1080, 5
      %v1083 = vor.u32 %v1079, %v1082
      %v1084 = vrot.slane %v1083, 4
      %v1086 = vshll.u32 %v660, 16
      %v1088 = vrot.slane %v1086, 5
      %v1089 = vsel %vm683, %v1084, %v1088
      %v1091 = vshrl.u32 %v665, 16
      %v1093 = vrot.slane %v1091, 4
      %v1094 = vshll.u32 %v665, 16
      %v1096 = vrot.slane %v1094, 5
      %v1097 = vor.u32 %v1093, %v1096
      %v1098 = vrot.slane %v1097, 4
      %v1100 = vshll.u32 %v666, 16
      %v1102 = vrot.slane %v1100, 5
      %v1103 = vsel %vm683, %v1098, %v1102
      %s1104 = scalar_lea.vmem %s8, 4
      %v1105 = vld [vmem:[%s1104] sm:$0x3]
      %v1106 = vunpack.c.l.b16 %v1005
      %v1107 = vunpack.c.l.b16 %v1019
      %v1108 = vunpack.c.l.b16 %v1033
      %v1109 = vunpack.c.l.b16 %v1047
      %v1110 = vunpack.c.l.b16 %v1061
      %v1111 = vunpack.c.l.b16 %v1075
      %v1112 = vunpack.c.l.b16 %v1089
      %v1113 = vunpack.c.l.b16 %v1103
      %v1114 = vpack.c.b16 %v1107, %v1106
      %v1115 = vpack.c.b16 %v1109, %v1108
      %v1116 = vpack.c.b16 %v1111, %v1110
      %v1117 = vpack.c.b16 %v1113, %v1112
      %v1119 = vsel %vm810, %v1114, 0
      %v1122 = vsel %vm810, %v1115, 0
      %v1125 = vsel %vm810, %v1116, 0
      %v1128 = vsel %vm810, %v1117, 0
      %v1131 = vsel %vm823, %v1105, 0
      %1133 = vmatprep.subr.bf16.mxu0 0
      %1134 = vmatpush1.bf16.msra.mxu0 0
      %1135 = vmatprep.subr.bf16.mxu0 0
      %1136 = vmatpush1.bf16.msra.mxu0 0
      %1137 = vmatprep.subr.bf16.mxu0 0
      %1138 = vmatpush1.bf16.msra.mxu0 0
      %1139 = vmatprep.subr.bf16.mxu0 0
      %1140 = vmatpush1.bf16.msra.mxu0 0
      %1141 = vmatprep.subr.bf16.mxu0 0
      %1142 = vmatpush1.bf16.msra.mxu0 0
      %1143 = vmatprep.subr.bf16.mxu0 0
      %1144 = vmatpush1.bf16.msra.mxu0 0
      %1145 = vmatprep.subr.bf16.mxu0 0
      %1146 = vmatpush1.bf16.msra.mxu0 0
      %1147 = vmatprep.subr.bf16.mxu0 0
      %1148 = vmatpush1.bf16.msra.mxu0 %v1131
      %1149 = vmatprep.subr.bf16.mxu0 0
      %1150 = vmatpush2.bf16.msra.mxu0 0
      %1151 = vmatprep.subr.bf16.mxu0 0
      %1152 = vmatpush2.bf16.msra.mxu0 0
      %1153 = vmatprep.subr.bf16.mxu0 0
      %1154 = vmatpush2.bf16.msra.mxu0 0
      %1155 = vmatprep.subr.bf16.mxu0 0
      %1156 = vmatpush2.bf16.msra.mxu0 0
      %1157 = vmatprep.subr.bf16.mxu0 0
      %1158 = vmatpush2.bf16.msra.mxu0 0
      %1159 = vmatprep.subr.bf16.mxu0 0
      %1160 = vmatpush2.bf16.msra.mxu0 0
      %1161 = vmatprep.subr.bf16.mxu0 0
      %1162 = vmatpush2.bf16.msra.mxu0 0
      %1163 = vmatprep.subr.bf16.mxu0 0
      %1164 = vmatpush2.bf16.msra.mxu0 0
      %1165 = vmatprep.mubr.bf16.mxu0 0
      %1166 = vmatmul.mubr.bf16.gmra.mxu0 %v1119
      %v1167 = vpop.f32.mrf.mxu0
      %v1168 = vadd.f32 0.0, %v1167
      %v1169 = vpop.f32.mrf.mxu0
      %v1170 = vpop.f32.mrf.mxu0
      %v1171 = vadd.f32 0.0, %v1170
      %v1172 = vpop.f32.mrf.mxu0
      %1173 = vmatprep.mubr.bf16.mxu0 0
      %1174 = vmatmul.mubr.bf16.gmra.mxu0 %v1122
      %v1175 = vpop.f32.mrf.mxu0
      %v1176 = vadd.f32 0.0, %v1175
      %v1177 = vpop.f32.mrf.mxu0
      %v1178 = vpop.f32.mrf.mxu0
      %v1179 = vadd.f32 0.0, %v1178
      %v1180 = vpop.f32.mrf.mxu0
      %1181 = vmatprep.mubr.bf16.mxu0 0
      %1182 = vmatmul.mubr.bf16.gmra.mxu0 %v1125
      %v1183 = vpop.f32.mrf.mxu0
      %v1184 = vadd.f32 0.0, %v1183
      %v1185 = vpop.f32.mrf.mxu0
      %v1186 = vpop.f32.mrf.mxu0
      %v1187 = vadd.f32 0.0, %v1186
      %v1188 = vpop.f32.mrf.mxu0
      %1189 = vmatprep.mubr.bf16.mxu0 0
      %1190 = vmatmul.mubr.bf16.gmra.mxu0 %v1128
      %v1191 = vpop.f32.mrf.mxu0
      %v1192 = vadd.f32 0.0, %v1191
      %v1193 = vpop.f32.mrf.mxu0
      %v1194 = vpop.f32.mrf.mxu0
      %v1195 = vadd.f32 0.0, %v1194
      %v1196 = vpop.f32.mrf.mxu0
      %1197 = vdwg.mxu0
      %v1198 = vadd.f32 %v962, %v1168
      %v1199 = vadd.f32 %v965, %v1171
      %v1200 = vadd.f32 %v970, %v1176
      %v1201 = vadd.f32 %v973, %v1179
      %v1202 = vadd.f32 %v978, %v1184
      %v1203 = vadd.f32 %v981, %v1187
      %v1204 = vadd.f32 %v986, %v1192
      %v1205 = vadd.f32 %v989, %v1195
      %s1206 = scalar_lea.vmem %s8, 6
      %v1207 = vld [vmem:[%s1206] sm:$0x3]
      %v1216 = vunpack.c.l.b16 %v626
      %v1217 = vunpack.c.l.b16 %v632
      %v1218 = vunpack.c.l.b16 %v638
      %v1219 = vunpack.c.l.b16 %v644
      %v1220 = vunpack.c.l.b16 %v650
      %v1221 = vunpack.c.l.b16 %v656
      %v1222 = vunpack.c.l.b16 %v662
      %v1223 = vunpack.c.l.b16 %v668
      %v1224 = vpack.c.b16 %v1217, %v1216
      %v1225 = vpack.c.b16 %v1219, %v1218
      %v1226 = vpack.c.b16 %v1221, %v1220
      %v1227 = vpack.c.b16 %v1223, %v1222
      %v1229 = vsel %vm810, %v1224, 0
      %v1232 = vsel %vm810, %v1225, 0
      %v1235 = vsel %vm810, %v1226, 0
      %v1238 = vsel %vm810, %v1227, 0
      %v1241 = vsel %vm823, %v1207, 0
      %1243 = vmatprep.subr.bf16.mxu0 0
      %1244 = vmatpush1.bf16.msra.mxu0 0
      %1245 = vmatprep.subr.bf16.mxu0 0
      %1246 = vmatpush1.bf16.msra.mxu0 0
      %1247 = vmatprep.subr.bf16.mxu0 0
      %1248 = vmatpush1.bf16.msra.mxu0 0
      %1249 = vmatprep.subr.bf16.mxu0 0
      %1250 = vmatpush1.bf16.msra.mxu0 0
      %1251 = vmatprep.subr.bf16.mxu0 0
      %1252 = vmatpush1.bf16.msra.mxu0 0
      %1253 = vmatprep.subr.bf16.mxu0 0
      %1254 = vmatpush1.bf16.msra.mxu0 0
      %1255 = vmatprep.subr.bf16.mxu0 0
      %1256 = vmatpush1.bf16.msra.mxu0 0
      %1257 = vmatprep.subr.bf16.mxu0 0
      %1258 = vmatpush1.bf16.msra.mxu0 %v1241
      %1259 = vmatprep.subr.bf16.mxu0 0
      %1260 = vmatpush2.bf16.msra.mxu0 0
      %1261 = vmatprep.subr.bf16.mxu0 0
      %1262 = vmatpush2.bf16.msra.mxu0 0
      %1263 = vmatprep.subr.bf16.mxu0 0
      %1264 = vmatpush2.bf16.msra.mxu0 0
      %1265 = vmatprep.subr.bf16.mxu0 0
      %1266 = vmatpush2.bf16.msra.mxu0 0
      %1267 = vmatprep.subr.bf16.mxu0 0
      %1268 = vmatpush2.bf16.msra.mxu0 0
      %1269 = vmatprep.subr.bf16.mxu0 0
      %1270 = vmatpush2.bf16.msra.mxu0 0
      %1271 = vmatprep.subr.bf16.mxu0 0
      %1272 = vmatpush2.bf16.msra.mxu0 0
      %1273 = vmatprep.subr.bf16.mxu0 0
      %1274 = vmatpush2.bf16.msra.mxu0 0
      %1275 = vmatprep.mubr.bf16.mxu0 0
      %1276 = vmatmul.mubr.bf16.gmra.mxu0 %v1229
      %v1277 = vpop.f32.mrf.mxu0
      %v1278 = vadd.f32 0.0, %v1277
      %v1279 = vpop.f32.mrf.mxu0
      %v1280 = vpop.f32.mrf.mxu0
      %v1281 = vadd.f32 0.0, %v1280
      %v1282 = vpop.f32.mrf.mxu0
      %1283 = vmatprep.mubr.bf16.mxu0 0
      %1284 = vmatmul.mubr.bf16.gmra.mxu0 %v1232
      %v1285 = vpop.f32.mrf.mxu0
      %v1286 = vadd.f32 0.0, %v1285
      %v1287 = vpop.f32.mrf.mxu0
      %v1288 = vpop.f32.mrf.mxu0
      %v1289 = vadd.f32 0.0, %v1288
      %v1290 = vpop.f32.mrf.mxu0
      %1291 = vmatprep.mubr.bf16.mxu0 0
      %1292 = vmatmul.mubr.bf16.gmra.mxu0 %v1235
      %v1293 = vpop.f32.mrf.mxu0
      %v1294 = vadd.f32 0.0, %v1293
      %v1295 = vpop.f32.mrf.mxu0
      %v1296 = vpop.f32.mrf.mxu0
      %v1297 = vadd.f32 0.0, %v1296
      %v1298 = vpop.f32.mrf.mxu0
      %1299 = vmatprep.mubr.bf16.mxu0 0
      %1300 = vmatmul.mubr.bf16.gmra.mxu0 %v1238
      %v1301 = vpop.f32.mrf.mxu0
      %v1302 = vadd.f32 0.0, %v1301
      %v1303 = vpop.f32.mrf.mxu0
      %v1304 = vpop.f32.mrf.mxu0
      %v1305 = vadd.f32 0.0, %v1304
      %v1306 = vpop.f32.mrf.mxu0
      %1307 = vdwg.mxu0
      %v1308 = vadd.f32 %v1198, %v1278
      %v1309 = vadd.f32 %v1199, %v1281
      %v1310 = vadd.f32 %v1200, %v1286
      %v1311 = vadd.f32 %v1201, %v1289
      %v1312 = vadd.f32 %v1202, %v1294
      %v1313 = vadd.f32 %v1203, %v1297
      %v1314 = vadd.f32 %v1204, %v1302
      %v1315 = vadd.f32 %v1205, %v1305
      %v1317 = vshrl.u32 %v566, 16
      %v1319 = vrot.slane %v1317, 4
      %v1320 = vshll.u32 %v566, 16
      %v1322 = vrot.slane %v1320, 5
      %v1323 = vor.u32 %v1319, %v1322
      %v1324 = vrot.slane %v1323, 4
      %v1326 = vshll.u32 %v567, 16
      %v1328 = vrot.slane %v1326, 5
      %v1329 = vsel %vm683, %v1324, %v1328
      %v1331 = vshrl.u32 %v572, 16
      %v1333 = vrot.slane %v1331, 4
      %v1334 = vshll.u32 %v572, 16
      %v1336 = vrot.slane %v1334, 5
      %v1337 = vor.u32 %v1333, %v1336
      %v1338 = vrot.slane %v1337, 4
      %v1340 = vshll.u32 %v573, 16
      %v1342 = vrot.slane %v1340, 5
      %v1343 = vsel %vm683, %v1338, %v1342
      %v1345 = vshrl.u32 %v578, 16
      %v1347 = vrot.slane %v1345, 4
      %v1348 = vshll.u32 %v578, 16
      %v1350 = vrot.slane %v1348, 5
      %v1351 = vor.u32 %v1347, %v1350
      %v1352 = vrot.slane %v1351, 4
      %v1354 = vshll.u32 %v579, 16
      %v1356 = vrot.slane %v1354, 5
      %v1357 = vsel %vm683, %v1352, %v1356
      %v1359 = vshrl.u32 %v584, 16
      %v1361 = vrot.slane %v1359, 4
      %v1362 = vshll.u32 %v584, 16
      %v1364 = vrot.slane %v1362, 5
      %v1365 = vor.u32 %v1361, %v1364
      %v1366 = vrot.slane %v1365, 4
      %v1368 = vshll.u32 %v585, 16
      %v1370 = vrot.slane %v1368, 5
      %v1371 = vsel %vm683, %v1366, %v1370
      %v1373 = vshrl.u32 %v590, 16
      %v1375 = vrot.slane %v1373, 4
      %v1376 = vshll.u32 %v590, 16
      %v1378 = vrot.slane %v1376, 5
      %v1379 = vor.u32 %v1375, %v1378
      %v1380 = vrot.slane %v1379, 4
      %v1382 = vshll.u32 %v591, 16
      %v1384 = vrot.slane %v1382, 5
      %v1385 = vsel %vm683, %v1380, %v1384
      %v1387 = vshrl.u32 %v596, 16
      %v1389 = vrot.slane %v1387, 4
      %v1390 = vshll.u32 %v596, 16
      %v1392 = vrot.slane %v1390, 5
      %v1393 = vor.u32 %v1389, %v1392
      %v1394 = vrot.slane %v1393, 4
      %v1396 = vshll.u32 %v597, 16
      %v1398 = vrot.slane %v1396, 5
      %v1399 = vsel %vm683, %v1394, %v1398
      %v1401 = vshrl.u32 %v602, 16
      %v1403 = vrot.slane %v1401, 4
      %v1404 = vshll.u32 %v602, 16
      %v1406 = vrot.slane %v1404, 5
      %v1407 = vor.u32 %v1403, %v1406
      %v1408 = vrot.slane %v1407, 4
      %v1410 = vshll.u32 %v603, 16
      %v1412 = vrot.slane %v1410, 5
      %v1413 = vsel %vm683, %v1408, %v1412
      %v1415 = vshrl.u32 %v608, 16
      %v1417 = vrot.slane %v1415, 4
      %v1418 = vshll.u32 %v608, 16
      %v1420 = vrot.slane %v1418, 5
      %v1421 = vor.u32 %v1417, %v1420
      %v1422 = vrot.slane %v1421, 4
      %v1424 = vshll.u32 %v609, 16
      %v1426 = vrot.slane %v1424, 5
      %v1427 = vsel %vm683, %v1422, %v1426
      %s1428 = scalar_lea.vmem %s8, 8
      %v1429 = vld [vmem:[%s1428] sm:$0x3]
      %v1430 = vunpack.c.l.b16 %v1329
      %v1431 = vunpack.c.l.b16 %v1343
      %v1432 = vunpack.c.l.b16 %v1357
      %v1433 = vunpack.c.l.b16 %v1371
      %v1434 = vunpack.c.l.b16 %v1385
      %v1435 = vunpack.c.l.b16 %v1399
      %v1436 = vunpack.c.l.b16 %v1413
      %v1437 = vunpack.c.l.b16 %v1427
      %v1438 = vpack.c.b16 %v1431, %v1430
      %v1439 = vpack.c.b16 %v1433, %v1432
      %v1440 = vpack.c.b16 %v1435, %v1434
      %v1441 = vpack.c.b16 %v1437, %v1436
      %v1443 = vsel %vm810, %v1438, 0
      %v1446 = vsel %vm810, %v1439, 0
      %v1449 = vsel %vm810, %v1440, 0
      %v1452 = vsel %vm810, %v1441, 0
      %v1455 = vsel %vm823, %v1429, 0
      %1457 = vmatprep.subr.bf16.mxu0 0
      %1458 = vmatpush1.bf16.msra.mxu0 0
      %1459 = vmatprep.subr.bf16.mxu0 0
      %1460 = vmatpush1.bf16.msra.mxu0 0
      %1461 = vmatprep.subr.bf16.mxu0 0
      %1462 = vmatpush1.bf16.msra.mxu0 0
      %1463 = vmatprep.subr.bf16.mxu0 0
      %1464 = vmatpush1.bf16.msra.mxu0 0
      %1465 = vmatprep.subr.bf16.mxu0 0
      %1466 = vmatpush1.bf16.msra.mxu0 0
      %1467 = vmatprep.subr.bf16.mxu0 0
      %1468 = vmatpush1.bf16.msra.mxu0 0
      %1469 = vmatprep.subr.bf16.mxu0 0
      %1470 = vmatpush1.bf16.msra.mxu0 0
      %1471 = vmatprep.subr.bf16.mxu0 0
      %1472 = vmatpush1.bf16.msra.mxu0 %v1455
      %1473 = vmatprep.subr.bf16.mxu0 0
      %1474 = vmatpush2.bf16.msra.mxu0 0
      %1475 = vmatprep.subr.bf16.mxu0 0
      %1476 = vmatpush2.bf16.msra.mxu0 0
      %1477 = vmatprep.subr.bf16.mxu0 0
      %1478 = vmatpush2.bf16.msra.mxu0 0
      %1479 = vmatprep.subr.bf16.mxu0 0
      %1480 = vmatpush2.bf16.msra.mxu0 0
      %1481 = vmatprep.subr.bf16.mxu0 0
      %1482 = vmatpush2.bf16.msra.mxu0 0
      %1483 = vmatprep.subr.bf16.mxu0 0
      %1484 = vmatpush2.bf16.msra.mxu0 0
      %1485 = vmatprep.subr.bf16.mxu0 0
      %1486 = vmatpush2.bf16.msra.mxu0 0
      %1487 = vmatprep.subr.bf16.mxu0 0
      %1488 = vmatpush2.bf16.msra.mxu0 0
      %1489 = vmatprep.mubr.bf16.mxu0 0
      %1490 = vmatmul.mubr.bf16.gmra.mxu0 %v1443
      %v1491 = vpop.f32.mrf.mxu0
      %v1492 = vadd.f32 0.0, %v1491
      %v1493 = vpop.f32.mrf.mxu0
      %v1494 = vpop.f32.mrf.mxu0
      %v1495 = vadd.f32 0.0, %v1494
      %v1496 = vpop.f32.mrf.mxu0
      %1497 = vmatprep.mubr.bf16.mxu0 0
      %1498 = vmatmul.mubr.bf16.gmra.mxu0 %v1446
      %v1499 = vpop.f32.mrf.mxu0
      %v1500 = vadd.f32 0.0, %v1499
      %v1501 = vpop.f32.mrf.mxu0
      %v1502 = vpop.f32.mrf.mxu0
      %v1503 = vadd.f32 0.0, %v1502
      %v1504 = vpop.f32.mrf.mxu0
      %1505 = vmatprep.mubr.bf16.mxu0 0
      %1506 = vmatmul.mubr.bf16.gmra.mxu0 %v1449
      %v1507 = vpop.f32.mrf.mxu0
      %v1508 = vadd.f32 0.0, %v1507
      %v1509 = vpop.f32.mrf.mxu0
      %v1510 = vpop.f32.mrf.mxu0
      %v1511 = vadd.f32 0.0, %v1510
      %v1512 = vpop.f32.mrf.mxu0
      %1513 = vmatprep.mubr.bf16.mxu0 0
      %1514 = vmatmul.mubr.bf16.gmra.mxu0 %v1452
      %v1515 = vpop.f32.mrf.mxu0
      %v1516 = vadd.f32 0.0, %v1515
      %v1517 = vpop.f32.mrf.mxu0
      %v1518 = vpop.f32.mrf.mxu0
      %v1519 = vadd.f32 0.0, %v1518
      %v1520 = vpop.f32.mrf.mxu0
      %1521 = vdwg.mxu0
      %v1522 = vadd.f32 %v1308, %v1492
      %v1523 = vadd.f32 %v1309, %v1495
      %v1524 = vadd.f32 %v1310, %v1500
      %v1525 = vadd.f32 %v1311, %v1503
      %v1526 = vadd.f32 %v1312, %v1508
      %v1527 = vadd.f32 %v1313, %v1511
      %v1528 = vadd.f32 %v1314, %v1516
      %v1529 = vadd.f32 %v1315, %v1519
      %v1531 = vshrl.u32 %v626, 16
      %v1533 = vrot.slane %v1531, 4
      %v1534 = vshll.u32 %v626, 16
      %v1536 = vrot.slane %v1534, 5
      %v1537 = vor.u32 %v1533, %v1536
      %v1538 = vrot.slane %v1537, 4
      %v1540 = vshll.u32 %v627, 16
      %v1542 = vrot.slane %v1540, 5
      %v1543 = vsel %vm683, %v1538, %v1542
      %v1545 = vshrl.u32 %v632, 16
      %v1547 = vrot.slane %v1545, 4
      %v1548 = vshll.u32 %v632, 16
      %v1550 = vrot.slane %v1548, 5
      %v1551 = vor.u32 %v1547, %v1550
      %v1552 = vrot.slane %v1551, 4
      %v1554 = vshll.u32 %v633, 16
      %v1556 = vrot.slane %v1554, 5
      %v1557 = vsel %vm683, %v1552, %v1556
      %v1559 = vshrl.u32 %v638, 16
      %v1561 = vrot.slane %v1559, 4
      %v1562 = vshll.u32 %v638, 16
      %v1564 = vrot.slane %v1562, 5
      %v1565 = vor.u32 %v1561, %v1564
      %v1566 = vrot.slane %v1565, 4
      %v1568 = vshll.u32 %v639, 16
      %v1570 = vrot.slane %v1568, 5
      %v1571 = vsel %vm683, %v1566, %v1570
      %v1573 = vshrl.u32 %v644, 16
      %v1575 = vrot.slane %v1573, 4
      %v1576 = vshll.u32 %v644, 16
      %v1578 = vrot.slane %v1576, 5
      %v1579 = vor.u32 %v1575, %v1578
      %v1580 = vrot.slane %v1579, 4
      %v1582 = vshll.u32 %v645, 16
      %v1584 = vrot.slane %v1582, 5
      %v1585 = vsel %vm683, %v1580, %v1584
      %v1587 = vshrl.u32 %v650, 16
      %v1589 = vrot.slane %v1587, 4
      %v1590 = vshll.u32 %v650, 16
      %v1592 = vrot.slane %v1590, 5
      %v1593 = vor.u32 %v1589, %v1592
      %v1594 = vrot.slane %v1593, 4
      %v1596 = vshll.u32 %v651, 16
      %v1598 = vrot.slane %v1596, 5
      %v1599 = vsel %vm683, %v1594, %v1598
      %v1601 = vshrl.u32 %v656, 16
      %v1603 = vrot.slane %v1601, 4
      %v1604 = vshll.u32 %v656, 16
      %v1606 = vrot.slane %v1604, 5
      %v1607 = vor.u32 %v1603, %v1606
      %v1608 = vrot.slane %v1607, 4
      %v1610 = vshll.u32 %v657, 16
      %v1612 = vrot.slane %v1610, 5
      %v1613 = vsel %vm683, %v1608, %v1612
      %v1615 = vshrl.u32 %v662, 16
      %v1617 = vrot.slane %v1615, 4
      %v1618 = vshll.u32 %v662, 16
      %v1620 = vrot.slane %v1618, 5
      %v1621 = vor.u32 %v1617, %v1620
      %v1622 = vrot.slane %v1621, 4
      %v1624 = vshll.u32 %v663, 16
      %v1626 = vrot.slane %v1624, 5
      %v1627 = vsel %vm683, %v1622, %v1626
      %v1629 = vshrl.u32 %v668, 16
      %v1631 = vrot.slane %v1629, 4
      %v1632 = vshll.u32 %v668, 16
      %v1634 = vrot.slane %v1632, 5
      %v1635 = vor.u32 %v1631, %v1634
      %v1636 = vrot.slane %v1635, 4
      %v1638 = vshll.u32 %v669, 16
      %v1640 = vrot.slane %v1638, 5
      %v1641 = vsel %vm683, %v1636, %v1640
      %s1642 = scalar_lea.vmem %s8, 10
      %v1643 = vld [vmem:[%s1642] sm:$0x3]
      %v1644 = vunpack.c.l.b16 %v1543
      %v1645 = vunpack.c.l.b16 %v1557
      %v1646 = vunpack.c.l.b16 %v1571
      %v1647 = vunpack.c.l.b16 %v1585
      %v1648 = vunpack.c.l.b16 %v1599
      %v1649 = vunpack.c.l.b16 %v1613
      %v1650 = vunpack.c.l.b16 %v1627
      %v1651 = vunpack.c.l.b16 %v1641
      %v1652 = vpack.c.b16 %v1645, %v1644
      %v1653 = vpack.c.b16 %v1647, %v1646
      %v1654 = vpack.c.b16 %v1649, %v1648
      %v1655 = vpack.c.b16 %v1651, %v1650
      %v1657 = vsel %vm810, %v1652, 0
      %v1660 = vsel %vm810, %v1653, 0
      %v1663 = vsel %vm810, %v1654, 0
      %v1666 = vsel %vm810, %v1655, 0
      %v1669 = vsel %vm823, %v1643, 0
      %1671 = vmatprep.subr.bf16.mxu0 0
      %1672 = vmatpush1.bf16.msra.mxu0 0
      %1673 = vmatprep.subr.bf16.mxu0 0
      %1674 = vmatpush1.bf16.msra.mxu0 0
      %1675 = vmatprep.subr.bf16.mxu0 0
      %1676 = vmatpush1.bf16.msra.mxu0 0
      %1677 = vmatprep.subr.bf16.mxu0 0
      %1678 = vmatpush1.bf16.msra.mxu0 0
      %1679 = vmatprep.subr.bf16.mxu0 0
      %1680 = vmatpush1.bf16.msra.mxu0 0
      %1681 = vmatprep.subr.bf16.mxu0 0
      %1682 = vmatpush1.bf16.msra.mxu0 0
      %1683 = vmatprep.subr.bf16.mxu0 0
      %1684 = vmatpush1.bf16.msra.mxu0 0
      %1685 = vmatprep.subr.bf16.mxu0 0
      %1686 = vmatpush1.bf16.msra.mxu0 %v1669
      %1687 = vmatprep.subr.bf16.mxu0 0
      %1688 = vmatpush2.bf16.msra.mxu0 0
      %1689 = vmatprep.subr.bf16.mxu0 0
      %1690 = vmatpush2.bf16.msra.mxu0 0
      %1691 = vmatprep.subr.bf16.mxu0 0
      %1692 = vmatpush2.bf16.msra.mxu0 0
      %1693 = vmatprep.subr.bf16.mxu0 0
      %1694 = vmatpush2.bf16.msra.mxu0 0
      %1695 = vmatprep.subr.bf16.mxu0 0
      %1696 = vmatpush2.bf16.msra.mxu0 0
      %1697 = vmatprep.subr.bf16.mxu0 0
      %1698 = vmatpush2.bf16.msra.mxu0 0
      %1699 = vmatprep.subr.bf16.mxu0 0
      %1700 = vmatpush2.bf16.msra.mxu0 0
      %1701 = vmatprep.subr.bf16.mxu0 0
      %1702 = vmatpush2.bf16.msra.mxu0 0
      %1703 = vmatprep.mubr.bf16.mxu0 0
      %1704 = vmatmul.mubr.bf16.gmra.mxu0 %v1657
      %v1705 = vpop.f32.mrf.mxu0
      %v1706 = vadd.f32 0.0, %v1705
      %v1707 = vpop.f32.mrf.mxu0
      %v1708 = vpop.f32.mrf.mxu0
      %v1709 = vadd.f32 0.0, %v1708
      %v1710 = vpop.f32.mrf.mxu0
      %1711 = vmatprep.mubr.bf16.mxu0 0
      %1712 = vmatmul.mubr.bf16.gmra.mxu0 %v1660
      %v1713 = vpop.f32.mrf.mxu0
      %v1714 = vadd.f32 0.0, %v1713
      %v1715 = vpop.f32.mrf.mxu0
      %v1716 = vpop.f32.mrf.mxu0
      %v1717 = vadd.f32 0.0, %v1716
      %v1718 = vpop.f32.mrf.mxu0
      %1719 = vmatprep.mubr.bf16.mxu0 0
      %1720 = vmatmul.mubr.bf16.gmra.mxu0 %v1663
      %v1721 = vpop.f32.mrf.mxu0
      %v1722 = vadd.f32 0.0, %v1721
      %v1723 = vpop.f32.mrf.mxu0
      %v1724 = vpop.f32.mrf.mxu0
      %v1725 = vadd.f32 0.0, %v1724
      %v1726 = vpop.f32.mrf.mxu0
      %1727 = vmatprep.mubr.bf16.mxu0 0
      %1728 = vmatmul.mubr.bf16.gmra.mxu0 %v1666
      %v1729 = vpop.f32.mrf.mxu0
      %v1730 = vadd.f32 0.0, %v1729
      %v1731 = vpop.f32.mrf.mxu0
      %v1732 = vpop.f32.mrf.mxu0
      %v1733 = vadd.f32 0.0, %v1732
      %v1734 = vpop.f32.mrf.mxu0
      %1735 = vdwg.mxu0
      %v1736 = vadd.f32 %v1522, %v1706
      %v1737 = vadd.f32 %v1523, %v1709
      %v1738 = vadd.f32 %v1524, %v1714
      %v1739 = vadd.f32 %v1525, %v1717
      %v1740 = vadd.f32 %v1526, %v1722
      %v1741 = vadd.f32 %v1527, %v1725
      %v1742 = vadd.f32 %v1528, %v1730
      %v1743 = vadd.f32 %v1529, %v1733
      %s1744 = scalar_lea.vmem %s8, 12
      %v1745 = vld [vmem:[%s1744] sm:$0x3]
      %v1747 = vunpack.c.l.b16 %v671
      %v1748 = vpack.c.b16 %v902, %v901
      %v1749 = vpack.c.b16 %v904, %v903
      %v1750 = vpack.c.b16 %v906, %v905
      %v1751 = vpack.c.b16 %v1747, %v907
      %v1753 = vsel %vm810, %v1748, 0
      %v1756 = vsel %vm810, %v1749, 0
      %v1759 = vsel %vm810, %v1750, 0
      %v1762 = vsel %vm810, %v1751, 0
      %v1765 = vsel %vm823, %v1745, 0
      %1767 = vmatprep.subr.bf16.mxu0 0
      %1768 = vmatpush1.bf16.msra.mxu0 0
      %1769 = vmatprep.subr.bf16.mxu0 0
      %1770 = vmatpush1.bf16.msra.mxu0 0
      %1771 = vmatprep.subr.bf16.mxu0 0
      %1772 = vmatpush1.bf16.msra.mxu0 0
      %1773 = vmatprep.subr.bf16.mxu0 0
      %1774 = vmatpush1.bf16.msra.mxu0 0
      %1775 = vmatprep.subr.bf16.mxu0 0
      %1776 = vmatpush1.bf16.msra.mxu0 0
      %1777 = vmatprep.subr.bf16.mxu0 0
      %1778 = vmatpush1.bf16.msra.mxu0 0
      %1779 = vmatprep.subr.bf16.mxu0 0
      %1780 = vmatpush1.bf16.msra.mxu0 0
      %1781 = vmatprep.subr.bf16.mxu0 0
      %1782 = vmatpush1.bf16.msra.mxu0 %v1765
      %1783 = vmatprep.subr.bf16.mxu0 0
      %1784 = vmatpush2.bf16.msra.mxu0 0
      %1785 = vmatprep.subr.bf16.mxu0 0
      %1786 = vmatpush2.bf16.msra.mxu0 0
      %1787 = vmatprep.subr.bf16.mxu0 0
      %1788 = vmatpush2.bf16.msra.mxu0 0
      %1789 = vmatprep.subr.bf16.mxu0 0
      %1790 = vmatpush2.bf16.msra.mxu0 0
      %1791 = vmatprep.subr.bf16.mxu0 0
      %1792 = vmatpush2.bf16.msra.mxu0 0
      %1793 = vmatprep.subr.bf16.mxu0 0
      %1794 = vmatpush2.bf16.msra.mxu0 0
      %1795 = vmatprep.subr.bf16.mxu0 0
      %1796 = vmatpush2.bf16.msra.mxu0 0
      %1797 = vmatprep.subr.bf16.mxu0 0
      %1798 = vmatpush2.bf16.msra.mxu0 0
      %1799 = vmatprep.mubr.bf16.mxu0 0
      %1800 = vmatmul.mubr.bf16.gmra.mxu0 %v1753
      %v1801 = vpop.f32.mrf.mxu0
      %v1802 = vadd.f32 0.0, %v1801
      %v1803 = vpop.f32.mrf.mxu0
      %v1804 = vpop.f32.mrf.mxu0
      %v1805 = vadd.f32 0.0, %v1804
      %v1806 = vpop.f32.mrf.mxu0
      %1807 = vmatprep.mubr.bf16.mxu0 0
      %1808 = vmatmul.mubr.bf16.gmra.mxu0 %v1756
      %v1809 = vpop.f32.mrf.mxu0
      %v1810 = vadd.f32 0.0, %v1809
      %v1811 = vpop.f32.mrf.mxu0
      %v1812 = vpop.f32.mrf.mxu0
      %v1813 = vadd.f32 0.0, %v1812
      %v1814 = vpop.f32.mrf.mxu0
      %1815 = vmatprep.mubr.bf16.mxu0 0
      %1816 = vmatmul.mubr.bf16.gmra.mxu0 %v1759
      %v1817 = vpop.f32.mrf.mxu0
      %v1818 = vadd.f32 0.0, %v1817
      %v1819 = vpop.f32.mrf.mxu0
      %v1820 = vpop.f32.mrf.mxu0
      %v1821 = vadd.f32 0.0, %v1820
      %v1822 = vpop.f32.mrf.mxu0
      %1823 = vmatprep.mubr.bf16.mxu0 0
      %1824 = vmatmul.mubr.bf16.gmra.mxu0 %v1762
      %v1825 = vpop.f32.mrf.mxu0
      %v1826 = vadd.f32 0.0, %v1825
      %v1827 = vpop.f32.mrf.mxu0
      %v1828 = vpop.f32.mrf.mxu0
      %v1829 = vadd.f32 0.0, %v1828
      %v1830 = vpop.f32.mrf.mxu0
      %1831 = vdwg.mxu0
      %v1832 = vadd.f32 %v1736, %v1802
      %v1833 = vadd.f32 %v1737, %v1805
      %v1834 = vadd.f32 %v1738, %v1810
      %v1835 = vadd.f32 %v1739, %v1813
      %v1836 = vadd.f32 %v1740, %v1818
      %v1837 = vadd.f32 %v1741, %v1821
      %v1838 = vadd.f32 %v1742, %v1826
      %v1839 = vadd.f32 %v1743, %v1829
      %v1841 = vshrl.u32 %v611, 16
      %v1843 = vrot.slane %v1841, 4
      %v1844 = vshll.u32 %v611, 16
      %v1846 = vrot.slane %v1844, 5
      %v1847 = vor.u32 %v1843, %v1846
      %v1848 = vrot.slane %v1847, 4
      %v1850 = vshll.u32 %v612, 16
      %v1852 = vrot.slane %v1850, 5
      %v1853 = vsel %vm683, %v1848, %v1852
      %s1854 = scalar_lea.vmem %s8, 14
      %v1855 = vld [vmem:[%s1854] sm:$0x3]
      %v1856 = vunpack.c.l.b16 %v1853
      %v1857 = vpack.c.b16 %v800, %v799
      %v1858 = vpack.c.b16 %v802, %v801
      %v1859 = vpack.c.b16 %v804, %v803
      %v1860 = vpack.c.b16 %v1856, %v805
      %v1862 = vsel %vm810, %v1857, 0
      %v1865 = vsel %vm810, %v1858, 0
      %v1868 = vsel %vm810, %v1859, 0
      %v1871 = vsel %vm810, %v1860, 0
      %v1874 = vsel %vm823, %v1855, 0
      %1876 = vmatprep.subr.bf16.mxu0 0
      %1877 = vmatpush1.bf16.msra.mxu0 0
      %1878 = vmatprep.subr.bf16.mxu0 0
      %1879 = vmatpush1.bf16.msra.mxu0 0
      %1880 = vmatprep.subr.bf16.mxu0 0
      %1881 = vmatpush1.bf16.msra.mxu0 0
      %1882 = vmatprep.subr.bf16.mxu0 0
      %1883 = vmatpush1.bf16.msra.mxu0 0
      %1884 = vmatprep.subr.bf16.mxu0 0
      %1885 = vmatpush1.bf16.msra.mxu0 0
      %1886 = vmatprep.subr.bf16.mxu0 0
      %1887 = vmatpush1.bf16.msra.mxu0 0
      %1888 = vmatprep.subr.bf16.mxu0 0
      %1889 = vmatpush1.bf16.msra.mxu0 0
      %1890 = vmatprep.subr.bf16.mxu0 0
      %1891 = vmatpush1.bf16.msra.mxu0 %v1874
      %1892 = vmatprep.subr.bf16.mxu0 0
      %1893 = vmatpush2.bf16.msra.mxu0 0
      %1894 = vmatprep.subr.bf16.mxu0 0
      %1895 = vmatpush2.bf16.msra.mxu0 0
      %1896 = vmatprep.subr.bf16.mxu0 0
      %1897 = vmatpush2.bf16.msra.mxu0 0
      %1898 = vmatprep.subr.bf16.mxu0 0
      %1899 = vmatpush2.bf16.msra.mxu0 0
      %1900 = vmatprep.subr.bf16.mxu0 0
      %1901 = vmatpush2.bf16.msra.mxu0 0
      %1902 = vmatprep.subr.bf16.mxu0 0
      %1903 = vmatpush2.bf16.msra.mxu0 0
      %1904 = vmatprep.subr.bf16.mxu0 0
      %1905 = vmatpush2.bf16.msra.mxu0 0
      %1906 = vmatprep.subr.bf16.mxu0 0
      %1907 = vmatpush2.bf16.msra.mxu0 0
      %1908 = vmatprep.mubr.bf16.mxu0 0
      %1909 = vmatmul.mubr.bf16.gmra.mxu0 %v1862
      %v1910 = vpop.f32.mrf.mxu0
      %v1911 = vadd.f32 0.0, %v1910
      %v1912 = vpop.f32.mrf.mxu0
      %v1913 = vpop.f32.mrf.mxu0
      %v1914 = vadd.f32 0.0, %v1913
      %v1915 = vpop.f32.mrf.mxu0
      %1916 = vmatprep.mubr.bf16.mxu0 0
      %1917 = vmatmul.mubr.bf16.gmra.mxu0 %v1865
      %v1918 = vpop.f32.mrf.mxu0
      %v1919 = vadd.f32 0.0, %v1918
      %v1920 = vpop.f32.mrf.mxu0
      %v1921 = vpop.f32.mrf.mxu0
      %v1922 = vadd.f32 0.0, %v1921
      %v1923 = vpop.f32.mrf.mxu0
      %1924 = vmatprep.mubr.bf16.mxu0 0
      %1925 = vmatmul.mubr.bf16.gmra.mxu0 %v1868
      %v1926 = vpop.f32.mrf.mxu0
      %v1927 = vadd.f32 0.0, %v1926
      %v1928 = vpop.f32.mrf.mxu0
      %v1929 = vpop.f32.mrf.mxu0
      %v1930 = vadd.f32 0.0, %v1929
      %v1931 = vpop.f32.mrf.mxu0
      %1932 = vmatprep.mubr.bf16.mxu0 0
      %1933 = vmatmul.mubr.bf16.gmra.mxu0 %v1871
      %v1934 = vpop.f32.mrf.mxu0
      %v1935 = vadd.f32 0.0, %v1934
      %v1936 = vpop.f32.mrf.mxu0
      %v1937 = vpop.f32.mrf.mxu0
      %v1938 = vadd.f32 0.0, %v1937
      %v1939 = vpop.f32.mrf.mxu0
      %1940 = vdwg.mxu0
      %v1941 = vadd.f32 %v1832, %v1911
      %v1942 = vadd.f32 %v1833, %v1914
      %v1943 = vadd.f32 %v1834, %v1919
      %v1944 = vadd.f32 %v1835, %v1922
      %v1945 = vadd.f32 %v1836, %v1927
      %v1946 = vadd.f32 %v1837, %v1930
      %v1947 = vadd.f32 %v1838, %v1935
      %v1948 = vadd.f32 %v1839, %v1938
      %v1950 = vshrl.u32 %v671, 16
      %v1952 = vrot.slane %v1950, 4
      %v1953 = vshll.u32 %v671, 16
      %v1955 = vrot.slane %v1953, 5
      %v1956 = vor.u32 %v1952, %v1955
      %v1957 = vrot.slane %v1956, 4
      %v1959 = vshll.u32 %v672, 16
      %v1961 = vrot.slane %v1959, 5
      %v1962 = vsel %vm683, %v1957, %v1961
      %s1963 = scalar_lea.vmem %s8, 16
      %v1964 = vld [vmem:[%s1963] sm:$0x3]
      %v1965 = vunpack.c.l.b16 %v1962
      %v1966 = vpack.c.b16 %v1108, %v1107
      %v1967 = vpack.c.b16 %v1110, %v1109
      %v1968 = vpack.c.b16 %v1112, %v1111
      %v1969 = vpack.c.b16 %v1965, %v1113
      %v1971 = vsel %vm810, %v1966, 0
      %v1974 = vsel %vm810, %v1967, 0
      %v1977 = vsel %vm810, %v1968, 0
      %v1980 = vsel %vm810, %v1969, 0
      %v1983 = vsel %vm823, %v1964, 0
      %1985 = vmatprep.subr.bf16.mxu0 0
      %1986 = vmatpush1.bf16.msra.mxu0 0
      %1987 = vmatprep.subr.bf16.mxu0 0
      %1988 = vmatpush1.bf16.msra.mxu0 0
      %1989 = vmatprep.subr.bf16.mxu0 0
      %1990 = vmatpush1.bf16.msra.mxu0 0
      %1991 = vmatprep.subr.bf16.mxu0 0
      %1992 = vmatpush1.bf16.msra.mxu0 0
      %1993 = vmatprep.subr.bf16.mxu0 0
      %1994 = vmatpush1.bf16.msra.mxu0 0
      %1995 = vmatprep.subr.bf16.mxu0 0
      %1996 = vmatpush1.bf16.msra.mxu0 0
      %1997 = vmatprep.subr.bf16.mxu0 0
      %1998 = vmatpush1.bf16.msra.mxu0 0
      %1999 = vmatprep.subr.bf16.mxu0 0
      %2000 = vmatpush1.bf16.msra.mxu0 %v1983
      %2001 = vmatprep.subr.bf16.mxu0 0
      %2002 = vmatpush2.bf16.msra.mxu0 0
      %2003 = vmatprep.subr.bf16.mxu0 0
      %2004 = vmatpush2.bf16.msra.mxu0 0
      %2005 = vmatprep.subr.bf16.mxu0 0
      %2006 = vmatpush2.bf16.msra.mxu0 0
      %2007 = vmatprep.subr.bf16.mxu0 0
      %2008 = vmatpush2.bf16.msra.mxu0 0
      %2009 = vmatprep.subr.bf16.mxu0 0
      %2010 = vmatpush2.bf16.msra.mxu0 0
      %2011 = vmatprep.subr.bf16.mxu0 0
      %2012 = vmatpush2.bf16.msra.mxu0 0
      %2013 = vmatprep.subr.bf16.mxu0 0
      %2014 = vmatpush2.bf16.msra.mxu0 0
      %2015 = vmatprep.subr.bf16.mxu0 0
      %2016 = vmatpush2.bf16.msra.mxu0 0
      %2017 = vmatprep.mubr.bf16.mxu0 0
      %2018 = vmatmul.mubr.bf16.gmra.mxu0 %v1971
      %v2019 = vpop.f32.mrf.mxu0
      %v2020 = vadd.f32 0.0, %v2019
      %v2021 = vpop.f32.mrf.mxu0
      %v2022 = vpop.f32.mrf.mxu0
      %v2023 = vadd.f32 0.0, %v2022
      %v2024 = vpop.f32.mrf.mxu0
      %2025 = vmatprep.mubr.bf16.mxu0 0
      %2026 = vmatmul.mubr.bf16.gmra.mxu0 %v1974
      %v2027 = vpop.f32.mrf.mxu0
      %v2028 = vadd.f32 0.0, %v2027
      %v2029 = vpop.f32.mrf.mxu0
      %v2030 = vpop.f32.mrf.mxu0
      %v2031 = vadd.f32 0.0, %v2030
      %v2032 = vpop.f32.mrf.mxu0
      %2033 = vmatprep.mubr.bf16.mxu0 0
      %2034 = vmatmul.mubr.bf16.gmra.mxu0 %v1977
      %v2035 = vpop.f32.mrf.mxu0
      %v2036 = vadd.f32 0.0, %v2035
      %v2037 = vpop.f32.mrf.mxu0
      %v2038 = vpop.f32.mrf.mxu0
      %v2039 = vadd.f32 0.0, %v2038
      %v2040 = vpop.f32.mrf.mxu0
      %2041 = vmatprep.mubr.bf16.mxu0 0
      %2042 = vmatmul.mubr.bf16.gmra.mxu0 %v1980
      %v2043 = vpop.f32.mrf.mxu0
      %v2044 = vadd.f32 0.0, %v2043
      %v2045 = vpop.f32.mrf.mxu0
      %v2046 = vpop.f32.mrf.mxu0
      %v2047 = vadd.f32 0.0, %v2046
      %v2048 = vpop.f32.mrf.mxu0
      %2049 = vdwg.mxu0
      %v2050 = vadd.f32 %v1941, %v2020
      %v2051 = vadd.f32 %v1942, %v2023
      %v2052 = vadd.f32 %v1943, %v2028
      %v2053 = vadd.f32 %v1944, %v2031
      %v2054 = vadd.f32 %v1945, %v2036
      %v2055 = vadd.f32 %v1946, %v2039
      %v2056 = vadd.f32 %v1947, %v2044
      %v2057 = vadd.f32 %v1948, %v2047
      %v2058 = vld [vmem:[%s9] sm:$0x1]
      %v2060 = vlaneseq
      %v2061 = vshrl.u32 %v2060, 7
      %v2062 = vsub.s32 0, %v2061
      %v2063 = vrot.slane %v2058, %v2062
      %v2065 = vadd.f32 %v2050, %v2063
      %v2066 = vadd.f32 %v2051, %v2063
      %v2067 = vadd.f32 %v2052, %v2063
      %v2068 = vadd.f32 %v2053, %v2063
      %v2069 = vadd.f32 %v2054, %v2063
      %v2070 = vadd.f32 %v2055, %v2063
      %v2071 = vadd.f32 %v2056, %v2063
      %v2072 = vadd.f32 %v2057, %v2063
      %vm2073 = vcmp.gt.f32.partialorder %v2065, 0.0
      %vm2074 = vcmp.gt.f32.partialorder %v2066, 0.0
      %vm2075 = vcmp.gt.f32.partialorder %v2067, 0.0
      %vm2076 = vcmp.gt.f32.partialorder %v2068, 0.0
      %vm2077 = vcmp.gt.f32.partialorder %v2069, 0.0
      %vm2078 = vcmp.gt.f32.partialorder %v2070, 0.0
      %vm2079 = vcmp.gt.f32.partialorder %v2071, 0.0
      %vm2080 = vcmp.gt.f32.partialorder %v2072, 0.0
      %v2081 = vmul.f32 %v2065, 0.2
      %v2082 = vmul.f32 %v2066, 0.2
      %v2083 = vmul.f32 %v2067, 0.2
      %v2084 = vmul.f32 %v2068, 0.2
      %v2085 = vmul.f32 %v2069, 0.2
      %v2086 = vmul.f32 %v2070, 0.2
      %v2087 = vmul.f32 %v2071, 0.2
      %v2088 = vmul.f32 %v2072, 0.2
      %v2089 = vsel %vm2073, %v2065, %v2081
      %v2090 = vsel %vm2074, %v2066, %v2082
      %v2091 = vsel %vm2075, %v2067, %v2083
      %v2092 = vsel %vm2076, %v2068, %v2084
      %v2093 = vsel %vm2077, %v2069, %v2085
      %v2094 = vsel %vm2078, %v2070, %v2086
      %v2095 = vsel %vm2079, %v2071, %v2087
      %v2096 = vsel %vm2080, %v2072, %v2088
      %v2097 = vld [vmem:[%s4] sm:$0x3]
      %s2098 = scalar_lea.vmem %s4, 2
      %v2099 = vld [vmem:[%s2098] sm:$0x3]
      %v2101 = vshrl.u32 %v560, 16
      %v2103 = vrot.slane %v2101, 4
      %v2104 = vshll.u32 %v560, 16
      %v2106 = vrot.slane %v2104, 5
      %v2107 = vor.u32 %v2103, %v2106
      %v2108 = vrot.slane %v2107, 4
      %v2110 = vshll.u32 %v561, 16
      %v2112 = vrot.slane %v2110, 5
      %v2113 = vsel %vm683, %v2108, %v2112
      %v2114 = vshrl.u32 %v561, 16
      %v2116 = vrot.slane %v2114, 4
      %v2117 = vor.u32 %v2116, %v2112
      %v2118 = vrot.slane %v2117, 4
      %v2120 = vshll.u32 %v562, 16
      %v2122 = vrot.slane %v2120, 5
      %v2123 = vsel %vm683, %v2118, %v2122
      %v2124 = vshrl.u32 %v564, 16
      %v2126 = vrot.slane %v2124, 4
      %v2127 = vor.u32 %v2126, %v696
      %v2128 = vrot.slane %v2127, 4
      %v2130 = vshll.u32 %v565, 16
      %v2132 = vrot.slane %v2130, 5
      %v2133 = vsel %vm683, %v2128, %v2132
      %v2134 = vshrl.u32 %v567, 16
      %v2136 = vrot.slane %v2134, 4
      %v2137 = vor.u32 %v2136, %v1328
      %v2138 = vrot.slane %v2137, 4
      %v2140 = vshll.u32 %v568, 16
      %v2142 = vrot.slane %v2140, 5
      %v2143 = vsel %vm683, %v2138, %v2142
      %v2144 = vshrl.u32 %v570, 16
      %v2146 = vrot.slane %v2144, 4
      %v2147 = vor.u32 %v2146, %v710
      %v2148 = vrot.slane %v2147, 4
      %v2150 = vshll.u32 %v571, 16
      %v2152 = vrot.slane %v2150, 5
      %v2153 = vsel %vm683, %v2148, %v2152
      %v2154 = vshrl.u32 %v573, 16
      %v2156 = vrot.slane %v2154, 4
      %v2157 = vor.u32 %v2156, %v1342
      %v2158 = vrot.slane %v2157, 4
      %v2160 = vshll.u32 %v574, 16
      %v2162 = vrot.slane %v2160, 5
      %v2163 = vsel %vm683, %v2158, %v2162
      %v2164 = vshrl.u32 %v576, 16
      %v2166 = vrot.slane %v2164, 4
      %v2167 = vor.u32 %v2166, %v724
      %v2168 = vrot.slane %v2167, 4
      %v2170 = vshll.u32 %v577, 16
      %v2172 = vrot.slane %v2170, 5
      %v2173 = vsel %vm683, %v2168, %v2172
      %v2174 = vshrl.u32 %v579, 16
      %v2176 = vrot.slane %v2174, 4
      %v2177 = vor.u32 %v2176, %v1356
      %v2178 = vrot.slane %v2177, 4
      %v2180 = vshll.u32 %v580, 16
      %v2182 = vrot.slane %v2180, 5
      %v2183 = vsel %vm683, %v2178, %v2182
      %v2184 = vshrl.u32 %v582, 16
      %v2186 = vrot.slane %v2184, 4
      %v2187 = vor.u32 %v2186, %v738
      %v2188 = vrot.slane %v2187, 4
      %v2190 = vshll.u32 %v583, 16
      %v2192 = vrot.slane %v2190, 5
      %v2193 = vsel %vm683, %v2188, %v2192
      %v2194 = vshrl.u32 %v585, 16
      %v2196 = vrot.slane %v2194, 4
      %v2197 = vor.u32 %v2196, %v1370
      %v2198 = vrot.slane %v2197, 4
      %v2200 = vshll.u32 %v586, 16
      %v2202 = vrot.slane %v2200, 5
      %v2203 = vsel %vm683, %v2198, %v2202
      %v2204 = vshrl.u32 %v588, 16
      %v2206 = vrot.slane %v2204, 4
      %v2207 = vor.u32 %v2206, %v752
      %v2208 = vrot.slane %v2207, 4
      %v2210 = vshll.u32 %v589, 16
      %v2212 = vrot.slane %v2210, 5
      %v2213 = vsel %vm683, %v2208, %v2212
      %v2214 = vshrl.u32 %v591, 16
      %v2216 = vrot.slane %v2214, 4
      %v2217 = vor.u32 %v2216, %v1384
      %v2218 = vrot.slane %v2217, 4
      %v2220 = vshll.u32 %v592, 16
      %v2222 = vrot.slane %v2220, 5
      %v2223 = vsel %vm683, %v2218, %v2222
      %v2224 = vshrl.u32 %v594, 16
      %v2226 = vrot.slane %v2224, 4
      %v2227 = vor.u32 %v2226, %v766
      %v2228 = vrot.slane %v2227, 4
      %v2230 = vshll.u32 %v595, 16
      %v2232 = vrot.slane %v2230, 5
      %v2233 = vsel %vm683, %v2228, %v2232
      %v2234 = vshrl.u32 %v597, 16
      %v2236 = vrot.slane %v2234, 4
      %v2237 = vor.u32 %v2236, %v1398
      %v2238 = vrot.slane %v2237, 4
      %v2240 = vshll.u32 %v598, 16
      %v2242 = vrot.slane %v2240, 5
      %v2243 = vsel %vm683, %v2238, %v2242
      %v2244 = vshrl.u32 %v600, 16
      %v2246 = vrot.slane %v2244, 4
      %v2247 = vor.u32 %v2246, %v780
      %v2248 = vrot.slane %v2247, 4
      %v2250 = vshll.u32 %v601, 16
      %v2252 = vrot.slane %v2250, 5
      %v2253 = vsel %vm683, %v2248, %v2252
      %v2254 = vshrl.u32 %v603, 16
      %v2256 = vrot.slane %v2254, 4
      %v2257 = vor.u32 %v2256, %v1412
      %v2258 = vrot.slane %v2257, 4
      %v2260 = vshll.u32 %v604, 16
      %v2262 = vrot.slane %v2260, 5
      %v2263 = vsel %vm683, %v2258, %v2262
      %v2264 = vshrl.u32 %v606, 16
      %v2266 = vrot.slane %v2264, 4
      %v2267 = vor.u32 %v2266, %v794
      %v2268 = vrot.slane %v2267, 4
      %v2270 = vshll.u32 %v607, 16
      %v2272 = vrot.slane %v2270, 5
      %v2273 = vsel %vm683, %v2268, %v2272
      %v2274 = vshrl.u32 %v609, 16
      %v2276 = vrot.slane %v2274, 4
      %v2277 = vor.u32 %v2276, %v1426
      %v2278 = vrot.slane %v2277, 4
      %v2280 = vshll.u32 %v610, 16
      %v2282 = vrot.slane %v2280, 5
      %v2283 = vsel %vm683, %v2278, %v2282
      %v2284 = vshrl.u32 %v612, 16
      %v2286 = vrot.slane %v2284, 4
      %v2287 = vor.u32 %v2286, %v1852
      %v2288 = vrot.slane %v2287, 4
      %v2290 = vshll.u32 %v613, 16
      %v2292 = vrot.slane %v2290, 5
      %v2293 = vsel %vm683, %v2288, %v2292
      %v2294 = vunpack.c.l.b16 %v2113
      %v2295 = vunpack.c.l.b16 %v2123
      %v2296 = vunpack.c.l.b16 %v2133
      %v2297 = vunpack.c.l.b16 %v2143
      %v2298 = vunpack.c.l.b16 %v2153
      %v2299 = vunpack.c.l.b16 %v2163
      %v2300 = vunpack.c.l.b16 %v2173
      %v2301 = vunpack.c.l.b16 %v2183
      %v2302 = vunpack.c.l.b16 %v2193
      %v2303 = vunpack.c.l.b16 %v2203
      %v2304 = vunpack.c.l.b16 %v2213
      %v2305 = vunpack.c.l.b16 %v2223
      %v2306 = vunpack.c.l.b16 %v2233
      %v2307 = vunpack.c.l.b16 %v2243
      %v2308 = vunpack.c.l.b16 %v2253
      %v2309 = vunpack.c.l.b16 %v2263
      %v2310 = vunpack.c.l.b16 %v2273
      %v2311 = vunpack.c.l.b16 %v2283
      %v2312 = vunpack.c.l.b16 %v2293
      %v2313 = vpack.c.b16 %v2295, %v2294
      %v2314 = vpack.c.b16 %v2296, %v798
      %v2315 = vpack.c.b16 %v2297, %v1430
      %v2316 = vpack.c.b16 %v2298, %v799
      %v2317 = vpack.c.b16 %v2299, %v1431
      %v2318 = vpack.c.b16 %v2300, %v800
      %v2319 = vpack.c.b16 %v2301, %v1432
      %v2320 = vpack.c.b16 %v2302, %v801
      %v2321 = vpack.c.b16 %v2303, %v1433
      %v2322 = vpack.c.b16 %v2304, %v802
      %v2323 = vpack.c.b16 %v2305, %v1434
      %v2324 = vpack.c.b16 %v2306, %v803
      %v2325 = vpack.c.b16 %v2307, %v1435
      %v2326 = vpack.c.b16 %v2308, %v804
      %v2327 = vpack.c.b16 %v2309, %v1436
      %v2328 = vpack.c.b16 %v2310, %v805
      %v2329 = vpack.c.b16 %v2311, %v1437
      %v2330 = vpack.c.b16 %v2312, %v1856
      %v2332 = vsel %vm810, %v2313, 0
      %v2335 = vsel %vm810, %v2314, 0
      %v2338 = vsel %vm810, %v2315, 0
      %v2341 = vsel %vm810, %v2316, 0
      %v2344 = vsel %vm810, %v2317, 0
      %v2347 = vsel %vm810, %v2318, 0
      %v2350 = vsel %vm810, %v2319, 0
      %v2353 = vsel %vm810, %v2320, 0
      %v2356 = vsel %vm810, %v2321, 0
      %v2359 = vsel %vm810, %v2322, 0
      %v2362 = vsel %vm810, %v2323, 0
      %v2365 = vsel %vm810, %v2324, 0
      %v2368 = vsel %vm810, %v2325, 0
      %v2371 = vsel %vm810, %v2326, 0
      %v2374 = vsel %vm810, %v2327, 0
      %v2377 = vsel %vm810, %v2328, 0
      %v2380 = vsel %vm810, %v2329, 0
      %v2383 = vsel %vm810, %v2330, 0
      %v2386 = vsel %vm823, %v2099, 0
      %2388 = vmatprep.subr.bf16.mxu0 0
      %2389 = vmatpush1.bf16.msra.mxu0 0
      %2390 = vmatprep.subr.bf16.mxu0 0
      %2391 = vmatpush1.bf16.msra.mxu0 0
      %2392 = vmatprep.subr.bf16.mxu0 0
      %2393 = vmatpush1.bf16.msra.mxu0 0
      %2394 = vmatprep.subr.bf16.mxu0 0
      %2395 = vmatpush1.bf16.msra.mxu0 0
      %2396 = vmatprep.subr.bf16.mxu0 0
      %2397 = vmatpush1.bf16.msra.mxu0 0
      %2398 = vmatprep.subr.bf16.mxu0 0
      %2399 = vmatpush1.bf16.msra.mxu0 0
      %2400 = vmatprep.subr.bf16.mxu0 0
      %2401 = vmatpush1.bf16.msra.mxu0 0
      %2402 = vmatprep.subr.bf16.mxu0 0
      %2403 = vmatpush1.bf16.msra.mxu0 %v2386
      %2404 = vmatprep.subr.bf16.mxu0 0
      %2405 = vmatpush2.bf16.msra.mxu0 0
      %2406 = vmatprep.subr.bf16.mxu0 0
      %2407 = vmatpush2.bf16.msra.mxu0 0
      %2408 = vmatprep.subr.bf16.mxu0 0
      %2409 = vmatpush2.bf16.msra.mxu0 0
      %2410 = vmatprep.subr.bf16.mxu0 0
      %2411 = vmatpush2.bf16.msra.mxu0 0
      %2412 = vmatprep.subr.bf16.mxu0 0
      %2413 = vmatpush2.bf16.msra.mxu0 0
      %2414 = vmatprep.subr.bf16.mxu0 0
      %2415 = vmatpush2.bf16.msra.mxu0 0
      %2416 = vmatprep.subr.bf16.mxu0 0
      %2417 = vmatpush2.bf16.msra.mxu0 0
      %2418 = vmatprep.subr.bf16.mxu0 0
      %2419 = vmatpush2.bf16.msra.mxu0 0
      %2420 = vmatprep.mubr.bf16.mxu0 0
      %2421 = vmatmul.mubr.bf16.gmra.mxu0 %v2332
      %v2422 = vpop.f32.mrf.mxu0
      %v2423 = vadd.f32 0.0, %v2422
      %v2424 = vpop.f32.mrf.mxu0
      %v2425 = vpop.f32.mrf.mxu0
      %v2426 = vadd.f32 0.0, %v2425
      %v2427 = vpop.f32.mrf.mxu0
      %2428 = vmatprep.mubr.bf16.mxu0 0
      %2429 = vmatmul.mubr.bf16.gmra.mxu0 %v2335
      %v2430 = vpop.f32.mrf.mxu0
      %v2431 = vadd.f32 0.0, %v2430
      %v2432 = vpop.f32.mrf.mxu0
      %v2433 = vpop.f32.mrf.mxu0
      %v2434 = vadd.f32 0.0, %v2433
      %v2435 = vpop.f32.mrf.mxu0
      %2436 = vmatprep.mubr.bf16.mxu0 0
      %2437 = vmatmul.mubr.bf16.gmra.mxu0 %v2338
      %v2438 = vpop.f32.mrf.mxu0
      %v2439 = vadd.f32 0.0, %v2438
      %v2440 = vpop.f32.mrf.mxu0
      %v2441 = vpop.f32.mrf.mxu0
      %v2442 = vadd.f32 0.0, %v2441
      %v2443 = vpop.f32.mrf.mxu0
      %2444 = vmatprep.mubr.bf16.mxu0 0
      %2445 = vmatmul.mubr.bf16.gmra.mxu0 %v2341
      %v2446 = vpop.f32.mrf.mxu0
      %v2447 = vadd.f32 0.0, %v2446
      %v2448 = vpop.f32.mrf.mxu0
      %v2449 = vpop.f32.mrf.mxu0
      %v2450 = vadd.f32 0.0, %v2449
      %v2451 = vpop.f32.mrf.mxu0
      %2452 = vmatprep.mubr.bf16.mxu0 0
      %2453 = vmatmul.mubr.bf16.gmra.mxu0 %v2344
      %v2454 = vpop.f32.mrf.mxu0
      %v2455 = vadd.f32 0.0, %v2454
      %v2456 = vpop.f32.mrf.mxu0
      %v2457 = vpop.f32.mrf.mxu0
      %v2458 = vadd.f32 0.0, %v2457
      %v2459 = vpop.f32.mrf.mxu0
      %2460 = vmatprep.mubr.bf16.mxu0 0
      %2461 = vmatmul.mubr.bf16.gmra.mxu0 %v2347
      %v2462 = vpop.f32.mrf.mxu0
      %v2463 = vadd.f32 0.0, %v2462
      %v2464 = vpop.f32.mrf.mxu0
      %v2465 = vpop.f32.mrf.mxu0
      %v2466 = vadd.f32 0.0, %v2465
      %v2467 = vpop.f32.mrf.mxu0
      %2468 = vmatprep.mubr.bf16.mxu0 0
      %2469 = vmatmul.mubr.bf16.gmra.mxu0 %v2350
      %v2470 = vpop.f32.mrf.mxu0
      %v2471 = vadd.f32 0.0, %v2470
      %v2472 = vpop.f32.mrf.mxu0
      %v2473 = vpop.f32.mrf.mxu0
      %v2474 = vadd.f32 0.0, %v2473
      %v2475 = vpop.f32.mrf.mxu0
      %2476 = vmatprep.mubr.bf16.mxu0 0
      %2477 = vmatmul.mubr.bf16.gmra.mxu0 %v2353
      %v2478 = vpop.f32.mrf.mxu0
      %v2479 = vadd.f32 0.0, %v2478
      %v2480 = vpop.f32.mrf.mxu0
      %v2481 = vpop.f32.mrf.mxu0
      %v2482 = vadd.f32 0.0, %v2481
      %v2483 = vpop.f32.mrf.mxu0
      %2484 = vmatprep.mubr.bf16.mxu0 0
      %2485 = vmatmul.mubr.bf16.gmra.mxu0 %v2356
      %v2486 = vpop.f32.mrf.mxu0
      %v2487 = vadd.f32 0.0, %v2486
      %v2488 = vpop.f32.mrf.mxu0
      %v2489 = vpop.f32.mrf.mxu0
      %v2490 = vadd.f32 0.0, %v2489
      %v2491 = vpop.f32.mrf.mxu0
      %2492 = vmatprep.mubr.bf16.mxu0 0
      %2493 = vmatmul.mubr.bf16.gmra.mxu0 %v2359
      %v2494 = vpop.f32.mrf.mxu0
      %v2495 = vadd.f32 0.0, %v2494
      %v2496 = vpop.f32.mrf.mxu0
      %v2497 = vpop.f32.mrf.mxu0
      %v2498 = vadd.f32 0.0, %v2497
      %v2499 = vpop.f32.mrf.mxu0
      %2500 = vmatprep.mubr.bf16.mxu0 0
      %2501 = vmatmul.mubr.bf16.gmra.mxu0 %v2362
      %v2502 = vpop.f32.mrf.mxu0
      %v2503 = vadd.f32 0.0, %v2502
      %v2504 = vpop.f32.mrf.mxu0
      %v2505 = vpop.f32.mrf.mxu0
      %v2506 = vadd.f32 0.0, %v2505
      %v2507 = vpop.f32.mrf.mxu0
      %2508 = vmatprep.mubr.bf16.mxu0 0
      %2509 = vmatmul.mubr.bf16.gmra.mxu0 %v2365
      %v2510 = vpop.f32.mrf.mxu0
      %v2511 = vadd.f32 0.0, %v2510
      %v2512 = vpop.f32.mrf.mxu0
      %v2513 = vpop.f32.mrf.mxu0
      %v2514 = vadd.f32 0.0, %v2513
      %v2515 = vpop.f32.mrf.mxu0
      %2516 = vmatprep.mubr.bf16.mxu0 0
      %2517 = vmatmul.mubr.bf16.gmra.mxu0 %v2368
      %v2518 = vpop.f32.mrf.mxu0
      %v2519 = vadd.f32 0.0, %v2518
      %v2520 = vpop.f32.mrf.mxu0
      %v2521 = vpop.f32.mrf.mxu0
      %v2522 = vadd.f32 0.0, %v2521
      %v2523 = vpop.f32.mrf.mxu0
      %2524 = vmatprep.mubr.bf16.mxu0 0
      %2525 = vmatmul.mubr.bf16.gmra.mxu0 %v2371
      %v2526 = vpop.f32.mrf.mxu0
      %v2527 = vadd.f32 0.0, %v2526
      %v2528 = vpop.f32.mrf.mxu0
      %v2529 = vpop.f32.mrf.mxu0
      %v2530 = vadd.f32 0.0, %v2529
      %v2531 = vpop.f32.mrf.mxu0
      %2532 = vmatprep.mubr.bf16.mxu0 0
      %2533 = vmatmul.mubr.bf16.gmra.mxu0 %v2374
      %v2534 = vpop.f32.mrf.mxu0
      %v2535 = vadd.f32 0.0, %v2534
      %v2536 = vpop.f32.mrf.mxu0
      %v2537 = vpop.f32.mrf.mxu0
      %v2538 = vadd.f32 0.0, %v2537
      %v2539 = vpop.f32.mrf.mxu0
      %2540 = vmatprep.mubr.bf16.mxu0 0
      %2541 = vmatmul.mubr.bf16.gmra.mxu0 %v2377
      %v2542 = vpop.f32.mrf.mxu0
      %v2543 = vadd.f32 0.0, %v2542
      %v2544 = vpop.f32.mrf.mxu0
      %v2545 = vpop.f32.mrf.mxu0
      %v2546 = vadd.f32 0.0, %v2545
      %v2547 = vpop.f32.mrf.mxu0
      %2548 = vmatprep.mubr.bf16.mxu0 0
      %2549 = vmatmul.mubr.bf16.gmra.mxu0 %v2380
      %v2550 = vpop.f32.mrf.mxu0
      %v2551 = vadd.f32 0.0, %v2550
      %v2552 = vpop.f32.mrf.mxu0
      %v2553 = vpop.f32.mrf.mxu0
      %v2554 = vadd.f32 0.0, %v2553
      %v2555 = vpop.f32.mrf.mxu0
      %2556 = vmatprep.mubr.bf16.mxu0 0
      %2557 = vmatmul.mubr.bf16.gmra.mxu0 %v2383
      %v2558 = vpop.f32.mrf.mxu0
      %v2559 = vpop.f32.mrf.mxu0
      %v2560 = vpop.f32.mrf.mxu0
      %v2561 = vpop.f32.mrf.mxu0
      %2562 = vdwg.mxu0
      %v2582 = vunpack.c.l.b16 %v620
      %v2583 = vunpack.c.l.b16 %v621
      %v2584 = vunpack.c.l.b16 %v624
      %v2585 = vunpack.c.l.b16 %v627
      %v2586 = vunpack.c.l.b16 %v630
      %v2587 = vunpack.c.l.b16 %v633
      %v2588 = vunpack.c.l.b16 %v636
      %v2589 = vunpack.c.l.b16 %v639
      %v2590 = vunpack.c.l.b16 %v642
      %v2591 = vunpack.c.l.b16 %v645
      %v2592 = vunpack.c.l.b16 %v648
      %v2593 = vunpack.c.l.b16 %v651
      %v2594 = vunpack.c.l.b16 %v654
      %v2595 = vunpack.c.l.b16 %v657
      %v2596 = vunpack.c.l.b16 %v660
      %v2597 = vunpack.c.l.b16 %v663
      %v2598 = vunpack.c.l.b16 %v666
      %v2599 = vunpack.c.l.b16 %v669
      %v2600 = vunpack.c.l.b16 %v672
      %v2601 = vpack.c.b16 %v2583, %v2582
      %v2602 = vpack.c.b16 %v2584, %v900
      %v2603 = vpack.c.b16 %v2585, %v1216
      %v2604 = vpack.c.b16 %v2586, %v901
      %v2605 = vpack.c.b16 %v2587, %v1217
      %v2606 = vpack.c.b16 %v2588, %v902
      %v2607 = vpack.c.b16 %v2589, %v1218
      %v2608 = vpack.c.b16 %v2590, %v903
      %v2609 = vpack.c.b16 %v2591, %v1219
      %v2610 = vpack.c.b16 %v2592, %v904
      %v2611 = vpack.c.b16 %v2593, %v1220
      %v2612 = vpack.c.b16 %v2594, %v905
      %v2613 = vpack.c.b16 %v2595, %v1221
      %v2614 = vpack.c.b16 %v2596, %v906
      %v2615 = vpack.c.b16 %v2597, %v1222
      %v2616 = vpack.c.b16 %v2598, %v907
      %v2617 = vpack.c.b16 %v2599, %v1223
      %v2618 = vpack.c.b16 %v2600, %v1747
      %v2620 = vsel %vm810, %v2601, 0
      %v2623 = vsel %vm810, %v2602, 0
      %v2626 = vsel %vm810, %v2603, 0
      %v2629 = vsel %vm810, %v2604, 0
      %v2632 = vsel %vm810, %v2605, 0
      %v2635 = vsel %vm810, %v2606, 0
      %v2638 = vsel %vm810, %v2607, 0
      %v2641 = vsel %vm810, %v2608, 0
      %v2644 = vsel %vm810, %v2609, 0
      %v2647 = vsel %vm810, %v2610, 0
      %v2650 = vsel %vm810, %v2611, 0
      %v2653 = vsel %vm810, %v2612, 0
      %v2656 = vsel %vm810, %v2613, 0
      %v2659 = vsel %vm810, %v2614, 0
      %v2662 = vsel %vm810, %v2615, 0
      %v2665 = vsel %vm810, %v2616, 0
      %v2668 = vsel %vm810, %v2617, 0
      %v2671 = vsel %vm810, %v2618, 0
      %v2674 = vsel %vm823, %v2097, 0
      %2676 = vmatprep.subr.bf16.mxu0 0
      %2677 = vmatpush1.bf16.msra.mxu0 0
      %2678 = vmatprep.subr.bf16.mxu0 0
      %2679 = vmatpush1.bf16.msra.mxu0 0
      %2680 = vmatprep.subr.bf16.mxu0 0
      %2681 = vmatpush1.bf16.msra.mxu0 0
      %2682 = vmatprep.subr.bf16.mxu0 0
      %2683 = vmatpush1.bf16.msra.mxu0 0
      %2684 = vmatprep.subr.bf16.mxu0 0
      %2685 = vmatpush1.bf16.msra.mxu0 0
      %2686 = vmatprep.subr.bf16.mxu0 0
      %2687 = vmatpush1.bf16.msra.mxu0 0
      %2688 = vmatprep.subr.bf16.mxu0 0
      %2689 = vmatpush1.bf16.msra.mxu0 0
      %2690 = vmatprep.subr.bf16.mxu0 0
      %2691 = vmatpush1.bf16.msra.mxu0 %v2674
      %2692 = vmatprep.subr.bf16.mxu0 0
      %2693 = vmatpush2.bf16.msra.mxu0 0
      %2694 = vmatprep.subr.bf16.mxu0 0
      %2695 = vmatpush2.bf16.msra.mxu0 0
      %2696 = vmatprep.subr.bf16.mxu0 0
      %2697 = vmatpush2.bf16.msra.mxu0 0
      %2698 = vmatprep.subr.bf16.mxu0 0
      %2699 = vmatpush2.bf16.msra.mxu0 0
      %2700 = vmatprep.subr.bf16.mxu0 0
      %2701 = vmatpush2.bf16.msra.mxu0 0
      %2702 = vmatprep.subr.bf16.mxu0 0
      %2703 = vmatpush2.bf16.msra.mxu0 0
      %2704 = vmatprep.subr.bf16.mxu0 0
      %2705 = vmatpush2.bf16.msra.mxu0 0
      %2706 = vmatprep.subr.bf16.mxu0 0
      %2707 = vmatpush2.bf16.msra.mxu0 0
      %2708 = vmatprep.mubr.bf16.mxu0 0
      %2709 = vmatmul.mubr.bf16.gmra.mxu0 %v2620
      %v2710 = vpop.f32.mrf.mxu0
      %v2711 = vadd.f32 %v2423, %v2710
      %v2712 = vpop.f32.mrf.mxu0
      %v2713 = vpop.f32.mrf.mxu0
      %v2714 = vadd.f32 %v2426, %v2713
      %v2715 = vpop.f32.mrf.mxu0
      %2716 = vmatprep.mubr.bf16.mxu0 0
      %2717 = vmatmul.mubr.bf16.gmra.mxu0 %v2623
      %v2718 = vpop.f32.mrf.mxu0
      %v2719 = vadd.f32 %v2431, %v2718
      %v2720 = vpop.f32.mrf.mxu0
      %v2721 = vpop.f32.mrf.mxu0
      %v2722 = vadd.f32 %v2434, %v2721
      %v2723 = vpop.f32.mrf.mxu0
      %2724 = vmatprep.mubr.bf16.mxu0 0
      %2725 = vmatmul.mubr.bf16.gmra.mxu0 %v2626
      %v2726 = vpop.f32.mrf.mxu0
      %v2727 = vadd.f32 %v2439, %v2726
      %v2728 = vpop.f32.mrf.mxu0
      %v2729 = vpop.f32.mrf.mxu0
      %v2730 = vadd.f32 %v2442, %v2729
      %v2731 = vpop.f32.mrf.mxu0
      %2732 = vmatprep.mubr.bf16.mxu0 0
      %2733 = vmatmul.mubr.bf16.gmra.mxu0 %v2629
      %v2734 = vpop.f32.mrf.mxu0
      %v2735 = vadd.f32 %v2447, %v2734
      %v2736 = vpop.f32.mrf.mxu0
      %v2737 = vpop.f32.mrf.mxu0
      %v2738 = vadd.f32 %v2450, %v2737
      %v2739 = vpop.f32.mrf.mxu0
      %2740 = vmatprep.mubr.bf16.mxu0 0
      %2741 = vmatmul.mubr.bf16.gmra.mxu0 %v2632
      %v2742 = vpop.f32.mrf.mxu0
      %v2743 = vadd.f32 %v2455, %v2742
      %v2744 = vpop.f32.mrf.mxu0
      %v2745 = vpop.f32.mrf.mxu0
      %v2746 = vadd.f32 %v2458, %v2745
      %v2747 = vpop.f32.mrf.mxu0
      %2748 = vmatprep.mubr.bf16.mxu0 0
      %2749 = vmatmul.mubr.bf16.gmra.mxu0 %v2635
      %v2750 = vpop.f32.mrf.mxu0
      %v2751 = vadd.f32 %v2463, %v2750
      %v2752 = vpop.f32.mrf.mxu0
      %v2753 = vpop.f32.mrf.mxu0
      %v2754 = vadd.f32 %v2466, %v2753
      %v2755 = vpop.f32.mrf.mxu0
      %2756 = vmatprep.mubr.bf16.mxu0 0
      %2757 = vmatmul.mubr.bf16.gmra.mxu0 %v2638
      %v2758 = vpop.f32.mrf.mxu0
      %v2759 = vadd.f32 %v2471, %v2758
      %v2760 = vpop.f32.mrf.mxu0
      %v2761 = vpop.f32.mrf.mxu0
      %v2762 = vadd.f32 %v2474, %v2761
      %v2763 = vpop.f32.mrf.mxu0
      %2764 = vmatprep.mubr.bf16.mxu0 0
      %2765 = vmatmul.mubr.bf16.gmra.mxu0 %v2641
      %v2766 = vpop.f32.mrf.mxu0
      %v2767 = vadd.f32 %v2479, %v2766
      %v2768 = vpop.f32.mrf.mxu0
      %v2769 = vpop.f32.mrf.mxu0
      %v2770 = vadd.f32 %v2482, %v2769
      %v2771 = vpop.f32.mrf.mxu0
      %2772 = vmatprep.mubr.bf16.mxu0 0
      %2773 = vmatmul.mubr.bf16.gmra.mxu0 %v2644
      %v2774 = vpop.f32.mrf.mxu0
      %v2775 = vadd.f32 %v2487, %v2774
      %v2776 = vpop.f32.mrf.mxu0
      %v2777 = vpop.f32.mrf.mxu0
      %v2778 = vadd.f32 %v2490, %v2777
      %v2779 = vpop.f32.mrf.mxu0
      %2780 = vmatprep.mubr.bf16.mxu0 0
      %2781 = vmatmul.mubr.bf16.gmra.mxu0 %v2647
      %v2782 = vpop.f32.mrf.mxu0
      %v2783 = vadd.f32 %v2495, %v2782
      %v2784 = vpop.f32.mrf.mxu0
      %v2785 = vpop.f32.mrf.mxu0
      %v2786 = vadd.f32 %v2498, %v2785
      %v2787 = vpop.f32.mrf.mxu0
      %2788 = vmatprep.mubr.bf16.mxu0 0
      %2789 = vmatmul.mubr.bf16.gmra.mxu0 %v2650
      %v2790 = vpop.f32.mrf.mxu0
      %v2791 = vadd.f32 %v2503, %v2790
      %v2792 = vpop.f32.mrf.mxu0
      %v2793 = vpop.f32.mrf.mxu0
      %v2794 = vadd.f32 %v2506, %v2793
      %v2795 = vpop.f32.mrf.mxu0
      %2796 = vmatprep.mubr.bf16.mxu0 0
      %2797 = vmatmul.mubr.bf16.gmra.mxu0 %v2653
      %v2798 = vpop.f32.mrf.mxu0
      %v2799 = vadd.f32 %v2511, %v2798
      %v2800 = vpop.f32.mrf.mxu0
      %v2801 = vpop.f32.mrf.mxu0
      %v2802 = vadd.f32 %v2514, %v2801
      %v2803 = vpop.f32.mrf.mxu0
      %2804 = vmatprep.mubr.bf16.mxu0 0
      %2805 = vmatmul.mubr.bf16.gmra.mxu0 %v2656
      %v2806 = vpop.f32.mrf.mxu0
      %v2807 = vadd.f32 %v2519, %v2806
      %v2808 = vpop.f32.mrf.mxu0
      %v2809 = vpop.f32.mrf.mxu0
      %v2810 = vadd.f32 %v2522, %v2809
      %v2811 = vpop.f32.mrf.mxu0
      %2812 = vmatprep.mubr.bf16.mxu0 0
      %2813 = vmatmul.mubr.bf16.gmra.mxu0 %v2659
      %v2814 = vpop.f32.mrf.mxu0
      %v2815 = vadd.f32 %v2527, %v2814
      %v2816 = vpop.f32.mrf.mxu0
      %v2817 = vpop.f32.mrf.mxu0
      %v2818 = vadd.f32 %v2530, %v2817
      %v2819 = vpop.f32.mrf.mxu0
      %2820 = vmatprep.mubr.bf16.mxu0 0
      %2821 = vmatmul.mubr.bf16.gmra.mxu0 %v2662
      %v2822 = vpop.f32.mrf.mxu0
      %v2823 = vadd.f32 %v2535, %v2822
      %v2824 = vpop.f32.mrf.mxu0
      %v2825 = vpop.f32.mrf.mxu0
      %v2826 = vadd.f32 %v2538, %v2825
      %v2827 = vpop.f32.mrf.mxu0
      %2828 = vmatprep.mubr.bf16.mxu0 0
      %2829 = vmatmul.mubr.bf16.gmra.mxu0 %v2665
      %v2830 = vpop.f32.mrf.mxu0
      %v2831 = vadd.f32 %v2543, %v2830
      %v2832 = vpop.f32.mrf.mxu0
      %v2833 = vpop.f32.mrf.mxu0
      %v2834 = vadd.f32 %v2546, %v2833
      %v2835 = vpop.f32.mrf.mxu0
      %2836 = vmatprep.mubr.bf16.mxu0 0
      %2837 = vmatmul.mubr.bf16.gmra.mxu0 %v2668
      %v2838 = vpop.f32.mrf.mxu0
      %v2839 = vadd.f32 %v2551, %v2838
      %v2840 = vpop.f32.mrf.mxu0
      %v2841 = vpop.f32.mrf.mxu0
      %v2842 = vadd.f32 %v2554, %v2841
      %v2843 = vpop.f32.mrf.mxu0
      %2844 = vmatprep.mubr.bf16.mxu0 0
      %2845 = vmatmul.mubr.bf16.gmra.mxu0 %v2671
      %v2846 = vpop.f32.mrf.mxu0
      %v2847 = vpop.f32.mrf.mxu0
      %v2848 = vpop.f32.mrf.mxu0
      %v2849 = vpop.f32.mrf.mxu0
      %2850 = vdwg.mxu0
      %2851 = vmatprep.subr.bf16.mxu0 0
      %2852 = vmatpush1.bf16.msra.mxu0 0
      %2853 = vmatprep.subr.bf16.mxu0 0
      %2854 = vmatpush1.bf16.msra.mxu0 0
      %2855 = vmatprep.subr.bf16.mxu0 0
      %2856 = vmatpush1.bf16.msra.mxu0 0
      %2857 = vmatprep.subr.bf16.mxu0 0
      %2858 = vmatpush1.bf16.msra.mxu0 0
      %2859 = vmatprep.subr.bf16.mxu0 0
      %2860 = vmatpush1.bf16.msra.mxu0 0
      %2861 = vmatprep.subr.bf16.mxu0 0
      %2862 = vmatpush1.bf16.msra.mxu0 0
      %2863 = vmatprep.subr.bf16.mxu0 0
      %2864 = vmatpush1.bf16.msra.mxu0 0
      %2865 = vmatprep.subr.bf16.mxu0 0
      %2866 = vmatpush1.bf16.msra.mxu0 %v2386
      %2867 = vmatprep.subr.bf16.mxu0 0
      %2868 = vmatpush2.bf16.msra.mxu0 0
      %2869 = vmatprep.subr.bf16.mxu0 0
      %2870 = vmatpush2.bf16.msra.mxu0 0
      %2871 = vmatprep.subr.bf16.mxu0 0
      %2872 = vmatpush2.bf16.msra.mxu0 0
      %2873 = vmatprep.subr.bf16.mxu0 0
      %2874 = vmatpush2.bf16.msra.mxu0 0
      %2875 = vmatprep.subr.bf16.mxu0 0
      %2876 = vmatpush2.bf16.msra.mxu0 0
      %2877 = vmatprep.subr.bf16.mxu0 0
      %2878 = vmatpush2.bf16.msra.mxu0 0
      %2879 = vmatprep.subr.bf16.mxu0 0
      %2880 = vmatpush2.bf16.msra.mxu0 0
      %2881 = vmatprep.subr.bf16.mxu0 0
      %2882 = vmatpush2.bf16.msra.mxu0 0
      %2883 = vmatprep.mubr.bf16.mxu0 0
      %2884 = vmatmul.mubr.bf16.gmra.mxu0 %v2620
      %v2885 = vpop.f32.mrf.mxu0
      %v2886 = vadd.f32 0.0, %v2885
      %v2887 = vpop.f32.mrf.mxu0
      %v2888 = vpop.f32.mrf.mxu0
      %v2889 = vadd.f32 0.0, %v2888
      %v2890 = vpop.f32.mrf.mxu0
      %2891 = vmatprep.mubr.bf16.mxu0 0
      %2892 = vmatmul.mubr.bf16.gmra.mxu0 %v2623
      %v2893 = vpop.f32.mrf.mxu0
      %v2894 = vadd.f32 0.0, %v2893
      %v2895 = vpop.f32.mrf.mxu0
      %v2896 = vpop.f32.mrf.mxu0
      %v2897 = vadd.f32 0.0, %v2896
      %v2898 = vpop.f32.mrf.mxu0
      %2899 = vmatprep.mubr.bf16.mxu0 0
      %2900 = vmatmul.mubr.bf16.gmra.mxu0 %v2626
      %v2901 = vpop.f32.mrf.mxu0
      %v2902 = vadd.f32 0.0, %v2901
      %v2903 = vpop.f32.mrf.mxu0
      %v2904 = vpop.f32.mrf.mxu0
      %v2905 = vadd.f32 0.0, %v2904
      %v2906 = vpop.f32.mrf.mxu0
      %2907 = vmatprep.mubr.bf16.mxu0 0
      %2908 = vmatmul.mubr.bf16.gmra.mxu0 %v2629
      %v2909 = vpop.f32.mrf.mxu0
      %v2910 = vadd.f32 0.0, %v2909
      %v2911 = vpop.f32.mrf.mxu0
      %v2912 = vpop.f32.mrf.mxu0
      %v2913 = vadd.f32 0.0, %v2912
      %v2914 = vpop.f32.mrf.mxu0
      %2915 = vmatprep.mubr.bf16.mxu0 0
      %2916 = vmatmul.mubr.bf16.gmra.mxu0 %v2632
      %v2917 = vpop.f32.mrf.mxu0
      %v2918 = vadd.f32 0.0, %v2917
      %v2919 = vpop.f32.mrf.mxu0
      %v2920 = vpop.f32.mrf.mxu0
      %v2921 = vadd.f32 0.0, %v2920
      %v2922 = vpop.f32.mrf.mxu0
      %2923 = vmatprep.mubr.bf16.mxu0 0
      %2924 = vmatmul.mubr.bf16.gmra.mxu0 %v2635
      %v2925 = vpop.f32.mrf.mxu0
      %v2926 = vadd.f32 0.0, %v2925
      %v2927 = vpop.f32.mrf.mxu0
      %v2928 = vpop.f32.mrf.mxu0
      %v2929 = vadd.f32 0.0, %v2928
      %v2930 = vpop.f32.mrf.mxu0
      %2931 = vmatprep.mubr.bf16.mxu0 0
      %2932 = vmatmul.mubr.bf16.gmra.mxu0 %v2638
      %v2933 = vpop.f32.mrf.mxu0
      %v2934 = vadd.f32 0.0, %v2933
      %v2935 = vpop.f32.mrf.mxu0
      %v2936 = vpop.f32.mrf.mxu0
      %v2937 = vadd.f32 0.0, %v2936
      %v2938 = vpop.f32.mrf.mxu0
      %2939 = vmatprep.mubr.bf16.mxu0 0
      %2940 = vmatmul.mubr.bf16.gmra.mxu0 %v2641
      %v2941 = vpop.f32.mrf.mxu0
      %v2942 = vadd.f32 0.0, %v2941
      %v2943 = vpop.f32.mrf.mxu0
      %v2944 = vpop.f32.mrf.mxu0
      %v2945 = vadd.f32 0.0, %v2944
      %v2946 = vpop.f32.mrf.mxu0
      %2947 = vmatprep.mubr.bf16.mxu0 0
      %2948 = vmatmul.mubr.bf16.gmra.mxu0 %v2644
      %v2949 = vpop.f32.mrf.mxu0
      %v2950 = vadd.f32 0.0, %v2949
      %v2951 = vpop.f32.mrf.mxu0
      %v2952 = vpop.f32.mrf.mxu0
      %v2953 = vadd.f32 0.0, %v2952
      %v2954 = vpop.f32.mrf.mxu0
      %2955 = vmatprep.mubr.bf16.mxu0 0
      %2956 = vmatmul.mubr.bf16.gmra.mxu0 %v2647
      %v2957 = vpop.f32.mrf.mxu0
      %v2958 = vadd.f32 0.0, %v2957
      %v2959 = vpop.f32.mrf.mxu0
      %v2960 = vpop.f32.mrf.mxu0
      %v2961 = vadd.f32 0.0, %v2960
      %v2962 = vpop.f32.mrf.mxu0
      %2963 = vmatprep.mubr.bf16.mxu0 0
      %2964 = vmatmul.mubr.bf16.gmra.mxu0 %v2650
      %v2965 = vpop.f32.mrf.mxu0
      %v2966 = vadd.f32 0.0, %v2965
      %v2967 = vpop.f32.mrf.mxu0
      %v2968 = vpop.f32.mrf.mxu0
      %v2969 = vadd.f32 0.0, %v2968
      %v2970 = vpop.f32.mrf.mxu0
      %2971 = vmatprep.mubr.bf16.mxu0 0
      %2972 = vmatmul.mubr.bf16.gmra.mxu0 %v2653
      %v2973 = vpop.f32.mrf.mxu0
      %v2974 = vadd.f32 0.0, %v2973
      %v2975 = vpop.f32.mrf.mxu0
      %v2976 = vpop.f32.mrf.mxu0
      %v2977 = vadd.f32 0.0, %v2976
      %v2978 = vpop.f32.mrf.mxu0
      %2979 = vmatprep.mubr.bf16.mxu0 0
      %2980 = vmatmul.mubr.bf16.gmra.mxu0 %v2656
      %v2981 = vpop.f32.mrf.mxu0
      %v2982 = vadd.f32 0.0, %v2981
      %v2983 = vpop.f32.mrf.mxu0
      %v2984 = vpop.f32.mrf.mxu0
      %v2985 = vadd.f32 0.0, %v2984
      %v2986 = vpop.f32.mrf.mxu0
      %2987 = vmatprep.mubr.bf16.mxu0 0
      %2988 = vmatmul.mubr.bf16.gmra.mxu0 %v2659
      %v2989 = vpop.f32.mrf.mxu0
      %v2990 = vadd.f32 0.0, %v2989
      %v2991 = vpop.f32.mrf.mxu0
      %v2992 = vpop.f32.mrf.mxu0
      %v2993 = vadd.f32 0.0, %v2992
      %v2994 = vpop.f32.mrf.mxu0
      %2995 = vmatprep.mubr.bf16.mxu0 0
      %2996 = vmatmul.mubr.bf16.gmra.mxu0 %v2662
      %v2997 = vpop.f32.mrf.mxu0
      %v2998 = vadd.f32 0.0, %v2997
      %v2999 = vpop.f32.mrf.mxu0
      %v3000 = vpop.f32.mrf.mxu0
      %v3001 = vadd.f32 0.0, %v3000
      %v3002 = vpop.f32.mrf.mxu0
      %3003 = vmatprep.mubr.bf16.mxu0 0
      %3004 = vmatmul.mubr.bf16.gmra.mxu0 %v2665
      %v3005 = vpop.f32.mrf.mxu0
      %v3006 = vadd.f32 0.0, %v3005
      %v3007 = vpop.f32.mrf.mxu0
      %v3008 = vpop.f32.mrf.mxu0
      %v3009 = vadd.f32 0.0, %v3008
      %v3010 = vpop.f32.mrf.mxu0
      %3011 = vmatprep.mubr.bf16.mxu0 0
      %3012 = vmatmul.mubr.bf16.gmra.mxu0 %v2668
      %v3013 = vpop.f32.mrf.mxu0
      %v3014 = vadd.f32 0.0, %v3013
      %v3015 = vpop.f32.mrf.mxu0
      %v3016 = vpop.f32.mrf.mxu0
      %v3017 = vadd.f32 0.0, %v3016
      %v3018 = vpop.f32.mrf.mxu0
      %3019 = vmatprep.mubr.bf16.mxu0 0
      %3020 = vmatmul.mubr.bf16.gmra.mxu0 %v2671
      %v3021 = vpop.f32.mrf.mxu0
      %v3022 = vpop.f32.mrf.mxu0
      %v3023 = vpop.f32.mrf.mxu0
      %v3024 = vpop.f32.mrf.mxu0
      %3025 = vdwg.mxu0
      %v3062 = vunpack.c.l.b16 %v560
      %v3063 = vunpack.c.l.b16 %v561
      %v3064 = vunpack.c.l.b16 %v563
      %v3065 = vunpack.c.l.b16 %v564
      %v3066 = vunpack.c.l.b16 %v566
      %v3067 = vunpack.c.l.b16 %v567
      %v3068 = vunpack.c.l.b16 %v569
      %v3069 = vunpack.c.l.b16 %v570
      %v3070 = vunpack.c.l.b16 %v572
      %v3071 = vunpack.c.l.b16 %v573
      %v3072 = vunpack.c.l.b16 %v575
      %v3073 = vunpack.c.l.b16 %v576
      %v3074 = vunpack.c.l.b16 %v578
      %v3075 = vunpack.c.l.b16 %v579
      %v3076 = vunpack.c.l.b16 %v581
      %v3077 = vunpack.c.l.b16 %v582
      %v3078 = vunpack.c.l.b16 %v584
      %v3079 = vunpack.c.l.b16 %v585
      %v3080 = vunpack.c.l.b16 %v587
      %v3081 = vunpack.c.l.b16 %v588
      %v3082 = vunpack.c.l.b16 %v590
      %v3083 = vunpack.c.l.b16 %v591
      %v3084 = vunpack.c.l.b16 %v593
      %v3085 = vunpack.c.l.b16 %v594
      %v3086 = vunpack.c.l.b16 %v596
      %v3087 = vunpack.c.l.b16 %v597
      %v3088 = vunpack.c.l.b16 %v599
      %v3089 = vunpack.c.l.b16 %v600
      %v3090 = vunpack.c.l.b16 %v602
      %v3091 = vunpack.c.l.b16 %v603
      %v3092 = vunpack.c.l.b16 %v605
      %v3093 = vunpack.c.l.b16 %v606
      %v3094 = vunpack.c.l.b16 %v608
      %v3095 = vunpack.c.l.b16 %v609
      %v3096 = vunpack.c.l.b16 %v611
      %v3097 = vunpack.c.l.b16 %v612
      %v3098 = vpack.c.b16 %v3063, %v3062
      %v3099 = vpack.c.b16 %v3065, %v3064
      %v3100 = vpack.c.b16 %v3067, %v3066
      %v3101 = vpack.c.b16 %v3069, %v3068
      %v3102 = vpack.c.b16 %v3071, %v3070
      %v3103 = vpack.c.b16 %v3073, %v3072
      %v3104 = vpack.c.b16 %v3075, %v3074
      %v3105 = vpack.c.b16 %v3077, %v3076
      %v3106 = vpack.c.b16 %v3079, %v3078
      %v3107 = vpack.c.b16 %v3081, %v3080
      %v3108 = vpack.c.b16 %v3083, %v3082
      %v3109 = vpack.c.b16 %v3085, %v3084
      %v3110 = vpack.c.b16 %v3087, %v3086
      %v3111 = vpack.c.b16 %v3089, %v3088
      %v3112 = vpack.c.b16 %v3091, %v3090
      %v3113 = vpack.c.b16 %v3093, %v3092
      %v3114 = vpack.c.b16 %v3095, %v3094
      %v3115 = vpack.c.b16 %v3097, %v3096
      %v3117 = vsel %vm810, %v3098, 0
      %v3120 = vsel %vm810, %v3099, 0
      %v3123 = vsel %vm810, %v3100, 0
      %v3126 = vsel %vm810, %v3101, 0
      %v3129 = vsel %vm810, %v3102, 0
      %v3132 = vsel %vm810, %v3103, 0
      %v3135 = vsel %vm810, %v3104, 0
      %v3138 = vsel %vm810, %v3105, 0
      %v3141 = vsel %vm810, %v3106, 0
      %v3144 = vsel %vm810, %v3107, 0
      %v3147 = vsel %vm810, %v3108, 0
      %v3150 = vsel %vm810, %v3109, 0
      %v3153 = vsel %vm810, %v3110, 0
      %v3156 = vsel %vm810, %v3111, 0
      %v3159 = vsel %vm810, %v3112, 0
      %v3162 = vsel %vm810, %v3113, 0
      %v3165 = vsel %vm810, %v3114, 0
      %v3168 = vsel %vm810, %v3115, 0
      %3170 = vmatprep.subr.bf16.mxu0 0
      %3171 = vmatpush1.bf16.msra.mxu0 0
      %3172 = vmatprep.subr.bf16.mxu0 0
      %3173 = vmatpush1.bf16.msra.mxu0 0
      %3174 = vmatprep.subr.bf16.mxu0 0
      %3175 = vmatpush1.bf16.msra.mxu0 0
      %3176 = vmatprep.subr.bf16.mxu0 0
      %3177 = vmatpush1.bf16.msra.mxu0 0
      %3178 = vmatprep.subr.bf16.mxu0 0
      %3179 = vmatpush1.bf16.msra.mxu0 0
      %3180 = vmatprep.subr.bf16.mxu0 0
      %3181 = vmatpush1.bf16.msra.mxu0 0
      %3182 = vmatprep.subr.bf16.mxu0 0
      %3183 = vmatpush1.bf16.msra.mxu0 0
      %3184 = vmatprep.subr.bf16.mxu0 0
      %3185 = vmatpush1.bf16.msra.mxu0 %v2674
      %3186 = vmatprep.subr.bf16.mxu0 0
      %3187 = vmatpush2.bf16.msra.mxu0 0
      %3188 = vmatprep.subr.bf16.mxu0 0
      %3189 = vmatpush2.bf16.msra.mxu0 0
      %3190 = vmatprep.subr.bf16.mxu0 0
      %3191 = vmatpush2.bf16.msra.mxu0 0
      %3192 = vmatprep.subr.bf16.mxu0 0
      %3193 = vmatpush2.bf16.msra.mxu0 0
      %3194 = vmatprep.subr.bf16.mxu0 0
      %3195 = vmatpush2.bf16.msra.mxu0 0
      %3196 = vmatprep.subr.bf16.mxu0 0
      %3197 = vmatpush2.bf16.msra.mxu0 0
      %3198 = vmatprep.subr.bf16.mxu0 0
      %3199 = vmatpush2.bf16.msra.mxu0 0
      %3200 = vmatprep.subr.bf16.mxu0 0
      %3201 = vmatpush2.bf16.msra.mxu0 0
      %3202 = vmatprep.mubr.bf16.mxu0 0
      %3203 = vmatmul.mubr.bf16.gmra.mxu0 %v3117
      %v3204 = vpop.f32.mrf.mxu0
      %v3205 = vadd.f32 %v2886, %v3204
      %v3206 = vpop.f32.mrf.mxu0
      %v3207 = vpop.f32.mrf.mxu0
      %v3208 = vadd.f32 %v2889, %v3207
      %v3209 = vpop.f32.mrf.mxu0
      %3210 = vmatprep.mubr.bf16.mxu0 0
      %3211 = vmatmul.mubr.bf16.gmra.mxu0 %v3120
      %v3212 = vpop.f32.mrf.mxu0
      %v3213 = vadd.f32 %v2894, %v3212
      %v3214 = vpop.f32.mrf.mxu0
      %v3215 = vpop.f32.mrf.mxu0
      %v3216 = vadd.f32 %v2897, %v3215
      %v3217 = vpop.f32.mrf.mxu0
      %3218 = vmatprep.mubr.bf16.mxu0 0
      %3219 = vmatmul.mubr.bf16.gmra.mxu0 %v3123
      %v3220 = vpop.f32.mrf.mxu0
      %v3221 = vadd.f32 %v2902, %v3220
      %v3222 = vpop.f32.mrf.mxu0
      %v3223 = vpop.f32.mrf.mxu0
      %v3224 = vadd.f32 %v2905, %v3223
      %v3225 = vpop.f32.mrf.mxu0
      %3226 = vmatprep.mubr.bf16.mxu0 0
      %3227 = vmatmul.mubr.bf16.gmra.mxu0 %v3126
      %v3228 = vpop.f32.mrf.mxu0
      %v3229 = vadd.f32 %v2910, %v3228
      %v3230 = vpop.f32.mrf.mxu0
      %v3231 = vpop.f32.mrf.mxu0
      %v3232 = vadd.f32 %v2913, %v3231
      %v3233 = vpop.f32.mrf.mxu0
      %3234 = vmatprep.mubr.bf16.mxu0 0
      %3235 = vmatmul.mubr.bf16.gmra.mxu0 %v3129
      %v3236 = vpop.f32.mrf.mxu0
      %v3237 = vadd.f32 %v2918, %v3236
      %v3238 = vpop.f32.mrf.mxu0
      %v3239 = vpop.f32.mrf.mxu0
      %v3240 = vadd.f32 %v2921, %v3239
      %v3241 = vpop.f32.mrf.mxu0
      %3242 = vmatprep.mubr.bf16.mxu0 0
      %3243 = vmatmul.mubr.bf16.gmra.mxu0 %v3132
      %v3244 = vpop.f32.mrf.mxu0
      %v3245 = vadd.f32 %v2926, %v3244
      %v3246 = vpop.f32.mrf.mxu0
      %v3247 = vpop.f32.mrf.mxu0
      %v3248 = vadd.f32 %v2929, %v3247
      %v3249 = vpop.f32.mrf.mxu0
      %3250 = vmatprep.mubr.bf16.mxu0 0
      %3251 = vmatmul.mubr.bf16.gmra.mxu0 %v3135
      %v3252 = vpop.f32.mrf.mxu0
      %v3253 = vadd.f32 %v2934, %v3252
      %v3254 = vpop.f32.mrf.mxu0
      %v3255 = vpop.f32.mrf.mxu0
      %v3256 = vadd.f32 %v2937, %v3255
      %v3257 = vpop.f32.mrf.mxu0
      %3258 = vmatprep.mubr.bf16.mxu0 0
      %3259 = vmatmul.mubr.bf16.gmra.mxu0 %v3138
      %v3260 = vpop.f32.mrf.mxu0
      %v3261 = vadd.f32 %v2942, %v3260
      %v3262 = vpop.f32.mrf.mxu0
      %v3263 = vpop.f32.mrf.mxu0
      %v3264 = vadd.f32 %v2945, %v3263
      %v3265 = vpop.f32.mrf.mxu0
      %3266 = vmatprep.mubr.bf16.mxu0 0
      %3267 = vmatmul.mubr.bf16.gmra.mxu0 %v3141
      %v3268 = vpop.f32.mrf.mxu0
      %v3269 = vadd.f32 %v2950, %v3268
      %v3270 = vpop.f32.mrf.mxu0
      %v3271 = vpop.f32.mrf.mxu0
      %v3272 = vadd.f32 %v2953, %v3271
      %v3273 = vpop.f32.mrf.mxu0
      %3274 = vmatprep.mubr.bf16.mxu0 0
      %3275 = vmatmul.mubr.bf16.gmra.mxu0 %v3144
      %v3276 = vpop.f32.mrf.mxu0
      %v3277 = vadd.f32 %v2958, %v3276
      %v3278 = vpop.f32.mrf.mxu0
      %v3279 = vpop.f32.mrf.mxu0
      %v3280 = vadd.f32 %v2961, %v3279
      %v3281 = vpop.f32.mrf.mxu0
      %3282 = vmatprep.mubr.bf16.mxu0 0
      %3283 = vmatmul.mubr.bf16.gmra.mxu0 %v3147
      %v3284 = vpop.f32.mrf.mxu0
      %v3285 = vadd.f32 %v2966, %v3284
      %v3286 = vpop.f32.mrf.mxu0
      %v3287 = vpop.f32.mrf.mxu0
      %v3288 = vadd.f32 %v2969, %v3287
      %v3289 = vpop.f32.mrf.mxu0
      %3290 = vmatprep.mubr.bf16.mxu0 0
      %3291 = vmatmul.mubr.bf16.gmra.mxu0 %v3150
      %v3292 = vpop.f32.mrf.mxu0
      %v3293 = vadd.f32 %v2974, %v3292
      %v3294 = vpop.f32.mrf.mxu0
      %v3295 = vpop.f32.mrf.mxu0
      %v3296 = vadd.f32 %v2977, %v3295
      %v3297 = vpop.f32.mrf.mxu0
      %3298 = vmatprep.mubr.bf16.mxu0 0
      %3299 = vmatmul.mubr.bf16.gmra.mxu0 %v3153
      %v3300 = vpop.f32.mrf.mxu0
      %v3301 = vadd.f32 %v2982, %v3300
      %v3302 = vpop.f32.mrf.mxu0
      %v3303 = vpop.f32.mrf.mxu0
      %v3304 = vadd.f32 %v2985, %v3303
      %v3305 = vpop.f32.mrf.mxu0
      %3306 = vmatprep.mubr.bf16.mxu0 0
      %3307 = vmatmul.mubr.bf16.gmra.mxu0 %v3156
      %v3308 = vpop.f32.mrf.mxu0
      %v3309 = vadd.f32 %v2990, %v3308
      %v3310 = vpop.f32.mrf.mxu0
      %v3311 = vpop.f32.mrf.mxu0
      %v3312 = vadd.f32 %v2993, %v3311
      %v3313 = vpop.f32.mrf.mxu0
      %3314 = vmatprep.mubr.bf16.mxu0 0
      %3315 = vmatmul.mubr.bf16.gmra.mxu0 %v3159
      %v3316 = vpop.f32.mrf.mxu0
      %v3317 = vadd.f32 %v2998, %v3316
      %v3318 = vpop.f32.mrf.mxu0
      %v3319 = vpop.f32.mrf.mxu0
      %v3320 = vadd.f32 %v3001, %v3319
      %v3321 = vpop.f32.mrf.mxu0
      %3322 = vmatprep.mubr.bf16.mxu0 0
      %3323 = vmatmul.mubr.bf16.gmra.mxu0 %v3162
      %v3324 = vpop.f32.mrf.mxu0
      %v3325 = vadd.f32 %v3006, %v3324
      %v3326 = vpop.f32.mrf.mxu0
      %v3327 = vpop.f32.mrf.mxu0
      %v3328 = vadd.f32 %v3009, %v3327
      %v3329 = vpop.f32.mrf.mxu0
      %3330 = vmatprep.mubr.bf16.mxu0 0
      %3331 = vmatmul.mubr.bf16.gmra.mxu0 %v3165
      %v3332 = vpop.f32.mrf.mxu0
      %v3333 = vadd.f32 %v3014, %v3332
      %v3334 = vpop.f32.mrf.mxu0
      %v3335 = vpop.f32.mrf.mxu0
      %v3336 = vadd.f32 %v3017, %v3335
      %v3337 = vpop.f32.mrf.mxu0
      %3338 = vmatprep.mubr.bf16.mxu0 0
      %3339 = vmatmul.mubr.bf16.gmra.mxu0 %v3168
      %v3340 = vpop.f32.mrf.mxu0
      %v3341 = vpop.f32.mrf.mxu0
      %v3342 = vpop.f32.mrf.mxu0
      %v3343 = vpop.f32.mrf.mxu0
      %3344 = vdwg.mxu0
      %s3345 = scalar_lea.vmem %s4, 4
      %v3346 = vld [vmem:[%s3345] sm:$0x3]
      %v3348 = vshrl.u32 %v620, 16
      %v3350 = vrot.slane %v3348, 4
      %v3351 = vshll.u32 %v620, 16
      %v3353 = vrot.slane %v3351, 5
      %v3354 = vor.u32 %v3350, %v3353
      %v3355 = vrot.slane %v3354, 4
      %v3357 = vshll.u32 %v621, 16
      %v3359 = vrot.slane %v3357, 5
      %v3360 = vsel %vm683, %v3355, %v3359
      %v3361 = vshrl.u32 %v621, 16
      %v3363 = vrot.slane %v3361, 4
      %v3364 = vor.u32 %v3363, %v3359
      %v3365 = vrot.slane %v3364, 4
      %v3367 = vshll.u32 %v622, 16
      %v3369 = vrot.slane %v3367, 5
      %v3370 = vsel %vm683, %v3365, %v3369
      %v3371 = vshrl.u32 %v624, 16
      %v3373 = vrot.slane %v3371, 4
      %v3374 = vor.u32 %v3373, %v1004
      %v3375 = vrot.slane %v3374, 4
      %v3377 = vshll.u32 %v625, 16
      %v3379 = vrot.slane %v3377, 5
      %v3380 = vsel %vm683, %v3375, %v3379
      %v3381 = vshrl.u32 %v627, 16
      %v3383 = vrot.slane %v3381, 4
      %v3384 = vor.u32 %v3383, %v1542
      %v3385 = vrot.slane %v3384, 4
      %v3387 = vshll.u32 %v628, 16
      %v3389 = vrot.slane %v3387, 5
      %v3390 = vsel %vm683, %v3385, %v3389
      %v3391 = vshrl.u32 %v630, 16
      %v3393 = vrot.slane %v3391, 4
      %v3394 = vor.u32 %v3393, %v1018
      %v3395 = vrot.slane %v3394, 4
      %v3397 = vshll.u32 %v631, 16
      %v3399 = vrot.slane %v3397, 5
      %v3400 = vsel %vm683, %v3395, %v3399
      %v3401 = vshrl.u32 %v633, 16
      %v3403 = vrot.slane %v3401, 4
      %v3404 = vor.u32 %v3403, %v1556
      %v3405 = vrot.slane %v3404, 4
      %v3407 = vshll.u32 %v634, 16
      %v3409 = vrot.slane %v3407, 5
      %v3410 = vsel %vm683, %v3405, %v3409
      %v3411 = vshrl.u32 %v636, 16
      %v3413 = vrot.slane %v3411, 4
      %v3414 = vor.u32 %v3413, %v1032
      %v3415 = vrot.slane %v3414, 4
      %v3417 = vshll.u32 %v637, 16
      %v3419 = vrot.slane %v3417, 5
      %v3420 = vsel %vm683, %v3415, %v3419
      %v3421 = vshrl.u32 %v639, 16
      %v3423 = vrot.slane %v3421, 4
      %v3424 = vor.u32 %v3423, %v1570
      %v3425 = vrot.slane %v3424, 4
      %v3427 = vshll.u32 %v640, 16
      %v3429 = vrot.slane %v3427, 5
      %v3430 = vsel %vm683, %v3425, %v3429
      %v3431 = vshrl.u32 %v642, 16
      %v3433 = vrot.slane %v3431, 4
      %v3434 = vor.u32 %v3433, %v1046
      %v3435 = vrot.slane %v3434, 4
      %v3437 = vshll.u32 %v643, 16
      %v3439 = vrot.slane %v3437, 5
      %v3440 = vsel %vm683, %v3435, %v3439
      %v3441 = vshrl.u32 %v645, 16
      %v3443 = vrot.slane %v3441, 4
      %v3444 = vor.u32 %v3443, %v1584
      %v3445 = vrot.slane %v3444, 4
      %v3447 = vshll.u32 %v646, 16
      %v3449 = vrot.slane %v3447, 5
      %v3450 = vsel %vm683, %v3445, %v3449
      %v3451 = vshrl.u32 %v648, 16
      %v3453 = vrot.slane %v3451, 4
      %v3454 = vor.u32 %v3453, %v1060
      %v3455 = vrot.slane %v3454, 4
      %v3457 = vshll.u32 %v649, 16
      %v3459 = vrot.slane %v3457, 5
      %v3460 = vsel %vm683, %v3455, %v3459
      %v3461 = vshrl.u32 %v651, 16
      %v3463 = vrot.slane %v3461, 4
      %v3464 = vor.u32 %v3463, %v1598
      %v3465 = vrot.slane %v3464, 4
      %v3467 = vshll.u32 %v652, 16
      %v3469 = vrot.slane %v3467, 5
      %v3470 = vsel %vm683, %v3465, %v3469
      %v3471 = vshrl.u32 %v654, 16
      %v3473 = vrot.slane %v3471, 4
      %v3474 = vor.u32 %v3473, %v1074
      %v3475 = vrot.slane %v3474, 4
      %v3477 = vshll.u32 %v655, 16
      %v3479 = vrot.slane %v3477, 5
      %v3480 = vsel %vm683, %v3475, %v3479
      %v3481 = vshrl.u32 %v657, 16
      %v3483 = vrot.slane %v3481, 4
      %v3484 = vor.u32 %v3483, %v1612
      %v3485 = vrot.slane %v3484, 4
      %v3487 = vshll.u32 %v658, 16
      %v3489 = vrot.slane %v3487, 5
      %v3490 = vsel %vm683, %v3485, %v3489
      %v3491 = vshrl.u32 %v660, 16
      %v3493 = vrot.slane %v3491, 4
      %v3494 = vor.u32 %v3493, %v1088
      %v3495 = vrot.slane %v3494, 4
      %v3497 = vshll.u32 %v661, 16
      %v3499 = vrot.slane %v3497, 5
      %v3500 = vsel %vm683, %v3495, %v3499
      %v3501 = vshrl.u32 %v663, 16
      %v3503 = vrot.slane %v3501, 4
      %v3504 = vor.u32 %v3503, %v1626
      %v3505 = vrot.slane %v3504, 4
      %v3507 = vshll.u32 %v664, 16
      %v3509 = vrot.slane %v3507, 5
      %v3510 = vsel %vm683, %v3505, %v3509
      %v3511 = vshrl.u32 %v666, 16
      %v3513 = vrot.slane %v3511, 4
      %v3514 = vor.u32 %v3513, %v1102
      %v3515 = vrot.slane %v3514, 4
      %v3517 = vshll.u32 %v667, 16
      %v3519 = vrot.slane %v3517, 5
      %v3520 = vsel %vm683, %v3515, %v3519
      %v3521 = vshrl.u32 %v669, 16
      %v3523 = vrot.slane %v3521, 4
      %v3524 = vor.u32 %v3523, %v1640
      %v3525 = vrot.slane %v3524, 4
      %v3527 = vshll.u32 %v670, 16
      %v3529 = vrot.slane %v3527, 5
      %v3530 = vsel %vm683, %v3525, %v3529
      %v3531 = vshrl.u32 %v672, 16
      %v3533 = vrot.slane %v3531, 4
      %v3534 = vor.u32 %v3533, %v1961
      %v3535 = vrot.slane %v3534, 4
      %v3537 = vshll.u32 %v673, 16
      %v3539 = vrot.slane %v3537, 5
      %v3540 = vsel %vm683, %v3535, %v3539
      %v3541 = vunpack.c.l.b16 %v3360
      %v3542 = vunpack.c.l.b16 %v3370
      %v3543 = vunpack.c.l.b16 %v3380
      %v3544 = vunpack.c.l.b16 %v3390
      %v3545 = vunpack.c.l.b16 %v3400
      %v3546 = vunpack.c.l.b16 %v3410
      %v3547 = vunpack.c.l.b16 %v3420
      %v3548 = vunpack.c.l.b16 %v3430
      %v3549 = vunpack.c.l.b16 %v3440
      %v3550 = vunpack.c.l.b16 %v3450
      %v3551 = vunpack.c.l.b16 %v3460
      %v3552 = vunpack.c.l.b16 %v3470
      %v3553 = vunpack.c.l.b16 %v3480
      %v3554 = vunpack.c.l.b16 %v3490
      %v3555 = vunpack.c.l.b16 %v3500
      %v3556 = vunpack.c.l.b16 %v3510
      %v3557 = vunpack.c.l.b16 %v3520
      %v3558 = vunpack.c.l.b16 %v3530
      %v3559 = vunpack.c.l.b16 %v3540
      %v3560 = vpack.c.b16 %v3542, %v3541
      %v3561 = vpack.c.b16 %v3543, %v1106
      %v3562 = vpack.c.b16 %v3544, %v1644
      %v3563 = vpack.c.b16 %v3545, %v1107
      %v3564 = vpack.c.b16 %v3546, %v1645
      %v3565 = vpack.c.b16 %v3547, %v1108
      %v3566 = vpack.c.b16 %v3548, %v1646
      %v3567 = vpack.c.b16 %v3549, %v1109
      %v3568 = vpack.c.b16 %v3550, %v1647
      %v3569 = vpack.c.b16 %v3551, %v1110
      %v3570 = vpack.c.b16 %v3552, %v1648
      %v3571 = vpack.c.b16 %v3553, %v1111
      %v3572 = vpack.c.b16 %v3554, %v1649
      %v3573 = vpack.c.b16 %v3555, %v1112
      %v3574 = vpack.c.b16 %v3556, %v1650
      %v3575 = vpack.c.b16 %v3557, %v1113
      %v3576 = vpack.c.b16 %v3558, %v1651
      %v3577 = vpack.c.b16 %v3559, %v1965
      %v3579 = vsel %vm810, %v3560, 0
      %v3582 = vsel %vm810, %v3561, 0
      %v3585 = vsel %vm810, %v3562, 0
      %v3588 = vsel %vm810, %v3563, 0
      %v3591 = vsel %vm810, %v3564, 0
      %v3594 = vsel %vm810, %v3565, 0
      %v3597 = vsel %vm810, %v3566, 0
      %v3600 = vsel %vm810, %v3567, 0
      %v3603 = vsel %vm810, %v3568, 0
      %v3606 = vsel %vm810, %v3569, 0
      %v3609 = vsel %vm810, %v3570, 0
      %v3612 = vsel %vm810, %v3571, 0
      %v3615 = vsel %vm810, %v3572, 0
      %v3618 = vsel %vm810, %v3573, 0
      %v3621 = vsel %vm810, %v3574, 0
      %v3624 = vsel %vm810, %v3575, 0
      %v3627 = vsel %vm810, %v3576, 0
      %v3630 = vsel %vm810, %v3577, 0
      %v3633 = vsel %vm823, %v3346, 0
      %3635 = vmatprep.subr.bf16.mxu0 0
      %3636 = vmatpush1.bf16.msra.mxu0 0
      %3637 = vmatprep.subr.bf16.mxu0 0
      %3638 = vmatpush1.bf16.msra.mxu0 0
      %3639 = vmatprep.subr.bf16.mxu0 0
      %3640 = vmatpush1.bf16.msra.mxu0 0
      %3641 = vmatprep.subr.bf16.mxu0 0
      %3642 = vmatpush1.bf16.msra.mxu0 0
      %3643 = vmatprep.subr.bf16.mxu0 0
      %3644 = vmatpush1.bf16.msra.mxu0 0
      %3645 = vmatprep.subr.bf16.mxu0 0
      %3646 = vmatpush1.bf16.msra.mxu0 0
      %3647 = vmatprep.subr.bf16.mxu0 0
      %3648 = vmatpush1.bf16.msra.mxu0 0
      %3649 = vmatprep.subr.bf16.mxu0 0
      %3650 = vmatpush1.bf16.msra.mxu0 %v3633
      %3651 = vmatprep.subr.bf16.mxu0 0
      %3652 = vmatpush2.bf16.msra.mxu0 0
      %3653 = vmatprep.subr.bf16.mxu0 0
      %3654 = vmatpush2.bf16.msra.mxu0 0
      %3655 = vmatprep.subr.bf16.mxu0 0
      %3656 = vmatpush2.bf16.msra.mxu0 0
      %3657 = vmatprep.subr.bf16.mxu0 0
      %3658 = vmatpush2.bf16.msra.mxu0 0
      %3659 = vmatprep.subr.bf16.mxu0 0
      %3660 = vmatpush2.bf16.msra.mxu0 0
      %3661 = vmatprep.subr.bf16.mxu0 0
      %3662 = vmatpush2.bf16.msra.mxu0 0
      %3663 = vmatprep.subr.bf16.mxu0 0
      %3664 = vmatpush2.bf16.msra.mxu0 0
      %3665 = vmatprep.subr.bf16.mxu0 0
      %3666 = vmatpush2.bf16.msra.mxu0 0
      %3667 = vmatprep.mubr.bf16.mxu0 0
      %3668 = vmatmul.mubr.bf16.gmra.mxu0 %v3579
      %v3669 = vpop.f32.mrf.mxu0
      %v3670 = vadd.f32 0.0, %v3669
      %v3671 = vpop.f32.mrf.mxu0
      %v3672 = vpop.f32.mrf.mxu0
      %v3673 = vadd.f32 0.0, %v3672
      %v3674 = vpop.f32.mrf.mxu0
      %3675 = vmatprep.mubr.bf16.mxu0 0
      %3676 = vmatmul.mubr.bf16.gmra.mxu0 %v3582
      %v3677 = vpop.f32.mrf.mxu0
      %v3678 = vadd.f32 0.0, %v3677
      %v3679 = vpop.f32.mrf.mxu0
      %v3680 = vpop.f32.mrf.mxu0
      %v3681 = vadd.f32 0.0, %v3680
      %v3682 = vpop.f32.mrf.mxu0
      %3683 = vmatprep.mubr.bf16.mxu0 0
      %3684 = vmatmul.mubr.bf16.gmra.mxu0 %v3585
      %v3685 = vpop.f32.mrf.mxu0
      %v3686 = vadd.f32 0.0, %v3685
      %v3687 = vpop.f32.mrf.mxu0
      %v3688 = vpop.f32.mrf.mxu0
      %v3689 = vadd.f32 0.0, %v3688
      %v3690 = vpop.f32.mrf.mxu0
      %3691 = vmatprep.mubr.bf16.mxu0 0
      %3692 = vmatmul.mubr.bf16.gmra.mxu0 %v3588
      %v3693 = vpop.f32.mrf.mxu0
      %v3694 = vadd.f32 0.0, %v3693
      %v3695 = vpop.f32.mrf.mxu0
      %v3696 = vpop.f32.mrf.mxu0
      %v3697 = vadd.f32 0.0, %v3696
      %v3698 = vpop.f32.mrf.mxu0
      %3699 = vmatprep.mubr.bf16.mxu0 0
      %3700 = vmatmul.mubr.bf16.gmra.mxu0 %v3591
      %v3701 = vpop.f32.mrf.mxu0
      %v3702 = vadd.f32 0.0, %v3701
      %v3703 = vpop.f32.mrf.mxu0
      %v3704 = vpop.f32.mrf.mxu0
      %v3705 = vadd.f32 0.0, %v3704
      %v3706 = vpop.f32.mrf.mxu0
      %3707 = vmatprep.mubr.bf16.mxu0 0
      %3708 = vmatmul.mubr.bf16.gmra.mxu0 %v3594
      %v3709 = vpop.f32.mrf.mxu0
      %v3710 = vadd.f32 0.0, %v3709
      %v3711 = vpop.f32.mrf.mxu0
      %v3712 = vpop.f32.mrf.mxu0
      %v3713 = vadd.f32 0.0, %v3712
      %v3714 = vpop.f32.mrf.mxu0
      %3715 = vmatprep.mubr.bf16.mxu0 0
      %3716 = vmatmul.mubr.bf16.gmra.mxu0 %v3597
      %v3717 = vpop.f32.mrf.mxu0
      %v3718 = vadd.f32 0.0, %v3717
      %v3719 = vpop.f32.mrf.mxu0
      %v3720 = vpop.f32.mrf.mxu0
      %v3721 = vadd.f32 0.0, %v3720
      %v3722 = vpop.f32.mrf.mxu0
      %3723 = vmatprep.mubr.bf16.mxu0 0
      %3724 = vmatmul.mubr.bf16.gmra.mxu0 %v3600
      %v3725 = vpop.f32.mrf.mxu0
      %v3726 = vadd.f32 0.0, %v3725
      %v3727 = vpop.f32.mrf.mxu0
      %v3728 = vpop.f32.mrf.mxu0
      %v3729 = vadd.f32 0.0, %v3728
      %v3730 = vpop.f32.mrf.mxu0
      %3731 = vmatprep.mubr.bf16.mxu0 0
      %3732 = vmatmul.mubr.bf16.gmra.mxu0 %v3603
      %v3733 = vpop.f32.mrf.mxu0
      %v3734 = vadd.f32 0.0, %v3733
      %v3735 = vpop.f32.mrf.mxu0
      %v3736 = vpop.f32.mrf.mxu0
      %v3737 = vadd.f32 0.0, %v3736
      %v3738 = vpop.f32.mrf.mxu0
      %3739 = vmatprep.mubr.bf16.mxu0 0
      %3740 = vmatmul.mubr.bf16.gmra.mxu0 %v3606
      %v3741 = vpop.f32.mrf.mxu0
      %v3742 = vadd.f32 0.0, %v3741
      %v3743 = vpop.f32.mrf.mxu0
      %v3744 = vpop.f32.mrf.mxu0
      %v3745 = vadd.f32 0.0, %v3744
      %v3746 = vpop.f32.mrf.mxu0
      %3747 = vmatprep.mubr.bf16.mxu0 0
      %3748 = vmatmul.mubr.bf16.gmra.mxu0 %v3609
      %v3749 = vpop.f32.mrf.mxu0
      %v3750 = vadd.f32 0.0, %v3749
      %v3751 = vpop.f32.mrf.mxu0
      %v3752 = vpop.f32.mrf.mxu0
      %v3753 = vadd.f32 0.0, %v3752
      %v3754 = vpop.f32.mrf.mxu0
      %3755 = vmatprep.mubr.bf16.mxu0 0
      %3756 = vmatmul.mubr.bf16.gmra.mxu0 %v3612
      %v3757 = vpop.f32.mrf.mxu0
      %v3758 = vadd.f32 0.0, %v3757
      %v3759 = vpop.f32.mrf.mxu0
      %v3760 = vpop.f32.mrf.mxu0
      %v3761 = vadd.f32 0.0, %v3760
      %v3762 = vpop.f32.mrf.mxu0
      %3763 = vmatprep.mubr.bf16.mxu0 0
      %3764 = vmatmul.mubr.bf16.gmra.mxu0 %v3615
      %v3765 = vpop.f32.mrf.mxu0
      %v3766 = vadd.f32 0.0, %v3765
      %v3767 = vpop.f32.mrf.mxu0
      %v3768 = vpop.f32.mrf.mxu0
      %v3769 = vadd.f32 0.0, %v3768
      %v3770 = vpop.f32.mrf.mxu0
      %3771 = vmatprep.mubr.bf16.mxu0 0
      %3772 = vmatmul.mubr.bf16.gmra.mxu0 %v3618
      %v3773 = vpop.f32.mrf.mxu0
      %v3774 = vadd.f32 0.0, %v3773
      %v3775 = vpop.f32.mrf.mxu0
      %v3776 = vpop.f32.mrf.mxu0
      %v3777 = vadd.f32 0.0, %v3776
      %v3778 = vpop.f32.mrf.mxu0
      %3779 = vmatprep.mubr.bf16.mxu0 0
      %3780 = vmatmul.mubr.bf16.gmra.mxu0 %v3621
      %v3781 = vpop.f32.mrf.mxu0
      %v3782 = vadd.f32 0.0, %v3781
      %v3783 = vpop.f32.mrf.mxu0
      %v3784 = vpop.f32.mrf.mxu0
      %v3785 = vadd.f32 0.0, %v3784
      %v3786 = vpop.f32.mrf.mxu0
      %3787 = vmatprep.mubr.bf16.mxu0 0
      %3788 = vmatmul.mubr.bf16.gmra.mxu0 %v3624
      %v3789 = vpop.f32.mrf.mxu0
      %v3790 = vadd.f32 0.0, %v3789
      %v3791 = vpop.f32.mrf.mxu0
      %v3792 = vpop.f32.mrf.mxu0
      %v3793 = vadd.f32 0.0, %v3792
      %v3794 = vpop.f32.mrf.mxu0
      %3795 = vmatprep.mubr.bf16.mxu0 0
      %3796 = vmatmul.mubr.bf16.gmra.mxu0 %v3627
      %v3797 = vpop.f32.mrf.mxu0
      %v3798 = vadd.f32 0.0, %v3797
      %v3799 = vpop.f32.mrf.mxu0
      %v3800 = vpop.f32.mrf.mxu0
      %v3801 = vadd.f32 0.0, %v3800
      %v3802 = vpop.f32.mrf.mxu0
      %3803 = vmatprep.mubr.bf16.mxu0 0
      %3804 = vmatmul.mubr.bf16.gmra.mxu0 %v3630
      %v3805 = vpop.f32.mrf.mxu0
      %v3806 = vpop.f32.mrf.mxu0
      %v3807 = vpop.f32.mrf.mxu0
      %v3808 = vpop.f32.mrf.mxu0
      %3809 = vdwg.mxu0
      %v3810 = vadd.f32 %v2711, %v3670
      %v3811 = vadd.f32 %v2714, %v3673
      %v3812 = vadd.f32 %v2719, %v3678
      %v3813 = vadd.f32 %v2722, %v3681
      %v3814 = vadd.f32 %v2727, %v3686
      %v3815 = vadd.f32 %v2730, %v3689
      %v3816 = vadd.f32 %v2735, %v3694
      %v3817 = vadd.f32 %v2738, %v3697
      %v3818 = vadd.f32 %v2743, %v3702
      %v3819 = vadd.f32 %v2746, %v3705
      %v3820 = vadd.f32 %v2751, %v3710
      %v3821 = vadd.f32 %v2754, %v3713
      %v3822 = vadd.f32 %v2759, %v3718
      %v3823 = vadd.f32 %v2762, %v3721
      %v3824 = vadd.f32 %v2767, %v3726
      %v3825 = vadd.f32 %v2770, %v3729
      %v3826 = vadd.f32 %v2775, %v3734
      %v3827 = vadd.f32 %v2778, %v3737
      %v3828 = vadd.f32 %v2783, %v3742
      %v3829 = vadd.f32 %v2786, %v3745
      %v3830 = vadd.f32 %v2791, %v3750
      %v3831 = vadd.f32 %v2794, %v3753
      %v3832 = vadd.f32 %v2799, %v3758
      %v3833 = vadd.f32 %v2802, %v3761
      %v3834 = vadd.f32 %v2807, %v3766
      %v3835 = vadd.f32 %v2810, %v3769
      %v3836 = vadd.f32 %v2815, %v3774
      %v3837 = vadd.f32 %v2818, %v3777
      %v3838 = vadd.f32 %v2823, %v3782
      %v3839 = vadd.f32 %v2826, %v3785
      %v3840 = vadd.f32 %v2831, %v3790
      %v3841 = vadd.f32 %v2834, %v3793
      %v3842 = vadd.f32 %v2839, %v3798
      %v3843 = vadd.f32 %v2842, %v3801
      %3844 = vmatprep.subr.bf16.mxu0 0
      %3845 = vmatpush1.bf16.msra.mxu0 0
      %3846 = vmatprep.subr.bf16.mxu0 0
      %3847 = vmatpush1.bf16.msra.mxu0 0
      %3848 = vmatprep.subr.bf16.mxu0 0
      %3849 = vmatpush1.bf16.msra.mxu0 0
      %3850 = vmatprep.subr.bf16.mxu0 0
      %3851 = vmatpush1.bf16.msra.mxu0 0
      %3852 = vmatprep.subr.bf16.mxu0 0
      %3853 = vmatpush1.bf16.msra.mxu0 0
      %3854 = vmatprep.subr.bf16.mxu0 0
      %3855 = vmatpush1.bf16.msra.mxu0 0
      %3856 = vmatprep.subr.bf16.mxu0 0
      %3857 = vmatpush1.bf16.msra.mxu0 0
      %3858 = vmatprep.subr.bf16.mxu0 0
      %3859 = vmatpush1.bf16.msra.mxu0 %v3633
      %3860 = vmatprep.subr.bf16.mxu0 0
      %3861 = vmatpush2.bf16.msra.mxu0 0
      %3862 = vmatprep.subr.bf16.mxu0 0
      %3863 = vmatpush2.bf16.msra.mxu0 0
      %3864 = vmatprep.subr.bf16.mxu0 0
      %3865 = vmatpush2.bf16.msra.mxu0 0
      %3866 = vmatprep.subr.bf16.mxu0 0
      %3867 = vmatpush2.bf16.msra.mxu0 0
      %3868 = vmatprep.subr.bf16.mxu0 0
      %3869 = vmatpush2.bf16.msra.mxu0 0
      %3870 = vmatprep.subr.bf16.mxu0 0
      %3871 = vmatpush2.bf16.msra.mxu0 0
      %3872 = vmatprep.subr.bf16.mxu0 0
      %3873 = vmatpush2.bf16.msra.mxu0 0
      %3874 = vmatprep.subr.bf16.mxu0 0
      %3875 = vmatpush2.bf16.msra.mxu0 0
      %3876 = vmatprep.mubr.bf16.mxu0 0
      %3877 = vmatmul.mubr.bf16.gmra.mxu0 %v2332
      %v3878 = vpop.f32.mrf.mxu0
      %v3879 = vadd.f32 0.0, %v3878
      %v3880 = vpop.f32.mrf.mxu0
      %v3881 = vpop.f32.mrf.mxu0
      %v3882 = vadd.f32 0.0, %v3881
      %v3883 = vpop.f32.mrf.mxu0
      %3884 = vmatprep.mubr.bf16.mxu0 0
      %3885 = vmatmul.mubr.bf16.gmra.mxu0 %v2335
      %v3886 = vpop.f32.mrf.mxu0
      %v3887 = vadd.f32 0.0, %v3886
      %v3888 = vpop.f32.mrf.mxu0
      %v3889 = vpop.f32.mrf.mxu0
      %v3890 = vadd.f32 0.0, %v3889
      %v3891 = vpop.f32.mrf.mxu0
      %3892 = vmatprep.mubr.bf16.mxu0 0
      %3893 = vmatmul.mubr.bf16.gmra.mxu0 %v2338
      %v3894 = vpop.f32.mrf.mxu0
      %v3895 = vadd.f32 0.0, %v3894
      %v3896 = vpop.f32.mrf.mxu0
      %v3897 = vpop.f32.mrf.mxu0
      %v3898 = vadd.f32 0.0, %v3897
      %v3899 = vpop.f32.mrf.mxu0
      %3900 = vmatprep.mubr.bf16.mxu0 0
      %3901 = vmatmul.mubr.bf16.gmra.mxu0 %v2341
      %v3902 = vpop.f32.mrf.mxu0
      %v3903 = vadd.f32 0.0, %v3902
      %v3904 = vpop.f32.mrf.mxu0
      %v3905 = vpop.f32.mrf.mxu0
      %v3906 = vadd.f32 0.0, %v3905
      %v3907 = vpop.f32.mrf.mxu0
      %3908 = vmatprep.mubr.bf16.mxu0 0
      %3909 = vmatmul.mubr.bf16.gmra.mxu0 %v2344
      %v3910 = vpop.f32.mrf.mxu0
      %v3911 = vadd.f32 0.0, %v3910
      %v3912 = vpop.f32.mrf.mxu0
      %v3913 = vpop.f32.mrf.mxu0
      %v3914 = vadd.f32 0.0, %v3913
      %v3915 = vpop.f32.mrf.mxu0
      %3916 = vmatprep.mubr.bf16.mxu0 0
      %3917 = vmatmul.mubr.bf16.gmra.mxu0 %v2347
      %v3918 = vpop.f32.mrf.mxu0
      %v3919 = vadd.f32 0.0, %v3918
      %v3920 = vpop.f32.mrf.mxu0
      %v3921 = vpop.f32.mrf.mxu0
      %v3922 = vadd.f32 0.0, %v3921
      %v3923 = vpop.f32.mrf.mxu0
      %3924 = vmatprep.mubr.bf16.mxu0 0
      %3925 = vmatmul.mubr.bf16.gmra.mxu0 %v2350
      %v3926 = vpop.f32.mrf.mxu0
      %v3927 = vadd.f32 0.0, %v3926
      %v3928 = vpop.f32.mrf.mxu0
      %v3929 = vpop.f32.mrf.mxu0
      %v3930 = vadd.f32 0.0, %v3929
      %v3931 = vpop.f32.mrf.mxu0
      %3932 = vmatprep.mubr.bf16.mxu0 0
      %3933 = vmatmul.mubr.bf16.gmra.mxu0 %v2353
      %v3934 = vpop.f32.mrf.mxu0
      %v3935 = vadd.f32 0.0, %v3934
      %v3936 = vpop.f32.mrf.mxu0
      %v3937 = vpop.f32.mrf.mxu0
      %v3938 = vadd.f32 0.0, %v3937
      %v3939 = vpop.f32.mrf.mxu0
      %3940 = vmatprep.mubr.bf16.mxu0 0
      %3941 = vmatmul.mubr.bf16.gmra.mxu0 %v2356
      %v3942 = vpop.f32.mrf.mxu0
      %v3943 = vadd.f32 0.0, %v3942
      %v3944 = vpop.f32.mrf.mxu0
      %v3945 = vpop.f32.mrf.mxu0
      %v3946 = vadd.f32 0.0, %v3945
      %v3947 = vpop.f32.mrf.mxu0
      %3948 = vmatprep.mubr.bf16.mxu0 0
      %3949 = vmatmul.mubr.bf16.gmra.mxu0 %v2359
      %v3950 = vpop.f32.mrf.mxu0
      %v3951 = vadd.f32 0.0, %v3950
      %v3952 = vpop.f32.mrf.mxu0
      %v3953 = vpop.f32.mrf.mxu0
      %v3954 = vadd.f32 0.0, %v3953
      %v3955 = vpop.f32.mrf.mxu0
      %3956 = vmatprep.mubr.bf16.mxu0 0
      %3957 = vmatmul.mubr.bf16.gmra.mxu0 %v2362
      %v3958 = vpop.f32.mrf.mxu0
      %v3959 = vadd.f32 0.0, %v3958
      %v3960 = vpop.f32.mrf.mxu0
      %v3961 = vpop.f32.mrf.mxu0
      %v3962 = vadd.f32 0.0, %v3961
      %v3963 = vpop.f32.mrf.mxu0
      %3964 = vmatprep.mubr.bf16.mxu0 0
      %3965 = vmatmul.mubr.bf16.gmra.mxu0 %v2365
      %v3966 = vpop.f32.mrf.mxu0
      %v3967 = vadd.f32 0.0, %v3966
      %v3968 = vpop.f32.mrf.mxu0
      %v3969 = vpop.f32.mrf.mxu0
      %v3970 = vadd.f32 0.0, %v3969
      %v3971 = vpop.f32.mrf.mxu0
      %3972 = vmatprep.mubr.bf16.mxu0 0
      %3973 = vmatmul.mubr.bf16.gmra.mxu0 %v2368
      %v3974 = vpop.f32.mrf.mxu0
      %v3975 = vadd.f32 0.0, %v3974
      %v3976 = vpop.f32.mrf.mxu0
      %v3977 = vpop.f32.mrf.mxu0
      %v3978 = vadd.f32 0.0, %v3977
      %v3979 = vpop.f32.mrf.mxu0
      %3980 = vmatprep.mubr.bf16.mxu0 0
      %3981 = vmatmul.mubr.bf16.gmra.mxu0 %v2371
      %v3982 = vpop.f32.mrf.mxu0
      %v3983 = vadd.f32 0.0, %v3982
      %v3984 = vpop.f32.mrf.mxu0
      %v3985 = vpop.f32.mrf.mxu0
      %v3986 = vadd.f32 0.0, %v3985
      %v3987 = vpop.f32.mrf.mxu0
      %3988 = vmatprep.mubr.bf16.mxu0 0
      %3989 = vmatmul.mubr.bf16.gmra.mxu0 %v2374
      %v3990 = vpop.f32.mrf.mxu0
      %v3991 = vadd.f32 0.0, %v3990
      %v3992 = vpop.f32.mrf.mxu0
      %v3993 = vpop.f32.mrf.mxu0
      %v3994 = vadd.f32 0.0, %v3993
      %v3995 = vpop.f32.mrf.mxu0
      %3996 = vmatprep.mubr.bf16.mxu0 0
      %3997 = vmatmul.mubr.bf16.gmra.mxu0 %v2377
      %v3998 = vpop.f32.mrf.mxu0
      %v3999 = vadd.f32 0.0, %v3998
      %v4000 = vpop.f32.mrf.mxu0
      %v4001 = vpop.f32.mrf.mxu0
      %v4002 = vadd.f32 0.0, %v4001
      %v4003 = vpop.f32.mrf.mxu0
      %4004 = vmatprep.mubr.bf16.mxu0 0
      %4005 = vmatmul.mubr.bf16.gmra.mxu0 %v2380
      %v4006 = vpop.f32.mrf.mxu0
      %v4007 = vadd.f32 0.0, %v4006
      %v4008 = vpop.f32.mrf.mxu0
      %v4009 = vpop.f32.mrf.mxu0
      %v4010 = vadd.f32 0.0, %v4009
      %v4011 = vpop.f32.mrf.mxu0
      %4012 = vmatprep.mubr.bf16.mxu0 0
      %4013 = vmatmul.mubr.bf16.gmra.mxu0 %v2383
      %v4014 = vpop.f32.mrf.mxu0
      %v4015 = vpop.f32.mrf.mxu0
      %v4016 = vpop.f32.mrf.mxu0
      %v4017 = vpop.f32.mrf.mxu0
      %4018 = vdwg.mxu0
      %v4019 = vadd.f32 %v3205, %v3879
      %v4020 = vadd.f32 %v3208, %v3882
      %v4021 = vadd.f32 %v3213, %v3887
      %v4022 = vadd.f32 %v3216, %v3890
      %v4023 = vadd.f32 %v3221, %v3895
      %v4024 = vadd.f32 %v3224, %v3898
      %v4025 = vadd.f32 %v3229, %v3903
      %v4026 = vadd.f32 %v3232, %v3906
      %v4027 = vadd.f32 %v3237, %v3911
      %v4028 = vadd.f32 %v3240, %v3914
      %v4029 = vadd.f32 %v3245, %v3919
      %v4030 = vadd.f32 %v3248, %v3922
      %v4031 = vadd.f32 %v3253, %v3927
      %v4032 = vadd.f32 %v3256, %v3930
      %v4033 = vadd.f32 %v3261, %v3935
      %v4034 = vadd.f32 %v3264, %v3938
      %v4035 = vadd.f32 %v3269, %v3943
      %v4036 = vadd.f32 %v3272, %v3946
      %v4037 = vadd.f32 %v3277, %v3951
      %v4038 = vadd.f32 %v3280, %v3954
      %v4039 = vadd.f32 %v3285, %v3959
      %v4040 = vadd.f32 %v3288, %v3962
      %v4041 = vadd.f32 %v3293, %v3967
      %v4042 = vadd.f32 %v3296, %v3970
      %v4043 = vadd.f32 %v3301, %v3975
      %v4044 = vadd.f32 %v3304, %v3978
      %v4045 = vadd.f32 %v3309, %v3983
      %v4046 = vadd.f32 %v3312, %v3986
      %v4047 = vadd.f32 %v3317, %v3991
      %v4048 = vadd.f32 %v3320, %v3994
      %v4049 = vadd.f32 %v3325, %v3999
      %v4050 = vadd.f32 %v3328, %v4002
      %v4051 = vadd.f32 %v3333, %v4007
      %v4052 = vadd.f32 %v3336, %v4010
      %s4053 = scalar_lea.vmem %s4, 6
      %v4054 = vld [vmem:[%s4053] sm:$0x3]
      %v4057 = vunpack.c.l.b16 %v674
      %v4058 = vunpack.c.l.b16 %v675
      %v4059 = vpack.c.b16 %v4058, %v4057
      %v4061 = vsel %vm810, %v4059, 0
      %v4064 = vsel %vm823, %v4054, 0
      %4066 = vmatprep.subr.bf16.mxu0 0
      %4067 = vmatpush1.bf16.msra.mxu0 0
      %4068 = vmatprep.subr.bf16.mxu0 0
      %4069 = vmatpush1.bf16.msra.mxu0 0
      %4070 = vmatprep.subr.bf16.mxu0 0
      %4071 = vmatpush1.bf16.msra.mxu0 0
      %4072 = vmatprep.subr.bf16.mxu0 0
      %4073 = vmatpush1.bf16.msra.mxu0 0
      %4074 = vmatprep.subr.bf16.mxu0 0
      %4075 = vmatpush1.bf16.msra.mxu0 0
      %4076 = vmatprep.subr.bf16.mxu0 0
      %4077 = vmatpush1.bf16.msra.mxu0 0
      %4078 = vmatprep.subr.bf16.mxu0 0
      %4079 = vmatpush1.bf16.msra.mxu0 0
      %4080 = vmatprep.subr.bf16.mxu0 0
      %4081 = vmatpush1.bf16.msra.mxu0 %v4064
      %4082 = vmatprep.subr.bf16.mxu0 0
      %4083 = vmatpush2.bf16.msra.mxu0 0
      %4084 = vmatprep.subr.bf16.mxu0 0
      %4085 = vmatpush2.bf16.msra.mxu0 0
      %4086 = vmatprep.subr.bf16.mxu0 0
      %4087 = vmatpush2.bf16.msra.mxu0 0
      %4088 = vmatprep.subr.bf16.mxu0 0
      %4089 = vmatpush2.bf16.msra.mxu0 0
      %4090 = vmatprep.subr.bf16.mxu0 0
      %4091 = vmatpush2.bf16.msra.mxu0 0
      %4092 = vmatprep.subr.bf16.mxu0 0
      %4093 = vmatpush2.bf16.msra.mxu0 0
      %4094 = vmatprep.subr.bf16.mxu0 0
      %4095 = vmatpush2.bf16.msra.mxu0 0
      %4096 = vmatprep.subr.bf16.mxu0 0
      %4097 = vmatpush2.bf16.msra.mxu0 0
      %4098 = vmatprep.mubr.bf16.mxu0 0
      %4099 = vmatmul.mubr.bf16.gmra.mxu0 %v2623
      %v4100 = vpop.f32.mrf.mxu0
      %v4101 = vadd.f32 0.0, %v4100
      %v4102 = vpop.f32.mrf.mxu0
      %v4103 = vpop.f32.mrf.mxu0
      %v4104 = vadd.f32 0.0, %v4103
      %v4105 = vpop.f32.mrf.mxu0
      %4106 = vmatprep.mubr.bf16.mxu0 0
      %4107 = vmatmul.mubr.bf16.gmra.mxu0 %v2626
      %v4108 = vpop.f32.mrf.mxu0
      %v4109 = vadd.f32 0.0, %v4108
      %v4110 = vpop.f32.mrf.mxu0
      %v4111 = vpop.f32.mrf.mxu0
      %v4112 = vadd.f32 0.0, %v4111
      %v4113 = vpop.f32.mrf.mxu0
      %4114 = vmatprep.mubr.bf16.mxu0 0
      %4115 = vmatmul.mubr.bf16.gmra.mxu0 %v2629
      %v4116 = vpop.f32.mrf.mxu0
      %v4117 = vadd.f32 0.0, %v4116
      %v4118 = vpop.f32.mrf.mxu0
      %v4119 = vpop.f32.mrf.mxu0
      %v4120 = vadd.f32 0.0, %v4119
      %v4121 = vpop.f32.mrf.mxu0
      %4122 = vmatprep.mubr.bf16.mxu0 0
      %4123 = vmatmul.mubr.bf16.gmra.mxu0 %v2632
      %v4124 = vpop.f32.mrf.mxu0
      %v4125 = vadd.f32 0.0, %v4124
      %v4126 = vpop.f32.mrf.mxu0
      %v4127 = vpop.f32.mrf.mxu0
      %v4128 = vadd.f32 0.0, %v4127
      %v4129 = vpop.f32.mrf.mxu0
      %4130 = vmatprep.mubr.bf16.mxu0 0
      %4131 = vmatmul.mubr.bf16.gmra.mxu0 %v2635
      %v4132 = vpop.f32.mrf.mxu0
      %v4133 = vadd.f32 0.0, %v4132
      %v4134 = vpop.f32.mrf.mxu0
      %v4135 = vpop.f32.mrf.mxu0
      %v4136 = vadd.f32 0.0, %v4135
      %v4137 = vpop.f32.mrf.mxu0
      %4138 = vmatprep.mubr.bf16.mxu0 0
      %4139 = vmatmul.mubr.bf16.gmra.mxu0 %v2638
      %v4140 = vpop.f32.mrf.mxu0
      %v4141 = vadd.f32 0.0, %v4140
      %v4142 = vpop.f32.mrf.mxu0
      %v4143 = vpop.f32.mrf.mxu0
      %v4144 = vadd.f32 0.0, %v4143
      %v4145 = vpop.f32.mrf.mxu0
      %4146 = vmatprep.mubr.bf16.mxu0 0
      %4147 = vmatmul.mubr.bf16.gmra.mxu0 %v2641
      %v4148 = vpop.f32.mrf.mxu0
      %v4149 = vadd.f32 0.0, %v4148
      %v4150 = vpop.f32.mrf.mxu0
      %v4151 = vpop.f32.mrf.mxu0
      %v4152 = vadd.f32 0.0, %v4151
      %v4153 = vpop.f32.mrf.mxu0
      %4154 = vmatprep.mubr.bf16.mxu0 0
      %4155 = vmatmul.mubr.bf16.gmra.mxu0 %v2644
      %v4156 = vpop.f32.mrf.mxu0
      %v4157 = vadd.f32 0.0, %v4156
      %v4158 = vpop.f32.mrf.mxu0
      %v4159 = vpop.f32.mrf.mxu0
      %v4160 = vadd.f32 0.0, %v4159
      %v4161 = vpop.f32.mrf.mxu0
      %4162 = vmatprep.mubr.bf16.mxu0 0
      %4163 = vmatmul.mubr.bf16.gmra.mxu0 %v2647
      %v4164 = vpop.f32.mrf.mxu0
      %v4165 = vadd.f32 0.0, %v4164
      %v4166 = vpop.f32.mrf.mxu0
      %v4167 = vpop.f32.mrf.mxu0
      %v4168 = vadd.f32 0.0, %v4167
      %v4169 = vpop.f32.mrf.mxu0
      %4170 = vmatprep.mubr.bf16.mxu0 0
      %4171 = vmatmul.mubr.bf16.gmra.mxu0 %v2650
      %v4172 = vpop.f32.mrf.mxu0
      %v4173 = vadd.f32 0.0, %v4172
      %v4174 = vpop.f32.mrf.mxu0
      %v4175 = vpop.f32.mrf.mxu0
      %v4176 = vadd.f32 0.0, %v4175
      %v4177 = vpop.f32.mrf.mxu0
      %4178 = vmatprep.mubr.bf16.mxu0 0
      %4179 = vmatmul.mubr.bf16.gmra.mxu0 %v2653
      %v4180 = vpop.f32.mrf.mxu0
      %v4181 = vadd.f32 0.0, %v4180
      %v4182 = vpop.f32.mrf.mxu0
      %v4183 = vpop.f32.mrf.mxu0
      %v4184 = vadd.f32 0.0, %v4183
      %v4185 = vpop.f32.mrf.mxu0
      %4186 = vmatprep.mubr.bf16.mxu0 0
      %4187 = vmatmul.mubr.bf16.gmra.mxu0 %v2656
      %v4188 = vpop.f32.mrf.mxu0
      %v4189 = vadd.f32 0.0, %v4188
      %v4190 = vpop.f32.mrf.mxu0
      %v4191 = vpop.f32.mrf.mxu0
      %v4192 = vadd.f32 0.0, %v4191
      %v4193 = vpop.f32.mrf.mxu0
      %4194 = vmatprep.mubr.bf16.mxu0 0
      %4195 = vmatmul.mubr.bf16.gmra.mxu0 %v2659
      %v4196 = vpop.f32.mrf.mxu0
      %v4197 = vadd.f32 0.0, %v4196
      %v4198 = vpop.f32.mrf.mxu0
      %v4199 = vpop.f32.mrf.mxu0
      %v4200 = vadd.f32 0.0, %v4199
      %v4201 = vpop.f32.mrf.mxu0
      %4202 = vmatprep.mubr.bf16.mxu0 0
      %4203 = vmatmul.mubr.bf16.gmra.mxu0 %v2662
      %v4204 = vpop.f32.mrf.mxu0
      %v4205 = vadd.f32 0.0, %v4204
      %v4206 = vpop.f32.mrf.mxu0
      %v4207 = vpop.f32.mrf.mxu0
      %v4208 = vadd.f32 0.0, %v4207
      %v4209 = vpop.f32.mrf.mxu0
      %4210 = vmatprep.mubr.bf16.mxu0 0
      %4211 = vmatmul.mubr.bf16.gmra.mxu0 %v2665
      %v4212 = vpop.f32.mrf.mxu0
      %v4213 = vadd.f32 0.0, %v4212
      %v4214 = vpop.f32.mrf.mxu0
      %v4215 = vpop.f32.mrf.mxu0
      %v4216 = vadd.f32 0.0, %v4215
      %v4217 = vpop.f32.mrf.mxu0
      %4218 = vmatprep.mubr.bf16.mxu0 0
      %4219 = vmatmul.mubr.bf16.gmra.mxu0 %v2668
      %v4220 = vpop.f32.mrf.mxu0
      %v4221 = vadd.f32 0.0, %v4220
      %v4222 = vpop.f32.mrf.mxu0
      %v4223 = vpop.f32.mrf.mxu0
      %v4224 = vadd.f32 0.0, %v4223
      %v4225 = vpop.f32.mrf.mxu0
      %4226 = vmatprep.mubr.bf16.mxu0 0
      %4227 = vmatmul.mubr.bf16.gmra.mxu0 %v2671
      %v4228 = vpop.f32.mrf.mxu0
      %v4229 = vadd.f32 0.0, %v4228
      %v4230 = vpop.f32.mrf.mxu0
      %v4231 = vpop.f32.mrf.mxu0
      %v4232 = vadd.f32 0.0, %v4231
      %v4233 = vpop.f32.mrf.mxu0
      %4234 = vmatprep.mubr.bf16.mxu0 0
      %4235 = vmatmul.mubr.bf16.gmra.mxu0 %v4061
      %v4236 = vpop.f32.mrf.mxu0
      %v4237 = vpop.f32.mrf.mxu0
      %v4238 = vpop.f32.mrf.mxu0
      %v4239 = vpop.f32.mrf.mxu0
      %4240 = vdwg.mxu0
      %v4241 = vadd.f32 %v3810, %v4101
      %v4242 = vadd.f32 %v3811, %v4104
      %v4243 = vadd.f32 %v3812, %v4109
      %v4244 = vadd.f32 %v3813, %v4112
      %v4245 = vadd.f32 %v3814, %v4117
      %v4246 = vadd.f32 %v3815, %v4120
      %v4247 = vadd.f32 %v3816, %v4125
      %v4248 = vadd.f32 %v3817, %v4128
      %v4249 = vadd.f32 %v3818, %v4133
      %v4250 = vadd.f32 %v3819, %v4136
      %v4251 = vadd.f32 %v3820, %v4141
      %v4252 = vadd.f32 %v3821, %v4144
      %v4253 = vadd.f32 %v3822, %v4149
      %v4254 = vadd.f32 %v3823, %v4152
      %v4255 = vadd.f32 %v3824, %v4157
      %v4256 = vadd.f32 %v3825, %v4160
      %v4257 = vadd.f32 %v3826, %v4165
      %v4258 = vadd.f32 %v3827, %v4168
      %v4259 = vadd.f32 %v3828, %v4173
      %v4260 = vadd.f32 %v3829, %v4176
      %v4261 = vadd.f32 %v3830, %v4181
      %v4262 = vadd.f32 %v3831, %v4184
      %v4263 = vadd.f32 %v3832, %v4189
      %v4264 = vadd.f32 %v3833, %v4192
      %v4265 = vadd.f32 %v3834, %v4197
      %v4266 = vadd.f32 %v3835, %v4200
      %v4267 = vadd.f32 %v3836, %v4205
      %v4268 = vadd.f32 %v3837, %v4208
      %v4269 = vadd.f32 %v3838, %v4213
      %v4270 = vadd.f32 %v3839, %v4216
      %v4271 = vadd.f32 %v3840, %v4221
      %v4272 = vadd.f32 %v3841, %v4224
      %v4273 = vadd.f32 %v3842, %v4229
      %v4274 = vadd.f32 %v3843, %v4232
      %v4277 = vunpack.c.l.b16 %v614
      %v4278 = vunpack.c.l.b16 %v615
      %v4279 = vpack.c.b16 %v4278, %v4277
      %v4281 = vsel %vm810, %v4279, 0
      %4283 = vmatprep.subr.bf16.mxu0 0
      %4284 = vmatpush1.bf16.msra.mxu0 0
      %4285 = vmatprep.subr.bf16.mxu0 0
      %4286 = vmatpush1.bf16.msra.mxu0 0
      %4287 = vmatprep.subr.bf16.mxu0 0
      %4288 = vmatpush1.bf16.msra.mxu0 0
      %4289 = vmatprep.subr.bf16.mxu0 0
      %4290 = vmatpush1.bf16.msra.mxu0 0
      %4291 = vmatprep.subr.bf16.mxu0 0
      %4292 = vmatpush1.bf16.msra.mxu0 0
      %4293 = vmatprep.subr.bf16.mxu0 0
      %4294 = vmatpush1.bf16.msra.mxu0 0
      %4295 = vmatprep.subr.bf16.mxu0 0
      %4296 = vmatpush1.bf16.msra.mxu0 0
      %4297 = vmatprep.subr.bf16.mxu0 0
      %4298 = vmatpush1.bf16.msra.mxu0 %v4064
      %4299 = vmatprep.subr.bf16.mxu0 0
      %4300 = vmatpush2.bf16.msra.mxu0 0
      %4301 = vmatprep.subr.bf16.mxu0 0
      %4302 = vmatpush2.bf16.msra.mxu0 0
      %4303 = vmatprep.subr.bf16.mxu0 0
      %4304 = vmatpush2.bf16.msra.mxu0 0
      %4305 = vmatprep.subr.bf16.mxu0 0
      %4306 = vmatpush2.bf16.msra.mxu0 0
      %4307 = vmatprep.subr.bf16.mxu0 0
      %4308 = vmatpush2.bf16.msra.mxu0 0
      %4309 = vmatprep.subr.bf16.mxu0 0
      %4310 = vmatpush2.bf16.msra.mxu0 0
      %4311 = vmatprep.subr.bf16.mxu0 0
      %4312 = vmatpush2.bf16.msra.mxu0 0
      %4313 = vmatprep.subr.bf16.mxu0 0
      %4314 = vmatpush2.bf16.msra.mxu0 0
      %4315 = vmatprep.mubr.bf16.mxu0 0
      %4316 = vmatmul.mubr.bf16.gmra.mxu0 %v3120
      %v4317 = vpop.f32.mrf.mxu0
      %v4318 = vadd.f32 0.0, %v4317
      %v4319 = vpop.f32.mrf.mxu0
      %v4320 = vpop.f32.mrf.mxu0
      %v4321 = vadd.f32 0.0, %v4320
      %v4322 = vpop.f32.mrf.mxu0
      %4323 = vmatprep.mubr.bf16.mxu0 0
      %4324 = vmatmul.mubr.bf16.gmra.mxu0 %v3123
      %v4325 = vpop.f32.mrf.mxu0
      %v4326 = vadd.f32 0.0, %v4325
      %v4327 = vpop.f32.mrf.mxu0
      %v4328 = vpop.f32.mrf.mxu0
      %v4329 = vadd.f32 0.0, %v4328
      %v4330 = vpop.f32.mrf.mxu0
      %4331 = vmatprep.mubr.bf16.mxu0 0
      %4332 = vmatmul.mubr.bf16.gmra.mxu0 %v3126
      %v4333 = vpop.f32.mrf.mxu0
      %v4334 = vadd.f32 0.0, %v4333
      %v4335 = vpop.f32.mrf.mxu0
      %v4336 = vpop.f32.mrf.mxu0
      %v4337 = vadd.f32 0.0, %v4336
      %v4338 = vpop.f32.mrf.mxu0
      %4339 = vmatprep.mubr.bf16.mxu0 0
      %4340 = vmatmul.mubr.bf16.gmra.mxu0 %v3129
      %v4341 = vpop.f32.mrf.mxu0
      %v4342 = vadd.f32 0.0, %v4341
      %v4343 = vpop.f32.mrf.mxu0
      %v4344 = vpop.f32.mrf.mxu0
      %v4345 = vadd.f32 0.0, %v4344
      %v4346 = vpop.f32.mrf.mxu0
      %4347 = vmatprep.mubr.bf16.mxu0 0
      %4348 = vmatmul.mubr.bf16.gmra.mxu0 %v3132
      %v4349 = vpop.f32.mrf.mxu0
      %v4350 = vadd.f32 0.0, %v4349
      %v4351 = vpop.f32.mrf.mxu0
      %v4352 = vpop.f32.mrf.mxu0
      %v4353 = vadd.f32 0.0, %v4352
      %v4354 = vpop.f32.mrf.mxu0
      %4355 = vmatprep.mubr.bf16.mxu0 0
      %4356 = vmatmul.mubr.bf16.gmra.mxu0 %v3135
      %v4357 = vpop.f32.mrf.mxu0
      %v4358 = vadd.f32 0.0, %v4357
      %v4359 = vpop.f32.mrf.mxu0
      %v4360 = vpop.f32.mrf.mxu0
      %v4361 = vadd.f32 0.0, %v4360
      %v4362 = vpop.f32.mrf.mxu0
      %4363 = vmatprep.mubr.bf16.mxu0 0
      %4364 = vmatmul.mubr.bf16.gmra.mxu0 %v3138
      %v4365 = vpop.f32.mrf.mxu0
      %v4366 = vadd.f32 0.0, %v4365
      %v4367 = vpop.f32.mrf.mxu0
      %v4368 = vpop.f32.mrf.mxu0
      %v4369 = vadd.f32 0.0, %v4368
      %v4370 = vpop.f32.mrf.mxu0
      %4371 = vmatprep.mubr.bf16.mxu0 0
      %4372 = vmatmul.mubr.bf16.gmra.mxu0 %v3141
      %v4373 = vpop.f32.mrf.mxu0
      %v4374 = vadd.f32 0.0, %v4373
      %v4375 = vpop.f32.mrf.mxu0
      %v4376 = vpop.f32.mrf.mxu0
      %v4377 = vadd.f32 0.0, %v4376
      %v4378 = vpop.f32.mrf.mxu0
      %4379 = vmatprep.mubr.bf16.mxu0 0
      %4380 = vmatmul.mubr.bf16.gmra.mxu0 %v3144
      %v4381 = vpop.f32.mrf.mxu0
      %v4382 = vadd.f32 0.0, %v4381
      %v4383 = vpop.f32.mrf.mxu0
      %v4384 = vpop.f32.mrf.mxu0
      %v4385 = vadd.f32 0.0, %v4384
      %v4386 = vpop.f32.mrf.mxu0
      %4387 = vmatprep.mubr.bf16.mxu0 0
      %4388 = vmatmul.mubr.bf16.gmra.mxu0 %v3147
      %v4389 = vpop.f32.mrf.mxu0
      %v4390 = vadd.f32 0.0, %v4389
      %v4391 = vpop.f32.mrf.mxu0
      %v4392 = vpop.f32.mrf.mxu0
      %v4393 = vadd.f32 0.0, %v4392
      %v4394 = vpop.f32.mrf.mxu0
      %4395 = vmatprep.mubr.bf16.mxu0 0
      %4396 = vmatmul.mubr.bf16.gmra.mxu0 %v3150
      %v4397 = vpop.f32.mrf.mxu0
      %v4398 = vadd.f32 0.0, %v4397
      %v4399 = vpop.f32.mrf.mxu0
      %v4400 = vpop.f32.mrf.mxu0
      %v4401 = vadd.f32 0.0, %v4400
      %v4402 = vpop.f32.mrf.mxu0
      %4403 = vmatprep.mubr.bf16.mxu0 0
      %4404 = vmatmul.mubr.bf16.gmra.mxu0 %v3153
      %v4405 = vpop.f32.mrf.mxu0
      %v4406 = vadd.f32 0.0, %v4405
      %v4407 = vpop.f32.mrf.mxu0
      %v4408 = vpop.f32.mrf.mxu0
      %v4409 = vadd.f32 0.0, %v4408
      %v4410 = vpop.f32.mrf.mxu0
      %4411 = vmatprep.mubr.bf16.mxu0 0
      %4412 = vmatmul.mubr.bf16.gmra.mxu0 %v3156
      %v4413 = vpop.f32.mrf.mxu0
      %v4414 = vadd.f32 0.0, %v4413
      %v4415 = vpop.f32.mrf.mxu0
      %v4416 = vpop.f32.mrf.mxu0
      %v4417 = vadd.f32 0.0, %v4416
      %v4418 = vpop.f32.mrf.mxu0
      %4419 = vmatprep.mubr.bf16.mxu0 0
      %4420 = vmatmul.mubr.bf16.gmra.mxu0 %v3159
      %v4421 = vpop.f32.mrf.mxu0
      %v4422 = vadd.f32 0.0, %v4421
      %v4423 = vpop.f32.mrf.mxu0
      %v4424 = vpop.f32.mrf.mxu0
      %v4425 = vadd.f32 0.0, %v4424
      %v4426 = vpop.f32.mrf.mxu0
      %4427 = vmatprep.mubr.bf16.mxu0 0
      %4428 = vmatmul.mubr.bf16.gmra.mxu0 %v3162
      %v4429 = vpop.f32.mrf.mxu0
      %v4430 = vadd.f32 0.0, %v4429
      %v4431 = vpop.f32.mrf.mxu0
      %v4432 = vpop.f32.mrf.mxu0
      %v4433 = vadd.f32 0.0, %v4432
      %v4434 = vpop.f32.mrf.mxu0
      %4435 = vmatprep.mubr.bf16.mxu0 0
      %4436 = vmatmul.mubr.bf16.gmra.mxu0 %v3165
      %v4437 = vpop.f32.mrf.mxu0
      %v4438 = vadd.f32 0.0, %v4437
      %v4439 = vpop.f32.mrf.mxu0
      %v4440 = vpop.f32.mrf.mxu0
      %v4441 = vadd.f32 0.0, %v4440
      %v4442 = vpop.f32.mrf.mxu0
      %4443 = vmatprep.mubr.bf16.mxu0 0
      %4444 = vmatmul.mubr.bf16.gmra.mxu0 %v3168
      %v4445 = vpop.f32.mrf.mxu0
      %v4446 = vadd.f32 0.0, %v4445
      %v4447 = vpop.f32.mrf.mxu0
      %v4448 = vpop.f32.mrf.mxu0
      %v4449 = vadd.f32 0.0, %v4448
      %v4450 = vpop.f32.mrf.mxu0
      %4451 = vmatprep.mubr.bf16.mxu0 0
      %4452 = vmatmul.mubr.bf16.gmra.mxu0 %v4281
      %v4453 = vpop.f32.mrf.mxu0
      %v4454 = vpop.f32.mrf.mxu0
      %v4455 = vpop.f32.mrf.mxu0
      %v4456 = vpop.f32.mrf.mxu0
      %4457 = vdwg.mxu0
      %v4458 = vadd.f32 %v4019, %v4318
      %v4459 = vadd.f32 %v4020, %v4321
      %v4460 = vadd.f32 %v4021, %v4326
      %v4461 = vadd.f32 %v4022, %v4329
      %v4462 = vadd.f32 %v4023, %v4334
      %v4463 = vadd.f32 %v4024, %v4337
      %v4464 = vadd.f32 %v4025, %v4342
      %v4465 = vadd.f32 %v4026, %v4345
      %v4466 = vadd.f32 %v4027, %v4350
      %v4467 = vadd.f32 %v4028, %v4353
      %v4468 = vadd.f32 %v4029, %v4358
      %v4469 = vadd.f32 %v4030, %v4361
      %v4470 = vadd.f32 %v4031, %v4366
      %v4471 = vadd.f32 %v4032, %v4369
      %v4472 = vadd.f32 %v4033, %v4374
      %v4473 = vadd.f32 %v4034, %v4377
      %v4474 = vadd.f32 %v4035, %v4382
      %v4475 = vadd.f32 %v4036, %v4385
      %v4476 = vadd.f32 %v4037, %v4390
      %v4477 = vadd.f32 %v4038, %v4393
      %v4478 = vadd.f32 %v4039, %v4398
      %v4479 = vadd.f32 %v4040, %v4401
      %v4480 = vadd.f32 %v4041, %v4406
      %v4481 = vadd.f32 %v4042, %v4409
      %v4482 = vadd.f32 %v4043, %v4414
      %v4483 = vadd.f32 %v4044, %v4417
      %v4484 = vadd.f32 %v4045, %v4422
      %v4485 = vadd.f32 %v4046, %v4425
      %v4486 = vadd.f32 %v4047, %v4430
      %v4487 = vadd.f32 %v4048, %v4433
      %v4488 = vadd.f32 %v4049, %v4438
      %v4489 = vadd.f32 %v4050, %v4441
      %v4490 = vadd.f32 %v4051, %v4446
      %v4491 = vadd.f32 %v4052, %v4449
      %s4492 = scalar_lea.vmem %s4, 8
      %v4493 = vld [vmem:[%s4492] sm:$0x3]
      %v4495 = vshrl.u32 %v614, 16
      %v4497 = vrot.slane %v4495, 4
      %v4498 = vshll.u32 %v614, 16
      %v4500 = vrot.slane %v4498, 5
      %v4501 = vor.u32 %v4497, %v4500
      %v4502 = vrot.slane %v4501, 4
      %v4504 = vshll.u32 %v615, 16
      %v4506 = vrot.slane %v4504, 5
      %v4507 = vsel %vm683, %v4502, %v4506
      %v4508 = vshrl.u32 %v615, 16
      %v4510 = vrot.slane %v4508, 4
      %v4511 = vor.u32 %v4510, %v4506
      %v4512 = vrot.slane %v4511, 4
      %v4514 = vshll.u32 %v616, 16
      %v4516 = vrot.slane %v4514, 5
      %v4517 = vsel %vm683, %v4512, %v4516
      %v4518 = vunpack.c.l.b16 %v4507
      %v4519 = vunpack.c.l.b16 %v4517
      %v4520 = vpack.c.b16 %v4519, %v4518
      %v4522 = vsel %vm810, %v4520, 0
      %v4525 = vsel %vm823, %v4493, 0
      %4527 = vmatprep.subr.bf16.mxu0 0
      %4528 = vmatpush1.bf16.msra.mxu0 0
      %4529 = vmatprep.subr.bf16.mxu0 0
      %4530 = vmatpush1.bf16.msra.mxu0 0
      %4531 = vmatprep.subr.bf16.mxu0 0
      %4532 = vmatpush1.bf16.msra.mxu0 0
      %4533 = vmatprep.subr.bf16.mxu0 0
      %4534 = vmatpush1.bf16.msra.mxu0 0
      %4535 = vmatprep.subr.bf16.mxu0 0
      %4536 = vmatpush1.bf16.msra.mxu0 0
      %4537 = vmatprep.subr.bf16.mxu0 0
      %4538 = vmatpush1.bf16.msra.mxu0 0
      %4539 = vmatprep.subr.bf16.mxu0 0
      %4540 = vmatpush1.bf16.msra.mxu0 0
      %4541 = vmatprep.subr.bf16.mxu0 0
      %4542 = vmatpush1.bf16.msra.mxu0 %v4525
      %4543 = vmatprep.subr.bf16.mxu0 0
      %4544 = vmatpush2.bf16.msra.mxu0 0
      %4545 = vmatprep.subr.bf16.mxu0 0
      %4546 = vmatpush2.bf16.msra.mxu0 0
      %4547 = vmatprep.subr.bf16.mxu0 0
      %4548 = vmatpush2.bf16.msra.mxu0 0
      %4549 = vmatprep.subr.bf16.mxu0 0
      %4550 = vmatpush2.bf16.msra.mxu0 0
      %4551 = vmatprep.subr.bf16.mxu0 0
      %4552 = vmatpush2.bf16.msra.mxu0 0
      %4553 = vmatprep.subr.bf16.mxu0 0
      %4554 = vmatpush2.bf16.msra.mxu0 0
      %4555 = vmatprep.subr.bf16.mxu0 0
      %4556 = vmatpush2.bf16.msra.mxu0 0
      %4557 = vmatprep.subr.bf16.mxu0 0
      %4558 = vmatpush2.bf16.msra.mxu0 0
      %4559 = vmatprep.mubr.bf16.mxu0 0
      %4560 = vmatmul.mubr.bf16.gmra.mxu0 %v2335
      %v4561 = vpop.f32.mrf.mxu0
      %v4562 = vadd.f32 0.0, %v4561
      %v4563 = vpop.f32.mrf.mxu0
      %v4564 = vpop.f32.mrf.mxu0
      %v4565 = vadd.f32 0.0, %v4564
      %v4566 = vpop.f32.mrf.mxu0
      %4567 = vmatprep.mubr.bf16.mxu0 0
      %4568 = vmatmul.mubr.bf16.gmra.mxu0 %v2338
      %v4569 = vpop.f32.mrf.mxu0
      %v4570 = vadd.f32 0.0, %v4569
      %v4571 = vpop.f32.mrf.mxu0
      %v4572 = vpop.f32.mrf.mxu0
      %v4573 = vadd.f32 0.0, %v4572
      %v4574 = vpop.f32.mrf.mxu0
      %4575 = vmatprep.mubr.bf16.mxu0 0
      %4576 = vmatmul.mubr.bf16.gmra.mxu0 %v2341
      %v4577 = vpop.f32.mrf.mxu0
      %v4578 = vadd.f32 0.0, %v4577
      %v4579 = vpop.f32.mrf.mxu0
      %v4580 = vpop.f32.mrf.mxu0
      %v4581 = vadd.f32 0.0, %v4580
      %v4582 = vpop.f32.mrf.mxu0
      %4583 = vmatprep.mubr.bf16.mxu0 0
      %4584 = vmatmul.mubr.bf16.gmra.mxu0 %v2344
      %v4585 = vpop.f32.mrf.mxu0
      %v4586 = vadd.f32 0.0, %v4585
      %v4587 = vpop.f32.mrf.mxu0
      %v4588 = vpop.f32.mrf.mxu0
      %v4589 = vadd.f32 0.0, %v4588
      %v4590 = vpop.f32.mrf.mxu0
      %4591 = vmatprep.mubr.bf16.mxu0 0
      %4592 = vmatmul.mubr.bf16.gmra.mxu0 %v2347
      %v4593 = vpop.f32.mrf.mxu0
      %v4594 = vadd.f32 0.0, %v4593
      %v4595 = vpop.f32.mrf.mxu0
      %v4596 = vpop.f32.mrf.mxu0
      %v4597 = vadd.f32 0.0, %v4596
      %v4598 = vpop.f32.mrf.mxu0
      %4599 = vmatprep.mubr.bf16.mxu0 0
      %4600 = vmatmul.mubr.bf16.gmra.mxu0 %v2350
      %v4601 = vpop.f32.mrf.mxu0
      %v4602 = vadd.f32 0.0, %v4601
      %v4603 = vpop.f32.mrf.mxu0
      %v4604 = vpop.f32.mrf.mxu0
      %v4605 = vadd.f32 0.0, %v4604
      %v4606 = vpop.f32.mrf.mxu0
      %4607 = vmatprep.mubr.bf16.mxu0 0
      %4608 = vmatmul.mubr.bf16.gmra.mxu0 %v2353
      %v4609 = vpop.f32.mrf.mxu0
      %v4610 = vadd.f32 0.0, %v4609
      %v4611 = vpop.f32.mrf.mxu0
      %v4612 = vpop.f32.mrf.mxu0
      %v4613 = vadd.f32 0.0, %v4612
      %v4614 = vpop.f32.mrf.mxu0
      %4615 = vmatprep.mubr.bf16.mxu0 0
      %4616 = vmatmul.mubr.bf16.gmra.mxu0 %v2356
      %v4617 = vpop.f32.mrf.mxu0
      %v4618 = vadd.f32 0.0, %v4617
      %v4619 = vpop.f32.mrf.mxu0
      %v4620 = vpop.f32.mrf.mxu0
      %v4621 = vadd.f32 0.0, %v4620
      %v4622 = vpop.f32.mrf.mxu0
      %4623 = vmatprep.mubr.bf16.mxu0 0
      %4624 = vmatmul.mubr.bf16.gmra.mxu0 %v2359
      %v4625 = vpop.f32.mrf.mxu0
      %v4626 = vadd.f32 0.0, %v4625
      %v4627 = vpop.f32.mrf.mxu0
      %v4628 = vpop.f32.mrf.mxu0
      %v4629 = vadd.f32 0.0, %v4628
      %v4630 = vpop.f32.mrf.mxu0
      %4631 = vmatprep.mubr.bf16.mxu0 0
      %4632 = vmatmul.mubr.bf16.gmra.mxu0 %v2362
      %v4633 = vpop.f32.mrf.mxu0
      %v4634 = vadd.f32 0.0, %v4633
      %v4635 = vpop.f32.mrf.mxu0
      %v4636 = vpop.f32.mrf.mxu0
      %v4637 = vadd.f32 0.0, %v4636
      %v4638 = vpop.f32.mrf.mxu0
      %4639 = vmatprep.mubr.bf16.mxu0 0
      %4640 = vmatmul.mubr.bf16.gmra.mxu0 %v2365
      %v4641 = vpop.f32.mrf.mxu0
      %v4642 = vadd.f32 0.0, %v4641
      %v4643 = vpop.f32.mrf.mxu0
      %v4644 = vpop.f32.mrf.mxu0
      %v4645 = vadd.f32 0.0, %v4644
      %v4646 = vpop.f32.mrf.mxu0
      %4647 = vmatprep.mubr.bf16.mxu0 0
      %4648 = vmatmul.mubr.bf16.gmra.mxu0 %v2368
      %v4649 = vpop.f32.mrf.mxu0
      %v4650 = vadd.f32 0.0, %v4649
      %v4651 = vpop.f32.mrf.mxu0
      %v4652 = vpop.f32.mrf.mxu0
      %v4653 = vadd.f32 0.0, %v4652
      %v4654 = vpop.f32.mrf.mxu0
      %4655 = vmatprep.mubr.bf16.mxu0 0
      %4656 = vmatmul.mubr.bf16.gmra.mxu0 %v2371
      %v4657 = vpop.f32.mrf.mxu0
      %v4658 = vadd.f32 0.0, %v4657
      %v4659 = vpop.f32.mrf.mxu0
      %v4660 = vpop.f32.mrf.mxu0
      %v4661 = vadd.f32 0.0, %v4660
      %v4662 = vpop.f32.mrf.mxu0
      %4663 = vmatprep.mubr.bf16.mxu0 0
      %4664 = vmatmul.mubr.bf16.gmra.mxu0 %v2374
      %v4665 = vpop.f32.mrf.mxu0
      %v4666 = vadd.f32 0.0, %v4665
      %v4667 = vpop.f32.mrf.mxu0
      %v4668 = vpop.f32.mrf.mxu0
      %v4669 = vadd.f32 0.0, %v4668
      %v4670 = vpop.f32.mrf.mxu0
      %4671 = vmatprep.mubr.bf16.mxu0 0
      %4672 = vmatmul.mubr.bf16.gmra.mxu0 %v2377
      %v4673 = vpop.f32.mrf.mxu0
      %v4674 = vadd.f32 0.0, %v4673
      %v4675 = vpop.f32.mrf.mxu0
      %v4676 = vpop.f32.mrf.mxu0
      %v4677 = vadd.f32 0.0, %v4676
      %v4678 = vpop.f32.mrf.mxu0
      %4679 = vmatprep.mubr.bf16.mxu0 0
      %4680 = vmatmul.mubr.bf16.gmra.mxu0 %v2380
      %v4681 = vpop.f32.mrf.mxu0
      %v4682 = vadd.f32 0.0, %v4681
      %v4683 = vpop.f32.mrf.mxu0
      %v4684 = vpop.f32.mrf.mxu0
      %v4685 = vadd.f32 0.0, %v4684
      %v4686 = vpop.f32.mrf.mxu0
      %4687 = vmatprep.mubr.bf16.mxu0 0
      %4688 = vmatmul.mubr.bf16.gmra.mxu0 %v2383
      %v4689 = vpop.f32.mrf.mxu0
      %v4690 = vadd.f32 0.0, %v4689
      %v4691 = vpop.f32.mrf.mxu0
      %v4692 = vpop.f32.mrf.mxu0
      %v4693 = vadd.f32 0.0, %v4692
      %v4694 = vpop.f32.mrf.mxu0
      %4695 = vmatprep.mubr.bf16.mxu0 0
      %4696 = vmatmul.mubr.bf16.gmra.mxu0 %v4522
      %v4697 = vpop.f32.mrf.mxu0
      %v4698 = vpop.f32.mrf.mxu0
      %v4699 = vpop.f32.mrf.mxu0
      %v4700 = vpop.f32.mrf.mxu0
      %4701 = vdwg.mxu0
      %v4702 = vadd.f32 %v4241, %v4562
      %v4703 = vadd.f32 %v4242, %v4565
      %v4704 = vadd.f32 %v4243, %v4570
      %v4705 = vadd.f32 %v4244, %v4573
      %v4706 = vadd.f32 %v4245, %v4578
      %v4707 = vadd.f32 %v4246, %v4581
      %v4708 = vadd.f32 %v4247, %v4586
      %v4709 = vadd.f32 %v4248, %v4589
      %v4710 = vadd.f32 %v4249, %v4594
      %v4711 = vadd.f32 %v4250, %v4597
      %v4712 = vadd.f32 %v4251, %v4602
      %v4713 = vadd.f32 %v4252, %v4605
      %v4714 = vadd.f32 %v4253, %v4610
      %v4715 = vadd.f32 %v4254, %v4613
      %v4716 = vadd.f32 %v4255, %v4618
      %v4717 = vadd.f32 %v4256, %v4621
      %v4718 = vadd.f32 %v4257, %v4626
      %v4719 = vadd.f32 %v4258, %v4629
      %v4720 = vadd.f32 %v4259, %v4634
      %v4721 = vadd.f32 %v4260, %v4637
      %v4722 = vadd.f32 %v4261, %v4642
      %v4723 = vadd.f32 %v4262, %v4645
      %v4724 = vadd.f32 %v4263, %v4650
      %v4725 = vadd.f32 %v4264, %v4653
      %v4726 = vadd.f32 %v4265, %v4658
      %v4727 = vadd.f32 %v4266, %v4661
      %v4728 = vadd.f32 %v4267, %v4666
      %v4729 = vadd.f32 %v4268, %v4669
      %v4730 = vadd.f32 %v4269, %v4674
      %v4731 = vadd.f32 %v4270, %v4677
      %v4732 = vadd.f32 %v4271, %v4682
      %v4733 = vadd.f32 %v4272, %v4685
      %v4734 = vadd.f32 %v4273, %v4690
      %v4735 = vadd.f32 %v4274, %v4693
      %4736 = vmatprep.subr.bf16.mxu0 0
      %4737 = vmatpush1.bf16.msra.mxu0 0
      %4738 = vmatprep.subr.bf16.mxu0 0
      %4739 = vmatpush1.bf16.msra.mxu0 0
      %4740 = vmatprep.subr.bf16.mxu0 0
      %4741 = vmatpush1.bf16.msra.mxu0 0
      %4742 = vmatprep.subr.bf16.mxu0 0
      %4743 = vmatpush1.bf16.msra.mxu0 0
      %4744 = vmatprep.subr.bf16.mxu0 0
      %4745 = vmatpush1.bf16.msra.mxu0 0
      %4746 = vmatprep.subr.bf16.mxu0 0
      %4747 = vmatpush1.bf16.msra.mxu0 0
      %4748 = vmatprep.subr.bf16.mxu0 0
      %4749 = vmatpush1.bf16.msra.mxu0 0
      %4750 = vmatprep.subr.bf16.mxu0 0
      %4751 = vmatpush1.bf16.msra.mxu0 %v4525
      %4752 = vmatprep.subr.bf16.mxu0 0
      %4753 = vmatpush2.bf16.msra.mxu0 0
      %4754 = vmatprep.subr.bf16.mxu0 0
      %4755 = vmatpush2.bf16.msra.mxu0 0
      %4756 = vmatprep.subr.bf16.mxu0 0
      %4757 = vmatpush2.bf16.msra.mxu0 0
      %4758 = vmatprep.subr.bf16.mxu0 0
      %4759 = vmatpush2.bf16.msra.mxu0 0
      %4760 = vmatprep.subr.bf16.mxu0 0
      %4761 = vmatpush2.bf16.msra.mxu0 0
      %4762 = vmatprep.subr.bf16.mxu0 0
      %4763 = vmatpush2.bf16.msra.mxu0 0
      %4764 = vmatprep.subr.bf16.mxu0 0
      %4765 = vmatpush2.bf16.msra.mxu0 0
      %4766 = vmatprep.subr.bf16.mxu0 0
      %4767 = vmatpush2.bf16.msra.mxu0 0
      %4768 = vmatprep.mubr.bf16.mxu0 0
      %4769 = vmatmul.mubr.bf16.gmra.mxu0 %v2623
      %v4770 = vpop.f32.mrf.mxu0
      %v4771 = vadd.f32 0.0, %v4770
      %v4772 = vpop.f32.mrf.mxu0
      %v4773 = vpop.f32.mrf.mxu0
      %v4774 = vadd.f32 0.0, %v4773
      %v4775 = vpop.f32.mrf.mxu0
      %4776 = vmatprep.mubr.bf16.mxu0 0
      %4777 = vmatmul.mubr.bf16.gmra.mxu0 %v2626
      %v4778 = vpop.f32.mrf.mxu0
      %v4779 = vadd.f32 0.0, %v4778
      %v4780 = vpop.f32.mrf.mxu0
      %v4781 = vpop.f32.mrf.mxu0
      %v4782 = vadd.f32 0.0, %v4781
      %v4783 = vpop.f32.mrf.mxu0
      %4784 = vmatprep.mubr.bf16.mxu0 0
      %4785 = vmatmul.mubr.bf16.gmra.mxu0 %v2629
      %v4786 = vpop.f32.mrf.mxu0
      %v4787 = vadd.f32 0.0, %v4786
      %v4788 = vpop.f32.mrf.mxu0
      %v4789 = vpop.f32.mrf.mxu0
      %v4790 = vadd.f32 0.0, %v4789
      %v4791 = vpop.f32.mrf.mxu0
      %4792 = vmatprep.mubr.bf16.mxu0 0
      %4793 = vmatmul.mubr.bf16.gmra.mxu0 %v2632
      %v4794 = vpop.f32.mrf.mxu0
      %v4795 = vadd.f32 0.0, %v4794
      %v4796 = vpop.f32.mrf.mxu0
      %v4797 = vpop.f32.mrf.mxu0
      %v4798 = vadd.f32 0.0, %v4797
      %v4799 = vpop.f32.mrf.mxu0
      %4800 = vmatprep.mubr.bf16.mxu0 0
      %4801 = vmatmul.mubr.bf16.gmra.mxu0 %v2635
      %v4802 = vpop.f32.mrf.mxu0
      %v4803 = vadd.f32 0.0, %v4802
      %v4804 = vpop.f32.mrf.mxu0
      %v4805 = vpop.f32.mrf.mxu0
      %v4806 = vadd.f32 0.0, %v4805
      %v4807 = vpop.f32.mrf.mxu0
      %4808 = vmatprep.mubr.bf16.mxu0 0
      %4809 = vmatmul.mubr.bf16.gmra.mxu0 %v2638
      %v4810 = vpop.f32.mrf.mxu0
      %v4811 = vadd.f32 0.0, %v4810
      %v4812 = vpop.f32.mrf.mxu0
      %v4813 = vpop.f32.mrf.mxu0
      %v4814 = vadd.f32 0.0, %v4813
      %v4815 = vpop.f32.mrf.mxu0
      %4816 = vmatprep.mubr.bf16.mxu0 0
      %4817 = vmatmul.mubr.bf16.gmra.mxu0 %v2641
      %v4818 = vpop.f32.mrf.mxu0
      %v4819 = vadd.f32 0.0, %v4818
      %v4820 = vpop.f32.mrf.mxu0
      %v4821 = vpop.f32.mrf.mxu0
      %v4822 = vadd.f32 0.0, %v4821
      %v4823 = vpop.f32.mrf.mxu0
      %4824 = vmatprep.mubr.bf16.mxu0 0
      %4825 = vmatmul.mubr.bf16.gmra.mxu0 %v2644
      %v4826 = vpop.f32.mrf.mxu0
      %v4827 = vadd.f32 0.0, %v4826
      %v4828 = vpop.f32.mrf.mxu0
      %v4829 = vpop.f32.mrf.mxu0
      %v4830 = vadd.f32 0.0, %v4829
      %v4831 = vpop.f32.mrf.mxu0
      %4832 = vmatprep.mubr.bf16.mxu0 0
      %4833 = vmatmul.mubr.bf16.gmra.mxu0 %v2647
      %v4834 = vpop.f32.mrf.mxu0
      %v4835 = vadd.f32 0.0, %v4834
      %v4836 = vpop.f32.mrf.mxu0
      %v4837 = vpop.f32.mrf.mxu0
      %v4838 = vadd.f32 0.0, %v4837
      %v4839 = vpop.f32.mrf.mxu0
      %4840 = vmatprep.mubr.bf16.mxu0 0
      %4841 = vmatmul.mubr.bf16.gmra.mxu0 %v2650
      %v4842 = vpop.f32.mrf.mxu0
      %v4843 = vadd.f32 0.0, %v4842
      %v4844 = vpop.f32.mrf.mxu0
      %v4845 = vpop.f32.mrf.mxu0
      %v4846 = vadd.f32 0.0, %v4845
      %v4847 = vpop.f32.mrf.mxu0
      %4848 = vmatprep.mubr.bf16.mxu0 0
      %4849 = vmatmul.mubr.bf16.gmra.mxu0 %v2653
      %v4850 = vpop.f32.mrf.mxu0
      %v4851 = vadd.f32 0.0, %v4850
      %v4852 = vpop.f32.mrf.mxu0
      %v4853 = vpop.f32.mrf.mxu0
      %v4854 = vadd.f32 0.0, %v4853
      %v4855 = vpop.f32.mrf.mxu0
      %4856 = vmatprep.mubr.bf16.mxu0 0
      %4857 = vmatmul.mubr.bf16.gmra.mxu0 %v2656
      %v4858 = vpop.f32.mrf.mxu0
      %v4859 = vadd.f32 0.0, %v4858
      %v4860 = vpop.f32.mrf.mxu0
      %v4861 = vpop.f32.mrf.mxu0
      %v4862 = vadd.f32 0.0, %v4861
      %v4863 = vpop.f32.mrf.mxu0
      %4864 = vmatprep.mubr.bf16.mxu0 0
      %4865 = vmatmul.mubr.bf16.gmra.mxu0 %v2659
      %v4866 = vpop.f32.mrf.mxu0
      %v4867 = vadd.f32 0.0, %v4866
      %v4868 = vpop.f32.mrf.mxu0
      %v4869 = vpop.f32.mrf.mxu0
      %v4870 = vadd.f32 0.0, %v4869
      %v4871 = vpop.f32.mrf.mxu0
      %4872 = vmatprep.mubr.bf16.mxu0 0
      %4873 = vmatmul.mubr.bf16.gmra.mxu0 %v2662
      %v4874 = vpop.f32.mrf.mxu0
      %v4875 = vadd.f32 0.0, %v4874
      %v4876 = vpop.f32.mrf.mxu0
      %v4877 = vpop.f32.mrf.mxu0
      %v4878 = vadd.f32 0.0, %v4877
      %v4879 = vpop.f32.mrf.mxu0
      %4880 = vmatprep.mubr.bf16.mxu0 0
      %4881 = vmatmul.mubr.bf16.gmra.mxu0 %v2665
      %v4882 = vpop.f32.mrf.mxu0
      %v4883 = vadd.f32 0.0, %v4882
      %v4884 = vpop.f32.mrf.mxu0
      %v4885 = vpop.f32.mrf.mxu0
      %v4886 = vadd.f32 0.0, %v4885
      %v4887 = vpop.f32.mrf.mxu0
      %4888 = vmatprep.mubr.bf16.mxu0 0
      %4889 = vmatmul.mubr.bf16.gmra.mxu0 %v2668
      %v4890 = vpop.f32.mrf.mxu0
      %v4891 = vadd.f32 0.0, %v4890
      %v4892 = vpop.f32.mrf.mxu0
      %v4893 = vpop.f32.mrf.mxu0
      %v4894 = vadd.f32 0.0, %v4893
      %v4895 = vpop.f32.mrf.mxu0
      %4896 = vmatprep.mubr.bf16.mxu0 0
      %4897 = vmatmul.mubr.bf16.gmra.mxu0 %v2671
      %v4898 = vpop.f32.mrf.mxu0
      %v4899 = vadd.f32 0.0, %v4898
      %v4900 = vpop.f32.mrf.mxu0
      %v4901 = vpop.f32.mrf.mxu0
      %v4902 = vadd.f32 0.0, %v4901
      %v4903 = vpop.f32.mrf.mxu0
      %4904 = vmatprep.mubr.bf16.mxu0 0
      %4905 = vmatmul.mubr.bf16.gmra.mxu0 %v4061
      %v4906 = vpop.f32.mrf.mxu0
      %v4907 = vpop.f32.mrf.mxu0
      %v4908 = vpop.f32.mrf.mxu0
      %v4909 = vpop.f32.mrf.mxu0
      %4910 = vdwg.mxu0
      %v4911 = vadd.f32 %v4458, %v4771
      %v4912 = vadd.f32 %v4459, %v4774
      %v4913 = vadd.f32 %v4460, %v4779
      %v4914 = vadd.f32 %v4461, %v4782
      %v4915 = vadd.f32 %v4462, %v4787
      %v4916 = vadd.f32 %v4463, %v4790
      %v4917 = vadd.f32 %v4464, %v4795
      %v4918 = vadd.f32 %v4465, %v4798
      %v4919 = vadd.f32 %v4466, %v4803
      %v4920 = vadd.f32 %v4467, %v4806
      %v4921 = vadd.f32 %v4468, %v4811
      %v4922 = vadd.f32 %v4469, %v4814
      %v4923 = vadd.f32 %v4470, %v4819
      %v4924 = vadd.f32 %v4471, %v4822
      %v4925 = vadd.f32 %v4472, %v4827
      %v4926 = vadd.f32 %v4473, %v4830
      %v4927 = vadd.f32 %v4474, %v4835
      %v4928 = vadd.f32 %v4475, %v4838
      %v4929 = vadd.f32 %v4476, %v4843
      %v4930 = vadd.f32 %v4477, %v4846
      %v4931 = vadd.f32 %v4478, %v4851
      %v4932 = vadd.f32 %v4479, %v4854
      %v4933 = vadd.f32 %v4480, %v4859
      %v4934 = vadd.f32 %v4481, %v4862
      %v4935 = vadd.f32 %v4482, %v4867
      %v4936 = vadd.f32 %v4483, %v4870
      %v4937 = vadd.f32 %v4484, %v4875
      %v4938 = vadd.f32 %v4485, %v4878
      %v4939 = vadd.f32 %v4486, %v4883
      %v4940 = vadd.f32 %v4487, %v4886
      %v4941 = vadd.f32 %v4488, %v4891
      %v4942 = vadd.f32 %v4489, %v4894
      %v4943 = vadd.f32 %v4490, %v4899
      %v4944 = vadd.f32 %v4491, %v4902
      %s4945 = scalar_lea.vmem %s4, 10
      %v4946 = vld [vmem:[%s4945] sm:$0x3]
      %v4948 = vshrl.u32 %v674, 16
      %v4950 = vrot.slane %v4948, 4
      %v4951 = vshll.u32 %v674, 16
      %v4953 = vrot.slane %v4951, 5
      %v4954 = vor.u32 %v4950, %v4953
      %v4955 = vrot.slane %v4954, 4
      %v4957 = vshll.u32 %v675, 16
      %v4959 = vrot.slane %v4957, 5
      %v4960 = vsel %vm683, %v4955, %v4959
      %v4961 = vshrl.u32 %v675, 16
      %v4963 = vrot.slane %v4961, 4
      %v4964 = vor.u32 %v4963, %v4959
      %v4965 = vrot.slane %v4964, 4
      %v4967 = vshll.u32 %v676, 16
      %v4969 = vrot.slane %v4967, 5
      %v4970 = vsel %vm683, %v4965, %v4969
      %v4971 = vunpack.c.l.b16 %v4960
      %v4972 = vunpack.c.l.b16 %v4970
      %v4973 = vpack.c.b16 %v4972, %v4971
      %v4975 = vsel %vm810, %v4973, 0
      %v4978 = vsel %vm823, %v4946, 0
      %4980 = vmatprep.subr.bf16.mxu0 0
      %4981 = vmatpush1.bf16.msra.mxu0 0
      %4982 = vmatprep.subr.bf16.mxu0 0
      %4983 = vmatpush1.bf16.msra.mxu0 0
      %4984 = vmatprep.subr.bf16.mxu0 0
      %4985 = vmatpush1.bf16.msra.mxu0 0
      %4986 = vmatprep.subr.bf16.mxu0 0
      %4987 = vmatpush1.bf16.msra.mxu0 0
      %4988 = vmatprep.subr.bf16.mxu0 0
      %4989 = vmatpush1.bf16.msra.mxu0 0
      %4990 = vmatprep.subr.bf16.mxu0 0
      %4991 = vmatpush1.bf16.msra.mxu0 0
      %4992 = vmatprep.subr.bf16.mxu0 0
      %4993 = vmatpush1.bf16.msra.mxu0 0
      %4994 = vmatprep.subr.bf16.mxu0 0
      %4995 = vmatpush1.bf16.msra.mxu0 %v4978
      %4996 = vmatprep.subr.bf16.mxu0 0
      %4997 = vmatpush2.bf16.msra.mxu0 0
      %4998 = vmatprep.subr.bf16.mxu0 0
      %4999 = vmatpush2.bf16.msra.mxu0 0
      %5000 = vmatprep.subr.bf16.mxu0 0
      %5001 = vmatpush2.bf16.msra.mxu0 0
      %5002 = vmatprep.subr.bf16.mxu0 0
      %5003 = vmatpush2.bf16.msra.mxu0 0
      %5004 = vmatprep.subr.bf16.mxu0 0
      %5005 = vmatpush2.bf16.msra.mxu0 0
      %5006 = vmatprep.subr.bf16.mxu0 0
      %5007 = vmatpush2.bf16.msra.mxu0 0
      %5008 = vmatprep.subr.bf16.mxu0 0
      %5009 = vmatpush2.bf16.msra.mxu0 0
      %5010 = vmatprep.subr.bf16.mxu0 0
      %5011 = vmatpush2.bf16.msra.mxu0 0
      %5012 = vmatprep.mubr.bf16.mxu0 0
      %5013 = vmatmul.mubr.bf16.gmra.mxu0 %v3582
      %v5014 = vpop.f32.mrf.mxu0
      %v5015 = vadd.f32 0.0, %v5014
      %v5016 = vpop.f32.mrf.mxu0
      %v5017 = vpop.f32.mrf.mxu0
      %v5018 = vadd.f32 0.0, %v5017
      %v5019 = vpop.f32.mrf.mxu0
      %5020 = vmatprep.mubr.bf16.mxu0 0
      %5021 = vmatmul.mubr.bf16.gmra.mxu0 %v3585
      %v5022 = vpop.f32.mrf.mxu0
      %v5023 = vadd.f32 0.0, %v5022
      %v5024 = vpop.f32.mrf.mxu0
      %v5025 = vpop.f32.mrf.mxu0
      %v5026 = vadd.f32 0.0, %v5025
      %v5027 = vpop.f32.mrf.mxu0
      %5028 = vmatprep.mubr.bf16.mxu0 0
      %5029 = vmatmul.mubr.bf16.gmra.mxu0 %v3588
      %v5030 = vpop.f32.mrf.mxu0
      %v5031 = vadd.f32 0.0, %v5030
      %v5032 = vpop.f32.mrf.mxu0
      %v5033 = vpop.f32.mrf.mxu0
      %v5034 = vadd.f32 0.0, %v5033
      %v5035 = vpop.f32.mrf.mxu0
      %5036 = vmatprep.mubr.bf16.mxu0 0
      %5037 = vmatmul.mubr.bf16.gmra.mxu0 %v3591
      %v5038 = vpop.f32.mrf.mxu0
      %v5039 = vadd.f32 0.0, %v5038
      %v5040 = vpop.f32.mrf.mxu0
      %v5041 = vpop.f32.mrf.mxu0
      %v5042 = vadd.f32 0.0, %v5041
      %v5043 = vpop.f32.mrf.mxu0
      %5044 = vmatprep.mubr.bf16.mxu0 0
      %5045 = vmatmul.mubr.bf16.gmra.mxu0 %v3594
      %v5046 = vpop.f32.mrf.mxu0
      %v5047 = vadd.f32 0.0, %v5046
      %v5048 = vpop.f32.mrf.mxu0
      %v5049 = vpop.f32.mrf.mxu0
      %v5050 = vadd.f32 0.0, %v5049
      %v5051 = vpop.f32.mrf.mxu0
      %5052 = vmatprep.mubr.bf16.mxu0 0
      %5053 = vmatmul.mubr.bf16.gmra.mxu0 %v3597
      %v5054 = vpop.f32.mrf.mxu0
      %v5055 = vadd.f32 0.0, %v5054
      %v5056 = vpop.f32.mrf.mxu0
      %v5057 = vpop.f32.mrf.mxu0
      %v5058 = vadd.f32 0.0, %v5057
      %v5059 = vpop.f32.mrf.mxu0
      %5060 = vmatprep.mubr.bf16.mxu0 0
      %5061 = vmatmul.mubr.bf16.gmra.mxu0 %v3600
      %v5062 = vpop.f32.mrf.mxu0
      %v5063 = vadd.f32 0.0, %v5062
      %v5064 = vpop.f32.mrf.mxu0
      %v5065 = vpop.f32.mrf.mxu0
      %v5066 = vadd.f32 0.0, %v5065
      %v5067 = vpop.f32.mrf.mxu0
      %5068 = vmatprep.mubr.bf16.mxu0 0
      %5069 = vmatmul.mubr.bf16.gmra.mxu0 %v3603
      %v5070 = vpop.f32.mrf.mxu0
      %v5071 = vadd.f32 0.0, %v5070
      %v5072 = vpop.f32.mrf.mxu0
      %v5073 = vpop.f32.mrf.mxu0
      %v5074 = vadd.f32 0.0, %v5073
      %v5075 = vpop.f32.mrf.mxu0
      %5076 = vmatprep.mubr.bf16.mxu0 0
      %5077 = vmatmul.mubr.bf16.gmra.mxu0 %v3606
      %v5078 = vpop.f32.mrf.mxu0
      %v5079 = vadd.f32 0.0, %v5078
      %v5080 = vpop.f32.mrf.mxu0
      %v5081 = vpop.f32.mrf.mxu0
      %v5082 = vadd.f32 0.0, %v5081
      %v5083 = vpop.f32.mrf.mxu0
      %5084 = vmatprep.mubr.bf16.mxu0 0
      %5085 = vmatmul.mubr.bf16.gmra.mxu0 %v3609
      %v5086 = vpop.f32.mrf.mxu0
      %v5087 = vadd.f32 0.0, %v5086
      %v5088 = vpop.f32.mrf.mxu0
      %v5089 = vpop.f32.mrf.mxu0
      %v5090 = vadd.f32 0.0, %v5089
      %v5091 = vpop.f32.mrf.mxu0
      %5092 = vmatprep.mubr.bf16.mxu0 0
      %5093 = vmatmul.mubr.bf16.gmra.mxu0 %v3612
      %v5094 = vpop.f32.mrf.mxu0
      %v5095 = vadd.f32 0.0, %v5094
      %v5096 = vpop.f32.mrf.mxu0
      %v5097 = vpop.f32.mrf.mxu0
      %v5098 = vadd.f32 0.0, %v5097
      %v5099 = vpop.f32.mrf.mxu0
      %5100 = vmatprep.mubr.bf16.mxu0 0
      %5101 = vmatmul.mubr.bf16.gmra.mxu0 %v3615
      %v5102 = vpop.f32.mrf.mxu0
      %v5103 = vadd.f32 0.0, %v5102
      %v5104 = vpop.f32.mrf.mxu0
      %v5105 = vpop.f32.mrf.mxu0
      %v5106 = vadd.f32 0.0, %v5105
      %v5107 = vpop.f32.mrf.mxu0
      %5108 = vmatprep.mubr.bf16.mxu0 0
      %5109 = vmatmul.mubr.bf16.gmra.mxu0 %v3618
      %v5110 = vpop.f32.mrf.mxu0
      %v5111 = vadd.f32 0.0, %v5110
      %v5112 = vpop.f32.mrf.mxu0
      %v5113 = vpop.f32.mrf.mxu0
      %v5114 = vadd.f32 0.0, %v5113
      %v5115 = vpop.f32.mrf.mxu0
      %5116 = vmatprep.mubr.bf16.mxu0 0
      %5117 = vmatmul.mubr.bf16.gmra.mxu0 %v3621
      %v5118 = vpop.f32.mrf.mxu0
      %v5119 = vadd.f32 0.0, %v5118
      %v5120 = vpop.f32.mrf.mxu0
      %v5121 = vpop.f32.mrf.mxu0
      %v5122 = vadd.f32 0.0, %v5121
      %v5123 = vpop.f32.mrf.mxu0
      %5124 = vmatprep.mubr.bf16.mxu0 0
      %5125 = vmatmul.mubr.bf16.gmra.mxu0 %v3624
      %v5126 = vpop.f32.mrf.mxu0
      %v5127 = vadd.f32 0.0, %v5126
      %v5128 = vpop.f32.mrf.mxu0
      %v5129 = vpop.f32.mrf.mxu0
      %v5130 = vadd.f32 0.0, %v5129
      %v5131 = vpop.f32.mrf.mxu0
      %5132 = vmatprep.mubr.bf16.mxu0 0
      %5133 = vmatmul.mubr.bf16.gmra.mxu0 %v3627
      %v5134 = vpop.f32.mrf.mxu0
      %v5135 = vadd.f32 0.0, %v5134
      %v5136 = vpop.f32.mrf.mxu0
      %v5137 = vpop.f32.mrf.mxu0
      %v5138 = vadd.f32 0.0, %v5137
      %v5139 = vpop.f32.mrf.mxu0
      %5140 = vmatprep.mubr.bf16.mxu0 0
      %5141 = vmatmul.mubr.bf16.gmra.mxu0 %v3630
      %v5142 = vpop.f32.mrf.mxu0
      %v5143 = vadd.f32 0.0, %v5142
      %v5144 = vpop.f32.mrf.mxu0
      %v5145 = vpop.f32.mrf.mxu0
      %v5146 = vadd.f32 0.0, %v5145
      %v5147 = vpop.f32.mrf.mxu0
      %5148 = vmatprep.mubr.bf16.mxu0 0
      %5149 = vmatmul.mubr.bf16.gmra.mxu0 %v4975
      %v5150 = vpop.f32.mrf.mxu0
      %v5151 = vpop.f32.mrf.mxu0
      %v5152 = vpop.f32.mrf.mxu0
      %v5153 = vpop.f32.mrf.mxu0
      %5154 = vdwg.mxu0
      %v5155 = vadd.f32 %v4702, %v5015
      %v5156 = vadd.f32 %v4703, %v5018
      %v5157 = vadd.f32 %v4704, %v5023
      %v5158 = vadd.f32 %v4705, %v5026
      %v5159 = vadd.f32 %v4706, %v5031
      %v5160 = vadd.f32 %v4707, %v5034
      %v5161 = vadd.f32 %v4708, %v5039
      %v5162 = vadd.f32 %v4709, %v5042
      %v5163 = vadd.f32 %v4710, %v5047
      %v5164 = vadd.f32 %v4711, %v5050
      %v5165 = vadd.f32 %v4712, %v5055
      %v5166 = vadd.f32 %v4713, %v5058
      %v5167 = vadd.f32 %v4714, %v5063
      %v5168 = vadd.f32 %v4715, %v5066
      %v5169 = vadd.f32 %v4716, %v5071
      %v5170 = vadd.f32 %v4717, %v5074
      %v5171 = vadd.f32 %v4718, %v5079
      %v5172 = vadd.f32 %v4719, %v5082
      %v5173 = vadd.f32 %v4720, %v5087
      %v5174 = vadd.f32 %v4721, %v5090
      %v5175 = vadd.f32 %v4722, %v5095
      %v5176 = vadd.f32 %v4723, %v5098
      %v5177 = vadd.f32 %v4724, %v5103
      %v5178 = vadd.f32 %v4725, %v5106
      %v5179 = vadd.f32 %v4726, %v5111
      %v5180 = vadd.f32 %v4727, %v5114
      %v5181 = vadd.f32 %v4728, %v5119
      %v5182 = vadd.f32 %v4729, %v5122
      %v5183 = vadd.f32 %v4730, %v5127
      %v5184 = vadd.f32 %v4731, %v5130
      %v5185 = vadd.f32 %v4732, %v5135
      %v5186 = vadd.f32 %v4733, %v5138
      %v5187 = vadd.f32 %v4734, %v5143
      %v5188 = vadd.f32 %v4735, %v5146
      %5189 = vmatprep.subr.bf16.mxu0 0
      %5190 = vmatpush1.bf16.msra.mxu0 0
      %5191 = vmatprep.subr.bf16.mxu0 0
      %5192 = vmatpush1.bf16.msra.mxu0 0
      %5193 = vmatprep.subr.bf16.mxu0 0
      %5194 = vmatpush1.bf16.msra.mxu0 0
      %5195 = vmatprep.subr.bf16.mxu0 0
      %5196 = vmatpush1.bf16.msra.mxu0 0
      %5197 = vmatprep.subr.bf16.mxu0 0
      %5198 = vmatpush1.bf16.msra.mxu0 0
      %5199 = vmatprep.subr.bf16.mxu0 0
      %5200 = vmatpush1.bf16.msra.mxu0 0
      %5201 = vmatprep.subr.bf16.mxu0 0
      %5202 = vmatpush1.bf16.msra.mxu0 0
      %5203 = vmatprep.subr.bf16.mxu0 0
      %5204 = vmatpush1.bf16.msra.mxu0 %v4978
      %5205 = vmatprep.subr.bf16.mxu0 0
      %5206 = vmatpush2.bf16.msra.mxu0 0
      %5207 = vmatprep.subr.bf16.mxu0 0
      %5208 = vmatpush2.bf16.msra.mxu0 0
      %5209 = vmatprep.subr.bf16.mxu0 0
      %5210 = vmatpush2.bf16.msra.mxu0 0
      %5211 = vmatprep.subr.bf16.mxu0 0
      %5212 = vmatpush2.bf16.msra.mxu0 0
      %5213 = vmatprep.subr.bf16.mxu0 0
      %5214 = vmatpush2.bf16.msra.mxu0 0
      %5215 = vmatprep.subr.bf16.mxu0 0
      %5216 = vmatpush2.bf16.msra.mxu0 0
      %5217 = vmatprep.subr.bf16.mxu0 0
      %5218 = vmatpush2.bf16.msra.mxu0 0
      %5219 = vmatprep.subr.bf16.mxu0 0
      %5220 = vmatpush2.bf16.msra.mxu0 0
      %5221 = vmatprep.mubr.bf16.mxu0 0
      %5222 = vmatmul.mubr.bf16.gmra.mxu0 %v2335
      %v5223 = vpop.f32.mrf.mxu0
      %v5224 = vadd.f32 0.0, %v5223
      %v5225 = vpop.f32.mrf.mxu0
      %v5226 = vpop.f32.mrf.mxu0
      %v5227 = vadd.f32 0.0, %v5226
      %v5228 = vpop.f32.mrf.mxu0
      %5229 = vmatprep.mubr.bf16.mxu0 0
      %5230 = vmatmul.mubr.bf16.gmra.mxu0 %v2338
      %v5231 = vpop.f32.mrf.mxu0
      %v5232 = vadd.f32 0.0, %v5231
      %v5233 = vpop.f32.mrf.mxu0
      %v5234 = vpop.f32.mrf.mxu0
      %v5235 = vadd.f32 0.0, %v5234
      %v5236 = vpop.f32.mrf.mxu0
      %5237 = vmatprep.mubr.bf16.mxu0 0
      %5238 = vmatmul.mubr.bf16.gmra.mxu0 %v2341
      %v5239 = vpop.f32.mrf.mxu0
      %v5240 = vadd.f32 0.0, %v5239
      %v5241 = vpop.f32.mrf.mxu0
      %v5242 = vpop.f32.mrf.mxu0
      %v5243 = vadd.f32 0.0, %v5242
      %v5244 = vpop.f32.mrf.mxu0
      %5245 = vmatprep.mubr.bf16.mxu0 0
      %5246 = vmatmul.mubr.bf16.gmra.mxu0 %v2344
      %v5247 = vpop.f32.mrf.mxu0
      %v5248 = vadd.f32 0.0, %v5247
      %v5249 = vpop.f32.mrf.mxu0
      %v5250 = vpop.f32.mrf.mxu0
      %v5251 = vadd.f32 0.0, %v5250
      %v5252 = vpop.f32.mrf.mxu0
      %5253 = vmatprep.mubr.bf16.mxu0 0
      %5254 = vmatmul.mubr.bf16.gmra.mxu0 %v2347
      %v5255 = vpop.f32.mrf.mxu0
      %v5256 = vadd.f32 0.0, %v5255
      %v5257 = vpop.f32.mrf.mxu0
      %v5258 = vpop.f32.mrf.mxu0
      %v5259 = vadd.f32 0.0, %v5258
      %v5260 = vpop.f32.mrf.mxu0
      %5261 = vmatprep.mubr.bf16.mxu0 0
      %5262 = vmatmul.mubr.bf16.gmra.mxu0 %v2350
      %v5263 = vpop.f32.mrf.mxu0
      %v5264 = vadd.f32 0.0, %v5263
      %v5265 = vpop.f32.mrf.mxu0
      %v5266 = vpop.f32.mrf.mxu0
      %v5267 = vadd.f32 0.0, %v5266
      %v5268 = vpop.f32.mrf.mxu0
      %5269 = vmatprep.mubr.bf16.mxu0 0
      %5270 = vmatmul.mubr.bf16.gmra.mxu0 %v2353
      %v5271 = vpop.f32.mrf.mxu0
      %v5272 = vadd.f32 0.0, %v5271
      %v5273 = vpop.f32.mrf.mxu0
      %v5274 = vpop.f32.mrf.mxu0
      %v5275 = vadd.f32 0.0, %v5274
      %v5276 = vpop.f32.mrf.mxu0
      %5277 = vmatprep.mubr.bf16.mxu0 0
      %5278 = vmatmul.mubr.bf16.gmra.mxu0 %v2356
      %v5279 = vpop.f32.mrf.mxu0
      %v5280 = vadd.f32 0.0, %v5279
      %v5281 = vpop.f32.mrf.mxu0
      %v5282 = vpop.f32.mrf.mxu0
      %v5283 = vadd.f32 0.0, %v5282
      %v5284 = vpop.f32.mrf.mxu0
      %5285 = vmatprep.mubr.bf16.mxu0 0
      %5286 = vmatmul.mubr.bf16.gmra.mxu0 %v2359
      %v5287 = vpop.f32.mrf.mxu0
      %v5288 = vadd.f32 0.0, %v5287
      %v5289 = vpop.f32.mrf.mxu0
      %v5290 = vpop.f32.mrf.mxu0
      %v5291 = vadd.f32 0.0, %v5290
      %v5292 = vpop.f32.mrf.mxu0
      %5293 = vmatprep.mubr.bf16.mxu0 0
      %5294 = vmatmul.mubr.bf16.gmra.mxu0 %v2362
      %v5295 = vpop.f32.mrf.mxu0
      %v5296 = vadd.f32 0.0, %v5295
      %v5297 = vpop.f32.mrf.mxu0
      %v5298 = vpop.f32.mrf.mxu0
      %v5299 = vadd.f32 0.0, %v5298
      %v5300 = vpop.f32.mrf.mxu0
      %5301 = vmatprep.mubr.bf16.mxu0 0
      %5302 = vmatmul.mubr.bf16.gmra.mxu0 %v2365
      %v5303 = vpop.f32.mrf.mxu0
      %v5304 = vadd.f32 0.0, %v5303
      %v5305 = vpop.f32.mrf.mxu0
      %v5306 = vpop.f32.mrf.mxu0
      %v5307 = vadd.f32 0.0, %v5306
      %v5308 = vpop.f32.mrf.mxu0
      %5309 = vmatprep.mubr.bf16.mxu0 0
      %5310 = vmatmul.mubr.bf16.gmra.mxu0 %v2368
      %v5311 = vpop.f32.mrf.mxu0
      %v5312 = vadd.f32 0.0, %v5311
      %v5313 = vpop.f32.mrf.mxu0
      %v5314 = vpop.f32.mrf.mxu0
      %v5315 = vadd.f32 0.0, %v5314
      %v5316 = vpop.f32.mrf.mxu0
      %5317 = vmatprep.mubr.bf16.mxu0 0
      %5318 = vmatmul.mubr.bf16.gmra.mxu0 %v2371
      %v5319 = vpop.f32.mrf.mxu0
      %v5320 = vadd.f32 0.0, %v5319
      %v5321 = vpop.f32.mrf.mxu0
      %v5322 = vpop.f32.mrf.mxu0
      %v5323 = vadd.f32 0.0, %v5322
      %v5324 = vpop.f32.mrf.mxu0
      %5325 = vmatprep.mubr.bf16.mxu0 0
      %5326 = vmatmul.mubr.bf16.gmra.mxu0 %v2374
      %v5327 = vpop.f32.mrf.mxu0
      %v5328 = vadd.f32 0.0, %v5327
      %v5329 = vpop.f32.mrf.mxu0
      %v5330 = vpop.f32.mrf.mxu0
      %v5331 = vadd.f32 0.0, %v5330
      %v5332 = vpop.f32.mrf.mxu0
      %5333 = vmatprep.mubr.bf16.mxu0 0
      %5334 = vmatmul.mubr.bf16.gmra.mxu0 %v2377
      %v5335 = vpop.f32.mrf.mxu0
      %v5336 = vadd.f32 0.0, %v5335
      %v5337 = vpop.f32.mrf.mxu0
      %v5338 = vpop.f32.mrf.mxu0
      %v5339 = vadd.f32 0.0, %v5338
      %v5340 = vpop.f32.mrf.mxu0
      %5341 = vmatprep.mubr.bf16.mxu0 0
      %5342 = vmatmul.mubr.bf16.gmra.mxu0 %v2380
      %v5343 = vpop.f32.mrf.mxu0
      %v5344 = vadd.f32 0.0, %v5343
      %v5345 = vpop.f32.mrf.mxu0
      %v5346 = vpop.f32.mrf.mxu0
      %v5347 = vadd.f32 0.0, %v5346
      %v5348 = vpop.f32.mrf.mxu0
      %5349 = vmatprep.mubr.bf16.mxu0 0
      %5350 = vmatmul.mubr.bf16.gmra.mxu0 %v2383
      %v5351 = vpop.f32.mrf.mxu0
      %v5352 = vadd.f32 0.0, %v5351
      %v5353 = vpop.f32.mrf.mxu0
      %v5354 = vpop.f32.mrf.mxu0
      %v5355 = vadd.f32 0.0, %v5354
      %v5356 = vpop.f32.mrf.mxu0
      %5357 = vmatprep.mubr.bf16.mxu0 0
      %5358 = vmatmul.mubr.bf16.gmra.mxu0 %v4522
      %v5359 = vpop.f32.mrf.mxu0
      %v5360 = vpop.f32.mrf.mxu0
      %v5361 = vpop.f32.mrf.mxu0
      %v5362 = vpop.f32.mrf.mxu0
      %5363 = vdwg.mxu0
      %v5364 = vadd.f32 %v4911, %v5224
      %v5365 = vadd.f32 %v4912, %v5227
      %v5366 = vadd.f32 %v4913, %v5232
      %v5367 = vadd.f32 %v4914, %v5235
      %v5368 = vadd.f32 %v4915, %v5240
      %v5369 = vadd.f32 %v4916, %v5243
      %v5370 = vadd.f32 %v4917, %v5248
      %v5371 = vadd.f32 %v4918, %v5251
      %v5372 = vadd.f32 %v4919, %v5256
      %v5373 = vadd.f32 %v4920, %v5259
      %v5374 = vadd.f32 %v4921, %v5264
      %v5375 = vadd.f32 %v4922, %v5267
      %v5376 = vadd.f32 %v4923, %v5272
      %v5377 = vadd.f32 %v4924, %v5275
      %v5378 = vadd.f32 %v4925, %v5280
      %v5379 = vadd.f32 %v4926, %v5283
      %v5380 = vadd.f32 %v4927, %v5288
      %v5381 = vadd.f32 %v4928, %v5291
      %v5382 = vadd.f32 %v4929, %v5296
      %v5383 = vadd.f32 %v4930, %v5299
      %v5384 = vadd.f32 %v4931, %v5304
      %v5385 = vadd.f32 %v4932, %v5307
      %v5386 = vadd.f32 %v4933, %v5312
      %v5387 = vadd.f32 %v4934, %v5315
      %v5388 = vadd.f32 %v4935, %v5320
      %v5389 = vadd.f32 %v4936, %v5323
      %v5390 = vadd.f32 %v4937, %v5328
      %v5391 = vadd.f32 %v4938, %v5331
      %v5392 = vadd.f32 %v4939, %v5336
      %v5393 = vadd.f32 %v4940, %v5339
      %v5394 = vadd.f32 %v4941, %v5344
      %v5395 = vadd.f32 %v4942, %v5347
      %v5396 = vadd.f32 %v4943, %v5352
      %v5397 = vadd.f32 %v4944, %v5355
      %s5398 = scalar_lea.vmem %s4, 12
      %v5399 = vld [vmem:[%s5398] sm:$0x3]
      %v5402 = vunpack.c.l.b16 %v677
      %v5403 = vunpack.c.l.b16 %v678
      %v5404 = vpack.c.b16 %v5403, %v5402
      %v5406 = vsel %vm810, %v5404, 0
      %v5409 = vsel %vm823, %v5399, 0
      %5411 = vmatprep.subr.bf16.mxu0 0
      %5412 = vmatpush1.bf16.msra.mxu0 0
      %5413 = vmatprep.subr.bf16.mxu0 0
      %5414 = vmatpush1.bf16.msra.mxu0 0
      %5415 = vmatprep.subr.bf16.mxu0 0
      %5416 = vmatpush1.bf16.msra.mxu0 0
      %5417 = vmatprep.subr.bf16.mxu0 0
      %5418 = vmatpush1.bf16.msra.mxu0 0
      %5419 = vmatprep.subr.bf16.mxu0 0
      %5420 = vmatpush1.bf16.msra.mxu0 0
      %5421 = vmatprep.subr.bf16.mxu0 0
      %5422 = vmatpush1.bf16.msra.mxu0 0
      %5423 = vmatprep.subr.bf16.mxu0 0
      %5424 = vmatpush1.bf16.msra.mxu0 0
      %5425 = vmatprep.subr.bf16.mxu0 0
      %5426 = vmatpush1.bf16.msra.mxu0 %v5409
      %5427 = vmatprep.subr.bf16.mxu0 0
      %5428 = vmatpush2.bf16.msra.mxu0 0
      %5429 = vmatprep.subr.bf16.mxu0 0
      %5430 = vmatpush2.bf16.msra.mxu0 0
      %5431 = vmatprep.subr.bf16.mxu0 0
      %5432 = vmatpush2.bf16.msra.mxu0 0
      %5433 = vmatprep.subr.bf16.mxu0 0
      %5434 = vmatpush2.bf16.msra.mxu0 0
      %5435 = vmatprep.subr.bf16.mxu0 0
      %5436 = vmatpush2.bf16.msra.mxu0 0
      %5437 = vmatprep.subr.bf16.mxu0 0
      %5438 = vmatpush2.bf16.msra.mxu0 0
      %5439 = vmatprep.subr.bf16.mxu0 0
      %5440 = vmatpush2.bf16.msra.mxu0 0
      %5441 = vmatprep.subr.bf16.mxu0 0
      %5442 = vmatpush2.bf16.msra.mxu0 0
      %5443 = vmatprep.mubr.bf16.mxu0 0
      %5444 = vmatmul.mubr.bf16.gmra.mxu0 %v2626
      %v5445 = vpop.f32.mrf.mxu0
      %v5446 = vadd.f32 0.0, %v5445
      %v5447 = vpop.f32.mrf.mxu0
      %v5448 = vpop.f32.mrf.mxu0
      %v5449 = vadd.f32 0.0, %v5448
      %v5450 = vpop.f32.mrf.mxu0
      %5451 = vmatprep.mubr.bf16.mxu0 0
      %5452 = vmatmul.mubr.bf16.gmra.mxu0 %v2629
      %v5453 = vpop.f32.mrf.mxu0
      %v5454 = vadd.f32 0.0, %v5453
      %v5455 = vpop.f32.mrf.mxu0
      %v5456 = vpop.f32.mrf.mxu0
      %v5457 = vadd.f32 0.0, %v5456
      %v5458 = vpop.f32.mrf.mxu0
      %5459 = vmatprep.mubr.bf16.mxu0 0
      %5460 = vmatmul.mubr.bf16.gmra.mxu0 %v2632
      %v5461 = vpop.f32.mrf.mxu0
      %v5462 = vadd.f32 0.0, %v5461
      %v5463 = vpop.f32.mrf.mxu0
      %v5464 = vpop.f32.mrf.mxu0
      %v5465 = vadd.f32 0.0, %v5464
      %v5466 = vpop.f32.mrf.mxu0
      %5467 = vmatprep.mubr.bf16.mxu0 0
      %5468 = vmatmul.mubr.bf16.gmra.mxu0 %v2635
      %v5469 = vpop.f32.mrf.mxu0
      %v5470 = vadd.f32 0.0, %v5469
      %v5471 = vpop.f32.mrf.mxu0
      %v5472 = vpop.f32.mrf.mxu0
      %v5473 = vadd.f32 0.0, %v5472
      %v5474 = vpop.f32.mrf.mxu0
      %5475 = vmatprep.mubr.bf16.mxu0 0
      %5476 = vmatmul.mubr.bf16.gmra.mxu0 %v2638
      %v5477 = vpop.f32.mrf.mxu0
      %v5478 = vadd.f32 0.0, %v5477
      %v5479 = vpop.f32.mrf.mxu0
      %v5480 = vpop.f32.mrf.mxu0
      %v5481 = vadd.f32 0.0, %v5480
      %v5482 = vpop.f32.mrf.mxu0
      %5483 = vmatprep.mubr.bf16.mxu0 0
      %5484 = vmatmul.mubr.bf16.gmra.mxu0 %v2641
      %v5485 = vpop.f32.mrf.mxu0
      %v5486 = vadd.f32 0.0, %v5485
      %v5487 = vpop.f32.mrf.mxu0
      %v5488 = vpop.f32.mrf.mxu0
      %v5489 = vadd.f32 0.0, %v5488
      %v5490 = vpop.f32.mrf.mxu0
      %5491 = vmatprep.mubr.bf16.mxu0 0
      %5492 = vmatmul.mubr.bf16.gmra.mxu0 %v2644
      %v5493 = vpop.f32.mrf.mxu0
      %v5494 = vadd.f32 0.0, %v5493
      %v5495 = vpop.f32.mrf.mxu0
      %v5496 = vpop.f32.mrf.mxu0
      %v5497 = vadd.f32 0.0, %v5496
      %v5498 = vpop.f32.mrf.mxu0
      %5499 = vmatprep.mubr.bf16.mxu0 0
      %5500 = vmatmul.mubr.bf16.gmra.mxu0 %v2647
      %v5501 = vpop.f32.mrf.mxu0
      %v5502 = vadd.f32 0.0, %v5501
      %v5503 = vpop.f32.mrf.mxu0
      %v5504 = vpop.f32.mrf.mxu0
      %v5505 = vadd.f32 0.0, %v5504
      %v5506 = vpop.f32.mrf.mxu0
      %5507 = vmatprep.mubr.bf16.mxu0 0
      %5508 = vmatmul.mubr.bf16.gmra.mxu0 %v2650
      %v5509 = vpop.f32.mrf.mxu0
      %v5510 = vadd.f32 0.0, %v5509
      %v5511 = vpop.f32.mrf.mxu0
      %v5512 = vpop.f32.mrf.mxu0
      %v5513 = vadd.f32 0.0, %v5512
      %v5514 = vpop.f32.mrf.mxu0
      %5515 = vmatprep.mubr.bf16.mxu0 0
      %5516 = vmatmul.mubr.bf16.gmra.mxu0 %v2653
      %v5517 = vpop.f32.mrf.mxu0
      %v5518 = vadd.f32 0.0, %v5517
      %v5519 = vpop.f32.mrf.mxu0
      %v5520 = vpop.f32.mrf.mxu0
      %v5521 = vadd.f32 0.0, %v5520
      %v5522 = vpop.f32.mrf.mxu0
      %5523 = vmatprep.mubr.bf16.mxu0 0
      %5524 = vmatmul.mubr.bf16.gmra.mxu0 %v2656
      %v5525 = vpop.f32.mrf.mxu0
      %v5526 = vadd.f32 0.0, %v5525
      %v5527 = vpop.f32.mrf.mxu0
      %v5528 = vpop.f32.mrf.mxu0
      %v5529 = vadd.f32 0.0, %v5528
      %v5530 = vpop.f32.mrf.mxu0
      %5531 = vmatprep.mubr.bf16.mxu0 0
      %5532 = vmatmul.mubr.bf16.gmra.mxu0 %v2659
      %v5533 = vpop.f32.mrf.mxu0
      %v5534 = vadd.f32 0.0, %v5533
      %v5535 = vpop.f32.mrf.mxu0
      %v5536 = vpop.f32.mrf.mxu0
      %v5537 = vadd.f32 0.0, %v5536
      %v5538 = vpop.f32.mrf.mxu0
      %5539 = vmatprep.mubr.bf16.mxu0 0
      %5540 = vmatmul.mubr.bf16.gmra.mxu0 %v2662
      %v5541 = vpop.f32.mrf.mxu0
      %v5542 = vadd.f32 0.0, %v5541
      %v5543 = vpop.f32.mrf.mxu0
      %v5544 = vpop.f32.mrf.mxu0
      %v5545 = vadd.f32 0.0, %v5544
      %v5546 = vpop.f32.mrf.mxu0
      %5547 = vmatprep.mubr.bf16.mxu0 0
      %5548 = vmatmul.mubr.bf16.gmra.mxu0 %v2665
      %v5549 = vpop.f32.mrf.mxu0
      %v5550 = vadd.f32 0.0, %v5549
      %v5551 = vpop.f32.mrf.mxu0
      %v5552 = vpop.f32.mrf.mxu0
      %v5553 = vadd.f32 0.0, %v5552
      %v5554 = vpop.f32.mrf.mxu0
      %5555 = vmatprep.mubr.bf16.mxu0 0
      %5556 = vmatmul.mubr.bf16.gmra.mxu0 %v2668
      %v5557 = vpop.f32.mrf.mxu0
      %v5558 = vadd.f32 0.0, %v5557
      %v5559 = vpop.f32.mrf.mxu0
      %v5560 = vpop.f32.mrf.mxu0
      %v5561 = vadd.f32 0.0, %v5560
      %v5562 = vpop.f32.mrf.mxu0
      %5563 = vmatprep.mubr.bf16.mxu0 0
      %5564 = vmatmul.mubr.bf16.gmra.mxu0 %v2671
      %v5565 = vpop.f32.mrf.mxu0
      %v5566 = vadd.f32 0.0, %v5565
      %v5567 = vpop.f32.mrf.mxu0
      %v5568 = vpop.f32.mrf.mxu0
      %v5569 = vadd.f32 0.0, %v5568
      %v5570 = vpop.f32.mrf.mxu0
      %5571 = vmatprep.mubr.bf16.mxu0 0
      %5572 = vmatmul.mubr.bf16.gmra.mxu0 %v4061
      %v5573 = vpop.f32.mrf.mxu0
      %v5574 = vadd.f32 0.0, %v5573
      %v5575 = vpop.f32.mrf.mxu0
      %v5576 = vpop.f32.mrf.mxu0
      %v5577 = vadd.f32 0.0, %v5576
      %v5578 = vpop.f32.mrf.mxu0
      %5579 = vmatprep.mubr.bf16.mxu0 0
      %5580 = vmatmul.mubr.bf16.gmra.mxu0 %v5406
      %v5581 = vpop.f32.mrf.mxu0
      %v5582 = vpop.f32.mrf.mxu0
      %v5583 = vpop.f32.mrf.mxu0
      %v5584 = vpop.f32.mrf.mxu0
      %5585 = vdwg.mxu0
      %v5586 = vadd.f32 %v5155, %v5446
      %v5587 = vadd.f32 %v5156, %v5449
      %v5588 = vadd.f32 %v5157, %v5454
      %v5589 = vadd.f32 %v5158, %v5457
      %v5590 = vadd.f32 %v5159, %v5462
      %v5591 = vadd.f32 %v5160, %v5465
      %v5592 = vadd.f32 %v5161, %v5470
      %v5593 = vadd.f32 %v5162, %v5473
      %v5594 = vadd.f32 %v5163, %v5478
      %v5595 = vadd.f32 %v5164, %v5481
      %v5596 = vadd.f32 %v5165, %v5486
      %v5597 = vadd.f32 %v5166, %v5489
      %v5598 = vadd.f32 %v5167, %v5494
      %v5599 = vadd.f32 %v5168, %v5497
      %v5600 = vadd.f32 %v5169, %v5502
      %v5601 = vadd.f32 %v5170, %v5505
      %v5602 = vadd.f32 %v5171, %v5510
      %v5603 = vadd.f32 %v5172, %v5513
      %v5604 = vadd.f32 %v5173, %v5518
      %v5605 = vadd.f32 %v5174, %v5521
      %v5606 = vadd.f32 %v5175, %v5526
      %v5607 = vadd.f32 %v5176, %v5529
      %v5608 = vadd.f32 %v5177, %v5534
      %v5609 = vadd.f32 %v5178, %v5537
      %v5610 = vadd.f32 %v5179, %v5542
      %v5611 = vadd.f32 %v5180, %v5545
      %v5612 = vadd.f32 %v5181, %v5550
      %v5613 = vadd.f32 %v5182, %v5553
      %v5614 = vadd.f32 %v5183, %v5558
      %v5615 = vadd.f32 %v5184, %v5561
      %v5616 = vadd.f32 %v5185, %v5566
      %v5617 = vadd.f32 %v5186, %v5569
      %v5618 = vadd.f32 %v5187, %v5574
      %v5619 = vadd.f32 %v5188, %v5577
      %v5622 = vunpack.c.l.b16 %v617
      %v5623 = vunpack.c.l.b16 %v618
      %v5624 = vpack.c.b16 %v5623, %v5622
      %v5626 = vsel %vm810, %v5624, 0
      %5628 = vmatprep.subr.bf16.mxu0 0
      %5629 = vmatpush1.bf16.msra.mxu0 0
      %5630 = vmatprep.subr.bf16.mxu0 0
      %5631 = vmatpush1.bf16.msra.mxu0 0
      %5632 = vmatprep.subr.bf16.mxu0 0
      %5633 = vmatpush1.bf16.msra.mxu0 0
      %5634 = vmatprep.subr.bf16.mxu0 0
      %5635 = vmatpush1.bf16.msra.mxu0 0
      %5636 = vmatprep.subr.bf16.mxu0 0
      %5637 = vmatpush1.bf16.msra.mxu0 0
      %5638 = vmatprep.subr.bf16.mxu0 0
      %5639 = vmatpush1.bf16.msra.mxu0 0
      %5640 = vmatprep.subr.bf16.mxu0 0
      %5641 = vmatpush1.bf16.msra.mxu0 0
      %5642 = vmatprep.subr.bf16.mxu0 0
      %5643 = vmatpush1.bf16.msra.mxu0 %v5409
      %5644 = vmatprep.subr.bf16.mxu0 0
      %5645 = vmatpush2.bf16.msra.mxu0 0
      %5646 = vmatprep.subr.bf16.mxu0 0
      %5647 = vmatpush2.bf16.msra.mxu0 0
      %5648 = vmatprep.subr.bf16.mxu0 0
      %5649 = vmatpush2.bf16.msra.mxu0 0
      %5650 = vmatprep.subr.bf16.mxu0 0
      %5651 = vmatpush2.bf16.msra.mxu0 0
      %5652 = vmatprep.subr.bf16.mxu0 0
      %5653 = vmatpush2.bf16.msra.mxu0 0
      %5654 = vmatprep.subr.bf16.mxu0 0
      %5655 = vmatpush2.bf16.msra.mxu0 0
      %5656 = vmatprep.subr.bf16.mxu0 0
      %5657 = vmatpush2.bf16.msra.mxu0 0
      %5658 = vmatprep.subr.bf16.mxu0 0
      %5659 = vmatpush2.bf16.msra.mxu0 0
      %5660 = vmatprep.mubr.bf16.mxu0 0
      %5661 = vmatmul.mubr.bf16.gmra.mxu0 %v3123
      %v5662 = vpop.f32.mrf.mxu0
      %v5663 = vadd.f32 0.0, %v5662
      %v5664 = vpop.f32.mrf.mxu0
      %v5665 = vpop.f32.mrf.mxu0
      %v5666 = vadd.f32 0.0, %v5665
      %v5667 = vpop.f32.mrf.mxu0
      %5668 = vmatprep.mubr.bf16.mxu0 0
      %5669 = vmatmul.mubr.bf16.gmra.mxu0 %v3126
      %v5670 = vpop.f32.mrf.mxu0
      %v5671 = vadd.f32 0.0, %v5670
      %v5672 = vpop.f32.mrf.mxu0
      %v5673 = vpop.f32.mrf.mxu0
      %v5674 = vadd.f32 0.0, %v5673
      %v5675 = vpop.f32.mrf.mxu0
      %5676 = vmatprep.mubr.bf16.mxu0 0
      %5677 = vmatmul.mubr.bf16.gmra.mxu0 %v3129
      %v5678 = vpop.f32.mrf.mxu0
      %v5679 = vadd.f32 0.0, %v5678
      %v5680 = vpop.f32.mrf.mxu0
      %v5681 = vpop.f32.mrf.mxu0
      %v5682 = vadd.f32 0.0, %v5681
      %v5683 = vpop.f32.mrf.mxu0
      %5684 = vmatprep.mubr.bf16.mxu0 0
      %5685 = vmatmul.mubr.bf16.gmra.mxu0 %v3132
      %v5686 = vpop.f32.mrf.mxu0
      %v5687 = vadd.f32 0.0, %v5686
      %v5688 = vpop.f32.mrf.mxu0
      %v5689 = vpop.f32.mrf.mxu0
      %v5690 = vadd.f32 0.0, %v5689
      %v5691 = vpop.f32.mrf.mxu0
      %5692 = vmatprep.mubr.bf16.mxu0 0
      %5693 = vmatmul.mubr.bf16.gmra.mxu0 %v3135
      %v5694 = vpop.f32.mrf.mxu0
      %v5695 = vadd.f32 0.0, %v5694
      %v5696 = vpop.f32.mrf.mxu0
      %v5697 = vpop.f32.mrf.mxu0
      %v5698 = vadd.f32 0.0, %v5697
      %v5699 = vpop.f32.mrf.mxu0
      %5700 = vmatprep.mubr.bf16.mxu0 0
      %5701 = vmatmul.mubr.bf16.gmra.mxu0 %v3138
      %v5702 = vpop.f32.mrf.mxu0
      %v5703 = vadd.f32 0.0, %v5702
      %v5704 = vpop.f32.mrf.mxu0
      %v5705 = vpop.f32.mrf.mxu0
      %v5706 = vadd.f32 0.0, %v5705
      %v5707 = vpop.f32.mrf.mxu0
      %5708 = vmatprep.mubr.bf16.mxu0 0
      %5709 = vmatmul.mubr.bf16.gmra.mxu0 %v3141
      %v5710 = vpop.f32.mrf.mxu0
      %v5711 = vadd.f32 0.0, %v5710
      %v5712 = vpop.f32.mrf.mxu0
      %v5713 = vpop.f32.mrf.mxu0
      %v5714 = vadd.f32 0.0, %v5713
      %v5715 = vpop.f32.mrf.mxu0
      %5716 = vmatprep.mubr.bf16.mxu0 0
      %5717 = vmatmul.mubr.bf16.gmra.mxu0 %v3144
      %v5718 = vpop.f32.mrf.mxu0
      %v5719 = vadd.f32 0.0, %v5718
      %v5720 = vpop.f32.mrf.mxu0
      %v5721 = vpop.f32.mrf.mxu0
      %v5722 = vadd.f32 0.0, %v5721
      %v5723 = vpop.f32.mrf.mxu0
      %5724 = vmatprep.mubr.bf16.mxu0 0
      %5725 = vmatmul.mubr.bf16.gmra.mxu0 %v3147
      %v5726 = vpop.f32.mrf.mxu0
      %v5727 = vadd.f32 0.0, %v5726
      %v5728 = vpop.f32.mrf.mxu0
      %v5729 = vpop.f32.mrf.mxu0
      %v5730 = vadd.f32 0.0, %v5729
      %v5731 = vpop.f32.mrf.mxu0
      %5732 = vmatprep.mubr.bf16.mxu0 0
      %5733 = vmatmul.mubr.bf16.gmra.mxu0 %v3150
      %v5734 = vpop.f32.mrf.mxu0
      %v5735 = vadd.f32 0.0, %v5734
      %v5736 = vpop.f32.mrf.mxu0
      %v5737 = vpop.f32.mrf.mxu0
      %v5738 = vadd.f32 0.0, %v5737
      %v5739 = vpop.f32.mrf.mxu0
      %5740 = vmatprep.mubr.bf16.mxu0 0
      %5741 = vmatmul.mubr.bf16.gmra.mxu0 %v3153
      %v5742 = vpop.f32.mrf.mxu0
      %v5743 = vadd.f32 0.0, %v5742
      %v5744 = vpop.f32.mrf.mxu0
      %v5745 = vpop.f32.mrf.mxu0
      %v5746 = vadd.f32 0.0, %v5745
      %v5747 = vpop.f32.mrf.mxu0
      %5748 = vmatprep.mubr.bf16.mxu0 0
      %5749 = vmatmul.mubr.bf16.gmra.mxu0 %v3156
      %v5750 = vpop.f32.mrf.mxu0
      %v5751 = vadd.f32 0.0, %v5750
      %v5752 = vpop.f32.mrf.mxu0
      %v5753 = vpop.f32.mrf.mxu0
      %v5754 = vadd.f32 0.0, %v5753
      %v5755 = vpop.f32.mrf.mxu0
      %5756 = vmatprep.mubr.bf16.mxu0 0
      %5757 = vmatmul.mubr.bf16.gmra.mxu0 %v3159
      %v5758 = vpop.f32.mrf.mxu0
      %v5759 = vadd.f32 0.0, %v5758
      %v5760 = vpop.f32.mrf.mxu0
      %v5761 = vpop.f32.mrf.mxu0
      %v5762 = vadd.f32 0.0, %v5761
      %v5763 = vpop.f32.mrf.mxu0
      %5764 = vmatprep.mubr.bf16.mxu0 0
      %5765 = vmatmul.mubr.bf16.gmra.mxu0 %v3162
      %v5766 = vpop.f32.mrf.mxu0
      %v5767 = vadd.f32 0.0, %v5766
      %v5768 = vpop.f32.mrf.mxu0
      %v5769 = vpop.f32.mrf.mxu0
      %v5770 = vadd.f32 0.0, %v5769
      %v5771 = vpop.f32.mrf.mxu0
      %5772 = vmatprep.mubr.bf16.mxu0 0
      %5773 = vmatmul.mubr.bf16.gmra.mxu0 %v3165
      %v5774 = vpop.f32.mrf.mxu0
      %v5775 = vadd.f32 0.0, %v5774
      %v5776 = vpop.f32.mrf.mxu0
      %v5777 = vpop.f32.mrf.mxu0
      %v5778 = vadd.f32 0.0, %v5777
      %v5779 = vpop.f32.mrf.mxu0
      %5780 = vmatprep.mubr.bf16.mxu0 0
      %5781 = vmatmul.mubr.bf16.gmra.mxu0 %v3168
      %v5782 = vpop.f32.mrf.mxu0
      %v5783 = vadd.f32 0.0, %v5782
      %v5784 = vpop.f32.mrf.mxu0
      %v5785 = vpop.f32.mrf.mxu0
      %v5786 = vadd.f32 0.0, %v5785
      %v5787 = vpop.f32.mrf.mxu0
      %5788 = vmatprep.mubr.bf16.mxu0 0
      %5789 = vmatmul.mubr.bf16.gmra.mxu0 %v4281
      %v5790 = vpop.f32.mrf.mxu0
      %v5791 = vadd.f32 0.0, %v5790
      %v5792 = vpop.f32.mrf.mxu0
      %v5793 = vpop.f32.mrf.mxu0
      %v5794 = vadd.f32 0.0, %v5793
      %v5795 = vpop.f32.mrf.mxu0
      %5796 = vmatprep.mubr.bf16.mxu0 0
      %5797 = vmatmul.mubr.bf16.gmra.mxu0 %v5626
      %v5798 = vpop.f32.mrf.mxu0
      %v5799 = vpop.f32.mrf.mxu0
      %v5800 = vpop.f32.mrf.mxu0
      %v5801 = vpop.f32.mrf.mxu0
      %5802 = vdwg.mxu0
      %v5803 = vadd.f32 %v5364, %v5663
      %v5804 = vadd.f32 %v5365, %v5666
      %v5805 = vadd.f32 %v5366, %v5671
      %v5806 = vadd.f32 %v5367, %v5674
      %v5807 = vadd.f32 %v5368, %v5679
      %v5808 = vadd.f32 %v5369, %v5682
      %v5809 = vadd.f32 %v5370, %v5687
      %v5810 = vadd.f32 %v5371, %v5690
      %v5811 = vadd.f32 %v5372, %v5695
      %v5812 = vadd.f32 %v5373, %v5698
      %v5813 = vadd.f32 %v5374, %v5703
      %v5814 = vadd.f32 %v5375, %v5706
      %v5815 = vadd.f32 %v5376, %v5711
      %v5816 = vadd.f32 %v5377, %v5714
      %v5817 = vadd.f32 %v5378, %v5719
      %v5818 = vadd.f32 %v5379, %v5722
      %v5819 = vadd.f32 %v5380, %v5727
      %v5820 = vadd.f32 %v5381, %v5730
      %v5821 = vadd.f32 %v5382, %v5735
      %v5822 = vadd.f32 %v5383, %v5738
      %v5823 = vadd.f32 %v5384, %v5743
      %v5824 = vadd.f32 %v5385, %v5746
      %v5825 = vadd.f32 %v5386, %v5751
      %v5826 = vadd.f32 %v5387, %v5754
      %v5827 = vadd.f32 %v5388, %v5759
      %v5828 = vadd.f32 %v5389, %v5762
      %v5829 = vadd.f32 %v5390, %v5767
      %v5830 = vadd.f32 %v5391, %v5770
      %v5831 = vadd.f32 %v5392, %v5775
      %v5832 = vadd.f32 %v5393, %v5778
      %v5833 = vadd.f32 %v5394, %v5783
      %v5834 = vadd.f32 %v5395, %v5786
      %v5835 = vadd.f32 %v5396, %v5791
      %v5836 = vadd.f32 %v5397, %v5794
      %s5837 = scalar_lea.vmem %s4, 14
      %v5838 = vld [vmem:[%s5837] sm:$0x3]
      %v5840 = vshrl.u32 %v617, 16
      %v5842 = vrot.slane %v5840, 4
      %v5843 = vshll.u32 %v617, 16
      %v5845 = vrot.slane %v5843, 5
      %v5846 = vor.u32 %v5842, %v5845
      %v5847 = vrot.slane %v5846, 4
      %v5849 = vshll.u32 %v618, 16
      %v5851 = vrot.slane %v5849, 5
      %v5852 = vsel %vm683, %v5847, %v5851
      %v5853 = vshrl.u32 %v618, 16
      %v5855 = vrot.slane %v5853, 4
      %v5856 = vor.u32 %v5855, %v5851
      %v5857 = vrot.slane %v5856, 4
      %v5859 = vshll.u32 %v619, 16
      %v5861 = vrot.slane %v5859, 5
      %v5862 = vsel %vm683, %v5857, %v5861
      %v5863 = vunpack.c.l.b16 %v5852
      %v5864 = vunpack.c.l.b16 %v5862
      %v5865 = vpack.c.b16 %v5864, %v5863
      %v5867 = vsel %vm810, %v5865, 0
      %v5870 = vsel %vm823, %v5838, 0
      %5872 = vmatprep.subr.bf16.mxu0 0
      %5873 = vmatpush1.bf16.msra.mxu0 0
      %5874 = vmatprep.subr.bf16.mxu0 0
      %5875 = vmatpush1.bf16.msra.mxu0 0
      %5876 = vmatprep.subr.bf16.mxu0 0
      %5877 = vmatpush1.bf16.msra.mxu0 0
      %5878 = vmatprep.subr.bf16.mxu0 0
      %5879 = vmatpush1.bf16.msra.mxu0 0
      %5880 = vmatprep.subr.bf16.mxu0 0
      %5881 = vmatpush1.bf16.msra.mxu0 0
      %5882 = vmatprep.subr.bf16.mxu0 0
      %5883 = vmatpush1.bf16.msra.mxu0 0
      %5884 = vmatprep.subr.bf16.mxu0 0
      %5885 = vmatpush1.bf16.msra.mxu0 0
      %5886 = vmatprep.subr.bf16.mxu0 0
      %5887 = vmatpush1.bf16.msra.mxu0 %v5870
      %5888 = vmatprep.subr.bf16.mxu0 0
      %5889 = vmatpush2.bf16.msra.mxu0 0
      %5890 = vmatprep.subr.bf16.mxu0 0
      %5891 = vmatpush2.bf16.msra.mxu0 0
      %5892 = vmatprep.subr.bf16.mxu0 0
      %5893 = vmatpush2.bf16.msra.mxu0 0
      %5894 = vmatprep.subr.bf16.mxu0 0
      %5895 = vmatpush2.bf16.msra.mxu0 0
      %5896 = vmatprep.subr.bf16.mxu0 0
      %5897 = vmatpush2.bf16.msra.mxu0 0
      %5898 = vmatprep.subr.bf16.mxu0 0
      %5899 = vmatpush2.bf16.msra.mxu0 0
      %5900 = vmatprep.subr.bf16.mxu0 0
      %5901 = vmatpush2.bf16.msra.mxu0 0
      %5902 = vmatprep.subr.bf16.mxu0 0
      %5903 = vmatpush2.bf16.msra.mxu0 0
      %5904 = vmatprep.mubr.bf16.mxu0 0
      %5905 = vmatmul.mubr.bf16.gmra.mxu0 %v2338
      %v5906 = vpop.f32.mrf.mxu0
      %v5907 = vadd.f32 0.0, %v5906
      %v5908 = vpop.f32.mrf.mxu0
      %v5909 = vpop.f32.mrf.mxu0
      %v5910 = vadd.f32 0.0, %v5909
      %v5911 = vpop.f32.mrf.mxu0
      %5912 = vmatprep.mubr.bf16.mxu0 0
      %5913 = vmatmul.mubr.bf16.gmra.mxu0 %v2341
      %v5914 = vpop.f32.mrf.mxu0
      %v5915 = vadd.f32 0.0, %v5914
      %v5916 = vpop.f32.mrf.mxu0
      %v5917 = vpop.f32.mrf.mxu0
      %v5918 = vadd.f32 0.0, %v5917
      %v5919 = vpop.f32.mrf.mxu0
      %5920 = vmatprep.mubr.bf16.mxu0 0
      %5921 = vmatmul.mubr.bf16.gmra.mxu0 %v2344
      %v5922 = vpop.f32.mrf.mxu0
      %v5923 = vadd.f32 0.0, %v5922
      %v5924 = vpop.f32.mrf.mxu0
      %v5925 = vpop.f32.mrf.mxu0
      %v5926 = vadd.f32 0.0, %v5925
      %v5927 = vpop.f32.mrf.mxu0
      %5928 = vmatprep.mubr.bf16.mxu0 0
      %5929 = vmatmul.mubr.bf16.gmra.mxu0 %v2347
      %v5930 = vpop.f32.mrf.mxu0
      %v5931 = vadd.f32 0.0, %v5930
      %v5932 = vpop.f32.mrf.mxu0
      %v5933 = vpop.f32.mrf.mxu0
      %v5934 = vadd.f32 0.0, %v5933
      %v5935 = vpop.f32.mrf.mxu0
      %5936 = vmatprep.mubr.bf16.mxu0 0
      %5937 = vmatmul.mubr.bf16.gmra.mxu0 %v2350
      %v5938 = vpop.f32.mrf.mxu0
      %v5939 = vadd.f32 0.0, %v5938
      %v5940 = vpop.f32.mrf.mxu0
      %v5941 = vpop.f32.mrf.mxu0
      %v5942 = vadd.f32 0.0, %v5941
      %v5943 = vpop.f32.mrf.mxu0
      %5944 = vmatprep.mubr.bf16.mxu0 0
      %5945 = vmatmul.mubr.bf16.gmra.mxu0 %v2353
      %v5946 = vpop.f32.mrf.mxu0
      %v5947 = vadd.f32 0.0, %v5946
      %v5948 = vpop.f32.mrf.mxu0
      %v5949 = vpop.f32.mrf.mxu0
      %v5950 = vadd.f32 0.0, %v5949
      %v5951 = vpop.f32.mrf.mxu0
      %5952 = vmatprep.mubr.bf16.mxu0 0
      %5953 = vmatmul.mubr.bf16.gmra.mxu0 %v2356
      %v5954 = vpop.f32.mrf.mxu0
      %v5955 = vadd.f32 0.0, %v5954
      %v5956 = vpop.f32.mrf.mxu0
      %v5957 = vpop.f32.mrf.mxu0
      %v5958 = vadd.f32 0.0, %v5957
      %v5959 = vpop.f32.mrf.mxu0
      %5960 = vmatprep.mubr.bf16.mxu0 0
      %5961 = vmatmul.mubr.bf16.gmra.mxu0 %v2359
      %v5962 = vpop.f32.mrf.mxu0
      %v5963 = vadd.f32 0.0, %v5962
      %v5964 = vpop.f32.mrf.mxu0
      %v5965 = vpop.f32.mrf.mxu0
      %v5966 = vadd.f32 0.0, %v5965
      %v5967 = vpop.f32.mrf.mxu0
      %5968 = vmatprep.mubr.bf16.mxu0 0
      %5969 = vmatmul.mubr.bf16.gmra.mxu0 %v2362
      %v5970 = vpop.f32.mrf.mxu0
      %v5971 = vadd.f32 0.0, %v5970
      %v5972 = vpop.f32.mrf.mxu0
      %v5973 = vpop.f32.mrf.mxu0
      %v5974 = vadd.f32 0.0, %v5973
      %v5975 = vpop.f32.mrf.mxu0
      %5976 = vmatprep.mubr.bf16.mxu0 0
      %5977 = vmatmul.mubr.bf16.gmra.mxu0 %v2365
      %v5978 = vpop.f32.mrf.mxu0
      %v5979 = vadd.f32 0.0, %v5978
      %v5980 = vpop.f32.mrf.mxu0
      %v5981 = vpop.f32.mrf.mxu0
      %v5982 = vadd.f32 0.0, %v5981
      %v5983 = vpop.f32.mrf.mxu0
      %5984 = vmatprep.mubr.bf16.mxu0 0
      %5985 = vmatmul.mubr.bf16.gmra.mxu0 %v2368
      %v5986 = vpop.f32.mrf.mxu0
      %v5987 = vadd.f32 0.0, %v5986
      %v5988 = vpop.f32.mrf.mxu0
      %v5989 = vpop.f32.mrf.mxu0
      %v5990 = vadd.f32 0.0, %v5989
      %v5991 = vpop.f32.mrf.mxu0
      %5992 = vmatprep.mubr.bf16.mxu0 0
      %5993 = vmatmul.mubr.bf16.gmra.mxu0 %v2371
      %v5994 = vpop.f32.mrf.mxu0
      %v5995 = vadd.f32 0.0, %v5994
      %v5996 = vpop.f32.mrf.mxu0
      %v5997 = vpop.f32.mrf.mxu0
      %v5998 = vadd.f32 0.0, %v5997
      %v5999 = vpop.f32.mrf.mxu0
      %6000 = vmatprep.mubr.bf16.mxu0 0
      %6001 = vmatmul.mubr.bf16.gmra.mxu0 %v2374
      %v6002 = vpop.f32.mrf.mxu0
      %v6003 = vadd.f32 0.0, %v6002
      %v6004 = vpop.f32.mrf.mxu0
      %v6005 = vpop.f32.mrf.mxu0
      %v6006 = vadd.f32 0.0, %v6005
      %v6007 = vpop.f32.mrf.mxu0
      %6008 = vmatprep.mubr.bf16.mxu0 0
      %6009 = vmatmul.mubr.bf16.gmra.mxu0 %v2377
      %v6010 = vpop.f32.mrf.mxu0
      %v6011 = vadd.f32 0.0, %v6010
      %v6012 = vpop.f32.mrf.mxu0
      %v6013 = vpop.f32.mrf.mxu0
      %v6014 = vadd.f32 0.0, %v6013
      %v6015 = vpop.f32.mrf.mxu0
      %6016 = vmatprep.mubr.bf16.mxu0 0
      %6017 = vmatmul.mubr.bf16.gmra.mxu0 %v2380
      %v6018 = vpop.f32.mrf.mxu0
      %v6019 = vadd.f32 0.0, %v6018
      %v6020 = vpop.f32.mrf.mxu0
      %v6021 = vpop.f32.mrf.mxu0
      %v6022 = vadd.f32 0.0, %v6021
      %v6023 = vpop.f32.mrf.mxu0
      %6024 = vmatprep.mubr.bf16.mxu0 0
      %6025 = vmatmul.mubr.bf16.gmra.mxu0 %v2383
      %v6026 = vpop.f32.mrf.mxu0
      %v6027 = vadd.f32 0.0, %v6026
      %v6028 = vpop.f32.mrf.mxu0
      %v6029 = vpop.f32.mrf.mxu0
      %v6030 = vadd.f32 0.0, %v6029
      %v6031 = vpop.f32.mrf.mxu0
      %6032 = vmatprep.mubr.bf16.mxu0 0
      %6033 = vmatmul.mubr.bf16.gmra.mxu0 %v4522
      %v6034 = vpop.f32.mrf.mxu0
      %v6035 = vadd.f32 0.0, %v6034
      %v6036 = vpop.f32.mrf.mxu0
      %v6037 = vpop.f32.mrf.mxu0
      %v6038 = vadd.f32 0.0, %v6037
      %v6039 = vpop.f32.mrf.mxu0
      %6040 = vmatprep.mubr.bf16.mxu0 0
      %6041 = vmatmul.mubr.bf16.gmra.mxu0 %v5867
      %v6042 = vpop.f32.mrf.mxu0
      %v6043 = vpop.f32.mrf.mxu0
      %v6044 = vpop.f32.mrf.mxu0
      %v6045 = vpop.f32.mrf.mxu0
      %6046 = vdwg.mxu0
      %v6047 = vadd.f32 %v5586, %v5907
      %v6048 = vadd.f32 %v5587, %v5910
      %v6049 = vadd.f32 %v5588, %v5915
      %v6050 = vadd.f32 %v5589, %v5918
      %v6051 = vadd.f32 %v5590, %v5923
      %v6052 = vadd.f32 %v5591, %v5926
      %v6053 = vadd.f32 %v5592, %v5931
      %v6054 = vadd.f32 %v5593, %v5934
      %v6055 = vadd.f32 %v5594, %v5939
      %v6056 = vadd.f32 %v5595, %v5942
      %v6057 = vadd.f32 %v5596, %v5947
      %v6058 = vadd.f32 %v5597, %v5950
      %v6059 = vadd.f32 %v5598, %v5955
      %v6060 = vadd.f32 %v5599, %v5958
      %v6061 = vadd.f32 %v5600, %v5963
      %v6062 = vadd.f32 %v5601, %v5966
      %v6063 = vadd.f32 %v5602, %v5971
      %v6064 = vadd.f32 %v5603, %v5974
      %v6065 = vadd.f32 %v5604, %v5979
      %v6066 = vadd.f32 %v5605, %v5982
      %v6067 = vadd.f32 %v5606, %v5987
      %v6068 = vadd.f32 %v5607, %v5990
      %v6069 = vadd.f32 %v5608, %v5995
      %v6070 = vadd.f32 %v5609, %v5998
      %v6071 = vadd.f32 %v5610, %v6003
      %v6072 = vadd.f32 %v5611, %v6006
      %v6073 = vadd.f32 %v5612, %v6011
      %v6074 = vadd.f32 %v5613, %v6014
      %v6075 = vadd.f32 %v5614, %v6019
      %v6076 = vadd.f32 %v5615, %v6022
      %v6077 = vadd.f32 %v5616, %v6027
      %v6078 = vadd.f32 %v5617, %v6030
      %v6079 = vadd.f32 %v5618, %v6035
      %v6080 = vadd.f32 %v5619, %v6038
      %6081 = vmatprep.subr.bf16.mxu0 0
      %6082 = vmatpush1.bf16.msra.mxu0 0
      %6083 = vmatprep.subr.bf16.mxu0 0
      %6084 = vmatpush1.bf16.msra.mxu0 0
      %6085 = vmatprep.subr.bf16.mxu0 0
      %6086 = vmatpush1.bf16.msra.mxu0 0
      %6087 = vmatprep.subr.bf16.mxu0 0
      %6088 = vmatpush1.bf16.msra.mxu0 0
      %6089 = vmatprep.subr.bf16.mxu0 0
      %6090 = vmatpush1.bf16.msra.mxu0 0
      %6091 = vmatprep.subr.bf16.mxu0 0
      %6092 = vmatpush1.bf16.msra.mxu0 0
      %6093 = vmatprep.subr.bf16.mxu0 0
      %6094 = vmatpush1.bf16.msra.mxu0 0
      %6095 = vmatprep.subr.bf16.mxu0 0
      %6096 = vmatpush1.bf16.msra.mxu0 %v5870
      %6097 = vmatprep.subr.bf16.mxu0 0
      %6098 = vmatpush2.bf16.msra.mxu0 0
      %6099 = vmatprep.subr.bf16.mxu0 0
      %6100 = vmatpush2.bf16.msra.mxu0 0
      %6101 = vmatprep.subr.bf16.mxu0 0
      %6102 = vmatpush2.bf16.msra.mxu0 0
      %6103 = vmatprep.subr.bf16.mxu0 0
      %6104 = vmatpush2.bf16.msra.mxu0 0
      %6105 = vmatprep.subr.bf16.mxu0 0
      %6106 = vmatpush2.bf16.msra.mxu0 0
      %6107 = vmatprep.subr.bf16.mxu0 0
      %6108 = vmatpush2.bf16.msra.mxu0 0
      %6109 = vmatprep.subr.bf16.mxu0 0
      %6110 = vmatpush2.bf16.msra.mxu0 0
      %6111 = vmatprep.subr.bf16.mxu0 0
      %6112 = vmatpush2.bf16.msra.mxu0 0
      %6113 = vmatprep.mubr.bf16.mxu0 0
      %6114 = vmatmul.mubr.bf16.gmra.mxu0 %v2626
      %v6115 = vpop.f32.mrf.mxu0
      %v6116 = vadd.f32 0.0, %v6115
      %v6117 = vpop.f32.mrf.mxu0
      %v6118 = vpop.f32.mrf.mxu0
      %v6119 = vadd.f32 0.0, %v6118
      %v6120 = vpop.f32.mrf.mxu0
      %6121 = vmatprep.mubr.bf16.mxu0 0
      %6122 = vmatmul.mubr.bf16.gmra.mxu0 %v2629
      %v6123 = vpop.f32.mrf.mxu0
      %v6124 = vadd.f32 0.0, %v6123
      %v6125 = vpop.f32.mrf.mxu0
      %v6126 = vpop.f32.mrf.mxu0
      %v6127 = vadd.f32 0.0, %v6126
      %v6128 = vpop.f32.mrf.mxu0
      %6129 = vmatprep.mubr.bf16.mxu0 0
      %6130 = vmatmul.mubr.bf16.gmra.mxu0 %v2632
      %v6131 = vpop.f32.mrf.mxu0
      %v6132 = vadd.f32 0.0, %v6131
      %v6133 = vpop.f32.mrf.mxu0
      %v6134 = vpop.f32.mrf.mxu0
      %v6135 = vadd.f32 0.0, %v6134
      %v6136 = vpop.f32.mrf.mxu0
      %6137 = vmatprep.mubr.bf16.mxu0 0
      %6138 = vmatmul.mubr.bf16.gmra.mxu0 %v2635
      %v6139 = vpop.f32.mrf.mxu0
      %v6140 = vadd.f32 0.0, %v6139
      %v6141 = vpop.f32.mrf.mxu0
      %v6142 = vpop.f32.mrf.mxu0
      %v6143 = vadd.f32 0.0, %v6142
      %v6144 = vpop.f32.mrf.mxu0
      %6145 = vmatprep.mubr.bf16.mxu0 0
      %6146 = vmatmul.mubr.bf16.gmra.mxu0 %v2638
      %v6147 = vpop.f32.mrf.mxu0
      %v6148 = vadd.f32 0.0, %v6147
      %v6149 = vpop.f32.mrf.mxu0
      %v6150 = vpop.f32.mrf.mxu0
      %v6151 = vadd.f32 0.0, %v6150
      %v6152 = vpop.f32.mrf.mxu0
      %6153 = vmatprep.mubr.bf16.mxu0 0
      %6154 = vmatmul.mubr.bf16.gmra.mxu0 %v2641
      %v6155 = vpop.f32.mrf.mxu0
      %v6156 = vadd.f32 0.0, %v6155
      %v6157 = vpop.f32.mrf.mxu0
      %v6158 = vpop.f32.mrf.mxu0
      %v6159 = vadd.f32 0.0, %v6158
      %v6160 = vpop.f32.mrf.mxu0
      %6161 = vmatprep.mubr.bf16.mxu0 0
      %6162 = vmatmul.mubr.bf16.gmra.mxu0 %v2644
      %v6163 = vpop.f32.mrf.mxu0
      %v6164 = vadd.f32 0.0, %v6163
      %v6165 = vpop.f32.mrf.mxu0
      %v6166 = vpop.f32.mrf.mxu0
      %v6167 = vadd.f32 0.0, %v6166
      %v6168 = vpop.f32.mrf.mxu0
      %6169 = vmatprep.mubr.bf16.mxu0 0
      %6170 = vmatmul.mubr.bf16.gmra.mxu0 %v2647
      %v6171 = vpop.f32.mrf.mxu0
      %v6172 = vadd.f32 0.0, %v6171
      %v6173 = vpop.f32.mrf.mxu0
      %v6174 = vpop.f32.mrf.mxu0
      %v6175 = vadd.f32 0.0, %v6174
      %v6176 = vpop.f32.mrf.mxu0
      %6177 = vmatprep.mubr.bf16.mxu0 0
      %6178 = vmatmul.mubr.bf16.gmra.mxu0 %v2650
      %v6179 = vpop.f32.mrf.mxu0
      %v6180 = vadd.f32 0.0, %v6179
      %v6181 = vpop.f32.mrf.mxu0
      %v6182 = vpop.f32.mrf.mxu0
      %v6183 = vadd.f32 0.0, %v6182
      %v6184 = vpop.f32.mrf.mxu0
      %6185 = vmatprep.mubr.bf16.mxu0 0
      %6186 = vmatmul.mubr.bf16.gmra.mxu0 %v2653
      %v6187 = vpop.f32.mrf.mxu0
      %v6188 = vadd.f32 0.0, %v6187
      %v6189 = vpop.f32.mrf.mxu0
      %v6190 = vpop.f32.mrf.mxu0
      %v6191 = vadd.f32 0.0, %v6190
      %v6192 = vpop.f32.mrf.mxu0
      %6193 = vmatprep.mubr.bf16.mxu0 0
      %6194 = vmatmul.mubr.bf16.gmra.mxu0 %v2656
      %v6195 = vpop.f32.mrf.mxu0
      %v6196 = vadd.f32 0.0, %v6195
      %v6197 = vpop.f32.mrf.mxu0
      %v6198 = vpop.f32.mrf.mxu0
      %v6199 = vadd.f32 0.0, %v6198
      %v6200 = vpop.f32.mrf.mxu0
      %6201 = vmatprep.mubr.bf16.mxu0 0
      %6202 = vmatmul.mubr.bf16.gmra.mxu0 %v2659
      %v6203 = vpop.f32.mrf.mxu0
      %v6204 = vadd.f32 0.0, %v6203
      %v6205 = vpop.f32.mrf.mxu0
      %v6206 = vpop.f32.mrf.mxu0
      %v6207 = vadd.f32 0.0, %v6206
      %v6208 = vpop.f32.mrf.mxu0
      %6209 = vmatprep.mubr.bf16.mxu0 0
      %6210 = vmatmul.mubr.bf16.gmra.mxu0 %v2662
      %v6211 = vpop.f32.mrf.mxu0
      %v6212 = vadd.f32 0.0, %v6211
      %v6213 = vpop.f32.mrf.mxu0
      %v6214 = vpop.f32.mrf.mxu0
      %v6215 = vadd.f32 0.0, %v6214
      %v6216 = vpop.f32.mrf.mxu0
      %6217 = vmatprep.mubr.bf16.mxu0 0
      %6218 = vmatmul.mubr.bf16.gmra.mxu0 %v2665
      %v6219 = vpop.f32.mrf.mxu0
      %v6220 = vadd.f32 0.0, %v6219
      %v6221 = vpop.f32.mrf.mxu0
      %v6222 = vpop.f32.mrf.mxu0
      %v6223 = vadd.f32 0.0, %v6222
      %v6224 = vpop.f32.mrf.mxu0
      %6225 = vmatprep.mubr.bf16.mxu0 0
      %6226 = vmatmul.mubr.bf16.gmra.mxu0 %v2668
      %v6227 = vpop.f32.mrf.mxu0
      %v6228 = vadd.f32 0.0, %v6227
      %v6229 = vpop.f32.mrf.mxu0
      %v6230 = vpop.f32.mrf.mxu0
      %v6231 = vadd.f32 0.0, %v6230
      %v6232 = vpop.f32.mrf.mxu0
      %6233 = vmatprep.mubr.bf16.mxu0 0
      %6234 = vmatmul.mubr.bf16.gmra.mxu0 %v2671
      %v6235 = vpop.f32.mrf.mxu0
      %v6236 = vadd.f32 0.0, %v6235
      %v6237 = vpop.f32.mrf.mxu0
      %v6238 = vpop.f32.mrf.mxu0
      %v6239 = vadd.f32 0.0, %v6238
      %v6240 = vpop.f32.mrf.mxu0
      %6241 = vmatprep.mubr.bf16.mxu0 0
      %6242 = vmatmul.mubr.bf16.gmra.mxu0 %v4061
      %v6243 = vpop.f32.mrf.mxu0
      %v6244 = vadd.f32 0.0, %v6243
      %v6245 = vpop.f32.mrf.mxu0
      %v6246 = vpop.f32.mrf.mxu0
      %v6247 = vadd.f32 0.0, %v6246
      %v6248 = vpop.f32.mrf.mxu0
      %6249 = vmatprep.mubr.bf16.mxu0 0
      %6250 = vmatmul.mubr.bf16.gmra.mxu0 %v5406
      %v6251 = vpop.f32.mrf.mxu0
      %v6252 = vpop.f32.mrf.mxu0
      %v6253 = vpop.f32.mrf.mxu0
      %v6254 = vpop.f32.mrf.mxu0
      %6255 = vdwg.mxu0
      %v6256 = vadd.f32 %v5803, %v6116
      %v6257 = vadd.f32 %v5804, %v6119
      %v6258 = vadd.f32 %v5805, %v6124
      %v6259 = vadd.f32 %v5806, %v6127
      %v6260 = vadd.f32 %v5807, %v6132
      %v6261 = vadd.f32 %v5808, %v6135
      %v6262 = vadd.f32 %v5809, %v6140
      %v6263 = vadd.f32 %v5810, %v6143
      %v6264 = vadd.f32 %v5811, %v6148
      %v6265 = vadd.f32 %v5812, %v6151
      %v6266 = vadd.f32 %v5813, %v6156
      %v6267 = vadd.f32 %v5814, %v6159
      %v6268 = vadd.f32 %v5815, %v6164
      %v6269 = vadd.f32 %v5816, %v6167
      %v6270 = vadd.f32 %v5817, %v6172
      %v6271 = vadd.f32 %v5818, %v6175
      %v6272 = vadd.f32 %v5819, %v6180
      %v6273 = vadd.f32 %v5820, %v6183
      %v6274 = vadd.f32 %v5821, %v6188
      %v6275 = vadd.f32 %v5822, %v6191
      %v6276 = vadd.f32 %v5823, %v6196
      %v6277 = vadd.f32 %v5824, %v6199
      %v6278 = vadd.f32 %v5825, %v6204
      %v6279 = vadd.f32 %v5826, %v6207
      %v6280 = vadd.f32 %v5827, %v6212
      %v6281 = vadd.f32 %v5828, %v6215
      %v6282 = vadd.f32 %v5829, %v6220
      %v6283 = vadd.f32 %v5830, %v6223
      %v6284 = vadd.f32 %v5831, %v6228
      %v6285 = vadd.f32 %v5832, %v6231
      %v6286 = vadd.f32 %v5833, %v6236
      %v6287 = vadd.f32 %v5834, %v6239
      %v6288 = vadd.f32 %v5835, %v6244
      %v6289 = vadd.f32 %v5836, %v6247
      %s6290 = scalar_lea.vmem %s4, 16
      %v6291 = vld [vmem:[%s6290] sm:$0x3]
      %v6293 = vshrl.u32 %v677, 16
      %v6295 = vrot.slane %v6293, 4
      %v6296 = vshll.u32 %v677, 16
      %v6298 = vrot.slane %v6296, 5
      %v6299 = vor.u32 %v6295, %v6298
      %v6300 = vrot.slane %v6299, 4
      %v6302 = vshll.u32 %v678, 16
      %v6304 = vrot.slane %v6302, 5
      %v6305 = vsel %vm683, %v6300, %v6304
      %v6306 = vshrl.u32 %v678, 16
      %v6308 = vrot.slane %v6306, 4
      %v6309 = vor.u32 %v6308, %v6304
      %v6310 = vrot.slane %v6309, 4
      %v6312 = vshll.u32 %v679, 16
      %v6314 = vrot.slane %v6312, 5
      %v6315 = vsel %vm683, %v6310, %v6314
      %v6316 = vunpack.c.l.b16 %v6305
      %v6317 = vunpack.c.l.b16 %v6315
      %v6318 = vpack.c.b16 %v6317, %v6316
      %v6320 = vsel %vm810, %v6318, 0
      %v6323 = vsel %vm823, %v6291, 0
      %6325 = vmatprep.subr.bf16.mxu0 0
      %6326 = vmatpush1.bf16.msra.mxu0 0
      %6327 = vmatprep.subr.bf16.mxu0 0
      %6328 = vmatpush1.bf16.msra.mxu0 0
      %6329 = vmatprep.subr.bf16.mxu0 0
      %6330 = vmatpush1.bf16.msra.mxu0 0
      %6331 = vmatprep.subr.bf16.mxu0 0
      %6332 = vmatpush1.bf16.msra.mxu0 0
      %6333 = vmatprep.subr.bf16.mxu0 0
      %6334 = vmatpush1.bf16.msra.mxu0 0
      %6335 = vmatprep.subr.bf16.mxu0 0
      %6336 = vmatpush1.bf16.msra.mxu0 0
      %6337 = vmatprep.subr.bf16.mxu0 0
      %6338 = vmatpush1.bf16.msra.mxu0 0
      %6339 = vmatprep.subr.bf16.mxu0 0
      %6340 = vmatpush1.bf16.msra.mxu0 %v6323
      %6341 = vmatprep.subr.bf16.mxu0 0
      %6342 = vmatpush2.bf16.msra.mxu0 0
      %6343 = vmatprep.subr.bf16.mxu0 0
      %6344 = vmatpush2.bf16.msra.mxu0 0
      %6345 = vmatprep.subr.bf16.mxu0 0
      %6346 = vmatpush2.bf16.msra.mxu0 0
      %6347 = vmatprep.subr.bf16.mxu0 0
      %6348 = vmatpush2.bf16.msra.mxu0 0
      %6349 = vmatprep.subr.bf16.mxu0 0
      %6350 = vmatpush2.bf16.msra.mxu0 0
      %6351 = vmatprep.subr.bf16.mxu0 0
      %6352 = vmatpush2.bf16.msra.mxu0 0
      %6353 = vmatprep.subr.bf16.mxu0 0
      %6354 = vmatpush2.bf16.msra.mxu0 0
      %6355 = vmatprep.subr.bf16.mxu0 0
      %6356 = vmatpush2.bf16.msra.mxu0 0
      %6357 = vmatprep.mubr.bf16.mxu0 0
      %6358 = vmatmul.mubr.bf16.gmra.mxu0 %v3585
      %v6359 = vpop.f32.mrf.mxu0
      %v6360 = vadd.f32 0.0, %v6359
      %v6361 = vpop.f32.mrf.mxu0
      %v6362 = vpop.f32.mrf.mxu0
      %v6363 = vadd.f32 0.0, %v6362
      %v6364 = vpop.f32.mrf.mxu0
      %6365 = vmatprep.mubr.bf16.mxu0 0
      %6366 = vmatmul.mubr.bf16.gmra.mxu0 %v3588
      %v6367 = vpop.f32.mrf.mxu0
      %v6368 = vadd.f32 0.0, %v6367
      %v6369 = vpop.f32.mrf.mxu0
      %v6370 = vpop.f32.mrf.mxu0
      %v6371 = vadd.f32 0.0, %v6370
      %v6372 = vpop.f32.mrf.mxu0
      %6373 = vmatprep.mubr.bf16.mxu0 0
      %6374 = vmatmul.mubr.bf16.gmra.mxu0 %v3591
      %v6375 = vpop.f32.mrf.mxu0
      %v6376 = vadd.f32 0.0, %v6375
      %v6377 = vpop.f32.mrf.mxu0
      %v6378 = vpop.f32.mrf.mxu0
      %v6379 = vadd.f32 0.0, %v6378
      %v6380 = vpop.f32.mrf.mxu0
      %6381 = vmatprep.mubr.bf16.mxu0 0
      %6382 = vmatmul.mubr.bf16.gmra.mxu0 %v3594
      %v6383 = vpop.f32.mrf.mxu0
      %v6384 = vadd.f32 0.0, %v6383
      %v6385 = vpop.f32.mrf.mxu0
      %v6386 = vpop.f32.mrf.mxu0
      %v6387 = vadd.f32 0.0, %v6386
      %v6388 = vpop.f32.mrf.mxu0
      %6389 = vmatprep.mubr.bf16.mxu0 0
      %6390 = vmatmul.mubr.bf16.gmra.mxu0 %v3597
      %v6391 = vpop.f32.mrf.mxu0
      %v6392 = vadd.f32 0.0, %v6391
      %v6393 = vpop.f32.mrf.mxu0
      %v6394 = vpop.f32.mrf.mxu0
      %v6395 = vadd.f32 0.0, %v6394
      %v6396 = vpop.f32.mrf.mxu0
      %6397 = vmatprep.mubr.bf16.mxu0 0
      %6398 = vmatmul.mubr.bf16.gmra.mxu0 %v3600
      %v6399 = vpop.f32.mrf.mxu0
      %v6400 = vadd.f32 0.0, %v6399
      %v6401 = vpop.f32.mrf.mxu0
      %v6402 = vpop.f32.mrf.mxu0
      %v6403 = vadd.f32 0.0, %v6402
      %v6404 = vpop.f32.mrf.mxu0
      %6405 = vmatprep.mubr.bf16.mxu0 0
      %6406 = vmatmul.mubr.bf16.gmra.mxu0 %v3603
      %v6407 = vpop.f32.mrf.mxu0
      %v6408 = vadd.f32 0.0, %v6407
      %v6409 = vpop.f32.mrf.mxu0
      %v6410 = vpop.f32.mrf.mxu0
      %v6411 = vadd.f32 0.0, %v6410
      %v6412 = vpop.f32.mrf.mxu0
      %6413 = vmatprep.mubr.bf16.mxu0 0
      %6414 = vmatmul.mubr.bf16.gmra.mxu0 %v3606
      %v6415 = vpop.f32.mrf.mxu0
      %v6416 = vadd.f32 0.0, %v6415
      %v6417 = vpop.f32.mrf.mxu0
      %v6418 = vpop.f32.mrf.mxu0
      %v6419 = vadd.f32 0.0, %v6418
      %v6420 = vpop.f32.mrf.mxu0
      %6421 = vmatprep.mubr.bf16.mxu0 0
      %6422 = vmatmul.mubr.bf16.gmra.mxu0 %v3609
      %v6423 = vpop.f32.mrf.mxu0
      %v6424 = vadd.f32 0.0, %v6423
      %v6425 = vpop.f32.mrf.mxu0
      %v6426 = vpop.f32.mrf.mxu0
      %v6427 = vadd.f32 0.0, %v6426
      %v6428 = vpop.f32.mrf.mxu0
      %6429 = vmatprep.mubr.bf16.mxu0 0
      %6430 = vmatmul.mubr.bf16.gmra.mxu0 %v3612
      %v6431 = vpop.f32.mrf.mxu0
      %v6432 = vadd.f32 0.0, %v6431
      %v6433 = vpop.f32.mrf.mxu0
      %v6434 = vpop.f32.mrf.mxu0
      %v6435 = vadd.f32 0.0, %v6434
      %v6436 = vpop.f32.mrf.mxu0
      %6437 = vmatprep.mubr.bf16.mxu0 0
      %6438 = vmatmul.mubr.bf16.gmra.mxu0 %v3615
      %v6439 = vpop.f32.mrf.mxu0
      %v6440 = vadd.f32 0.0, %v6439
      %v6441 = vpop.f32.mrf.mxu0
      %v6442 = vpop.f32.mrf.mxu0
      %v6443 = vadd.f32 0.0, %v6442
      %v6444 = vpop.f32.mrf.mxu0
      %6445 = vmatprep.mubr.bf16.mxu0 0
      %6446 = vmatmul.mubr.bf16.gmra.mxu0 %v3618
      %v6447 = vpop.f32.mrf.mxu0
      %v6448 = vadd.f32 0.0, %v6447
      %v6449 = vpop.f32.mrf.mxu0
      %v6450 = vpop.f32.mrf.mxu0
      %v6451 = vadd.f32 0.0, %v6450
      %v6452 = vpop.f32.mrf.mxu0
      %6453 = vmatprep.mubr.bf16.mxu0 0
      %6454 = vmatmul.mubr.bf16.gmra.mxu0 %v3621
      %v6455 = vpop.f32.mrf.mxu0
      %v6456 = vadd.f32 0.0, %v6455
      %v6457 = vpop.f32.mrf.mxu0
      %v6458 = vpop.f32.mrf.mxu0
      %v6459 = vadd.f32 0.0, %v6458
      %v6460 = vpop.f32.mrf.mxu0
      %6461 = vmatprep.mubr.bf16.mxu0 0
      %6462 = vmatmul.mubr.bf16.gmra.mxu0 %v3624
      %v6463 = vpop.f32.mrf.mxu0
      %v6464 = vadd.f32 0.0, %v6463
      %v6465 = vpop.f32.mrf.mxu0
      %v6466 = vpop.f32.mrf.mxu0
      %v6467 = vadd.f32 0.0, %v6466
      %v6468 = vpop.f32.mrf.mxu0
      %6469 = vmatprep.mubr.bf16.mxu0 0
      %6470 = vmatmul.mubr.bf16.gmra.mxu0 %v3627
      %v6471 = vpop.f32.mrf.mxu0
      %v6472 = vadd.f32 0.0, %v6471
      %v6473 = vpop.f32.mrf.mxu0
      %v6474 = vpop.f32.mrf.mxu0
      %v6475 = vadd.f32 0.0, %v6474
      %v6476 = vpop.f32.mrf.mxu0
      %6477 = vmatprep.mubr.bf16.mxu0 0
      %6478 = vmatmul.mubr.bf16.gmra.mxu0 %v3630
      %v6479 = vpop.f32.mrf.mxu0
      %v6480 = vadd.f32 0.0, %v6479
      %v6481 = vpop.f32.mrf.mxu0
      %v6482 = vpop.f32.mrf.mxu0
      %v6483 = vadd.f32 0.0, %v6482
      %v6484 = vpop.f32.mrf.mxu0
      %6485 = vmatprep.mubr.bf16.mxu0 0
      %6486 = vmatmul.mubr.bf16.gmra.mxu0 %v4975
      %v6487 = vpop.f32.mrf.mxu0
      %v6488 = vadd.f32 0.0, %v6487
      %v6489 = vpop.f32.mrf.mxu0
      %v6490 = vpop.f32.mrf.mxu0
      %v6491 = vadd.f32 0.0, %v6490
      %v6492 = vpop.f32.mrf.mxu0
      %6493 = vmatprep.mubr.bf16.mxu0 0
      %6494 = vmatmul.mubr.bf16.gmra.mxu0 %v6320
      %v6495 = vpop.f32.mrf.mxu0
      %v6496 = vpop.f32.mrf.mxu0
      %v6497 = vpop.f32.mrf.mxu0
      %v6498 = vpop.f32.mrf.mxu0
      %6499 = vdwg.mxu0
      %v6500 = vadd.f32 %v6047, %v6360
      %v6501 = vadd.f32 %v6048, %v6363
      %v6502 = vadd.f32 %v6049, %v6368
      %v6503 = vadd.f32 %v6050, %v6371
      %v6504 = vadd.f32 %v6051, %v6376
      %v6505 = vadd.f32 %v6052, %v6379
      %v6506 = vadd.f32 %v6053, %v6384
      %v6507 = vadd.f32 %v6054, %v6387
      %v6508 = vadd.f32 %v6055, %v6392
      %v6509 = vadd.f32 %v6056, %v6395
      %v6510 = vadd.f32 %v6057, %v6400
      %v6511 = vadd.f32 %v6058, %v6403
      %v6512 = vadd.f32 %v6059, %v6408
      %v6513 = vadd.f32 %v6060, %v6411
      %v6514 = vadd.f32 %v6061, %v6416
      %v6515 = vadd.f32 %v6062, %v6419
      %v6516 = vadd.f32 %v6063, %v6424
      %v6517 = vadd.f32 %v6064, %v6427
      %v6518 = vadd.f32 %v6065, %v6432
      %v6519 = vadd.f32 %v6066, %v6435
      %v6520 = vadd.f32 %v6067, %v6440
      %v6521 = vadd.f32 %v6068, %v6443
      %v6522 = vadd.f32 %v6069, %v6448
      %v6523 = vadd.f32 %v6070, %v6451
      %v6524 = vadd.f32 %v6071, %v6456
      %v6525 = vadd.f32 %v6072, %v6459
      %v6526 = vadd.f32 %v6073, %v6464
      %v6527 = vadd.f32 %v6074, %v6467
      %v6528 = vadd.f32 %v6075, %v6472
      %v6529 = vadd.f32 %v6076, %v6475
      %v6530 = vadd.f32 %v6077, %v6480
      %v6531 = vadd.f32 %v6078, %v6483
      %v6532 = vadd.f32 %v6079, %v6488
      %v6533 = vadd.f32 %v6080, %v6491
      %6534 = vmatprep.subr.bf16.mxu0 0
      %6535 = vmatpush1.bf16.msra.mxu0 0
      %6536 = vmatprep.subr.bf16.mxu0 0
      %6537 = vmatpush1.bf16.msra.mxu0 0
      %6538 = vmatprep.subr.bf16.mxu0 0
      %6539 = vmatpush1.bf16.msra.mxu0 0
      %6540 = vmatprep.subr.bf16.mxu0 0
      %6541 = vmatpush1.bf16.msra.mxu0 0
      %6542 = vmatprep.subr.bf16.mxu0 0
      %6543 = vmatpush1.bf16.msra.mxu0 0
      %6544 = vmatprep.subr.bf16.mxu0 0
      %6545 = vmatpush1.bf16.msra.mxu0 0
      %6546 = vmatprep.subr.bf16.mxu0 0
      %6547 = vmatpush1.bf16.msra.mxu0 0
      %6548 = vmatprep.subr.bf16.mxu0 0
      %6549 = vmatpush1.bf16.msra.mxu0 %v6323
      %6550 = vmatprep.subr.bf16.mxu0 0
      %6551 = vmatpush2.bf16.msra.mxu0 0
      %6552 = vmatprep.subr.bf16.mxu0 0
      %6553 = vmatpush2.bf16.msra.mxu0 0
      %6554 = vmatprep.subr.bf16.mxu0 0
      %6555 = vmatpush2.bf16.msra.mxu0 0
      %6556 = vmatprep.subr.bf16.mxu0 0
      %6557 = vmatpush2.bf16.msra.mxu0 0
      %6558 = vmatprep.subr.bf16.mxu0 0
      %6559 = vmatpush2.bf16.msra.mxu0 0
      %6560 = vmatprep.subr.bf16.mxu0 0
      %6561 = vmatpush2.bf16.msra.mxu0 0
      %6562 = vmatprep.subr.bf16.mxu0 0
      %6563 = vmatpush2.bf16.msra.mxu0 0
      %6564 = vmatprep.subr.bf16.mxu0 0
      %6565 = vmatpush2.bf16.msra.mxu0 0
      %6566 = vmatprep.mubr.bf16.mxu0 0
      %6567 = vmatmul.mubr.bf16.gmra.mxu0 %v2338
      %v6568 = vpop.f32.mrf.mxu0
      %v6569 = vadd.f32 0.0, %v6568
      %v6570 = vpop.f32.mrf.mxu0
      %v6571 = vpop.f32.mrf.mxu0
      %v6572 = vadd.f32 0.0, %v6571
      %v6573 = vpop.f32.mrf.mxu0
      %6574 = vmatprep.mubr.bf16.mxu0 0
      %6575 = vmatmul.mubr.bf16.gmra.mxu0 %v2341
      %v6576 = vpop.f32.mrf.mxu0
      %v6577 = vadd.f32 0.0, %v6576
      %v6578 = vpop.f32.mrf.mxu0
      %v6579 = vpop.f32.mrf.mxu0
      %v6580 = vadd.f32 0.0, %v6579
      %v6581 = vpop.f32.mrf.mxu0
      %6582 = vmatprep.mubr.bf16.mxu0 0
      %6583 = vmatmul.mubr.bf16.gmra.mxu0 %v2344
      %v6584 = vpop.f32.mrf.mxu0
      %v6585 = vadd.f32 0.0, %v6584
      %v6586 = vpop.f32.mrf.mxu0
      %v6587 = vpop.f32.mrf.mxu0
      %v6588 = vadd.f32 0.0, %v6587
      %v6589 = vpop.f32.mrf.mxu0
      %6590 = vmatprep.mubr.bf16.mxu0 0
      %6591 = vmatmul.mubr.bf16.gmra.mxu0 %v2347
      %v6592 = vpop.f32.mrf.mxu0
      %v6593 = vadd.f32 0.0, %v6592
      %v6594 = vpop.f32.mrf.mxu0
      %v6595 = vpop.f32.mrf.mxu0
      %v6596 = vadd.f32 0.0, %v6595
      %v6597 = vpop.f32.mrf.mxu0
      %6598 = vmatprep.mubr.bf16.mxu0 0
      %6599 = vmatmul.mubr.bf16.gmra.mxu0 %v2350
      %v6600 = vpop.f32.mrf.mxu0
      %v6601 = vadd.f32 0.0, %v6600
      %v6602 = vpop.f32.mrf.mxu0
      %v6603 = vpop.f32.mrf.mxu0
      %v6604 = vadd.f32 0.0, %v6603
      %v6605 = vpop.f32.mrf.mxu0
      %6606 = vmatprep.mubr.bf16.mxu0 0
      %6607 = vmatmul.mubr.bf16.gmra.mxu0 %v2353
      %v6608 = vpop.f32.mrf.mxu0
      %v6609 = vadd.f32 0.0, %v6608
      %v6610 = vpop.f32.mrf.mxu0
      %v6611 = vpop.f32.mrf.mxu0
      %v6612 = vadd.f32 0.0, %v6611
      %v6613 = vpop.f32.mrf.mxu0
      %6614 = vmatprep.mubr.bf16.mxu0 0
      %6615 = vmatmul.mubr.bf16.gmra.mxu0 %v2356
      %v6616 = vpop.f32.mrf.mxu0
      %v6617 = vadd.f32 0.0, %v6616
      %v6618 = vpop.f32.mrf.mxu0
      %v6619 = vpop.f32.mrf.mxu0
      %v6620 = vadd.f32 0.0, %v6619
      %v6621 = vpop.f32.mrf.mxu0
      %6622 = vmatprep.mubr.bf16.mxu0 0
      %6623 = vmatmul.mubr.bf16.gmra.mxu0 %v2359
      %v6624 = vpop.f32.mrf.mxu0
      %v6625 = vadd.f32 0.0, %v6624
      %v6626 = vpop.f32.mrf.mxu0
      %v6627 = vpop.f32.mrf.mxu0
      %v6628 = vadd.f32 0.0, %v6627
      %v6629 = vpop.f32.mrf.mxu0
      %6630 = vmatprep.mubr.bf16.mxu0 0
      %6631 = vmatmul.mubr.bf16.gmra.mxu0 %v2362
      %v6632 = vpop.f32.mrf.mxu0
      %v6633 = vadd.f32 0.0, %v6632
      %v6634 = vpop.f32.mrf.mxu0
      %v6635 = vpop.f32.mrf.mxu0
      %v6636 = vadd.f32 0.0, %v6635
      %v6637 = vpop.f32.mrf.mxu0
      %6638 = vmatprep.mubr.bf16.mxu0 0
      %6639 = vmatmul.mubr.bf16.gmra.mxu0 %v2365
      %v6640 = vpop.f32.mrf.mxu0
      %v6641 = vadd.f32 0.0, %v6640
      %v6642 = vpop.f32.mrf.mxu0
      %v6643 = vpop.f32.mrf.mxu0
      %v6644 = vadd.f32 0.0, %v6643
      %v6645 = vpop.f32.mrf.mxu0
      %6646 = vmatprep.mubr.bf16.mxu0 0
      %6647 = vmatmul.mubr.bf16.gmra.mxu0 %v2368
      %v6648 = vpop.f32.mrf.mxu0
      %v6649 = vadd.f32 0.0, %v6648
      %v6650 = vpop.f32.mrf.mxu0
      %v6651 = vpop.f32.mrf.mxu0
      %v6652 = vadd.f32 0.0, %v6651
      %v6653 = vpop.f32.mrf.mxu0
      %6654 = vmatprep.mubr.bf16.mxu0 0
      %6655 = vmatmul.mubr.bf16.gmra.mxu0 %v2371
      %v6656 = vpop.f32.mrf.mxu0
      %v6657 = vadd.f32 0.0, %v6656
      %v6658 = vpop.f32.mrf.mxu0
      %v6659 = vpop.f32.mrf.mxu0
      %v6660 = vadd.f32 0.0, %v6659
      %v6661 = vpop.f32.mrf.mxu0
      %6662 = vmatprep.mubr.bf16.mxu0 0
      %6663 = vmatmul.mubr.bf16.gmra.mxu0 %v2374
      %v6664 = vpop.f32.mrf.mxu0
      %v6665 = vadd.f32 0.0, %v6664
      %v6666 = vpop.f32.mrf.mxu0
      %v6667 = vpop.f32.mrf.mxu0
      %v6668 = vadd.f32 0.0, %v6667
      %v6669 = vpop.f32.mrf.mxu0
      %6670 = vmatprep.mubr.bf16.mxu0 0
      %6671 = vmatmul.mubr.bf16.gmra.mxu0 %v2377
      %v6672 = vpop.f32.mrf.mxu0
      %v6673 = vadd.f32 0.0, %v6672
      %v6674 = vpop.f32.mrf.mxu0
      %v6675 = vpop.f32.mrf.mxu0
      %v6676 = vadd.f32 0.0, %v6675
      %v6677 = vpop.f32.mrf.mxu0
      %6678 = vmatprep.mubr.bf16.mxu0 0
      %6679 = vmatmul.mubr.bf16.gmra.mxu0 %v2380
      %v6680 = vpop.f32.mrf.mxu0
      %v6681 = vadd.f32 0.0, %v6680
      %v6682 = vpop.f32.mrf.mxu0
      %v6683 = vpop.f32.mrf.mxu0
      %v6684 = vadd.f32 0.0, %v6683
      %v6685 = vpop.f32.mrf.mxu0
      %6686 = vmatprep.mubr.bf16.mxu0 0
      %6687 = vmatmul.mubr.bf16.gmra.mxu0 %v2383
      %v6688 = vpop.f32.mrf.mxu0
      %v6689 = vadd.f32 0.0, %v6688
      %v6690 = vpop.f32.mrf.mxu0
      %v6691 = vpop.f32.mrf.mxu0
      %v6692 = vadd.f32 0.0, %v6691
      %v6693 = vpop.f32.mrf.mxu0
      %6694 = vmatprep.mubr.bf16.mxu0 0
      %6695 = vmatmul.mubr.bf16.gmra.mxu0 %v4522
      %v6696 = vpop.f32.mrf.mxu0
      %v6697 = vadd.f32 0.0, %v6696
      %v6698 = vpop.f32.mrf.mxu0
      %v6699 = vpop.f32.mrf.mxu0
      %v6700 = vadd.f32 0.0, %v6699
      %v6701 = vpop.f32.mrf.mxu0
      %6702 = vmatprep.mubr.bf16.mxu0 0
      %6703 = vmatmul.mubr.bf16.gmra.mxu0 %v5867
      %v6704 = vpop.f32.mrf.mxu0
      %v6705 = vpop.f32.mrf.mxu0
      %v6706 = vpop.f32.mrf.mxu0
      %v6707 = vpop.f32.mrf.mxu0
      %6708 = vdwg.mxu0
      %v6709 = vadd.f32 %v6256, %v6569
      %v6710 = vadd.f32 %v6257, %v6572
      %v6711 = vadd.f32 %v6258, %v6577
      %v6712 = vadd.f32 %v6259, %v6580
      %v6713 = vadd.f32 %v6260, %v6585
      %v6714 = vadd.f32 %v6261, %v6588
      %v6715 = vadd.f32 %v6262, %v6593
      %v6716 = vadd.f32 %v6263, %v6596
      %v6717 = vadd.f32 %v6264, %v6601
      %v6718 = vadd.f32 %v6265, %v6604
      %v6719 = vadd.f32 %v6266, %v6609
      %v6720 = vadd.f32 %v6267, %v6612
      %v6721 = vadd.f32 %v6268, %v6617
      %v6722 = vadd.f32 %v6269, %v6620
      %v6723 = vadd.f32 %v6270, %v6625
      %v6724 = vadd.f32 %v6271, %v6628
      %v6725 = vadd.f32 %v6272, %v6633
      %v6726 = vadd.f32 %v6273, %v6636
      %v6727 = vadd.f32 %v6274, %v6641
      %v6728 = vadd.f32 %v6275, %v6644
      %v6729 = vadd.f32 %v6276, %v6649
      %v6730 = vadd.f32 %v6277, %v6652
      %v6731 = vadd.f32 %v6278, %v6657
      %v6732 = vadd.f32 %v6279, %v6660
      %v6733 = vadd.f32 %v6280, %v6665
      %v6734 = vadd.f32 %v6281, %v6668
      %v6735 = vadd.f32 %v6282, %v6673
      %v6736 = vadd.f32 %v6283, %v6676
      %v6737 = vadd.f32 %v6284, %v6681
      %v6738 = vadd.f32 %v6285, %v6684
      %v6739 = vadd.f32 %v6286, %v6689
      %v6740 = vadd.f32 %v6287, %v6692
      %v6741 = vadd.f32 %v6288, %v6697
      %v6742 = vadd.f32 %v6289, %v6700
      %v6743 = vld [vmem:[%s5] sm:$0x1]
      %v6745 = vlaneseq
      %v6746 = vshrl.u32 %v6745, 7
      %v6747 = vsub.s32 0, %v6746
      %v6748 = vrot.slane %v6743, %v6747
      %v6750 = vadd.f32 %v6500, %v6748
      %v6751 = vadd.f32 %v6501, %v6748
      %v6752 = vadd.f32 %v6502, %v6748
      %v6753 = vadd.f32 %v6503, %v6748
      %v6754 = vadd.f32 %v6504, %v6748
      %v6755 = vadd.f32 %v6505, %v6748
      %v6756 = vadd.f32 %v6506, %v6748
      %v6757 = vadd.f32 %v6507, %v6748
      %v6758 = vadd.f32 %v6508, %v6748
      %v6759 = vadd.f32 %v6509, %v6748
      %v6760 = vadd.f32 %v6510, %v6748
      %v6761 = vadd.f32 %v6511, %v6748
      %v6762 = vadd.f32 %v6512, %v6748
      %v6763 = vadd.f32 %v6513, %v6748
      %v6764 = vadd.f32 %v6514, %v6748
      %v6765 = vadd.f32 %v6515, %v6748
      %v6766 = vadd.f32 %v6516, %v6748
      %v6767 = vadd.f32 %v6517, %v6748
      %v6768 = vadd.f32 %v6518, %v6748
      %v6769 = vadd.f32 %v6519, %v6748
      %v6770 = vadd.f32 %v6520, %v6748
      %v6771 = vadd.f32 %v6521, %v6748
      %v6772 = vadd.f32 %v6522, %v6748
      %v6773 = vadd.f32 %v6523, %v6748
      %v6774 = vadd.f32 %v6524, %v6748
      %v6775 = vadd.f32 %v6525, %v6748
      %v6776 = vadd.f32 %v6526, %v6748
      %v6777 = vadd.f32 %v6527, %v6748
      %v6778 = vadd.f32 %v6528, %v6748
      %v6779 = vadd.f32 %v6529, %v6748
      %v6780 = vadd.f32 %v6530, %v6748
      %v6781 = vadd.f32 %v6531, %v6748
      %v6782 = vadd.f32 %v6532, %v6748
      %v6783 = vadd.f32 %v6533, %v6748
      %vm6784 = vcmp.gt.f32.partialorder %v6750, 0.0
      %vm6785 = vcmp.gt.f32.partialorder %v6751, 0.0
      %vm6786 = vcmp.gt.f32.partialorder %v6752, 0.0
      %vm6787 = vcmp.gt.f32.partialorder %v6753, 0.0
      %vm6788 = vcmp.gt.f32.partialorder %v6754, 0.0
      %vm6789 = vcmp.gt.f32.partialorder %v6755, 0.0
      %vm6790 = vcmp.gt.f32.partialorder %v6756, 0.0
      %vm6791 = vcmp.gt.f32.partialorder %v6757, 0.0
      %vm6792 = vcmp.gt.f32.partialorder %v6758, 0.0
      %vm6793 = vcmp.gt.f32.partialorder %v6759, 0.0
      %vm6794 = vcmp.gt.f32.partialorder %v6760, 0.0
      %vm6795 = vcmp.gt.f32.partialorder %v6761, 0.0
      %vm6796 = vcmp.gt.f32.partialorder %v6762, 0.0
      %vm6797 = vcmp.gt.f32.partialorder %v6763, 0.0
      %vm6798 = vcmp.gt.f32.partialorder %v6764, 0.0
      %vm6799 = vcmp.gt.f32.partialorder %v6765, 0.0
      %vm6800 = vcmp.gt.f32.partialorder %v6766, 0.0
      %vm6801 = vcmp.gt.f32.partialorder %v6767, 0.0
      %vm6802 = vcmp.gt.f32.partialorder %v6768, 0.0
      %vm6803 = vcmp.gt.f32.partialorder %v6769, 0.0
      %vm6804 = vcmp.gt.f32.partialorder %v6770, 0.0
      %vm6805 = vcmp.gt.f32.partialorder %v6771, 0.0
      %vm6806 = vcmp.gt.f32.partialorder %v6772, 0.0
      %vm6807 = vcmp.gt.f32.partialorder %v6773, 0.0
      %vm6808 = vcmp.gt.f32.partialorder %v6774, 0.0
      %vm6809 = vcmp.gt.f32.partialorder %v6775, 0.0
      %vm6810 = vcmp.gt.f32.partialorder %v6776, 0.0
      %vm6811 = vcmp.gt.f32.partialorder %v6777, 0.0
      %vm6812 = vcmp.gt.f32.partialorder %v6778, 0.0
      %vm6813 = vcmp.gt.f32.partialorder %v6779, 0.0
      %vm6814 = vcmp.gt.f32.partialorder %v6780, 0.0
      %vm6815 = vcmp.gt.f32.partialorder %v6781, 0.0
      %vm6816 = vcmp.gt.f32.partialorder %v6782, 0.0
      %vm6817 = vcmp.gt.f32.partialorder %v6783, 0.0
      %v6818 = vmul.f32 %v6750, 0.2
      %v6819 = vmul.f32 %v6751, 0.2
      %v6820 = vmul.f32 %v6752, 0.2
      %v6821 = vmul.f32 %v6753, 0.2
      %v6822 = vmul.f32 %v6754, 0.2
      %v6823 = vmul.f32 %v6755, 0.2
      %v6824 = vmul.f32 %v6756, 0.2
      %v6825 = vmul.f32 %v6757, 0.2
      %v6826 = vmul.f32 %v6758, 0.2
      %v6827 = vmul.f32 %v6759, 0.2
      %v6828 = vmul.f32 %v6760, 0.2
      %v6829 = vmul.f32 %v6761, 0.2
      %v6830 = vmul.f32 %v6762, 0.2
      %v6831 = vmul.f32 %v6763, 0.2
      %v6832 = vmul.f32 %v6764, 0.2
      %v6833 = vmul.f32 %v6765, 0.2
      %v6834 = vmul.f32 %v6766, 0.2
      %v6835 = vmul.f32 %v6767, 0.2
      %v6836 = vmul.f32 %v6768, 0.2
      %v6837 = vmul.f32 %v6769, 0.2
      %v6838 = vmul.f32 %v6770, 0.2
      %v6839 = vmul.f32 %v6771, 0.2
      %v6840 = vmul.f32 %v6772, 0.2
      %v6841 = vmul.f32 %v6773, 0.2
      %v6842 = vmul.f32 %v6774, 0.2
      %v6843 = vmul.f32 %v6775, 0.2
      %v6844 = vmul.f32 %v6776, 0.2
      %v6845 = vmul.f32 %v6777, 0.2
      %v6846 = vmul.f32 %v6778, 0.2
      %v6847 = vmul.f32 %v6779, 0.2
      %v6848 = vmul.f32 %v6780, 0.2
      %v6849 = vmul.f32 %v6781, 0.2
      %v6850 = vmul.f32 %v6782, 0.2
      %v6851 = vmul.f32 %v6783, 0.2
      %v6852 = vsel %vm6784, %v6750, %v6818
      %v6853 = vsel %vm6785, %v6751, %v6819
      %v6854 = vsel %vm6786, %v6752, %v6820
      %v6855 = vsel %vm6787, %v6753, %v6821
      %v6856 = vsel %vm6788, %v6754, %v6822
      %v6857 = vsel %vm6789, %v6755, %v6823
      %v6858 = vsel %vm6790, %v6756, %v6824
      %v6859 = vsel %vm6791, %v6757, %v6825
      %v6860 = vsel %vm6792, %v6758, %v6826
      %v6861 = vsel %vm6793, %v6759, %v6827
      %v6862 = vsel %vm6794, %v6760, %v6828
      %v6863 = vsel %vm6795, %v6761, %v6829
      %v6864 = vsel %vm6796, %v6762, %v6830
      %v6865 = vsel %vm6797, %v6763, %v6831
      %v6866 = vsel %vm6798, %v6764, %v6832
      %v6867 = vsel %vm6799, %v6765, %v6833
      %v6868 = vsel %vm6800, %v6766, %v6834
      %v6869 = vsel %vm6801, %v6767, %v6835
      %v6870 = vsel %vm6802, %v6768, %v6836
      %v6871 = vsel %vm6803, %v6769, %v6837
      %v6872 = vsel %vm6804, %v6770, %v6838
      %v6873 = vsel %vm6805, %v6771, %v6839
      %v6874 = vsel %vm6806, %v6772, %v6840
      %v6875 = vsel %vm6807, %v6773, %v6841
      %v6876 = vsel %vm6808, %v6774, %v6842
      %v6877 = vsel %vm6809, %v6775, %v6843
      %v6878 = vsel %vm6810, %v6776, %v6844
      %v6879 = vsel %vm6811, %v6777, %v6845
      %v6880 = vsel %vm6812, %v6778, %v6846
      %v6881 = vsel %vm6813, %v6779, %v6847
      %v6882 = vsel %vm6814, %v6780, %v6848
      %v6883 = vsel %vm6815, %v6781, %v6849
      %v6884 = vsel %vm6816, %v6782, %v6850
      %v6885 = vsel %vm6817, %v6783, %v6851
      %v6886 = vadd.f32 %v6709, %v6748
      %v6887 = vadd.f32 %v6710, %v6748
      %v6888 = vadd.f32 %v6711, %v6748
      %v6889 = vadd.f32 %v6712, %v6748
      %v6890 = vadd.f32 %v6713, %v6748
      %v6891 = vadd.f32 %v6714, %v6748
      %v6892 = vadd.f32 %v6715, %v6748
      %v6893 = vadd.f32 %v6716, %v6748
      %v6894 = vadd.f32 %v6717, %v6748
      %v6895 = vadd.f32 %v6718, %v6748
      %v6896 = vadd.f32 %v6719, %v6748
      %v6897 = vadd.f32 %v6720, %v6748
      %v6898 = vadd.f32 %v6721, %v6748
      %v6899 = vadd.f32 %v6722, %v6748
      %v6900 = vadd.f32 %v6723, %v6748
      %v6901 = vadd.f32 %v6724, %v6748
      %v6902 = vadd.f32 %v6725, %v6748
      %v6903 = vadd.f32 %v6726, %v6748
      %v6904 = vadd.f32 %v6727, %v6748
      %v6905 = vadd.f32 %v6728, %v6748
      %v6906 = vadd.f32 %v6729, %v6748
      %v6907 = vadd.f32 %v6730, %v6748
      %v6908 = vadd.f32 %v6731, %v6748
      %v6909 = vadd.f32 %v6732, %v6748
      %v6910 = vadd.f32 %v6733, %v6748
      %v6911 = vadd.f32 %v6734, %v6748
      %v6912 = vadd.f32 %v6735, %v6748
      %v6913 = vadd.f32 %v6736, %v6748
      %v6914 = vadd.f32 %v6737, %v6748
      %v6915 = vadd.f32 %v6738, %v6748
      %v6916 = vadd.f32 %v6739, %v6748
      %v6917 = vadd.f32 %v6740, %v6748
      %v6918 = vadd.f32 %v6741, %v6748
      %v6919 = vadd.f32 %v6742, %v6748
      %vm6920 = vcmp.gt.f32.partialorder %v6886, 0.0
      %vm6921 = vcmp.gt.f32.partialorder %v6887, 0.0
      %vm6922 = vcmp.gt.f32.partialorder %v6888, 0.0
      %vm6923 = vcmp.gt.f32.partialorder %v6889, 0.0
      %vm6924 = vcmp.gt.f32.partialorder %v6890, 0.0
      %vm6925 = vcmp.gt.f32.partialorder %v6891, 0.0
      %vm6926 = vcmp.gt.f32.partialorder %v6892, 0.0
      %vm6927 = vcmp.gt.f32.partialorder %v6893, 0.0
      %vm6928 = vcmp.gt.f32.partialorder %v6894, 0.0
      %vm6929 = vcmp.gt.f32.partialorder %v6895, 0.0
      %vm6930 = vcmp.gt.f32.partialorder %v6896, 0.0
      %vm6931 = vcmp.gt.f32.partialorder %v6897, 0.0
      %vm6932 = vcmp.gt.f32.partialorder %v6898, 0.0
      %vm6933 = vcmp.gt.f32.partialorder %v6899, 0.0
      %vm6934 = vcmp.gt.f32.partialorder %v6900, 0.0
      %vm6935 = vcmp.gt.f32.partialorder %v6901, 0.0
      %vm6936 = vcmp.gt.f32.partialorder %v6902, 0.0
      %vm6937 = vcmp.gt.f32.partialorder %v6903, 0.0
      %vm6938 = vcmp.gt.f32.partialorder %v6904, 0.0
      %vm6939 = vcmp.gt.f32.partialorder %v6905, 0.0
      %vm6940 = vcmp.gt.f32.partialorder %v6906, 0.0
      %vm6941 = vcmp.gt.f32.partialorder %v6907, 0.0
      %vm6942 = vcmp.gt.f32.partialorder %v6908, 0.0
      %vm6943 = vcmp.gt.f32.partialorder %v6909, 0.0
      %vm6944 = vcmp.gt.f32.partialorder %v6910, 0.0
      %vm6945 = vcmp.gt.f32.partialorder %v6911, 0.0
      %vm6946 = vcmp.gt.f32.partialorder %v6912, 0.0
      %vm6947 = vcmp.gt.f32.partialorder %v6913, 0.0
      %vm6948 = vcmp.gt.f32.partialorder %v6914, 0.0
      %vm6949 = vcmp.gt.f32.partialorder %v6915, 0.0
      %vm6950 = vcmp.gt.f32.partialorder %v6916, 0.0
      %vm6951 = vcmp.gt.f32.partialorder %v6917, 0.0
      %vm6952 = vcmp.gt.f32.partialorder %v6918, 0.0
      %vm6953 = vcmp.gt.f32.partialorder %v6919, 0.0
      %v6954 = vmul.f32 %v6886, 0.2
      %v6955 = vmul.f32 %v6887, 0.2
      %v6956 = vmul.f32 %v6888, 0.2
      %v6957 = vmul.f32 %v6889, 0.2
      %v6958 = vmul.f32 %v6890, 0.2
      %v6959 = vmul.f32 %v6891, 0.2
      %v6960 = vmul.f32 %v6892, 0.2
      %v6961 = vmul.f32 %v6893, 0.2
      %v6962 = vmul.f32 %v6894, 0.2
      %v6963 = vmul.f32 %v6895, 0.2
      %v6964 = vmul.f32 %v6896, 0.2
      %v6965 = vmul.f32 %v6897, 0.2
      %v6966 = vmul.f32 %v6898, 0.2
      %v6967 = vmul.f32 %v6899, 0.2
      %v6968 = vmul.f32 %v6900, 0.2
      %v6969 = vmul.f32 %v6901, 0.2
      %v6970 = vmul.f32 %v6902, 0.2
      %v6971 = vmul.f32 %v6903, 0.2
      %v6972 = vmul.f32 %v6904, 0.2
      %v6973 = vmul.f32 %v6905, 0.2
      %v6974 = vmul.f32 %v6906, 0.2
      %v6975 = vmul.f32 %v6907, 0.2
      %v6976 = vmul.f32 %v6908, 0.2
      %v6977 = vmul.f32 %v6909, 0.2
      %v6978 = vmul.f32 %v6910, 0.2
      %v6979 = vmul.f32 %v6911, 0.2
      %v6980 = vmul.f32 %v6912, 0.2
      %v6981 = vmul.f32 %v6913, 0.2
      %v6982 = vmul.f32 %v6914, 0.2
      %v6983 = vmul.f32 %v6915, 0.2
      %v6984 = vmul.f32 %v6916, 0.2
      %v6985 = vmul.f32 %v6917, 0.2
      %v6986 = vmul.f32 %v6918, 0.2
      %v6987 = vmul.f32 %v6919, 0.2
      %v6988 = vsel %vm6920, %v6886, %v6954
      %v6989 = vsel %vm6921, %v6887, %v6955
      %v6990 = vsel %vm6922, %v6888, %v6956
      %v6991 = vsel %vm6923, %v6889, %v6957
      %v6992 = vsel %vm6924, %v6890, %v6958
      %v6993 = vsel %vm6925, %v6891, %v6959
      %v6994 = vsel %vm6926, %v6892, %v6960
      %v6995 = vsel %vm6927, %v6893, %v6961
      %v6996 = vsel %vm6928, %v6894, %v6962
      %v6997 = vsel %vm6929, %v6895, %v6963
      %v6998 = vsel %vm6930, %v6896, %v6964
      %v6999 = vsel %vm6931, %v6897, %v6965
      %v7000 = vsel %vm6932, %v6898, %v6966
      %v7001 = vsel %vm6933, %v6899, %v6967
      %v7002 = vsel %vm6934, %v6900, %v6968
      %v7003 = vsel %vm6935, %v6901, %v6969
      %v7004 = vsel %vm6936, %v6902, %v6970
      %v7005 = vsel %vm6937, %v6903, %v6971
      %v7006 = vsel %vm6938, %v6904, %v6972
      %v7007 = vsel %vm6939, %v6905, %v6973
      %v7008 = vsel %vm6940, %v6906, %v6974
      %v7009 = vsel %vm6941, %v6907, %v6975
      %v7010 = vsel %vm6942, %v6908, %v6976
      %v7011 = vsel %vm6943, %v6909, %v6977
      %v7012 = vsel %vm6944, %v6910, %v6978
      %v7013 = vsel %vm6945, %v6911, %v6979
      %v7014 = vsel %vm6946, %v6912, %v6980
      %v7015 = vsel %vm6947, %v6913, %v6981
      %v7016 = vsel %vm6948, %v6914, %v6982
      %v7017 = vsel %vm6949, %v6915, %v6983
      %v7018 = vsel %vm6950, %v6916, %v6984
      %v7019 = vsel %vm6951, %v6917, %v6985
      %v7020 = vsel %vm6952, %v6918, %v6986
      %v7021 = vsel %vm6953, %v6919, %v6987
      %v7022 = vlaneseq
      %v7023 = vshrl.u32 %v7022, 7
      %v7024 = vadd.s32 %v7023, 8
      %s7025 = smul.u32 %s26, 16
      %v7026 = vstv %s7025
      %v7027 = vadd.s32 %v7026, 1
      %v7028 = vadd.s32 %v7026, 2
      %v7029 = vadd.s32 %v7026, 3
      %v7030 = vadd.s32 %v7026, 4
      %v7031 = vadd.s32 %v7026, 5
      %v7032 = vadd.s32 %v7026, 6
      %v7033 = vadd.s32 %v7026, 7
      %v7034 = vadd.s32 %v7026, 8
      %v7035 = vadd.s32 %v7026, 9
      %v7036 = vadd.s32 %v7026, 10
      %v7037 = vadd.s32 %v7026, 11
      %v7038 = vadd.s32 %v7026, 12
      %v7039 = vadd.s32 %v7026, 13
      %v7040 = vadd.s32 %v7026, 14
      %v7041 = vadd.s32 %v7026, 15
      %v7042 = vadd.s32 %v7026, 16
      %vm7043 = vcmp.ge.s32.totalorder %v7026, 1
      %vm7044 = vcmp.ge.s32.totalorder %v7027, 1
      %vm7045 = vcmp.ge.s32.totalorder %v7028, 1
      %vm7046 = vcmp.ge.s32.totalorder %v7029, 1
      %vm7047 = vcmp.ge.s32.totalorder %v7030, 1
      %vm7048 = vcmp.ge.s32.totalorder %v7031, 1
      %vm7049 = vcmp.ge.s32.totalorder %v7032, 1
      %vm7050 = vcmp.ge.s32.totalorder %v7033, 1
      %vm7051 = vcmp.ge.s32.totalorder %v7034, 1
      %vm7052 = vcmp.ge.s32.totalorder %v7035, 1
      %vm7053 = vcmp.ge.s32.totalorder %v7036, 1
      %vm7054 = vcmp.ge.s32.totalorder %v7037, 1
      %vm7055 = vcmp.ge.s32.totalorder %v7038, 1
      %vm7056 = vcmp.ge.s32.totalorder %v7039, 1
      %vm7057 = vcmp.ge.s32.totalorder %v7040, 1
      %vm7058 = vcmp.ge.s32.totalorder %v7041, 1
      %vm7059 = vcmp.ge.s32.totalorder %v7042, 1
      %v7060 = vsel %vm7043, %v6852, 0.0
      %v7061 = vsel %vm7043, %v6853, 0.0
      %v7062 = vsel %vm7044, %v6854, 0.0
      %v7063 = vsel %vm7044, %v6855, 0.0
      %v7064 = vsel %vm7045, %v6856, 0.0
      %v7065 = vsel %vm7045, %v6857, 0.0
      %v7066 = vsel %vm7046, %v6858, 0.0
      %v7067 = vsel %vm7046, %v6859, 0.0
      %v7068 = vsel %vm7047, %v6860, 0.0
      %v7069 = vsel %vm7047, %v6861, 0.0
      %v7070 = vsel %vm7048, %v6862, 0.0
      %v7071 = vsel %vm7048, %v6863, 0.0
      %v7072 = vsel %vm7049, %v6864, 0.0
      %v7073 = vsel %vm7049, %v6865, 0.0
      %v7074 = vsel %vm7050, %v6866, 0.0
      %v7075 = vsel %vm7050, %v6867, 0.0
      %v7076 = vsel %vm7051, %v6868, 0.0
      %v7077 = vsel %vm7051, %v6869, 0.0
      %v7078 = vsel %vm7052, %v6870, 0.0
      %v7079 = vsel %vm7052, %v6871, 0.0
      %v7080 = vsel %vm7053, %v6872, 0.0
      %v7081 = vsel %vm7053, %v6873, 0.0
      %v7082 = vsel %vm7054, %v6874, 0.0
      %v7083 = vsel %vm7054, %v6875, 0.0
      %v7084 = vsel %vm7055, %v6876, 0.0
      %v7085 = vsel %vm7055, %v6877, 0.0
      %v7086 = vsel %vm7056, %v6878, 0.0
      %v7087 = vsel %vm7056, %v6879, 0.0
      %v7088 = vsel %vm7057, %v6880, 0.0
      %v7089 = vsel %vm7057, %v6881, 0.0
      %v7090 = vsel %vm7058, %v6882, 0.0
      %v7091 = vsel %vm7058, %v6883, 0.0
      %v7092 = vsel %vm7059, %v6884, 0.0
      %v7093 = vsel %vm7059, %v6885, 0.0
      %v7094 = vpack.c.bf16 %v7061, %v7060
      %v7095 = vpack.c.bf16 %v7063, %v7062
      %v7096 = vpack.c.bf16 %v7065, %v7064
      %v7097 = vpack.c.bf16 %v7067, %v7066
      %v7098 = vpack.c.bf16 %v7069, %v7068
      %v7099 = vpack.c.bf16 %v7071, %v7070
      %v7100 = vpack.c.bf16 %v7073, %v7072
      %v7101 = vpack.c.bf16 %v7075, %v7074
      %v7102 = vpack.c.bf16 %v7077, %v7076
      %v7103 = vpack.c.bf16 %v7079, %v7078
      %v7104 = vpack.c.bf16 %v7081, %v7080
      %v7105 = vpack.c.bf16 %v7083, %v7082
      %v7106 = vpack.c.bf16 %v7085, %v7084
      %v7107 = vpack.c.bf16 %v7087, %v7086
      %v7108 = vpack.c.bf16 %v7089, %v7088
      %v7109 = vpack.c.bf16 %v7091, %v7090
      %v7110 = vpack.c.bf16 %v7093, %v7092
      %vm7111 = vcmp.ge.s32.totalorder %v7023, 1
      %vm7112 = vcmp.ge.s32.totalorder %v7024, 1
      %vm7113 = vmand %vm7043, %vm7111
      %vm7114 = vmand %vm7043, %vm7112
      %vm7115 = vmand %vm7044, %vm7111
      %vm7116 = vmand %vm7044, %vm7112
      %vm7117 = vmand %vm7045, %vm7111
      %vm7118 = vmand %vm7045, %vm7112
      %vm7119 = vmand %vm7046, %vm7111
      %vm7120 = vmand %vm7046, %vm7112
      %vm7121 = vmand %vm7047, %vm7111
      %vm7122 = vmand %vm7047, %vm7112
      %vm7123 = vmand %vm7048, %vm7111
      %vm7124 = vmand %vm7048, %vm7112
      %vm7125 = vmand %vm7049, %vm7111
      %vm7126 = vmand %vm7049, %vm7112
      %vm7127 = vmand %vm7050, %vm7111
      %vm7128 = vmand %vm7050, %vm7112
      %vm7129 = vmand %vm7051, %vm7111
      %vm7130 = vmand %vm7051, %vm7112
      %vm7131 = vmand %vm7052, %vm7111
      %vm7132 = vmand %vm7052, %vm7112
      %vm7133 = vmand %vm7053, %vm7111
      %vm7134 = vmand %vm7053, %vm7112
      %vm7135 = vmand %vm7054, %vm7111
      %vm7136 = vmand %vm7054, %vm7112
      %vm7137 = vmand %vm7055, %vm7111
      %vm7138 = vmand %vm7055, %vm7112
      %vm7139 = vmand %vm7056, %vm7111
      %vm7140 = vmand %vm7056, %vm7112
      %vm7141 = vmand %vm7057, %vm7111
      %vm7142 = vmand %vm7057, %vm7112
      %vm7143 = vmand %vm7058, %vm7111
      %vm7144 = vmand %vm7058, %vm7112
      %vm7145 = vmand %vm7059, %vm7111
      %vm7146 = vmand %vm7059, %vm7112
      %v7147 = vsel %vm7113, %v6988, 0.0
      %v7148 = vsel %vm7114, %v6989, 0.0
      %v7149 = vsel %vm7115, %v6990, 0.0
      %v7150 = vsel %vm7116, %v6991, 0.0
      %v7151 = vsel %vm7117, %v6992, 0.0
      %v7152 = vsel %vm7118, %v6993, 0.0
      %v7153 = vsel %vm7119, %v6994, 0.0
      %v7154 = vsel %vm7120, %v6995, 0.0
      %v7155 = vsel %vm7121, %v6996, 0.0
      %v7156 = vsel %vm7122, %v6997, 0.0
      %v7157 = vsel %vm7123, %v6998, 0.0
      %v7158 = vsel %vm7124, %v6999, 0.0
      %v7159 = vsel %vm7125, %v7000, 0.0
      %v7160 = vsel %vm7126, %v7001, 0.0
      %v7161 = vsel %vm7127, %v7002, 0.0
      %v7162 = vsel %vm7128, %v7003, 0.0
      %v7163 = vsel %vm7129, %v7004, 0.0
      %v7164 = vsel %vm7130, %v7005, 0.0
      %v7165 = vsel %vm7131, %v7006, 0.0
      %v7166 = vsel %vm7132, %v7007, 0.0
      %v7167 = vsel %vm7133, %v7008, 0.0
      %v7168 = vsel %vm7134, %v7009, 0.0
      %v7169 = vsel %vm7135, %v7010, 0.0
      %v7170 = vsel %vm7136, %v7011, 0.0
      %v7171 = vsel %vm7137, %v7012, 0.0
      %v7172 = vsel %vm7138, %v7013, 0.0
      %v7173 = vsel %vm7139, %v7014, 0.0
      %v7174 = vsel %vm7140, %v7015, 0.0
      %v7175 = vsel %vm7141, %v7016, 0.0
      %v7176 = vsel %vm7142, %v7017, 0.0
      %v7177 = vsel %vm7143, %v7018, 0.0
      %v7178 = vsel %vm7144, %v7019, 0.0
      %v7179 = vsel %vm7145, %v7020, 0.0
      %v7180 = vsel %vm7146, %v7021, 0.0
      %v7181 = vpack.c.bf16 %v7148, %v7147
      %v7182 = vpack.c.bf16 %v7150, %v7149
      %v7183 = vpack.c.bf16 %v7152, %v7151
      %v7184 = vpack.c.bf16 %v7154, %v7153
      %v7185 = vpack.c.bf16 %v7156, %v7155
      %v7186 = vpack.c.bf16 %v7158, %v7157
      %v7187 = vpack.c.bf16 %v7160, %v7159
      %v7188 = vpack.c.bf16 %v7162, %v7161
      %v7189 = vpack.c.bf16 %v7164, %v7163
      %v7190 = vpack.c.bf16 %v7166, %v7165
      %v7191 = vpack.c.bf16 %v7168, %v7167
      %v7192 = vpack.c.bf16 %v7170, %v7169
      %v7193 = vpack.c.bf16 %v7172, %v7171
      %v7194 = vpack.c.bf16 %v7174, %v7173
      %v7195 = vpack.c.bf16 %v7176, %v7175
      %v7196 = vpack.c.bf16 %v7178, %v7177
      %v7197 = vpack.c.bf16 %v7180, %v7179
      %v7198 = vld [vmem:[%s6] sm:$0xf]
      %s7199 = scalar_lea.vmem %s6, 4
      %v7200 = vld [vmem:[%s7199] sm:$0xf]
      %v7209 = vunpack.c.l.b16 %v7094
      %v7210 = vunpack.c.l.b16 %v7096
      %v7211 = vunpack.c.l.b16 %v7098
      %v7212 = vunpack.c.l.b16 %v7100
      %v7213 = vunpack.c.l.b16 %v7102
      %v7214 = vunpack.c.l.b16 %v7104
      %v7215 = vunpack.c.l.b16 %v7106
      %v7216 = vunpack.c.l.b16 %v7108
      %v7217 = vpack.c.b16 %v7210, %v7209
      %v7218 = vpack.c.b16 %v7212, %v7211
      %v7219 = vpack.c.b16 %v7214, %v7213
      %v7220 = vpack.c.b16 %v7216, %v7215
      %vm7221 = vcmask 64512
      %v7223 = vsel %vm7221, %v7217, 0
      %v7226 = vsel %vm7221, %v7218, 0
      %v7229 = vsel %vm7221, %v7219, 0
      %v7232 = vsel %vm7221, %v7220, 0
      %vm7234 = vcmask 1043456
      %v7236 = vsel %vm7234, %v7200, 0
      %7238 = vmatprep.subr.bf16.mxu0 0
      %7239 = vmatpush1.bf16.msra.mxu0 0
      %7240 = vmatprep.subr.bf16.mxu0 0
      %7241 = vmatpush1.bf16.msra.mxu0 0
      %7242 = vmatprep.subr.bf16.mxu0 0
      %7243 = vmatpush1.bf16.msra.mxu0 0
      %7244 = vmatprep.subr.bf16.mxu0 0
      %7245 = vmatpush1.bf16.msra.mxu0 0
      %7246 = vmatprep.subr.bf16.mxu0 0
      %7247 = vmatpush1.bf16.msra.mxu0 0
      %7248 = vmatprep.subr.bf16.mxu0 0
      %7249 = vmatpush1.bf16.msra.mxu0 0
      %7250 = vmatprep.subr.bf16.mxu0 0
      %7251 = vmatpush1.bf16.msra.mxu0 0
      %7252 = vmatprep.subr.bf16.mxu0 0
      %7253 = vmatpush1.bf16.msra.mxu0 %v7236
      %7254 = vmatprep.subr.bf16.mxu0 0
      %7255 = vmatpush2.bf16.msra.mxu0 0
      %7256 = vmatprep.subr.bf16.mxu0 0
      %7257 = vmatpush2.bf16.msra.mxu0 0
      %7258 = vmatprep.subr.bf16.mxu0 0
      %7259 = vmatpush2.bf16.msra.mxu0 0
      %7260 = vmatprep.subr.bf16.mxu0 0
      %7261 = vmatpush2.bf16.msra.mxu0 0
      %7262 = vmatprep.subr.bf16.mxu0 0
      %7263 = vmatpush2.bf16.msra.mxu0 0
      %7264 = vmatprep.subr.bf16.mxu0 0
      %7265 = vmatpush2.bf16.msra.mxu0 0
      %7266 = vmatprep.subr.bf16.mxu0 0
      %7267 = vmatpush2.bf16.msra.mxu0 0
      %7268 = vmatprep.subr.bf16.mxu0 0
      %7269 = vmatpush2.bf16.msra.mxu0 0
      %7270 = vmatprep.mubr.bf16.mxu0 0
      %7271 = vmatmul.mubr.bf16.gmra.mxu0 %v7223
      %v7272 = vpop.f32.mrf.mxu0
      %v7273 = vadd.f32 0.0, %v7272
      %v7274 = vpop.f32.mrf.mxu0
      %v7275 = vpop.f32.mrf.mxu0
      %v7276 = vadd.f32 0.0, %v7275
      %v7277 = vpop.f32.mrf.mxu0
      %7278 = vmatprep.mubr.bf16.mxu0 0
      %7279 = vmatmul.mubr.bf16.gmra.mxu0 %v7226
      %v7280 = vpop.f32.mrf.mxu0
      %v7281 = vadd.f32 0.0, %v7280
      %v7282 = vpop.f32.mrf.mxu0
      %v7283 = vpop.f32.mrf.mxu0
      %v7284 = vadd.f32 0.0, %v7283
      %v7285 = vpop.f32.mrf.mxu0
      %7286 = vmatprep.mubr.bf16.mxu0 0
      %7287 = vmatmul.mubr.bf16.gmra.mxu0 %v7229
      %v7288 = vpop.f32.mrf.mxu0
      %v7289 = vadd.f32 0.0, %v7288
      %v7290 = vpop.f32.mrf.mxu0
      %v7291 = vpop.f32.mrf.mxu0
      %v7292 = vadd.f32 0.0, %v7291
      %v7293 = vpop.f32.mrf.mxu0
      %7294 = vmatprep.mubr.bf16.mxu0 0
      %7295 = vmatmul.mubr.bf16.gmra.mxu0 %v7232
      %v7296 = vpop.f32.mrf.mxu0
      %v7297 = vadd.f32 0.0, %v7296
      %v7298 = vpop.f32.mrf.mxu0
      %v7299 = vpop.f32.mrf.mxu0
      %v7300 = vadd.f32 0.0, %v7299
      %v7301 = vpop.f32.mrf.mxu0
      %7302 = vdwg.mxu0
      %v7311 = vunpack.c.l.b16 %v7181
      %v7312 = vunpack.c.l.b16 %v7183
      %v7313 = vunpack.c.l.b16 %v7185
      %v7314 = vunpack.c.l.b16 %v7187
      %v7315 = vunpack.c.l.b16 %v7189
      %v7316 = vunpack.c.l.b16 %v7191
      %v7317 = vunpack.c.l.b16 %v7193
      %v7318 = vunpack.c.l.b16 %v7195
      %v7319 = vpack.c.b16 %v7312, %v7311
      %v7320 = vpack.c.b16 %v7314, %v7313
      %v7321 = vpack.c.b16 %v7316, %v7315
      %v7322 = vpack.c.b16 %v7318, %v7317
      %v7324 = vsel %vm7221, %v7319, 0
      %v7327 = vsel %vm7221, %v7320, 0
      %v7330 = vsel %vm7221, %v7321, 0
      %v7333 = vsel %vm7221, %v7322, 0
      %v7336 = vsel %vm7234, %v7198, 0
      %7338 = vmatprep.subr.bf16.mxu0 0
      %7339 = vmatpush1.bf16.msra.mxu0 0
      %7340 = vmatprep.subr.bf16.mxu0 0
      %7341 = vmatpush1.bf16.msra.mxu0 0
      %7342 = vmatprep.subr.bf16.mxu0 0
      %7343 = vmatpush1.bf16.msra.mxu0 0
      %7344 = vmatprep.subr.bf16.mxu0 0
      %7345 = vmatpush1.bf16.msra.mxu0 0
      %7346 = vmatprep.subr.bf16.mxu0 0
      %7347 = vmatpush1.bf16.msra.mxu0 0
      %7348 = vmatprep.subr.bf16.mxu0 0
      %7349 = vmatpush1.bf16.msra.mxu0 0
      %7350 = vmatprep.subr.bf16.mxu0 0
      %7351 = vmatpush1.bf16.msra.mxu0 0
      %7352 = vmatprep.subr.bf16.mxu0 0
      %7353 = vmatpush1.bf16.msra.mxu0 %v7336
      %7354 = vmatprep.subr.bf16.mxu0 0
      %7355 = vmatpush2.bf16.msra.mxu0 0
      %7356 = vmatprep.subr.bf16.mxu0 0
      %7357 = vmatpush2.bf16.msra.mxu0 0
      %7358 = vmatprep.subr.bf16.mxu0 0
      %7359 = vmatpush2.bf16.msra.mxu0 0
      %7360 = vmatprep.subr.bf16.mxu0 0
      %7361 = vmatpush2.bf16.msra.mxu0 0
      %7362 = vmatprep.subr.bf16.mxu0 0
      %7363 = vmatpush2.bf16.msra.mxu0 0
      %7364 = vmatprep.subr.bf16.mxu0 0
      %7365 = vmatpush2.bf16.msra.mxu0 0
      %7366 = vmatprep.subr.bf16.mxu0 0
      %7367 = vmatpush2.bf16.msra.mxu0 0
      %7368 = vmatprep.subr.bf16.mxu0 0
      %7369 = vmatpush2.bf16.msra.mxu0 0
      %7370 = vmatprep.mubr.bf16.mxu0 0
      %7371 = vmatmul.mubr.bf16.gmra.mxu0 %v7324
      %v7372 = vpop.f32.mrf.mxu0
      %v7373 = vadd.f32 %v7273, %v7372
      %v7374 = vpop.f32.mrf.mxu0
      %v7375 = vpop.f32.mrf.mxu0
      %v7376 = vadd.f32 %v7276, %v7375
      %v7377 = vpop.f32.mrf.mxu0
      %7378 = vmatprep.mubr.bf16.mxu0 0
      %7379 = vmatmul.mubr.bf16.gmra.mxu0 %v7327
      %v7380 = vpop.f32.mrf.mxu0
      %v7381 = vadd.f32 %v7281, %v7380
      %v7382 = vpop.f32.mrf.mxu0
      %v7383 = vpop.f32.mrf.mxu0
      %v7384 = vadd.f32 %v7284, %v7383
      %v7385 = vpop.f32.mrf.mxu0
      %7386 = vmatprep.mubr.bf16.mxu0 0
      %7387 = vmatmul.mubr.bf16.gmra.mxu0 %v7330
      %v7388 = vpop.f32.mrf.mxu0
      %v7389 = vadd.f32 %v7289, %v7388
      %v7390 = vpop.f32.mrf.mxu0
      %v7391 = vpop.f32.mrf.mxu0
      %v7392 = vadd.f32 %v7292, %v7391
      %v7393 = vpop.f32.mrf.mxu0
      %7394 = vmatprep.mubr.bf16.mxu0 0
      %7395 = vmatmul.mubr.bf16.gmra.mxu0 %v7333
      %v7396 = vpop.f32.mrf.mxu0
      %v7397 = vadd.f32 %v7297, %v7396
      %v7398 = vpop.f32.mrf.mxu0
      %v7399 = vpop.f32.mrf.mxu0
      %v7400 = vadd.f32 %v7300, %v7399
      %v7401 = vpop.f32.mrf.mxu0
      %7402 = vdwg.mxu0
      %v7403 = vunpack.c.h.b16 %v7181
      %v7404 = vunpack.c.h.b16 %v7183
      %v7405 = vunpack.c.h.b16 %v7185
      %v7406 = vunpack.c.h.b16 %v7187
      %v7407 = vunpack.c.h.b16 %v7189
      %v7408 = vunpack.c.h.b16 %v7191
      %v7409 = vunpack.c.h.b16 %v7193
      %v7410 = vunpack.c.h.b16 %v7195
      %v7411 = vpack.c.b16 %v7311, %v7311
      %v7412 = vpack.c.b16 %v7403, %v7403
      %v7413 = vpack.c.b16 %v7312, %v7312
      %v7414 = vpack.c.b16 %v7404, %v7404
      %v7415 = vpack.c.b16 %v7313, %v7313
      %v7416 = vpack.c.b16 %v7405, %v7405
      %v7417 = vpack.c.b16 %v7314, %v7314
      %v7418 = vpack.c.b16 %v7406, %v7406
      %v7419 = vpack.c.b16 %v7315, %v7315
      %v7420 = vpack.c.b16 %v7407, %v7407
      %v7421 = vpack.c.b16 %v7316, %v7316
      %v7422 = vpack.c.b16 %v7408, %v7408
      %v7423 = vpack.c.b16 %v7317, %v7317
      %v7424 = vpack.c.b16 %v7409, %v7409
      %v7425 = vpack.c.b16 %v7318, %v7318
      %v7426 = vpack.c.b16 %v7410, %v7410
      %v7428 = vshrl.u32 %v7411, 16
      %v7430 = vrot.slane %v7428, 4
      %v7431 = vshll.u32 %v7411, 16
      %v7433 = vrot.slane %v7431, 5
      %v7434 = vor.u32 %v7430, %v7433
      %v7435 = vrot.slane %v7434, 4
      %v7437 = vshll.u32 %v7412, 16
      %v7439 = vrot.slane %v7437, 5
      %v7440 = vsel %vm683, %v7435, %v7439
      %v7442 = vshrl.u32 %v7413, 16
      %v7444 = vrot.slane %v7442, 4
      %v7445 = vshll.u32 %v7413, 16
      %v7447 = vrot.slane %v7445, 5
      %v7448 = vor.u32 %v7444, %v7447
      %v7449 = vrot.slane %v7448, 4
      %v7451 = vshll.u32 %v7414, 16
      %v7453 = vrot.slane %v7451, 5
      %v7454 = vsel %vm683, %v7449, %v7453
      %v7456 = vshrl.u32 %v7415, 16
      %v7458 = vrot.slane %v7456, 4
      %v7459 = vshll.u32 %v7415, 16
      %v7461 = vrot.slane %v7459, 5
      %v7462 = vor.u32 %v7458, %v7461
      %v7463 = vrot.slane %v7462, 4
      %v7465 = vshll.u32 %v7416, 16
      %v7467 = vrot.slane %v7465, 5
      %v7468 = vsel %vm683, %v7463, %v7467
      %v7470 = vshrl.u32 %v7417, 16
      %v7472 = vrot.slane %v7470, 4
      %v7473 = vshll.u32 %v7417, 16
      %v7475 = vrot.slane %v7473, 5
      %v7476 = vor.u32 %v7472, %v7475
      %v7477 = vrot.slane %v7476, 4
      %v7479 = vshll.u32 %v7418, 16
      %v7481 = vrot.slane %v7479, 5
      %v7482 = vsel %vm683, %v7477, %v7481
      %v7484 = vshrl.u32 %v7419, 16
      %v7486 = vrot.slane %v7484, 4
      %v7487 = vshll.u32 %v7419, 16
      %v7489 = vrot.slane %v7487, 5
      %v7490 = vor.u32 %v7486, %v7489
      %v7491 = vrot.slane %v7490, 4
      %v7493 = vshll.u32 %v7420, 16
      %v7495 = vrot.slane %v7493, 5
      %v7496 = vsel %vm683, %v7491, %v7495
      %v7498 = vshrl.u32 %v7421, 16
      %v7500 = vrot.slane %v7498, 4
      %v7501 = vshll.u32 %v7421, 16
      %v7503 = vrot.slane %v7501, 5
      %v7504 = vor.u32 %v7500, %v7503
      %v7505 = vrot.slane %v7504, 4
      %v7507 = vshll.u32 %v7422, 16
      %v7509 = vrot.slane %v7507, 5
      %v7510 = vsel %vm683, %v7505, %v7509
      %v7512 = vshrl.u32 %v7423, 16
      %v7514 = vrot.slane %v7512, 4
      %v7515 = vshll.u32 %v7423, 16
      %v7517 = vrot.slane %v7515, 5
      %v7518 = vor.u32 %v7514, %v7517
      %v7519 = vrot.slane %v7518, 4
      %v7521 = vshll.u32 %v7424, 16
      %v7523 = vrot.slane %v7521, 5
      %v7524 = vsel %vm683, %v7519, %v7523
      %v7526 = vshrl.u32 %v7425, 16
      %v7528 = vrot.slane %v7526, 4
      %v7529 = vshll.u32 %v7425, 16
      %v7531 = vrot.slane %v7529, 5
      %v7532 = vor.u32 %v7528, %v7531
      %v7533 = vrot.slane %v7532, 4
      %v7535 = vshll.u32 %v7426, 16
      %v7537 = vrot.slane %v7535, 5
      %v7538 = vsel %vm683, %v7533, %v7537
      %s7539 = scalar_lea.vmem %s6, 8
      %v7540 = vld [vmem:[%s7539] sm:$0xf]
      %v7541 = vunpack.c.l.b16 %v7440
      %v7542 = vunpack.c.l.b16 %v7454
      %v7543 = vunpack.c.l.b16 %v7468
      %v7544 = vunpack.c.l.b16 %v7482
      %v7545 = vunpack.c.l.b16 %v7496
      %v7546 = vunpack.c.l.b16 %v7510
      %v7547 = vunpack.c.l.b16 %v7524
      %v7548 = vunpack.c.l.b16 %v7538
      %v7549 = vpack.c.b16 %v7542, %v7541
      %v7550 = vpack.c.b16 %v7544, %v7543
      %v7551 = vpack.c.b16 %v7546, %v7545
      %v7552 = vpack.c.b16 %v7548, %v7547
      %v7554 = vsel %vm7221, %v7549, 0
      %v7557 = vsel %vm7221, %v7550, 0
      %v7560 = vsel %vm7221, %v7551, 0
      %v7563 = vsel %vm7221, %v7552, 0
      %v7566 = vsel %vm7234, %v7540, 0
      %7568 = vmatprep.subr.bf16.mxu0 0
      %7569 = vmatpush1.bf16.msra.mxu0 0
      %7570 = vmatprep.subr.bf16.mxu0 0
      %7571 = vmatpush1.bf16.msra.mxu0 0
      %7572 = vmatprep.subr.bf16.mxu0 0
      %7573 = vmatpush1.bf16.msra.mxu0 0
      %7574 = vmatprep.subr.bf16.mxu0 0
      %7575 = vmatpush1.bf16.msra.mxu0 0
      %7576 = vmatprep.subr.bf16.mxu0 0
      %7577 = vmatpush1.bf16.msra.mxu0 0
      %7578 = vmatprep.subr.bf16.mxu0 0
      %7579 = vmatpush1.bf16.msra.mxu0 0
      %7580 = vmatprep.subr.bf16.mxu0 0
      %7581 = vmatpush1.bf16.msra.mxu0 0
      %7582 = vmatprep.subr.bf16.mxu0 0
      %7583 = vmatpush1.bf16.msra.mxu0 %v7566
      %7584 = vmatprep.subr.bf16.mxu0 0
      %7585 = vmatpush2.bf16.msra.mxu0 0
      %7586 = vmatprep.subr.bf16.mxu0 0
      %7587 = vmatpush2.bf16.msra.mxu0 0
      %7588 = vmatprep.subr.bf16.mxu0 0
      %7589 = vmatpush2.bf16.msra.mxu0 0
      %7590 = vmatprep.subr.bf16.mxu0 0
      %7591 = vmatpush2.bf16.msra.mxu0 0
      %7592 = vmatprep.subr.bf16.mxu0 0
      %7593 = vmatpush2.bf16.msra.mxu0 0
      %7594 = vmatprep.subr.bf16.mxu0 0
      %7595 = vmatpush2.bf16.msra.mxu0 0
      %7596 = vmatprep.subr.bf16.mxu0 0
      %7597 = vmatpush2.bf16.msra.mxu0 0
      %7598 = vmatprep.subr.bf16.mxu0 0
      %7599 = vmatpush2.bf16.msra.mxu0 0
      %7600 = vmatprep.mubr.bf16.mxu0 0
      %7601 = vmatmul.mubr.bf16.gmra.mxu0 %v7554
      %v7602 = vpop.f32.mrf.mxu0
      %v7603 = vadd.f32 0.0, %v7602
      %v7604 = vpop.f32.mrf.mxu0
      %v7605 = vpop.f32.mrf.mxu0
      %v7606 = vadd.f32 0.0, %v7605
      %v7607 = vpop.f32.mrf.mxu0
      %7608 = vmatprep.mubr.bf16.mxu0 0
      %7609 = vmatmul.mubr.bf16.gmra.mxu0 %v7557
      %v7610 = vpop.f32.mrf.mxu0
      %v7611 = vadd.f32 0.0, %v7610
      %v7612 = vpop.f32.mrf.mxu0
      %v7613 = vpop.f32.mrf.mxu0
      %v7614 = vadd.f32 0.0, %v7613
      %v7615 = vpop.f32.mrf.mxu0
      %7616 = vmatprep.mubr.bf16.mxu0 0
      %7617 = vmatmul.mubr.bf16.gmra.mxu0 %v7560
      %v7618 = vpop.f32.mrf.mxu0
      %v7619 = vadd.f32 0.0, %v7618
      %v7620 = vpop.f32.mrf.mxu0
      %v7621 = vpop.f32.mrf.mxu0
      %v7622 = vadd.f32 0.0, %v7621
      %v7623 = vpop.f32.mrf.mxu0
      %7624 = vmatprep.mubr.bf16.mxu0 0
      %7625 = vmatmul.mubr.bf16.gmra.mxu0 %v7563
      %v7626 = vpop.f32.mrf.mxu0
      %v7627 = vadd.f32 0.0, %v7626
      %v7628 = vpop.f32.mrf.mxu0
      %v7629 = vpop.f32.mrf.mxu0
      %v7630 = vadd.f32 0.0, %v7629
      %v7631 = vpop.f32.mrf.mxu0
      %7632 = vdwg.mxu0
      %v7633 = vadd.f32 %v7373, %v7603
      %v7634 = vadd.f32 %v7376, %v7606
      %v7635 = vadd.f32 %v7381, %v7611
      %v7636 = vadd.f32 %v7384, %v7614
      %v7637 = vadd.f32 %v7389, %v7619
      %v7638 = vadd.f32 %v7392, %v7622
      %v7639 = vadd.f32 %v7397, %v7627
      %v7640 = vadd.f32 %v7400, %v7630
      %s7641 = scalar_lea.vmem %s6, 12
      %v7642 = vld [vmem:[%s7641] sm:$0xf]
      %v7651 = vunpack.c.l.b16 %v7182
      %v7652 = vunpack.c.l.b16 %v7184
      %v7653 = vunpack.c.l.b16 %v7186
      %v7654 = vunpack.c.l.b16 %v7188
      %v7655 = vunpack.c.l.b16 %v7190
      %v7656 = vunpack.c.l.b16 %v7192
      %v7657 = vunpack.c.l.b16 %v7194
      %v7658 = vunpack.c.l.b16 %v7196
      %v7659 = vpack.c.b16 %v7652, %v7651
      %v7660 = vpack.c.b16 %v7654, %v7653
      %v7661 = vpack.c.b16 %v7656, %v7655
      %v7662 = vpack.c.b16 %v7658, %v7657
      %v7664 = vsel %vm7221, %v7659, 0
      %v7667 = vsel %vm7221, %v7660, 0
      %v7670 = vsel %vm7221, %v7661, 0
      %v7673 = vsel %vm7221, %v7662, 0
      %v7676 = vsel %vm7234, %v7642, 0
      %7678 = vmatprep.subr.bf16.mxu0 0
      %7679 = vmatpush1.bf16.msra.mxu0 0
      %7680 = vmatprep.subr.bf16.mxu0 0
      %7681 = vmatpush1.bf16.msra.mxu0 0
      %7682 = vmatprep.subr.bf16.mxu0 0
      %7683 = vmatpush1.bf16.msra.mxu0 0
      %7684 = vmatprep.subr.bf16.mxu0 0
      %7685 = vmatpush1.bf16.msra.mxu0 0
      %7686 = vmatprep.subr.bf16.mxu0 0
      %7687 = vmatpush1.bf16.msra.mxu0 0
      %7688 = vmatprep.subr.bf16.mxu0 0
      %7689 = vmatpush1.bf16.msra.mxu0 0
      %7690 = vmatprep.subr.bf16.mxu0 0
      %7691 = vmatpush1.bf16.msra.mxu0 0
      %7692 = vmatprep.subr.bf16.mxu0 0
      %7693 = vmatpush1.bf16.msra.mxu0 %v7676
      %7694 = vmatprep.subr.bf16.mxu0 0
      %7695 = vmatpush2.bf16.msra.mxu0 0
      %7696 = vmatprep.subr.bf16.mxu0 0
      %7697 = vmatpush2.bf16.msra.mxu0 0
      %7698 = vmatprep.subr.bf16.mxu0 0
      %7699 = vmatpush2.bf16.msra.mxu0 0
      %7700 = vmatprep.subr.bf16.mxu0 0
      %7701 = vmatpush2.bf16.msra.mxu0 0
      %7702 = vmatprep.subr.bf16.mxu0 0
      %7703 = vmatpush2.bf16.msra.mxu0 0
      %7704 = vmatprep.subr.bf16.mxu0 0
      %7705 = vmatpush2.bf16.msra.mxu0 0
      %7706 = vmatprep.subr.bf16.mxu0 0
      %7707 = vmatpush2.bf16.msra.mxu0 0
      %7708 = vmatprep.subr.bf16.mxu0 0
      %7709 = vmatpush2.bf16.msra.mxu0 0
      %7710 = vmatprep.mubr.bf16.mxu0 0
      %7711 = vmatmul.mubr.bf16.gmra.mxu0 %v7664
      %v7712 = vpop.f32.mrf.mxu0
      %v7713 = vadd.f32 0.0, %v7712
      %v7714 = vpop.f32.mrf.mxu0
      %v7715 = vpop.f32.mrf.mxu0
      %v7716 = vadd.f32 0.0, %v7715
      %v7717 = vpop.f32.mrf.mxu0
      %7718 = vmatprep.mubr.bf16.mxu0 0
      %7719 = vmatmul.mubr.bf16.gmra.mxu0 %v7667
      %v7720 = vpop.f32.mrf.mxu0
      %v7721 = vadd.f32 0.0, %v7720
      %v7722 = vpop.f32.mrf.mxu0
      %v7723 = vpop.f32.mrf.mxu0
      %v7724 = vadd.f32 0.0, %v7723
      %v7725 = vpop.f32.mrf.mxu0
      %7726 = vmatprep.mubr.bf16.mxu0 0
      %7727 = vmatmul.mubr.bf16.gmra.mxu0 %v7670
      %v7728 = vpop.f32.mrf.mxu0
      %v7729 = vadd.f32 0.0, %v7728
      %v7730 = vpop.f32.mrf.mxu0
      %v7731 = vpop.f32.mrf.mxu0
      %v7732 = vadd.f32 0.0, %v7731
      %v7733 = vpop.f32.mrf.mxu0
      %7734 = vmatprep.mubr.bf16.mxu0 0
      %7735 = vmatmul.mubr.bf16.gmra.mxu0 %v7673
      %v7736 = vpop.f32.mrf.mxu0
      %v7737 = vadd.f32 0.0, %v7736
      %v7738 = vpop.f32.mrf.mxu0
      %v7739 = vpop.f32.mrf.mxu0
      %v7740 = vadd.f32 0.0, %v7739
      %v7741 = vpop.f32.mrf.mxu0
      %7742 = vdwg.mxu0
      %v7743 = vadd.f32 %v7633, %v7713
      %v7744 = vadd.f32 %v7634, %v7716
      %v7745 = vadd.f32 %v7635, %v7721
      %v7746 = vadd.f32 %v7636, %v7724
      %v7747 = vadd.f32 %v7637, %v7729
      %v7748 = vadd.f32 %v7638, %v7732
      %v7749 = vadd.f32 %v7639, %v7737
      %v7750 = vadd.f32 %v7640, %v7740
      %s7751 = scalar_lea.vmem %s6, 16
      %v7752 = vld [vmem:[%s7751] sm:$0xf]
      %v7761 = vunpack.c.l.b16 %v7095
      %v7762 = vunpack.c.l.b16 %v7097
      %v7763 = vunpack.c.l.b16 %v7099
      %v7764 = vunpack.c.l.b16 %v7101
      %v7765 = vunpack.c.l.b16 %v7103
      %v7766 = vunpack.c.l.b16 %v7105
      %v7767 = vunpack.c.l.b16 %v7107
      %v7768 = vunpack.c.l.b16 %v7109
      %v7769 = vpack.c.b16 %v7762, %v7761
      %v7770 = vpack.c.b16 %v7764, %v7763
      %v7771 = vpack.c.b16 %v7766, %v7765
      %v7772 = vpack.c.b16 %v7768, %v7767
      %v7774 = vsel %vm7221, %v7769, 0
      %v7777 = vsel %vm7221, %v7770, 0
      %v7780 = vsel %vm7221, %v7771, 0
      %v7783 = vsel %vm7221, %v7772, 0
      %v7786 = vsel %vm7234, %v7752, 0
      %7788 = vmatprep.subr.bf16.mxu0 0
      %7789 = vmatpush1.bf16.msra.mxu0 0
      %7790 = vmatprep.subr.bf16.mxu0 0
      %7791 = vmatpush1.bf16.msra.mxu0 0
      %7792 = vmatprep.subr.bf16.mxu0 0
      %7793 = vmatpush1.bf16.msra.mxu0 0
      %7794 = vmatprep.subr.bf16.mxu0 0
      %7795 = vmatpush1.bf16.msra.mxu0 0
      %7796 = vmatprep.subr.bf16.mxu0 0
      %7797 = vmatpush1.bf16.msra.mxu0 0
      %7798 = vmatprep.subr.bf16.mxu0 0
      %7799 = vmatpush1.bf16.msra.mxu0 0
      %7800 = vmatprep.subr.bf16.mxu0 0
      %7801 = vmatpush1.bf16.msra.mxu0 0
      %7802 = vmatprep.subr.bf16.mxu0 0
      %7803 = vmatpush1.bf16.msra.mxu0 %v7786
      %7804 = vmatprep.subr.bf16.mxu0 0
      %7805 = vmatpush2.bf16.msra.mxu0 0
      %7806 = vmatprep.subr.bf16.mxu0 0
      %7807 = vmatpush2.bf16.msra.mxu0 0
      %7808 = vmatprep.subr.bf16.mxu0 0
      %7809 = vmatpush2.bf16.msra.mxu0 0
      %7810 = vmatprep.subr.bf16.mxu0 0
      %7811 = vmatpush2.bf16.msra.mxu0 0
      %7812 = vmatprep.subr.bf16.mxu0 0
      %7813 = vmatpush2.bf16.msra.mxu0 0
      %7814 = vmatprep.subr.bf16.mxu0 0
      %7815 = vmatpush2.bf16.msra.mxu0 0
      %7816 = vmatprep.subr.bf16.mxu0 0
      %7817 = vmatpush2.bf16.msra.mxu0 0
      %7818 = vmatprep.subr.bf16.mxu0 0
      %7819 = vmatpush2.bf16.msra.mxu0 0
      %7820 = vmatprep.mubr.bf16.mxu0 0
      %7821 = vmatmul.mubr.bf16.gmra.mxu0 %v7774
      %v7822 = vpop.f32.mrf.mxu0
      %v7823 = vadd.f32 0.0, %v7822
      %v7824 = vpop.f32.mrf.mxu0
      %v7825 = vpop.f32.mrf.mxu0
      %v7826 = vadd.f32 0.0, %v7825
      %v7827 = vpop.f32.mrf.mxu0
      %7828 = vmatprep.mubr.bf16.mxu0 0
      %7829 = vmatmul.mubr.bf16.gmra.mxu0 %v7777
      %v7830 = vpop.f32.mrf.mxu0
      %v7831 = vadd.f32 0.0, %v7830
      %v7832 = vpop.f32.mrf.mxu0
      %v7833 = vpop.f32.mrf.mxu0
      %v7834 = vadd.f32 0.0, %v7833
      %v7835 = vpop.f32.mrf.mxu0
      %7836 = vmatprep.mubr.bf16.mxu0 0
      %7837 = vmatmul.mubr.bf16.gmra.mxu0 %v7780
      %v7838 = vpop.f32.mrf.mxu0
      %v7839 = vadd.f32 0.0, %v7838
      %v7840 = vpop.f32.mrf.mxu0
      %v7841 = vpop.f32.mrf.mxu0
      %v7842 = vadd.f32 0.0, %v7841
      %v7843 = vpop.f32.mrf.mxu0
      %7844 = vmatprep.mubr.bf16.mxu0 0
      %7845 = vmatmul.mubr.bf16.gmra.mxu0 %v7783
      %v7846 = vpop.f32.mrf.mxu0
      %v7847 = vadd.f32 0.0, %v7846
      %v7848 = vpop.f32.mrf.mxu0
      %v7849 = vpop.f32.mrf.mxu0
      %v7850 = vadd.f32 0.0, %v7849
      %v7851 = vpop.f32.mrf.mxu0
      %7852 = vdwg.mxu0
      %v7853 = vadd.f32 %v7743, %v7823
      %v7854 = vadd.f32 %v7744, %v7826
      %v7855 = vadd.f32 %v7745, %v7831
      %v7856 = vadd.f32 %v7746, %v7834
      %v7857 = vadd.f32 %v7747, %v7839
      %v7858 = vadd.f32 %v7748, %v7842
      %v7859 = vadd.f32 %v7749, %v7847
      %v7860 = vadd.f32 %v7750, %v7850
      %v7861 = vunpack.c.h.b16 %v7182
      %v7862 = vunpack.c.h.b16 %v7184
      %v7863 = vunpack.c.h.b16 %v7186
      %v7864 = vunpack.c.h.b16 %v7188
      %v7865 = vunpack.c.h.b16 %v7190
      %v7866 = vunpack.c.h.b16 %v7192
      %v7867 = vunpack.c.h.b16 %v7194
      %v7868 = vunpack.c.h.b16 %v7196
      %v7869 = vpack.c.b16 %v7651, %v7651
      %v7870 = vpack.c.b16 %v7861, %v7861
      %v7871 = vpack.c.b16 %v7652, %v7652
      %v7872 = vpack.c.b16 %v7862, %v7862
      %v7873 = vpack.c.b16 %v7653, %v7653
      %v7874 = vpack.c.b16 %v7863, %v7863
      %v7875 = vpack.c.b16 %v7654, %v7654
      %v7876 = vpack.c.b16 %v7864, %v7864
      %v7877 = vpack.c.b16 %v7655, %v7655
      %v7878 = vpack.c.b16 %v7865, %v7865
      %v7879 = vpack.c.b16 %v7656, %v7656
      %v7880 = vpack.c.b16 %v7866, %v7866
      %v7881 = vpack.c.b16 %v7657, %v7657
      %v7882 = vpack.c.b16 %v7867, %v7867
      %v7883 = vpack.c.b16 %v7658, %v7658
      %v7884 = vpack.c.b16 %v7868, %v7868
      %v7886 = vshrl.u32 %v7869, 16
      %v7888 = vrot.slane %v7886, 4
      %v7889 = vshll.u32 %v7869, 16
      %v7891 = vrot.slane %v7889, 5
      %v7892 = vor.u32 %v7888, %v7891
      %v7893 = vrot.slane %v7892, 4
      %v7895 = vshll.u32 %v7870, 16
      %v7897 = vrot.slane %v7895, 5
      %v7898 = vsel %vm683, %v7893, %v7897
      %v7900 = vshrl.u32 %v7871, 16
      %v7902 = vrot.slane %v7900, 4
      %v7903 = vshll.u32 %v7871, 16
      %v7905 = vrot.slane %v7903, 5
      %v7906 = vor.u32 %v7902, %v7905
      %v7907 = vrot.slane %v7906, 4
      %v7909 = vshll.u32 %v7872, 16
      %v7911 = vrot.slane %v7909, 5
      %v7912 = vsel %vm683, %v7907, %v7911
      %v7914 = vshrl.u32 %v7873, 16
      %v7916 = vrot.slane %v7914, 4
      %v7917 = vshll.u32 %v7873, 16
      %v7919 = vrot.slane %v7917, 5
      %v7920 = vor.u32 %v7916, %v7919
      %v7921 = vrot.slane %v7920, 4
      %v7923 = vshll.u32 %v7874, 16
      %v7925 = vrot.slane %v7923, 5
      %v7926 = vsel %vm683, %v7921, %v7925
      %v7928 = vshrl.u32 %v7875, 16
      %v7930 = vrot.slane %v7928, 4
      %v7931 = vshll.u32 %v7875, 16
      %v7933 = vrot.slane %v7931, 5
      %v7934 = vor.u32 %v7930, %v7933
      %v7935 = vrot.slane %v7934, 4
      %v7937 = vshll.u32 %v7876, 16
      %v7939 = vrot.slane %v7937, 5
      %v7940 = vsel %vm683, %v7935, %v7939
      %v7942 = vshrl.u32 %v7877, 16
      %v7944 = vrot.slane %v7942, 4
      %v7945 = vshll.u32 %v7877, 16
      %v7947 = vrot.slane %v7945, 5
      %v7948 = vor.u32 %v7944, %v7947
      %v7949 = vrot.slane %v7948, 4
      %v7951 = vshll.u32 %v7878, 16
      %v7953 = vrot.slane %v7951, 5
      %v7954 = vsel %vm683, %v7949, %v7953
      %v7956 = vshrl.u32 %v7879, 16
      %v7958 = vrot.slane %v7956, 4
      %v7959 = vshll.u32 %v7879, 16
      %v7961 = vrot.slane %v7959, 5
      %v7962 = vor.u32 %v7958, %v7961
      %v7963 = vrot.slane %v7962, 4
      %v7965 = vshll.u32 %v7880, 16
      %v7967 = vrot.slane %v7965, 5
      %v7968 = vsel %vm683, %v7963, %v7967
      %v7970 = vshrl.u32 %v7881, 16
      %v7972 = vrot.slane %v7970, 4
      %v7973 = vshll.u32 %v7881, 16
      %v7975 = vrot.slane %v7973, 5
      %v7976 = vor.u32 %v7972, %v7975
      %v7977 = vrot.slane %v7976, 4
      %v7979 = vshll.u32 %v7882, 16
      %v7981 = vrot.slane %v7979, 5
      %v7982 = vsel %vm683, %v7977, %v7981
      %v7984 = vshrl.u32 %v7883, 16
      %v7986 = vrot.slane %v7984, 4
      %v7987 = vshll.u32 %v7883, 16
      %v7989 = vrot.slane %v7987, 5
      %v7990 = vor.u32 %v7986, %v7989
      %v7991 = vrot.slane %v7990, 4
      %v7993 = vshll.u32 %v7884, 16
      %v7995 = vrot.slane %v7993, 5
      %v7996 = vsel %vm683, %v7991, %v7995
      %s7997 = scalar_lea.vmem %s6, 20
      %v7998 = vld [vmem:[%s7997] sm:$0xf]
      %v7999 = vunpack.c.l.b16 %v7898
      %v8000 = vunpack.c.l.b16 %v7912
      %v8001 = vunpack.c.l.b16 %v7926
      %v8002 = vunpack.c.l.b16 %v7940
      %v8003 = vunpack.c.l.b16 %v7954
      %v8004 = vunpack.c.l.b16 %v7968
      %v8005 = vunpack.c.l.b16 %v7982
      %v8006 = vunpack.c.l.b16 %v7996
      %v8007 = vpack.c.b16 %v8000, %v7999
      %v8008 = vpack.c.b16 %v8002, %v8001
      %v8009 = vpack.c.b16 %v8004, %v8003
      %v8010 = vpack.c.b16 %v8006, %v8005
      %v8012 = vsel %vm7221, %v8007, 0
      %v8015 = vsel %vm7221, %v8008, 0
      %v8018 = vsel %vm7221, %v8009, 0
      %v8021 = vsel %vm7221, %v8010, 0
      %v8024 = vsel %vm7234, %v7998, 0
      %8026 = vmatprep.subr.bf16.mxu0 0
      %8027 = vmatpush1.bf16.msra.mxu0 0
      %8028 = vmatprep.subr.bf16.mxu0 0
      %8029 = vmatpush1.bf16.msra.mxu0 0
      %8030 = vmatprep.subr.bf16.mxu0 0
      %8031 = vmatpush1.bf16.msra.mxu0 0
      %8032 = vmatprep.subr.bf16.mxu0 0
      %8033 = vmatpush1.bf16.msra.mxu0 0
      %8034 = vmatprep.subr.bf16.mxu0 0
      %8035 = vmatpush1.bf16.msra.mxu0 0
      %8036 = vmatprep.subr.bf16.mxu0 0
      %8037 = vmatpush1.bf16.msra.mxu0 0
      %8038 = vmatprep.subr.bf16.mxu0 0
      %8039 = vmatpush1.bf16.msra.mxu0 0
      %8040 = vmatprep.subr.bf16.mxu0 0
      %8041 = vmatpush1.bf16.msra.mxu0 %v8024
      %8042 = vmatprep.subr.bf16.mxu0 0
      %8043 = vmatpush2.bf16.msra.mxu0 0
      %8044 = vmatprep.subr.bf16.mxu0 0
      %8045 = vmatpush2.bf16.msra.mxu0 0
      %8046 = vmatprep.subr.bf16.mxu0 0
      %8047 = vmatpush2.bf16.msra.mxu0 0
      %8048 = vmatprep.subr.bf16.mxu0 0
      %8049 = vmatpush2.bf16.msra.mxu0 0
      %8050 = vmatprep.subr.bf16.mxu0 0
      %8051 = vmatpush2.bf16.msra.mxu0 0
      %8052 = vmatprep.subr.bf16.mxu0 0
      %8053 = vmatpush2.bf16.msra.mxu0 0
      %8054 = vmatprep.subr.bf16.mxu0 0
      %8055 = vmatpush2.bf16.msra.mxu0 0
      %8056 = vmatprep.subr.bf16.mxu0 0
      %8057 = vmatpush2.bf16.msra.mxu0 0
      %8058 = vmatprep.mubr.bf16.mxu0 0
      %8059 = vmatmul.mubr.bf16.gmra.mxu0 %v8012
      %v8060 = vpop.f32.mrf.mxu0
      %v8061 = vadd.f32 0.0, %v8060
      %v8062 = vpop.f32.mrf.mxu0
      %v8063 = vpop.f32.mrf.mxu0
      %v8064 = vadd.f32 0.0, %v8063
      %v8065 = vpop.f32.mrf.mxu0
      %8066 = vmatprep.mubr.bf16.mxu0 0
      %8067 = vmatmul.mubr.bf16.gmra.mxu0 %v8015
      %v8068 = vpop.f32.mrf.mxu0
      %v8069 = vadd.f32 0.0, %v8068
      %v8070 = vpop.f32.mrf.mxu0
      %v8071 = vpop.f32.mrf.mxu0
      %v8072 = vadd.f32 0.0, %v8071
      %v8073 = vpop.f32.mrf.mxu0
      %8074 = vmatprep.mubr.bf16.mxu0 0
      %8075 = vmatmul.mubr.bf16.gmra.mxu0 %v8018
      %v8076 = vpop.f32.mrf.mxu0
      %v8077 = vadd.f32 0.0, %v8076
      %v8078 = vpop.f32.mrf.mxu0
      %v8079 = vpop.f32.mrf.mxu0
      %v8080 = vadd.f32 0.0, %v8079
      %v8081 = vpop.f32.mrf.mxu0
      %8082 = vmatprep.mubr.bf16.mxu0 0
      %8083 = vmatmul.mubr.bf16.gmra.mxu0 %v8021
      %v8084 = vpop.f32.mrf.mxu0
      %v8085 = vadd.f32 0.0, %v8084
      %v8086 = vpop.f32.mrf.mxu0
      %v8087 = vpop.f32.mrf.mxu0
      %v8088 = vadd.f32 0.0, %v8087
      %v8089 = vpop.f32.mrf.mxu0
      %8090 = vdwg.mxu0
      %v8091 = vadd.f32 %v7853, %v8061
      %v8092 = vadd.f32 %v7854, %v8064
      %v8093 = vadd.f32 %v7855, %v8069
      %v8094 = vadd.f32 %v7856, %v8072
      %v8095 = vadd.f32 %v7857, %v8077
      %v8096 = vadd.f32 %v7858, %v8080
      %v8097 = vadd.f32 %v7859, %v8085
      %v8098 = vadd.f32 %v7860, %v8088
      %s8099 = scalar_lea.vmem %s6, 24
      %v8100 = vld [vmem:[%s8099] sm:$0xf]
      %v8102 = vunpack.c.l.b16 %v7197
      %v8103 = vpack.c.b16 %v7313, %v7312
      %v8104 = vpack.c.b16 %v7315, %v7314
      %v8105 = vpack.c.b16 %v7317, %v7316
      %v8106 = vpack.c.b16 %v8102, %v7318
      %v8108 = vsel %vm7221, %v8103, 0
      %v8111 = vsel %vm7221, %v8104, 0
      %v8114 = vsel %vm7221, %v8105, 0
      %v8117 = vsel %vm7221, %v8106, 0
      %v8120 = vsel %vm7234, %v8100, 0
      %8122 = vmatprep.subr.bf16.mxu0 0
      %8123 = vmatpush1.bf16.msra.mxu0 0
      %8124 = vmatprep.subr.bf16.mxu0 0
      %8125 = vmatpush1.bf16.msra.mxu0 0
      %8126 = vmatprep.subr.bf16.mxu0 0
      %8127 = vmatpush1.bf16.msra.mxu0 0
      %8128 = vmatprep.subr.bf16.mxu0 0
      %8129 = vmatpush1.bf16.msra.mxu0 0
      %8130 = vmatprep.subr.bf16.mxu0 0
      %8131 = vmatpush1.bf16.msra.mxu0 0
      %8132 = vmatprep.subr.bf16.mxu0 0
      %8133 = vmatpush1.bf16.msra.mxu0 0
      %8134 = vmatprep.subr.bf16.mxu0 0
      %8135 = vmatpush1.bf16.msra.mxu0 0
      %8136 = vmatprep.subr.bf16.mxu0 0
      %8137 = vmatpush1.bf16.msra.mxu0 %v8120
      %8138 = vmatprep.subr.bf16.mxu0 0
      %8139 = vmatpush2.bf16.msra.mxu0 0
      %8140 = vmatprep.subr.bf16.mxu0 0
      %8141 = vmatpush2.bf16.msra.mxu0 0
      %8142 = vmatprep.subr.bf16.mxu0 0
      %8143 = vmatpush2.bf16.msra.mxu0 0
      %8144 = vmatprep.subr.bf16.mxu0 0
      %8145 = vmatpush2.bf16.msra.mxu0 0
      %8146 = vmatprep.subr.bf16.mxu0 0
      %8147 = vmatpush2.bf16.msra.mxu0 0
      %8148 = vmatprep.subr.bf16.mxu0 0
      %8149 = vmatpush2.bf16.msra.mxu0 0
      %8150 = vmatprep.subr.bf16.mxu0 0
      %8151 = vmatpush2.bf16.msra.mxu0 0
      %8152 = vmatprep.subr.bf16.mxu0 0
      %8153 = vmatpush2.bf16.msra.mxu0 0
      %8154 = vmatprep.mubr.bf16.mxu0 0
      %8155 = vmatmul.mubr.bf16.gmra.mxu0 %v8108
      %v8156 = vpop.f32.mrf.mxu0
      %v8157 = vadd.f32 0.0, %v8156
      %v8158 = vpop.f32.mrf.mxu0
      %v8159 = vpop.f32.mrf.mxu0
      %v8160 = vadd.f32 0.0, %v8159
      %v8161 = vpop.f32.mrf.mxu0
      %8162 = vmatprep.mubr.bf16.mxu0 0
      %8163 = vmatmul.mubr.bf16.gmra.mxu0 %v8111
      %v8164 = vpop.f32.mrf.mxu0
      %v8165 = vadd.f32 0.0, %v8164
      %v8166 = vpop.f32.mrf.mxu0
      %v8167 = vpop.f32.mrf.mxu0
      %v8168 = vadd.f32 0.0, %v8167
      %v8169 = vpop.f32.mrf.mxu0
      %8170 = vmatprep.mubr.bf16.mxu0 0
      %8171 = vmatmul.mubr.bf16.gmra.mxu0 %v8114
      %v8172 = vpop.f32.mrf.mxu0
      %v8173 = vadd.f32 0.0, %v8172
      %v8174 = vpop.f32.mrf.mxu0
      %v8175 = vpop.f32.mrf.mxu0
      %v8176 = vadd.f32 0.0, %v8175
      %v8177 = vpop.f32.mrf.mxu0
      %8178 = vmatprep.mubr.bf16.mxu0 0
      %8179 = vmatmul.mubr.bf16.gmra.mxu0 %v8117
      %v8180 = vpop.f32.mrf.mxu0
      %v8181 = vadd.f32 0.0, %v8180
      %v8182 = vpop.f32.mrf.mxu0
      %v8183 = vpop.f32.mrf.mxu0
      %v8184 = vadd.f32 0.0, %v8183
      %v8185 = vpop.f32.mrf.mxu0
      %8186 = vdwg.mxu0
      %v8187 = vadd.f32 %v8091, %v8157
      %v8188 = vadd.f32 %v8092, %v8160
      %v8189 = vadd.f32 %v8093, %v8165
      %v8190 = vadd.f32 %v8094, %v8168
      %v8191 = vadd.f32 %v8095, %v8173
      %v8192 = vadd.f32 %v8096, %v8176
      %v8193 = vadd.f32 %v8097, %v8181
      %v8194 = vadd.f32 %v8098, %v8184
      %s8195 = scalar_lea.vmem %s6, 28
      %v8196 = vld [vmem:[%s8195] sm:$0xf]
      %v8198 = vunpack.c.l.b16 %v7110
      %v8199 = vpack.c.b16 %v7211, %v7210
      %v8200 = vpack.c.b16 %v7213, %v7212
      %v8201 = vpack.c.b16 %v7215, %v7214
      %v8202 = vpack.c.b16 %v8198, %v7216
      %v8204 = vsel %vm7221, %v8199, 0
      %v8207 = vsel %vm7221, %v8200, 0
      %v8210 = vsel %vm7221, %v8201, 0
      %v8213 = vsel %vm7221, %v8202, 0
      %v8216 = vsel %vm7234, %v8196, 0
      %8218 = vmatprep.subr.bf16.mxu0 0
      %8219 = vmatpush1.bf16.msra.mxu0 0
      %8220 = vmatprep.subr.bf16.mxu0 0
      %8221 = vmatpush1.bf16.msra.mxu0 0
      %8222 = vmatprep.subr.bf16.mxu0 0
      %8223 = vmatpush1.bf16.msra.mxu0 0
      %8224 = vmatprep.subr.bf16.mxu0 0
      %8225 = vmatpush1.bf16.msra.mxu0 0
      %8226 = vmatprep.subr.bf16.mxu0 0
      %8227 = vmatpush1.bf16.msra.mxu0 0
      %8228 = vmatprep.subr.bf16.mxu0 0
      %8229 = vmatpush1.bf16.msra.mxu0 0
      %8230 = vmatprep.subr.bf16.mxu0 0
      %8231 = vmatpush1.bf16.msra.mxu0 0
      %8232 = vmatprep.subr.bf16.mxu0 0
      %8233 = vmatpush1.bf16.msra.mxu0 %v8216
      %8234 = vmatprep.subr.bf16.mxu0 0
      %8235 = vmatpush2.bf16.msra.mxu0 0
      %8236 = vmatprep.subr.bf16.mxu0 0
      %8237 = vmatpush2.bf16.msra.mxu0 0
      %8238 = vmatprep.subr.bf16.mxu0 0
      %8239 = vmatpush2.bf16.msra.mxu0 0
      %8240 = vmatprep.subr.bf16.mxu0 0
      %8241 = vmatpush2.bf16.msra.mxu0 0
      %8242 = vmatprep.subr.bf16.mxu0 0
      %8243 = vmatpush2.bf16.msra.mxu0 0
      %8244 = vmatprep.subr.bf16.mxu0 0
      %8245 = vmatpush2.bf16.msra.mxu0 0
      %8246 = vmatprep.subr.bf16.mxu0 0
      %8247 = vmatpush2.bf16.msra.mxu0 0
      %8248 = vmatprep.subr.bf16.mxu0 0
      %8249 = vmatpush2.bf16.msra.mxu0 0
      %8250 = vmatprep.mubr.bf16.mxu0 0
      %8251 = vmatmul.mubr.bf16.gmra.mxu0 %v8204
      %v8252 = vpop.f32.mrf.mxu0
      %v8253 = vadd.f32 0.0, %v8252
      %v8254 = vpop.f32.mrf.mxu0
      %v8255 = vpop.f32.mrf.mxu0
      %v8256 = vadd.f32 0.0, %v8255
      %v8257 = vpop.f32.mrf.mxu0
      %8258 = vmatprep.mubr.bf16.mxu0 0
      %8259 = vmatmul.mubr.bf16.gmra.mxu0 %v8207
      %v8260 = vpop.f32.mrf.mxu0
      %v8261 = vadd.f32 0.0, %v8260
      %v8262 = vpop.f32.mrf.mxu0
      %v8263 = vpop.f32.mrf.mxu0
      %v8264 = vadd.f32 0.0, %v8263
      %v8265 = vpop.f32.mrf.mxu0
      %8266 = vmatprep.mubr.bf16.mxu0 0
      %8267 = vmatmul.mubr.bf16.gmra.mxu0 %v8210
      %v8268 = vpop.f32.mrf.mxu0
      %v8269 = vadd.f32 0.0, %v8268
      %v8270 = vpop.f32.mrf.mxu0
      %v8271 = vpop.f32.mrf.mxu0
      %v8272 = vadd.f32 0.0, %v8271
      %v8273 = vpop.f32.mrf.mxu0
      %8274 = vmatprep.mubr.bf16.mxu0 0
      %8275 = vmatmul.mubr.bf16.gmra.mxu0 %v8213
      %v8276 = vpop.f32.mrf.mxu0
      %v8277 = vadd.f32 0.0, %v8276
      %v8278 = vpop.f32.mrf.mxu0
      %v8279 = vpop.f32.mrf.mxu0
      %v8280 = vadd.f32 0.0, %v8279
      %v8281 = vpop.f32.mrf.mxu0
      %8282 = vdwg.mxu0
      %v8283 = vadd.f32 %v8187, %v8253
      %v8284 = vadd.f32 %v8188, %v8256
      %v8285 = vadd.f32 %v8189, %v8261
      %v8286 = vadd.f32 %v8190, %v8264
      %v8287 = vadd.f32 %v8191, %v8269
      %v8288 = vadd.f32 %v8192, %v8272
      %v8289 = vadd.f32 %v8193, %v8277
      %v8290 = vadd.f32 %v8194, %v8280
      %v8291 = vunpack.c.h.b16 %v7197
      %v8292 = vpack.c.b16 %v8102, %v8102
      %v8293 = vpack.c.b16 %v8291, %v8291
      %v8295 = vshrl.u32 %v8292, 16
      %v8297 = vrot.slane %v8295, 4
      %v8298 = vshll.u32 %v8292, 16
      %v8300 = vrot.slane %v8298, 5
      %v8301 = vor.u32 %v8297, %v8300
      %v8302 = vrot.slane %v8301, 4
      %v8304 = vshll.u32 %v8293, 16
      %v8306 = vrot.slane %v8304, 5
      %v8307 = vsel %vm683, %v8302, %v8306
      %s8308 = scalar_lea.vmem %s6, 32
      %v8309 = vld [vmem:[%s8308] sm:$0xf]
      %v8310 = vunpack.c.l.b16 %v8307
      %v8311 = vpack.c.b16 %v7543, %v7542
      %v8312 = vpack.c.b16 %v7545, %v7544
      %v8313 = vpack.c.b16 %v7547, %v7546
      %v8314 = vpack.c.b16 %v8310, %v7548
      %v8316 = vsel %vm7221, %v8311, 0
      %v8319 = vsel %vm7221, %v8312, 0
      %v8322 = vsel %vm7221, %v8313, 0
      %v8325 = vsel %vm7221, %v8314, 0
      %v8328 = vsel %vm7234, %v8309, 0
      %8330 = vmatprep.subr.bf16.mxu0 0
      %8331 = vmatpush1.bf16.msra.mxu0 0
      %8332 = vmatprep.subr.bf16.mxu0 0
      %8333 = vmatpush1.bf16.msra.mxu0 0
      %8334 = vmatprep.subr.bf16.mxu0 0
      %8335 = vmatpush1.bf16.msra.mxu0 0
      %8336 = vmatprep.subr.bf16.mxu0 0
      %8337 = vmatpush1.bf16.msra.mxu0 0
      %8338 = vmatprep.subr.bf16.mxu0 0
      %8339 = vmatpush1.bf16.msra.mxu0 0
      %8340 = vmatprep.subr.bf16.mxu0 0
      %8341 = vmatpush1.bf16.msra.mxu0 0
      %8342 = vmatprep.subr.bf16.mxu0 0
      %8343 = vmatpush1.bf16.msra.mxu0 0
      %8344 = vmatprep.subr.bf16.mxu0 0
      %8345 = vmatpush1.bf16.msra.mxu0 %v8328
      %8346 = vmatprep.subr.bf16.mxu0 0
      %8347 = vmatpush2.bf16.msra.mxu0 0
      %8348 = vmatprep.subr.bf16.mxu0 0
      %8349 = vmatpush2.bf16.msra.mxu0 0
      %8350 = vmatprep.subr.bf16.mxu0 0
      %8351 = vmatpush2.bf16.msra.mxu0 0
      %8352 = vmatprep.subr.bf16.mxu0 0
      %8353 = vmatpush2.bf16.msra.mxu0 0
      %8354 = vmatprep.subr.bf16.mxu0 0
      %8355 = vmatpush2.bf16.msra.mxu0 0
      %8356 = vmatprep.subr.bf16.mxu0 0
      %8357 = vmatpush2.bf16.msra.mxu0 0
      %8358 = vmatprep.subr.bf16.mxu0 0
      %8359 = vmatpush2.bf16.msra.mxu0 0
      %8360 = vmatprep.subr.bf16.mxu0 0
      %8361 = vmatpush2.bf16.msra.mxu0 0
      %8362 = vmatprep.mubr.bf16.mxu0 0
      %8363 = vmatmul.mubr.bf16.gmra.mxu0 %v8316
      %v8364 = vpop.f32.mrf.mxu0
      %v8365 = vadd.f32 0.0, %v8364
      %v8366 = vpop.f32.mrf.mxu0
      %v8367 = vpop.f32.mrf.mxu0
      %v8368 = vadd.f32 0.0, %v8367
      %v8369 = vpop.f32.mrf.mxu0
      %8370 = vmatprep.mubr.bf16.mxu0 0
      %8371 = vmatmul.mubr.bf16.gmra.mxu0 %v8319
      %v8372 = vpop.f32.mrf.mxu0
      %v8373 = vadd.f32 0.0, %v8372
      %v8374 = vpop.f32.mrf.mxu0
      %v8375 = vpop.f32.mrf.mxu0
      %v8376 = vadd.f32 0.0, %v8375
      %v8377 = vpop.f32.mrf.mxu0
      %8378 = vmatprep.mubr.bf16.mxu0 0
      %8379 = vmatmul.mubr.bf16.gmra.mxu0 %v8322
      %v8380 = vpop.f32.mrf.mxu0
      %v8381 = vadd.f32 0.0, %v8380
      %v8382 = vpop.f32.mrf.mxu0
      %v8383 = vpop.f32.mrf.mxu0
      %v8384 = vadd.f32 0.0, %v8383
      %v8385 = vpop.f32.mrf.mxu0
      %8386 = vmatprep.mubr.bf16.mxu0 0
      %8387 = vmatmul.mubr.bf16.gmra.mxu0 %v8325
      %v8388 = vpop.f32.mrf.mxu0
      %v8389 = vadd.f32 0.0, %v8388
      %v8390 = vpop.f32.mrf.mxu0
      %v8391 = vpop.f32.mrf.mxu0
      %v8392 = vadd.f32 0.0, %v8391
      %v8393 = vpop.f32.mrf.mxu0
      %8394 = vdwg.mxu0
      %v8395 = vadd.f32 %v8283, %v8365
      %v8396 = vadd.f32 %v8284, %v8368
      %v8397 = vadd.f32 %v8285, %v8373
      %v8398 = vadd.f32 %v8286, %v8376
      %v8399 = vadd.f32 %v8287, %v8381
      %v8400 = vadd.f32 %v8288, %v8384
      %v8401 = vadd.f32 %v8289, %v8389
      %v8402 = vadd.f32 %v8290, %v8392
      %v8403 = vld [vmem:[%s7] sm:$0x1]
      %v8405 = vlaneseq
      %v8406 = vshrl.u32 %v8405, 7
      %v8407 = vsub.s32 0, %v8406
      %v8408 = vrot.slane %v8403, %v8407
      %v8410 = vadd.f32 %v8395, %v8408
      %v8411 = vadd.f32 %v8396, %v8408
      %v8412 = vadd.f32 %v8397, %v8408
      %v8413 = vadd.f32 %v8398, %v8408
      %v8414 = vadd.f32 %v8399, %v8408
      %v8415 = vadd.f32 %v8400, %v8408
      %v8416 = vadd.f32 %v8401, %v8408
      %v8417 = vadd.f32 %v8402, %v8408
      %vm8418 = vcmp.gt.f32.partialorder %v8410, 0.0
      %vm8419 = vcmp.gt.f32.partialorder %v8411, 0.0
      %vm8420 = vcmp.gt.f32.partialorder %v8412, 0.0
      %vm8421 = vcmp.gt.f32.partialorder %v8413, 0.0
      %vm8422 = vcmp.gt.f32.partialorder %v8414, 0.0
      %vm8423 = vcmp.gt.f32.partialorder %v8415, 0.0
      %vm8424 = vcmp.gt.f32.partialorder %v8416, 0.0
      %vm8425 = vcmp.gt.f32.partialorder %v8417, 0.0
      %v8426 = vmul.f32 %v8410, 0.2
      %v8427 = vmul.f32 %v8411, 0.2
      %v8428 = vmul.f32 %v8412, 0.2
      %v8429 = vmul.f32 %v8413, 0.2
      %v8430 = vmul.f32 %v8414, 0.2
      %v8431 = vmul.f32 %v8415, 0.2
      %v8432 = vmul.f32 %v8416, 0.2
      %v8433 = vmul.f32 %v8417, 0.2
      %v8434 = vsel %vm8418, %v8410, %v8426
      %v8435 = vsel %vm8419, %v8411, %v8427
      %v8436 = vsel %vm8420, %v8412, %v8428
      %v8437 = vsel %vm8421, %v8413, %v8429
      %v8438 = vsel %vm8422, %v8414, %v8430
      %v8439 = vsel %vm8423, %v8415, %v8431
      %v8440 = vsel %vm8424, %v8416, %v8432
      %v8441 = vsel %vm8425, %v8417, %v8433
      %v8442 = vadd.f32 %v8434, %v2089
      %v8443 = vadd.f32 %v8435, %v2090
      %v8444 = vadd.f32 %v8436, %v2091
      %v8445 = vadd.f32 %v8437, %v2092
      %v8446 = vadd.f32 %v8438, %v2093
      %v8447 = vadd.f32 %v8439, %v2094
      %v8448 = vadd.f32 %v8440, %v2095
      %v8449 = vadd.f32 %v8441, %v2096
      %8450 = vst.msk [vmem:[%s557] sm:$0xff] %vm7221, %v8442
      %8451 = vst.msk [vmem:[%s557 + $0x8] sm:$0xff] %vm7221, %v8443
      %8452 = vst.msk [vmem:[%s557 + $0x10] sm:$0xff] %vm7221, %v8444
      %8453 = vst.msk [vmem:[%s557 + $0x18] sm:$0xff] %vm7221, %v8445
      %8454 = vst.msk [vmem:[%s557 + $0x20] sm:$0xff] %vm7221, %v8446
      %8455 = vst.msk [vmem:[%s557 + $0x28] sm:$0xff] %vm7221, %v8447
      %8456 = vst.msk [vmem:[%s557 + $0x30] sm:$0xff] %vm7221, %v8448
      %8457 = vst.msk [vmem:[%s557 + $0x38] sm:$0xff] %vm7221, %v8449
      %s8458 = smul.u32 8, %s26
      %p8459 = scmp.lt.s32.totalorder %s25, 1
      %s8460 = scalar_select %p8459, %s25, 1
      %p8461 = scmp.lt.s32.totalorder %s8458, 7
      %s8462 = scalar_select %p8461, %s8458, 7
      %s8463 = smul.addr %s8460, 8
      %s8464 = sadd.s32 %s8462, %s8463
      %s8465 = smul.addr %s8464, 8
      %s8466 = scalar_lea.vmem %s10, %s8465
      // Predicated region
      $region61: #{block_d_forward.1} parent=59 // pred_check
        %p8467 = pneg %p291
      $region62: #{block_d_forward.1} parent=59 // pred_check_branch
        %8469 = sbr.rel (%p8467) target = $region64
      $region63: #{block_d_forward.1} parent=59 // pred_region
        %s8470 = smul.u32 8, %s26
      $region64: #{block_d_forward.1} parent=59 // pred_fallthru
        _
    $region60: #{block_d_forward.1} parent=5 // pred_fallthru
      _
    %p8471 = scmp.le.s32.totalorder 2, %s16
    // Predicated region
    $region65: #{block_d_forward.1} parent=5 // pred_check
      %p8472 = pneg %p8471
    $region66: #{block_d_forward.1} parent=5 // pred_check_branch
      %8474 = sbr.rel (%p8472) target = $region68
    $region67: #{block_d_forward.1} parent=5 // pred_region
      %s8475 = ssub.s32 %s16, 2
      // Predicated region
      $region69: #{block_d_forward.1} parent=67 // pred_check
        %p8476 = pneg %p297
      $region70: #{block_d_forward.1} parent=67 // pred_check_branch
        %8478 = sbr.rel (%p8476) target = $region72
      $region71: #{block_d_forward.1} parent=67 // pred_region
        %s8479 = smul.u32 8, %s28
        %p8480 = scmp.lt.s32.totalorder %s27, 1
        %s8481 = scalar_select %p8480, %s27, 1
        %p8482 = scmp.lt.s32.totalorder %s8479, 7
        %s8483 = scalar_select %p8482, %s8479, 7
        %s8484 = smul.addr %s8481, 8
        %s8485 = sadd.s32 %s8483, %s8484
        %s8486 = smul.addr %s8485, 8
        %s8487 = scalar_lea.vmem %s10, %s8486
      $region72: #{block_d_forward.1} parent=67 // pred_fallthru
        _
    $region68: #{block_d_forward.1} parent=5 // pred_fallthru
      _
  $region6: #{block_d_forward.1} parent=0 // loop_footer
    %s20 = sadd.s32 1, %s16
  $region7: #{block_d_forward.1} parent=0 // loop_footer_branch
    %15 = sbr.rel target = $region3
  $region8: #{block_d_forward.1} parent=0 // loop_exit
    _

</llo_original>
